<compile_context>
chip_gen: v7x
topology: tpu7x:2x2x1
jax: 0.10.0
libtpu: 0.0.40
codegen_flags: <defaults>
</compile_context>

<pallas_src>
import jax
import jax.numpy as jnp
import numpy as np
from jax import lax
from jax.experimental import pallas as pl
from jax.experimental.pallas import tpu as pltpu

H = W = 28                 # spatial size implied by fc = Linear(32*28*28, 10)
CIN = 1
HID = CIN * 6              # expand_ratio = 6
COUT = 32
NUM_CLASSES = 10
BN_EPS = 1e-5

G = 32                     # image embedded in a 32x32 zero-bordered grid
OFF = 2                    # image origin inside the grid (2-pixel zero border)
WIDTH = G * G              # 1024 lanes per image row = exactly 8 f32 vregs
RB = 8                     # register-block rows (one vreg of sublanes) per chunk
BATCH_TILE = 64            # max images per grid step

# tap lane offsets for the 3x3 depthwise conv, dh-major (index t = dh*3 + dw)
_TAP_OFFSETS = tuple((dh - 1) * G + (dw - 1) for dh in range(3) for dw in range(3))
_MAX_OFF = G + 1

# Invariant tying the layout to correctness: every lane whose y2 value can be
# contaminated by roll wrap-around (within _MAX_OFF of either row edge) or that lies
# outside the 28x28 image region feeds ONLY zero rows of wcomb/wres, so garbage
# computed there never reaches the logits.
assert OFF * G + OFF >= _MAX_OFF
assert (OFF + H - 1) * G + (OFF + W - 1) + _MAX_OFF < WIDTH
assert WIDTH % 128 == 0 and RB % 8 == 0 and BATCH_TILE % RB == 0


# ----------------------------------------------------------------------------
# Fused kernel: InvertedResidual + flatten + fc for one batch tile.
# ----------------------------------------------------------------------------
def mbv2_fused_kernel(x_ref, a1_ref, b1_ref, wdw_ref, b2w_ref,
                      wcomb_ref, wres_ref, bias_ref, out_ref, y2_scr):
    """x_ref   : (bt, WIDTH)           VMEM  images on the 32x32 grid, one row per image
       a1 / b1 : (HID,)                SMEM  expand-1x1 weight (BN1-folded) / BN1 bias
       wdw     : (HID*9,)              SMEM  depthwise 3x3 weights (BN2-folded), idx c*9+dh*3+dw
       b2w     : (HID, RB, WIDTH)      VMEM  BN2 bias + ring-fix, pre-broadcast over RB rows
       wcomb   : (HID*WIDTH, 10)       VMEM  project-1x1(+BN3) folded into FC, stacked per channel
       wres    : (WIDTH, 10)           VMEM  residual (x broadcast over COUT) folded into FC
       bias    : (1, 10)               VMEM  fc bias + BN3-bias term
       out_ref : (bt, 10)                    logits
       y2_scr  : (bt, HID*WIDTH)       VMEM  scratch holding every channel's y2 row
    """
    bt = x_ref.shape[0]

    # Elementwise chain, register-blocked: each (RB, WIDTH) temporary is 8 vregs.
    for r in range(bt // RB):
        xw = x_ref[r * RB:(r + 1) * RB, :]                          # (RB, WIDTH)
        for c in range(HID):
            # expand 1x1 (BN1-folded) + BN1 bias + ReLU6.  No mask: lanes outside the
            # image hold clip(b1[c],0,6); the ring-fix inside b2w cancels their
            # contribution to every valid depthwise output.
            y1 = jnp.clip(xw * a1_ref[c] + b1_ref[c], 0.0, 6.0)     # (RB, WIDTH)

            # depthwise 3x3 (BN2-folded): XLU lane rotations of the register-resident
            # row; tap[L] must equal y1[L + off]  =>  roll shift = -off (mod WIDTH).
            dw = y1 * wdw_ref[c * 9 + 4]                            # centre tap, off = 0
            for t, off in enumerate(_TAP_OFFSETS):
                if off == 0:
                    continue
                rot = pltpu.roll(y1, (-off) % WIDTH, axis=1)
                dw = dw + rot * wdw_ref[c * 9 + t]

            # BN2 bias + ring-fix + ReLU6, then park the channel's row in the scratch
            # slab (aligned full-vreg store) for the single fused matmul below.
            y2 = jnp.clip(dw + b2w_ref[c], 0.0, 6.0)                # (RB, WIDTH)
            y2_scr[r * RB:(r + 1) * RB, c * WIDTH:(c + 1) * WIDTH] = y2

    # Residual path + all constant bias terms + project/FC contraction: two MXU dots.
    acc = jnp.dot(x_ref[...], wres_ref[...], preferred_element_type=jnp.float32)
    acc = acc + bias_ref[...]
    acc = acc + jnp.dot(y2_scr[...], wcomb_ref[...], preferred_element_type=jnp.float32)
    out_ref[...] = acc.astype(out_ref.dtype)


# ----------------------------------------------------------------------------
# Wrapper
# ----------------------------------------------------------------------------
def _round_up(x, m):
    return -(-x // m) * m


def _choose_bt(n):
    """Batch tile: multiple of RB, capped at BATCH_TILE, and picked so the grid has
    >= 2 steps whenever possible (lets v7x shard the 'parallel' axis over both TCs)."""
    n8 = _round_up(max(n, 1), RB)
    bt = min(BATCH_TILE, n8)
    if n8 > RB and -(-n8 // bt) < 2:
        bt = _round_up(-(-n8 // 2), RB)
    return bt


@jax.jit
def simple_mobilenet_v2(x_nchw, params):
    n = x_nchw.shape[0]
    bt = _choose_bt(n)
    n_pad = _round_up(n, bt)

    # Single-pass layout plumbing: NCHW (C=1) -> (n_pad, 32, 32) zero-bordered grid
    # -> one 1024-lane row per image.  Padded batch rows produce garbage logits that
    # are sliced off below (never consumed).
    x = x_nchw[:, 0, :, :]
    xw = jnp.pad(x, ((0, n_pad - n), (OFF, G - H - OFF), (OFF, G - W - OFF))
                 ).reshape(n_pad, WIDTH)

    out = pl.pallas_call(
        mbv2_fused_kernel,
        out_shape=jax.ShapeDtypeStruct((n_pad, NUM_CLASSES), jnp.float32),
        grid_spec=pltpu.PrefetchScalarGridSpec(
            num_scalar_prefetch=0,
            grid=(n_pad // bt,),
            in_specs=[
                pl.BlockSpec((bt, WIDTH), lambda i: (i, 0)),                   # images
                pl.BlockSpec(memory_space=pltpu.MemorySpace.SMEM),             # a1
                pl.BlockSpec(memory_space=pltpu.MemorySpace.SMEM),             # b1
                pl.BlockSpec(memory_space=pltpu.MemorySpace.SMEM),             # wdw
                pl.BlockSpec((HID, RB, WIDTH), lambda i: (0, 0, 0)),           # b2w
                pl.BlockSpec((HID * WIDTH, NUM_CLASSES), lambda i: (0, 0)),    # wcomb
                pl.BlockSpec((WIDTH, NUM_CLASSES), lambda i: (0, 0)),          # wres
                pl.BlockSpec((1, NUM_CLASSES), lambda i: (0, 0)),              # bias
            ],
            out_specs=pl.BlockSpec((bt, NUM_CLASSES), lambda i: (i, 0)),
            scratch_shapes=[pltpu.VMEM((bt, HID * WIDTH), jnp.float32)],
        ),
        compiler_params=pltpu.CompilerParams(
            dimension_semantics=("parallel",),          # shard batch tiles over TCs
            vmem_limit_bytes=32 * 1024 * 1024,          # ~10 MiB live; < 64 MiB (v7x)
        ),
    )(xw, params["a1"], params["b1"], params["wdw"], params["b2w"],
      params["wcomb"], params["wres"], params["bias"])
    return out[:n]


# ----------------------------------------------------------------------------
# Deterministic PyTorch-layout raw params and folding into kernel layouts
# ----------------------------------------------------------------------------
def init_raw_params(key):
    ks = jax.random.split(key, 18)

    def bn_params(k0, k1, k2, k3, c):
        gamma = 1.0 + 0.1 * jax.random.normal(k0, (c,), jnp.float32)
        beta = 0.1 * jax.random.normal(k1, (c,), jnp.float32)
        mean = 0.1 * jax.random.normal(k2, (c,), jnp.float32)
        var = 1.0 + 0.2 * jax.random.uniform(k3, (c,), jnp.float32)
        return gamma, beta, mean, var

    return {
        "conv1_w": 0.5 * jax.random.normal(ks[0], (HID, CIN, 1, 1), jnp.float32),
        "bn1": bn_params(ks[1], ks[2], ks[3], ks[4], HID),
        "dw_w": 0.3 * jax.random.normal(ks[5], (HID, 1, 3, 3), jnp.float32),
        "bn2": bn_params(ks[6], ks[7], ks[8], ks[9], HID),
        "conv3_w": 0.3 * jax.random.normal(ks[10], (COUT, HID, 1, 1), jnp.float32),
        "bn3": bn_params(ks[11], ks[12], ks[13], ks[14], COUT),
        "fc_w": 0.02 * jax.random.normal(ks[15], (NUM_CLASSES, COUT * H * W), jnp.float32),
        "fc_b": 0.02 * jax.random.normal(ks[16], (NUM_CLASSES,), jnp.float32),
    }


def fold_params(raw):
    """Fold eval-mode BNs into the convs and combine project-1x1 + BN3 + residual
    broadcast + FC into the matmul weights the kernel uses.  Exact algebra:
        logits[b,k] = sum_{c,p} y2[b,c,p] * Wcomb[c*WIDTH+p, k]
                    + sum_{p}   x[b,p]    * Wres[p,k]  + bias[k]
        Wcomb[c,p,k] = sum_o conv3_w[o,c]*s3[o] * fc_w[k, o, p]   (p on image lanes)
        Wres[p,k]    = sum_o                      fc_w[k, o, p]
        bias[k]      = fc_b[k] + sum_{o,p} b3[o] * fc_w[k, o, p]
    with y2 = ReLU6(BN2(depthwise(ReLU6(BN1(expand(x)))))) computed in-kernel, and
    the depthwise zero-padding ring restored through the per-channel b2w ring-fix."""
    hp = lax.Precision.HIGHEST

    def bn_fold(bn):
        gamma, beta, mean, var = bn
        s = gamma / jnp.sqrt(var + BN_EPS)
        return s, beta - mean * s

    s1, b1 = bn_fold(raw["bn1"])
    s2, b2 = bn_fold(raw["bn2"])
    s3, b3 = bn_fold(raw["bn3"])

    a1 = raw["conv1_w"][:, 0, 0, 0] * s1                                    # (HID,)
    wdw_hw = raw["dw_w"][:, 0] * s2[:, None, None]                          # (HID,3,3)
    wdw = wdw_hw.reshape(HID * 9)
    w3f = raw["conv3_w"][:, :, 0, 0] * s3[:, None]                          # (COUT, HID)

    wfc = raw["fc_w"].reshape(NUM_CLASSES, COUT, H, W).transpose(1, 2, 3, 0)  # (COUT,H,W,10)
    wcomb_hw = jnp.einsum("oc,ohwk->chwk", w3f, wfc, precision=hp)          # (HID,H,W,10)
    wres_hw = wfc.sum(axis=0)                                               # (H,W,10)
    bias = (raw["fc_b"] + jnp.einsum("o,ohwk->k", b3, wfc, precision=hp)
            ).reshape(1, NUM_CLASSES)

    # embed the (H, W) weight maps into the flattened 32x32 grid; all lanes outside
    # the image region stay zero (this is the wrap-safety invariant the kernel relies on)
    wcomb_g = jnp.zeros((HID, G, G, NUM_CLASSES), jnp.float32)
    wcomb_g = wcomb_g.at[:, OFF:OFF + H, OFF:OFF + W, :].set(wcomb_hw)
    wcomb = wcomb_g.reshape(HID * WIDTH, NUM_CLASSES)

    wres_g = jnp.zeros((G, G, NUM_CLASSES), jnp.float32)
    wres_g = wres_g.at[OFF:OFF + H, OFF:OFF + W, :].set(wres_hw)
    wres = wres_g.reshape(WIDTH, NUM_CLASSES)

    # ring-fix: without the interior mask, y1 on non-image lanes equals clip(b1,0,6)
    # instead of 0; subtract its contribution to every valid depthwise output and fold
    # it, together with the BN2 bias, into a per-channel full-width bias b2w.
    img = jnp.zeros((G, G), jnp.float32).at[OFF:OFF + H, OFF:OFF + W].set(1.0)
    non_img = 1.0 - img
    non_img_p = jnp.pad(non_img, ((1, 1), (1, 1)), constant_values=1.0)
    ring_sum = jnp.zeros((HID, G, G), jnp.float32)
    for dh in range(3):
        for dwi in range(3):
            nb = non_img_p[dh:dh + G, dwi:dwi + G]          # non_img at (gi+dh-1, gj+dw-1)
            ring_sum = ring_sum + wdw_hw[:, dh, dwi][:, None, None] * nb[None]
    const1 = jnp.clip(b1, 0.0, 6.0)
    b2w_g = b2[:, None, None] - const1[:, None, None] * ring_sum            # (HID,G,G)
    b2w = jnp.tile(b2w_g.reshape(HID, 1, WIDTH), (1, RB, 1))                # (HID,RB,WIDTH)

    return {"a1": a1, "b1": b1, "wdw": wdw, "b2w": b2w,
            "wcomb": wcomb, "wres": wres, "bias": bias}


# ----------------------------------------------------------------------------
# Pure-JAX reference (mirrors the PyTorch module: NCHW, eval-mode BN, unfolded)
# ----------------------------------------------------------------------------
def reference_forward(x_nchw, raw):
    def bn(x, p):
        gamma, beta, mean, var = p
        inv = gamma / jnp.sqrt(var + BN_EPS)
        return (x - mean[None, :, None, None]) * inv[None, :, None, None] \
            + beta[None, :, None, None]

    prec = lax.Precision.HIGHEST
    y = lax.conv_general_dilated(x_nchw, raw["conv1_w"], (1, 1), "VALID",
                                 dimension_numbers=("NCHW", "OIHW", "NCHW"),
                                 precision=prec)
    y = jnp.clip(bn(y, raw["bn1"]), 0.0, 6.0)
    y = lax.conv_general_dilated(y, raw["dw_w"], (1, 1), ((1, 1), (1, 1)),
                                 dimension_numbers=("NCHW", "OIHW", "NCHW"),
                                 feature_group_count=HID, precision=prec)
    y = jnp.clip(bn(y, raw["bn2"]), 0.0, 6.0)
    y = lax.conv_general_dilated(y, raw["conv3_w"], (1, 1), "VALID",
                                 dimension_numbers=("NCHW", "OIHW", "NCHW"),
                                 precision=prec)
    y = bn(y, raw["bn3"])
    y = y + x_nchw                                    # residual: 1 channel -> 32 broadcast
    y = y.reshape(y.shape[0], -1)                     # torch.flatten(x, 1), CHW order
    return jnp.dot(y, raw["fc_w"].T, precision=prec) + raw["fc_b"][None, :]


if __name__ == "__main__":
    key = jax.random.PRNGKey(0)
    k_x, k_p = jax.random.split(key)

    # fc = Linear(32*28*28, 10) forces a 1x28x28 input
    x = jax.random.normal(k_x, (2, CIN, H, W), jnp.float32)

    raw = init_raw_params(k_p)
    params = fold_params(raw)

    out = jax.block_until_ready(simple_mobilenet_v2(x, params))
    ref = reference_forward(x, raw)
    # kernel dots run at default (single-pass bf16) MXU precision; reference is f32
    np.testing.assert_allclose(np.asarray(out), np.asarray(ref), rtol=1e-2, atol=5e-2)

    print("KERNEL_OK")
</pallas_src>

<mosaic_0001>
module attributes {stable_mosaic.version = 11 : i64} {
  func.func @mbv2_fused_kernel(%arg0: i32, %arg1: memref<8x1024xf32, #tpu.memory_space<vmem>>, %arg2: memref<6xf32, #tpu.memory_space<smem>>, %arg3: memref<6xf32, #tpu.memory_space<smem>>, %arg4: memref<54xf32, #tpu.memory_space<smem>>, %arg5: memref<6x8x1024xf32, #tpu.memory_space<vmem>>, %arg6: memref<6144x10xf32, #tpu.memory_space<vmem>>, %arg7: memref<1024x10xf32, #tpu.memory_space<vmem>>, %arg8: memref<1x10xf32, #tpu.memory_space<vmem>>, %arg9: memref<8x10xf32, #tpu.memory_space<vmem>>, %arg10: memref<8x6144xf32, #tpu.memory_space<vmem>>) attributes {dimension_semantics = [#tpu.dimension_semantics<parallel>], iteration_bounds = array<i64: 1>, scalar_prefetch = 0 : i64, scratch_operands = 1 : i64, tpu.core_type = #tpu.core_type<tc>, window_params = [{transform_indices = @transform_0, window_bounds = array<i64: 8, 1024>}, {transform_indices = @transform_1, window_bounds = array<i64: 6>}, {transform_indices = @transform_2, window_bounds = array<i64: 6>}, {transform_indices = @transform_3, window_bounds = array<i64: 54>}, {pipeline_mode = #tpu.pipeline_mode<synchronous>, transform_indices = @transform_4, window_bounds = array<i64: 6, 8, 1024>}, {pipeline_mode = #tpu.pipeline_mode<synchronous>, transform_indices = @transform_5, window_bounds = array<i64: 6144, 10>}, {pipeline_mode = #tpu.pipeline_mode<synchronous>, transform_indices = @transform_6, window_bounds = array<i64: 1024, 10>}, {pipeline_mode = #tpu.pipeline_mode<synchronous>, transform_indices = @transform_7, window_bounds = array<i64: 1, 10>}, {transform_indices = @transform_8, window_bounds = array<i64: 8, 10>}]} {
    %c0 = arith.constant 0 : index
    %c0_0 = arith.constant 0 : index
    %0 = vector.load %arg1[%c0, %c0_0] : memref<8x1024xf32, #tpu.memory_space<vmem>>, vector<8x1024xf32>
    %c0_1 = arith.constant 0 : index
    %1 = memref.load %arg2[%c0_1] : memref<6xf32, #tpu.memory_space<smem>>
    %2 = vector.broadcast %1 : f32 to vector<8x1024xf32>
    %3 = arith.mulf %0, %2 : vector<8x1024xf32>
    %c0_2 = arith.constant 0 : index
    %4 = memref.load %arg3[%c0_2] : memref<6xf32, #tpu.memory_space<smem>>
    %5 = vector.broadcast %4 : f32 to vector<8x1024xf32>
    %6 = arith.addf %3, %5 : vector<8x1024xf32>
    %cst = arith.constant 0.000000e+00 : f32
    %cst_3 = arith.constant 6.000000e+00 : f32
    %7 = vector.broadcast %cst : f32 to vector<8x1024xf32>
    %8 = arith.maximumf %7, %6 : vector<8x1024xf32>
    %9 = vector.broadcast %cst_3 : f32 to vector<8x1024xf32>
    %10 = arith.minimumf %9, %8 : vector<8x1024xf32>
    %c4 = arith.constant 4 : index
    %11 = memref.load %arg4[%c4] : memref<54xf32, #tpu.memory_space<smem>>
    %12 = vector.broadcast %11 : f32 to vector<8x1024xf32>
    %13 = arith.mulf %10, %12 : vector<8x1024xf32>
    %c33_i32 = arith.constant 33 : i32
    %14 = tpu.dynamic_rotate %10 by %c33_i32 dim 1 : vector<8x1024xf32>, i32 -> vector<8x1024xf32>
    %c0_4 = arith.constant 0 : index
    %15 = memref.load %arg4[%c0_4] : memref<54xf32, #tpu.memory_space<smem>>
    %16 = vector.broadcast %15 : f32 to vector<8x1024xf32>
    %17 = arith.mulf %14, %16 : vector<8x1024xf32>
    %18 = arith.addf %13, %17 : vector<8x1024xf32>
    %c32_i32 = arith.constant 32 : i32
    %19 = tpu.dynamic_rotate %10 by %c32_i32 dim 1 : vector<8x1024xf32>, i32 -> vector<8x1024xf32>
    %c1 = arith.constant 1 : index
    %20 = memref.load %arg4[%c1] : memref<54xf32, #tpu.memory_space<smem>>
    %21 = vector.broadcast %20 : f32 to vector<8x1024xf32>
    %22 = arith.mulf %19, %21 : vector<8x1024xf32>
    %23 = arith.addf %18, %22 : vector<8x1024xf32>
    %c31_i32 = arith.constant 31 : i32
    %24 = tpu.dynamic_rotate %10 by %c31_i32 dim 1 : vector<8x1024xf32>, i32 -> vector<8x1024xf32>
    %c2 = arith.constant 2 : index
    %25 = memref.load %arg4[%c2] : memref<54xf32, #tpu.memory_space<smem>>
    %26 = vector.broadcast %25 : f32 to vector<8x1024xf32>
    %27 = arith.mulf %24, %26 : vector<8x1024xf32>
    %28 = arith.addf %23, %27 : vector<8x1024xf32>
    %c1_i32 = arith.constant 1 : i32
    %29 = tpu.dynamic_rotate %10 by %c1_i32 dim 1 : vector<8x1024xf32>, i32 -> vector<8x1024xf32>
    %c3 = arith.constant 3 : index
    %30 = memref.load %arg4[%c3] : memref<54xf32, #tpu.memory_space<smem>>
    %31 = vector.broadcast %30 : f32 to vector<8x1024xf32>
    %32 = arith.mulf %29, %31 : vector<8x1024xf32>
    %33 = arith.addf %28, %32 : vector<8x1024xf32>
    %c1023_i32 = arith.constant 1023 : i32
    %34 = tpu.dynamic_rotate %10 by %c1023_i32 dim 1 : vector<8x1024xf32>, i32 -> vector<8x1024xf32>
    %c5 = arith.constant 5 : index
    %35 = memref.load %arg4[%c5] : memref<54xf32, #tpu.memory_space<smem>>
    %36 = vector.broadcast %35 : f32 to vector<8x1024xf32>
    %37 = arith.mulf %34, %36 : vector<8x1024xf32>
    %38 = arith.addf %33, %37 : vector<8x1024xf32>
    %c993_i32 = arith.constant 993 : i32
    %39 = tpu.dynamic_rotate %10 by %c993_i32 dim 1 : vector<8x1024xf32>, i32 -> vector<8x1024xf32>
    %c6 = arith.constant 6 : index
    %40 = memref.load %arg4[%c6] : memref<54xf32, #tpu.memory_space<smem>>
    %41 = vector.broadcast %40 : f32 to vector<8x1024xf32>
    %42 = arith.mulf %39, %41 : vector<8x1024xf32>
    %43 = arith.addf %38, %42 : vector<8x1024xf32>
    %c992_i32 = arith.constant 992 : i32
    %44 = tpu.dynamic_rotate %10 by %c992_i32 dim 1 : vector<8x1024xf32>, i32 -> vector<8x1024xf32>
    %c7 = arith.constant 7 : index
    %45 = memref.load %arg4[%c7] : memref<54xf32, #tpu.memory_space<smem>>
    %46 = vector.broadcast %45 : f32 to vector<8x1024xf32>
    %47 = arith.mulf %44, %46 : vector<8x1024xf32>
    %48 = arith.addf %43, %47 : vector<8x1024xf32>
    %c991_i32 = arith.constant 991 : i32
    %49 = tpu.dynamic_rotate %10 by %c991_i32 dim 1 : vector<8x1024xf32>, i32 -> vector<8x1024xf32>
    %c8 = arith.constant 8 : index
    %50 = memref.load %arg4[%c8] : memref<54xf32, #tpu.memory_space<smem>>
    %51 = vector.broadcast %50 : f32 to vector<8x1024xf32>
    %52 = arith.mulf %49, %51 : vector<8x1024xf32>
    %53 = arith.addf %48, %52 : vector<8x1024xf32>
    %c0_5 = arith.constant 0 : index
    %c0_6 = arith.constant 0 : index
    %c0_7 = arith.constant 0 : index
    %54 = vector.load %arg5[%c0_5, %c0_6, %c0_7] : memref<6x8x1024xf32, #tpu.memory_space<vmem>>, vector<1x8x1024xf32>
    %55 = vector.shape_cast %54 : vector<1x8x1024xf32> to vector<8x1024xf32>
    %56 = arith.addf %53, %55 : vector<8x1024xf32>
    %cst_8 = arith.constant 0.000000e+00 : f32
    %cst_9 = arith.constant 6.000000e+00 : f32
    %57 = vector.broadcast %cst_8 : f32 to vector<8x1024xf32>
    %58 = arith.maximumf %57, %56 : vector<8x1024xf32>
    %59 = vector.broadcast %cst_9 : f32 to vector<8x1024xf32>
    %60 = arith.minimumf %59, %58 : vector<8x1024xf32>
    %c0_10 = arith.constant 0 : index
    %c0_11 = arith.constant 0 : index
    %61 = vector.load %arg10[%c0_10, %c0_11] : memref<8x6144xf32, #tpu.memory_space<vmem>>, vector<8x1024xf32>
    tpu.vector_store %arg10[%c0_10, %c0_11], %60 {strides = array<i32>} : memref<8x6144xf32, #tpu.memory_space<vmem>>, vector<8x1024xf32>,
    %c1_12 = arith.constant 1 : index
    %62 = memref.load %arg2[%c1_12] : memref<6xf32, #tpu.memory_space<smem>>
    %63 = vector.broadcast %62 : f32 to vector<8x1024xf32>
    %64 = arith.mulf %0, %63 : vector<8x1024xf32>
    %c1_13 = arith.constant 1 : index
    %65 = memref.load %arg3[%c1_13] : memref<6xf32, #tpu.memory_space<smem>>
    %66 = vector.broadcast %65 : f32 to vector<8x1024xf32>
    %67 = arith.addf %64, %66 : vector<8x1024xf32>
    %cst_14 = arith.constant 0.000000e+00 : f32
    %cst_15 = arith.constant 6.000000e+00 : f32
    %68 = vector.broadcast %cst_14 : f32 to vector<8x1024xf32>
    %69 = arith.maximumf %68, %67 : vector<8x1024xf32>
    %70 = vector.broadcast %cst_15 : f32 to vector<8x1024xf32>
    %71 = arith.minimumf %70, %69 : vector<8x1024xf32>
    %c13 = arith.constant 13 : index
    %72 = memref.load %arg4[%c13] : memref<54xf32, #tpu.memory_space<smem>>
    %73 = vector.broadcast %72 : f32 to vector<8x1024xf32>
    %74 = arith.mulf %71, %73 : vector<8x1024xf32>
    %c33_i32_16 = arith.constant 33 : i32
    %75 = tpu.dynamic_rotate %71 by %c33_i32_16 dim 1 : vector<8x1024xf32>, i32 -> vector<8x1024xf32>
    %c9 = arith.constant 9 : index
    %76 = memref.load %arg4[%c9] : memref<54xf32, #tpu.memory_space<smem>>
    %77 = vector.broadcast %76 : f32 to vector<8x1024xf32>
    %78 = arith.mulf %75, %77 : vector<8x1024xf32>
    %79 = arith.addf %74, %78 : vector<8x1024xf32>
    %c32_i32_17 = arith.constant 32 : i32
    %80 = tpu.dynamic_rotate %71 by %c32_i32_17 dim 1 : vector<8x1024xf32>, i32 -> vector<8x1024xf32>
    %c10 = arith.constant 10 : index
    %81 = memref.load %arg4[%c10] : memref<54xf32, #tpu.memory_space<smem>>
    %82 = vector.broadcast %81 : f32 to vector<8x1024xf32>
    %83 = arith.mulf %80, %82 : vector<8x1024xf32>
    %84 = arith.addf %79, %83 : vector<8x1024xf32>
    %c31_i32_18 = arith.constant 31 : i32
    %85 = tpu.dynamic_rotate %71 by %c31_i32_18 dim 1 : vector<8x1024xf32>, i32 -> vector<8x1024xf32>
    %c11 = arith.constant 11 : index
    %86 = memref.load %arg4[%c11] : memref<54xf32, #tpu.memory_space<smem>>
    %87 = vector.broadcast %86 : f32 to vector<8x1024xf32>
    %88 = arith.mulf %85, %87 : vector<8x1024xf32>
    %89 = arith.addf %84, %88 : vector<8x1024xf32>
    %c1_i32_19 = arith.constant 1 : i32
    %90 = tpu.dynamic_rotate %71 by %c1_i32_19 dim 1 : vector<8x1024xf32>, i32 -> vector<8x1024xf32>
    %c12 = arith.constant 12 : index
    %91 = memref.load %arg4[%c12] : memref<54xf32, #tpu.memory_space<smem>>
    %92 = vector.broadcast %91 : f32 to vector<8x1024xf32>
    %93 = arith.mulf %90, %92 : vector<8x1024xf32>
    %94 = arith.addf %89, %93 : vector<8x1024xf32>
    %c1023_i32_20 = arith.constant 1023 : i32
    %95 = tpu.dynamic_rotate %71 by %c1023_i32_20 dim 1 : vector<8x1024xf32>, i32 -> vector<8x1024xf32>
    %c14 = arith.constant 14 : index
    %96 = memref.load %arg4[%c14] : memref<54xf32, #tpu.memory_space<smem>>
    %97 = vector.broadcast %96 : f32 to vector<8x1024xf32>
    %98 = arith.mulf %95, %97 : vector<8x1024xf32>
    %99 = arith.addf %94, %98 : vector<8x1024xf32>
    %c993_i32_21 = arith.constant 993 : i32
    %100 = tpu.dynamic_rotate %71 by %c993_i32_21 dim 1 : vector<8x1024xf32>, i32 -> vector<8x1024xf32>
    %c15 = arith.constant 15 : index
    %101 = memref.load %arg4[%c15] : memref<54xf32, #tpu.memory_space<smem>>
    %102 = vector.broadcast %101 : f32 to vector<8x1024xf32>
    %103 = arith.mulf %100, %102 : vector<8x1024xf32>
    %104 = arith.addf %99, %103 : vector<8x1024xf32>
    %c992_i32_22 = arith.constant 992 : i32
    %105 = tpu.dynamic_rotate %71 by %c992_i32_22 dim 1 : vector<8x1024xf32>, i32 -> vector<8x1024xf32>
    %c16 = arith.constant 16 : index
    %106 = memref.load %arg4[%c16] : memref<54xf32, #tpu.memory_space<smem>>
    %107 = vector.broadcast %106 : f32 to vector<8x1024xf32>
    %108 = arith.mulf %105, %107 : vector<8x1024xf32>
    %109 = arith.addf %104, %108 : vector<8x1024xf32>
    %c991_i32_23 = arith.constant 991 : i32
    %110 = tpu.dynamic_rotate %71 by %c991_i32_23 dim 1 : vector<8x1024xf32>, i32 -> vector<8x1024xf32>
    %c17 = arith.constant 17 : index
    %111 = memref.load %arg4[%c17] : memref<54xf32, #tpu.memory_space<smem>>
    %112 = vector.broadcast %111 : f32 to vector<8x1024xf32>
    %113 = arith.mulf %110, %112 : vector<8x1024xf32>
    %114 = arith.addf %109, %113 : vector<8x1024xf32>
    %c1_24 = arith.constant 1 : index
    %c0_25 = arith.constant 0 : index
    %c0_26 = arith.constant 0 : index
    %115 = vector.load %arg5[%c1_24, %c0_25, %c0_26] : memref<6x8x1024xf32, #tpu.memory_space<vmem>>, vector<1x8x1024xf32>
    %116 = vector.shape_cast %115 : vector<1x8x1024xf32> to vector<8x1024xf32>
    %117 = arith.addf %114, %116 : vector<8x1024xf32>
    %cst_27 = arith.constant 0.000000e+00 : f32
    %cst_28 = arith.constant 6.000000e+00 : f32
    %118 = vector.broadcast %cst_27 : f32 to vector<8x1024xf32>
    %119 = arith.maximumf %118, %117 : vector<8x1024xf32>
    %120 = vector.broadcast %cst_28 : f32 to vector<8x1024xf32>
    %121 = arith.minimumf %120, %119 : vector<8x1024xf32>
    %c0_29 = arith.constant 0 : index
    %c1024 = arith.constant 1024 : index
    %122 = vector.load %arg10[%c0_29, %c1024] : memref<8x6144xf32, #tpu.memory_space<vmem>>, vector<8x1024xf32>
    tpu.vector_store %arg10[%c0_29, %c1024], %121 {strides = array<i32>} : memref<8x6144xf32, #tpu.memory_space<vmem>>, vector<8x1024xf32>,
    %c2_30 = arith.constant 2 : index
    %123 = memref.load %arg2[%c2_30] : memref<6xf32, #tpu.memory_space<smem>>
    %124 = vector.broadcast %123 : f32 to vector<8x1024xf32>
    %125 = arith.mulf %0, %124 : vector<8x1024xf32>
    %c2_31 = arith.constant 2 : index
    %126 = memref.load %arg3[%c2_31] : memref<6xf32, #tpu.memory_space<smem>>
    %127 = vector.broadcast %126 : f32 to vector<8x1024xf32>
    %128 = arith.addf %125, %127 : vector<8x1024xf32>
    %cst_32 = arith.constant 0.000000e+00 : f32
    %cst_33 = arith.constant 6.000000e+00 : f32
    %129 = vector.broadcast %cst_32 : f32 to vector<8x1024xf32>
    %130 = arith.maximumf %129, %128 : vector<8x1024xf32>
    %131 = vector.broadcast %cst_33 : f32 to vector<8x1024xf32>
    %132 = arith.minimumf %131, %130 : vector<8x1024xf32>
    %c22 = arith.constant 22 : index
    %133 = memref.load %arg4[%c22] : memref<54xf32, #tpu.memory_space<smem>>
    %134 = vector.broadcast %133 : f32 to vector<8x1024xf32>
    %135 = arith.mulf %132, %134 : vector<8x1024xf32>
    %c33_i32_34 = arith.constant 33 : i32
    %136 = tpu.dynamic_rotate %132 by %c33_i32_34 dim 1 : vector<8x1024xf32>, i32 -> vector<8x1024xf32>
    %c18 = arith.constant 18 : index
    %137 = memref.load %arg4[%c18] : memref<54xf32, #tpu.memory_space<smem>>
    %138 = vector.broadcast %137 : f32 to vector<8x1024xf32>
    %139 = arith.mulf %136, %138 : vector<8x1024xf32>
    %140 = arith.addf %135, %139 : vector<8x1024xf32>
    %c32_i32_35 = arith.constant 32 : i32
    %141 = tpu.dynamic_rotate %132 by %c32_i32_35 dim 1 : vector<8x1024xf32>, i32 -> vector<8x1024xf32>
    %c19 = arith.constant 19 : index
    %142 = memref.load %arg4[%c19] : memref<54xf32, #tpu.memory_space<smem>>
    %143 = vector.broadcast %142 : f32 to vector<8x1024xf32>
    %144 = arith.mulf %141, %143 : vector<8x1024xf32>
    %145 = arith.addf %140, %144 : vector<8x1024xf32>
    %c31_i32_36 = arith.constant 31 : i32
    %146 = tpu.dynamic_rotate %132 by %c31_i32_36 dim 1 : vector<8x1024xf32>, i32 -> vector<8x1024xf32>
    %c20 = arith.constant 20 : index
    %147 = memref.load %arg4[%c20] : memref<54xf32, #tpu.memory_space<smem>>
    %148 = vector.broadcast %147 : f32 to vector<8x1024xf32>
    %149 = arith.mulf %146, %148 : vector<8x1024xf32>
    %150 = arith.addf %145, %149 : vector<8x1024xf32>
    %c1_i32_37 = arith.constant 1 : i32
    %151 = tpu.dynamic_rotate %132 by %c1_i32_37 dim 1 : vector<8x1024xf32>, i32 -> vector<8x1024xf32>
    %c21 = arith.constant 21 : index
    %152 = memref.load %arg4[%c21] : memref<54xf32, #tpu.memory_space<smem>>
    %153 = vector.broadcast %152 : f32 to vector<8x1024xf32>
    %154 = arith.mulf %151, %153 : vector<8x1024xf32>
    %155 = arith.addf %150, %154 : vector<8x1024xf32>
    %c1023_i32_38 = arith.constant 1023 : i32
    %156 = tpu.dynamic_rotate %132 by %c1023_i32_38 dim 1 : vector<8x1024xf32>, i32 -> vector<8x1024xf32>
    %c23 = arith.constant 23 : index
    %157 = memref.load %arg4[%c23] : memref<54xf32, #tpu.memory_space<smem>>
    %158 = vector.broadcast %157 : f32 to vector<8x1024xf32>
    %159 = arith.mulf %156, %158 : vector<8x1024xf32>
    %160 = arith.addf %155, %159 : vector<8x1024xf32>
    %c993_i32_39 = arith.constant 993 : i32
    %161 = tpu.dynamic_rotate %132 by %c993_i32_39 dim 1 : vector<8x1024xf32>, i32 -> vector<8x1024xf32>
    %c24 = arith.constant 24 : index
    %162 = memref.load %arg4[%c24] : memref<54xf32, #tpu.memory_space<smem>>
    %163 = vector.broadcast %162 : f32 to vector<8x1024xf32>
    %164 = arith.mulf %161, %163 : vector<8x1024xf32>
    %165 = arith.addf %160, %164 : vector<8x1024xf32>
    %c992_i32_40 = arith.constant 992 : i32
    %166 = tpu.dynamic_rotate %132 by %c992_i32_40 dim 1 : vector<8x1024xf32>, i32 -> vector<8x1024xf32>
    %c25 = arith.constant 25 : index
    %167 = memref.load %arg4[%c25] : memref<54xf32, #tpu.memory_space<smem>>
    %168 = vector.broadcast %167 : f32 to vector<8x1024xf32>
    %169 = arith.mulf %166, %168 : vector<8x1024xf32>
    %170 = arith.addf %165, %169 : vector<8x1024xf32>
    %c991_i32_41 = arith.constant 991 : i32
    %171 = tpu.dynamic_rotate %132 by %c991_i32_41 dim 1 : vector<8x1024xf32>, i32 -> vector<8x1024xf32>
    %c26 = arith.constant 26 : index
    %172 = memref.load %arg4[%c26] : memref<54xf32, #tpu.memory_space<smem>>
    %173 = vector.broadcast %172 : f32 to vector<8x1024xf32>
    %174 = arith.mulf %171, %173 : vector<8x1024xf32>
    %175 = arith.addf %170, %174 : vector<8x1024xf32>
    %c2_42 = arith.constant 2 : index
    %c0_43 = arith.constant 0 : index
    %c0_44 = arith.constant 0 : index
    %176 = vector.load %arg5[%c2_42, %c0_43, %c0_44] : memref<6x8x1024xf32, #tpu.memory_space<vmem>>, vector<1x8x1024xf32>
    %177 = vector.shape_cast %176 : vector<1x8x1024xf32> to vector<8x1024xf32>
    %178 = arith.addf %175, %177 : vector<8x1024xf32>
    %cst_45 = arith.constant 0.000000e+00 : f32
    %cst_46 = arith.constant 6.000000e+00 : f32
    %179 = vector.broadcast %cst_45 : f32 to vector<8x1024xf32>
    %180 = arith.maximumf %179, %178 : vector<8x1024xf32>
    %181 = vector.broadcast %cst_46 : f32 to vector<8x1024xf32>
    %182 = arith.minimumf %181, %180 : vector<8x1024xf32>
    %c0_47 = arith.constant 0 : index
    %c2048 = arith.constant 2048 : index
    %183 = vector.load %arg10[%c0_47, %c2048] : memref<8x6144xf32, #tpu.memory_space<vmem>>, vector<8x1024xf32>
    tpu.vector_store %arg10[%c0_47, %c2048], %182 {strides = array<i32>} : memref<8x6144xf32, #tpu.memory_space<vmem>>, vector<8x1024xf32>,
    %c3_48 = arith.constant 3 : index
    %184 = memref.load %arg2[%c3_48] : memref<6xf32, #tpu.memory_space<smem>>
    %185 = vector.broadcast %184 : f32 to vector<8x1024xf32>
    %186 = arith.mulf %0, %185 : vector<8x1024xf32>
    %c3_49 = arith.constant 3 : index
    %187 = memref.load %arg3[%c3_49] : memref<6xf32, #tpu.memory_space<smem>>
    %188 = vector.broadcast %187 : f32 to vector<8x1024xf32>
    %189 = arith.addf %186, %188 : vector<8x1024xf32>
    %cst_50 = arith.constant 0.000000e+00 : f32
    %cst_51 = arith.constant 6.000000e+00 : f32
    %190 = vector.broadcast %cst_50 : f32 to vector<8x1024xf32>
    %191 = arith.maximumf %190, %189 : vector<8x1024xf32>
    %192 = vector.broadcast %cst_51 : f32 to vector<8x1024xf32>
    %193 = arith.minimumf %192, %191 : vector<8x1024xf32>
    %c31 = arith.constant 31 : index
    %194 = memref.load %arg4[%c31] : memref<54xf32, #tpu.memory_space<smem>>
    %195 = vector.broadcast %194 : f32 to vector<8x1024xf32>
    %196 = arith.mulf %193, %195 : vector<8x1024xf32>
    %c33_i32_52 = arith.constant 33 : i32
    %197 = tpu.dynamic_rotate %193 by %c33_i32_52 dim 1 : vector<8x1024xf32>, i32 -> vector<8x1024xf32>
    %c27 = arith.constant 27 : index
    %198 = memref.load %arg4[%c27] : memref<54xf32, #tpu.memory_space<smem>>
    %199 = vector.broadcast %198 : f32 to vector<8x1024xf32>
    %200 = arith.mulf %197, %199 : vector<8x1024xf32>
    %201 = arith.addf %196, %200 : vector<8x1024xf32>
    %c32_i32_53 = arith.constant 32 : i32
    %202 = tpu.dynamic_rotate %193 by %c32_i32_53 dim 1 : vector<8x1024xf32>, i32 -> vector<8x1024xf32>
    %c28 = arith.constant 28 : index
    %203 = memref.load %arg4[%c28] : memref<54xf32, #tpu.memory_space<smem>>
    %204 = vector.broadcast %203 : f32 to vector<8x1024xf32>
    %205 = arith.mulf %202, %204 : vector<8x1024xf32>
    %206 = arith.addf %201, %205 : vector<8x1024xf32>
    %c31_i32_54 = arith.constant 31 : i32
    %207 = tpu.dynamic_rotate %193 by %c31_i32_54 dim 1 : vector<8x1024xf32>, i32 -> vector<8x1024xf32>
    %c29 = arith.constant 29 : index
    %208 = memref.load %arg4[%c29] : memref<54xf32, #tpu.memory_space<smem>>
    %209 = vector.broadcast %208 : f32 to vector<8x1024xf32>
    %210 = arith.mulf %207, %209 : vector<8x1024xf32>
    %211 = arith.addf %206, %210 : vector<8x1024xf32>
    %c1_i32_55 = arith.constant 1 : i32
    %212 = tpu.dynamic_rotate %193 by %c1_i32_55 dim 1 : vector<8x1024xf32>, i32 -> vector<8x1024xf32>
    %c30 = arith.constant 30 : index
    %213 = memref.load %arg4[%c30] : memref<54xf32, #tpu.memory_space<smem>>
    %214 = vector.broadcast %213 : f32 to vector<8x1024xf32>
    %215 = arith.mulf %212, %214 : vector<8x1024xf32>
    %216 = arith.addf %211, %215 : vector<8x1024xf32>
    %c1023_i32_56 = arith.constant 1023 : i32
    %217 = tpu.dynamic_rotate %193 by %c1023_i32_56 dim 1 : vector<8x1024xf32>, i32 -> vector<8x1024xf32>
    %c32 = arith.constant 32 : index
    %218 = memref.load %arg4[%c32] : memref<54xf32, #tpu.memory_space<smem>>
    %219 = vector.broadcast %218 : f32 to vector<8x1024xf32>
    %220 = arith.mulf %217, %219 : vector<8x1024xf32>
    %221 = arith.addf %216, %220 : vector<8x1024xf32>
    %c993_i32_57 = arith.constant 993 : i32
    %222 = tpu.dynamic_rotate %193 by %c993_i32_57 dim 1 : vector<8x1024xf32>, i32 -> vector<8x1024xf32>
    %c33 = arith.constant 33 : index
    %223 = memref.load %arg4[%c33] : memref<54xf32, #tpu.memory_space<smem>>
    %224 = vector.broadcast %223 : f32 to vector<8x1024xf32>
    %225 = arith.mulf %222, %224 : vector<8x1024xf32>
    %226 = arith.addf %221, %225 : vector<8x1024xf32>
    %c992_i32_58 = arith.constant 992 : i32
    %227 = tpu.dynamic_rotate %193 by %c992_i32_58 dim 1 : vector<8x1024xf32>, i32 -> vector<8x1024xf32>
    %c34 = arith.constant 34 : index
    %228 = memref.load %arg4[%c34] : memref<54xf32, #tpu.memory_space<smem>>
    %229 = vector.broadcast %228 : f32 to vector<8x1024xf32>
    %230 = arith.mulf %227, %229 : vector<8x1024xf32>
    %231 = arith.addf %226, %230 : vector<8x1024xf32>
    %c991_i32_59 = arith.constant 991 : i32
    %232 = tpu.dynamic_rotate %193 by %c991_i32_59 dim 1 : vector<8x1024xf32>, i32 -> vector<8x1024xf32>
    %c35 = arith.constant 35 : index
    %233 = memref.load %arg4[%c35] : memref<54xf32, #tpu.memory_space<smem>>
    %234 = vector.broadcast %233 : f32 to vector<8x1024xf32>
    %235 = arith.mulf %232, %234 : vector<8x1024xf32>
    %236 = arith.addf %231, %235 : vector<8x1024xf32>
    %c3_60 = arith.constant 3 : index
    %c0_61 = arith.constant 0 : index
    %c0_62 = arith.constant 0 : index
    %237 = vector.load %arg5[%c3_60, %c0_61, %c0_62] : memref<6x8x1024xf32, #tpu.memory_space<vmem>>, vector<1x8x1024xf32>
    %238 = vector.shape_cast %237 : vector<1x8x1024xf32> to vector<8x1024xf32>
    %239 = arith.addf %236, %238 : vector<8x1024xf32>
    %cst_63 = arith.constant 0.000000e+00 : f32
    %cst_64 = arith.constant 6.000000e+00 : f32
    %240 = vector.broadcast %cst_63 : f32 to vector<8x1024xf32>
    %241 = arith.maximumf %240, %239 : vector<8x1024xf32>
    %242 = vector.broadcast %cst_64 : f32 to vector<8x1024xf32>
    %243 = arith.minimumf %242, %241 : vector<8x1024xf32>
    %c0_65 = arith.constant 0 : index
    %c3072 = arith.constant 3072 : index
    %244 = vector.load %arg10[%c0_65, %c3072] : memref<8x6144xf32, #tpu.memory_space<vmem>>, vector<8x1024xf32>
    tpu.vector_store %arg10[%c0_65, %c3072], %243 {strides = array<i32>} : memref<8x6144xf32, #tpu.memory_space<vmem>>, vector<8x1024xf32>,
    %c4_66 = arith.constant 4 : index
    %245 = memref.load %arg2[%c4_66] : memref<6xf32, #tpu.memory_space<smem>>
    %246 = vector.broadcast %245 : f32 to vector<8x1024xf32>
    %247 = arith.mulf %0, %246 : vector<8x1024xf32>
    %c4_67 = arith.constant 4 : index
    %248 = memref.load %arg3[%c4_67] : memref<6xf32, #tpu.memory_space<smem>>
    %249 = vector.broadcast %248 : f32 to vector<8x1024xf32>
    %250 = arith.addf %247, %249 : vector<8x1024xf32>
    %cst_68 = arith.constant 0.000000e+00 : f32
    %cst_69 = arith.constant 6.000000e+00 : f32
    %251 = vector.broadcast %cst_68 : f32 to vector<8x1024xf32>
    %252 = arith.maximumf %251, %250 : vector<8x1024xf32>
    %253 = vector.broadcast %cst_69 : f32 to vector<8x1024xf32>
    %254 = arith.minimumf %253, %252 : vector<8x1024xf32>
    %c40 = arith.constant 40 : index
    %255 = memref.load %arg4[%c40] : memref<54xf32, #tpu.memory_space<smem>>
    %256 = vector.broadcast %255 : f32 to vector<8x1024xf32>
    %257 = arith.mulf %254, %256 : vector<8x1024xf32>
    %c33_i32_70 = arith.constant 33 : i32
    %258 = tpu.dynamic_rotate %254 by %c33_i32_70 dim 1 : vector<8x1024xf32>, i32 -> vector<8x1024xf32>
    %c36 = arith.constant 36 : index
    %259 = memref.load %arg4[%c36] : memref<54xf32, #tpu.memory_space<smem>>
    %260 = vector.broadcast %259 : f32 to vector<8x1024xf32>
    %261 = arith.mulf %258, %260 : vector<8x1024xf32>
    %262 = arith.addf %257, %261 : vector<8x1024xf32>
    %c32_i32_71 = arith.constant 32 : i32
    %263 = tpu.dynamic_rotate %254 by %c32_i32_71 dim 1 : vector<8x1024xf32>, i32 -> vector<8x1024xf32>
    %c37 = arith.constant 37 : index
    %264 = memref.load %arg4[%c37] : memref<54xf32, #tpu.memory_space<smem>>
    %265 = vector.broadcast %264 : f32 to vector<8x1024xf32>
    %266 = arith.mulf %263, %265 : vector<8x1024xf32>
    %267 = arith.addf %262, %266 : vector<8x1024xf32>
    %c31_i32_72 = arith.constant 31 : i32
    %268 = tpu.dynamic_rotate %254 by %c31_i32_72 dim 1 : vector<8x1024xf32>, i32 -> vector<8x1024xf32>
    %c38 = arith.constant 38 : index
    %269 = memref.load %arg4[%c38] : memref<54xf32, #tpu.memory_space<smem>>
    %270 = vector.broadcast %269 : f32 to vector<8x1024xf32>
    %271 = arith.mulf %268, %270 : vector<8x1024xf32>
    %272 = arith.addf %267, %271 : vector<8x1024xf32>
    %c1_i32_73 = arith.constant 1 : i32
    %273 = tpu.dynamic_rotate %254 by %c1_i32_73 dim 1 : vector<8x1024xf32>, i32 -> vector<8x1024xf32>
    %c39 = arith.constant 39 : index
    %274 = memref.load %arg4[%c39] : memref<54xf32, #tpu.memory_space<smem>>
    %275 = vector.broadcast %274 : f32 to vector<8x1024xf32>
    %276 = arith.mulf %273, %275 : vector<8x1024xf32>
    %277 = arith.addf %272, %276 : vector<8x1024xf32>
    %c1023_i32_74 = arith.constant 1023 : i32
    %278 = tpu.dynamic_rotate %254 by %c1023_i32_74 dim 1 : vector<8x1024xf32>, i32 -> vector<8x1024xf32>
    %c41 = arith.constant 41 : index
    %279 = memref.load %arg4[%c41] : memref<54xf32, #tpu.memory_space<smem>>
    %280 = vector.broadcast %279 : f32 to vector<8x1024xf32>
    %281 = arith.mulf %278, %280 : vector<8x1024xf32>
    %282 = arith.addf %277, %281 : vector<8x1024xf32>
    %c993_i32_75 = arith.constant 993 : i32
    %283 = tpu.dynamic_rotate %254 by %c993_i32_75 dim 1 : vector<8x1024xf32>, i32 -> vector<8x1024xf32>
    %c42 = arith.constant 42 : index
    %284 = memref.load %arg4[%c42] : memref<54xf32, #tpu.memory_space<smem>>
    %285 = vector.broadcast %284 : f32 to vector<8x1024xf32>
    %286 = arith.mulf %283, %285 : vector<8x1024xf32>
    %287 = arith.addf %282, %286 : vector<8x1024xf32>
    %c992_i32_76 = arith.constant 992 : i32
    %288 = tpu.dynamic_rotate %254 by %c992_i32_76 dim 1 : vector<8x1024xf32>, i32 -> vector<8x1024xf32>
    %c43 = arith.constant 43 : index
    %289 = memref.load %arg4[%c43] : memref<54xf32, #tpu.memory_space<smem>>
    %290 = vector.broadcast %289 : f32 to vector<8x1024xf32>
    %291 = arith.mulf %288, %290 : vector<8x1024xf32>
    %292 = arith.addf %287, %291 : vector<8x1024xf32>
    %c991_i32_77 = arith.constant 991 : i32
    %293 = tpu.dynamic_rotate %254 by %c991_i32_77 dim 1 : vector<8x1024xf32>, i32 -> vector<8x1024xf32>
    %c44 = arith.constant 44 : index
    %294 = memref.load %arg4[%c44] : memref<54xf32, #tpu.memory_space<smem>>
    %295 = vector.broadcast %294 : f32 to vector<8x1024xf32>
    %296 = arith.mulf %293, %295 : vector<8x1024xf32>
    %297 = arith.addf %292, %296 : vector<8x1024xf32>
    %c4_78 = arith.constant 4 : index
    %c0_79 = arith.constant 0 : index
    %c0_80 = arith.constant 0 : index
    %298 = vector.load %arg5[%c4_78, %c0_79, %c0_80] : memref<6x8x1024xf32, #tpu.memory_space<vmem>>, vector<1x8x1024xf32>
    %299 = vector.shape_cast %298 : vector<1x8x1024xf32> to vector<8x1024xf32>
    %300 = arith.addf %297, %299 : vector<8x1024xf32>
    %cst_81 = arith.constant 0.000000e+00 : f32
    %cst_82 = arith.constant 6.000000e+00 : f32
    %301 = vector.broadcast %cst_81 : f32 to vector<8x1024xf32>
    %302 = arith.maximumf %301, %300 : vector<8x1024xf32>
    %303 = vector.broadcast %cst_82 : f32 to vector<8x1024xf32>
    %304 = arith.minimumf %303, %302 : vector<8x1024xf32>
    %c0_83 = arith.constant 0 : index
    %c4096 = arith.constant 4096 : index
    %305 = vector.load %arg10[%c0_83, %c4096] : memref<8x6144xf32, #tpu.memory_space<vmem>>, vector<8x1024xf32>
    tpu.vector_store %arg10[%c0_83, %c4096], %304 {strides = array<i32>} : memref<8x6144xf32, #tpu.memory_space<vmem>>, vector<8x1024xf32>,
    %c5_84 = arith.constant 5 : index
    %306 = memref.load %arg2[%c5_84] : memref<6xf32, #tpu.memory_space<smem>>
    %307 = vector.broadcast %306 : f32 to vector<8x1024xf32>
    %308 = arith.mulf %0, %307 : vector<8x1024xf32>
    %c5_85 = arith.constant 5 : index
    %309 = memref.load %arg3[%c5_85] : memref<6xf32, #tpu.memory_space<smem>>
    %310 = vector.broadcast %309 : f32 to vector<8x1024xf32>
    %311 = arith.addf %308, %310 : vector<8x1024xf32>
    %cst_86 = arith.constant 0.000000e+00 : f32
    %cst_87 = arith.constant 6.000000e+00 : f32
    %312 = vector.broadcast %cst_86 : f32 to vector<8x1024xf32>
    %313 = arith.maximumf %312, %311 : vector<8x1024xf32>
    %314 = vector.broadcast %cst_87 : f32 to vector<8x1024xf32>
    %315 = arith.minimumf %314, %313 : vector<8x1024xf32>
    %c49 = arith.constant 49 : index
    %316 = memref.load %arg4[%c49] : memref<54xf32, #tpu.memory_space<smem>>
    %317 = vector.broadcast %316 : f32 to vector<8x1024xf32>
    %318 = arith.mulf %315, %317 : vector<8x1024xf32>
    %c33_i32_88 = arith.constant 33 : i32
    %319 = tpu.dynamic_rotate %315 by %c33_i32_88 dim 1 : vector<8x1024xf32>, i32 -> vector<8x1024xf32>
    %c45 = arith.constant 45 : index
    %320 = memref.load %arg4[%c45] : memref<54xf32, #tpu.memory_space<smem>>
    %321 = vector.broadcast %320 : f32 to vector<8x1024xf32>
    %322 = arith.mulf %319, %321 : vector<8x1024xf32>
    %323 = arith.addf %318, %322 : vector<8x1024xf32>
    %c32_i32_89 = arith.constant 32 : i32
    %324 = tpu.dynamic_rotate %315 by %c32_i32_89 dim 1 : vector<8x1024xf32>, i32 -> vector<8x1024xf32>
    %c46 = arith.constant 46 : index
    %325 = memref.load %arg4[%c46] : memref<54xf32, #tpu.memory_space<smem>>
    %326 = vector.broadcast %325 : f32 to vector<8x1024xf32>
    %327 = arith.mulf %324, %326 : vector<8x1024xf32>
    %328 = arith.addf %323, %327 : vector<8x1024xf32>
    %c31_i32_90 = arith.constant 31 : i32
    %329 = tpu.dynamic_rotate %315 by %c31_i32_90 dim 1 : vector<8x1024xf32>, i32 -> vector<8x1024xf32>
    %c47 = arith.constant 47 : index
    %330 = memref.load %arg4[%c47] : memref<54xf32, #tpu.memory_space<smem>>
    %331 = vector.broadcast %330 : f32 to vector<8x1024xf32>
    %332 = arith.mulf %329, %331 : vector<8x1024xf32>
    %333 = arith.addf %328, %332 : vector<8x1024xf32>
    %c1_i32_91 = arith.constant 1 : i32
    %334 = tpu.dynamic_rotate %315 by %c1_i32_91 dim 1 : vector<8x1024xf32>, i32 -> vector<8x1024xf32>
    %c48 = arith.constant 48 : index
    %335 = memref.load %arg4[%c48] : memref<54xf32, #tpu.memory_space<smem>>
    %336 = vector.broadcast %335 : f32 to vector<8x1024xf32>
    %337 = arith.mulf %334, %336 : vector<8x1024xf32>
    %338 = arith.addf %333, %337 : vector<8x1024xf32>
    %c1023_i32_92 = arith.constant 1023 : i32
    %339 = tpu.dynamic_rotate %315 by %c1023_i32_92 dim 1 : vector<8x1024xf32>, i32 -> vector<8x1024xf32>
    %c50 = arith.constant 50 : index
    %340 = memref.load %arg4[%c50] : memref<54xf32, #tpu.memory_space<smem>>
    %341 = vector.broadcast %340 : f32 to vector<8x1024xf32>
    %342 = arith.mulf %339, %341 : vector<8x1024xf32>
    %343 = arith.addf %338, %342 : vector<8x1024xf32>
    %c993_i32_93 = arith.constant 993 : i32
    %344 = tpu.dynamic_rotate %315 by %c993_i32_93 dim 1 : vector<8x1024xf32>, i32 -> vector<8x1024xf32>
    %c51 = arith.constant 51 : index
    %345 = memref.load %arg4[%c51] : memref<54xf32, #tpu.memory_space<smem>>
    %346 = vector.broadcast %345 : f32 to vector<8x1024xf32>
    %347 = arith.mulf %344, %346 : vector<8x1024xf32>
    %348 = arith.addf %343, %347 : vector<8x1024xf32>
    %c992_i32_94 = arith.constant 992 : i32
    %349 = tpu.dynamic_rotate %315 by %c992_i32_94 dim 1 : vector<8x1024xf32>, i32 -> vector<8x1024xf32>
    %c52 = arith.constant 52 : index
    %350 = memref.load %arg4[%c52] : memref<54xf32, #tpu.memory_space<smem>>
    %351 = vector.broadcast %350 : f32 to vector<8x1024xf32>
    %352 = arith.mulf %349, %351 : vector<8x1024xf32>
    %353 = arith.addf %348, %352 : vector<8x1024xf32>
    %c991_i32_95 = arith.constant 991 : i32
    %354 = tpu.dynamic_rotate %315 by %c991_i32_95 dim 1 : vector<8x1024xf32>, i32 -> vector<8x1024xf32>
    %c53 = arith.constant 53 : index
    %355 = memref.load %arg4[%c53] : memref<54xf32, #tpu.memory_space<smem>>
    %356 = vector.broadcast %355 : f32 to vector<8x1024xf32>
    %357 = arith.mulf %354, %356 : vector<8x1024xf32>
    %358 = arith.addf %353, %357 : vector<8x1024xf32>
    %c5_96 = arith.constant 5 : index
    %c0_97 = arith.constant 0 : index
    %c0_98 = arith.constant 0 : index
    %359 = vector.load %arg5[%c5_96, %c0_97, %c0_98] : memref<6x8x1024xf32, #tpu.memory_space<vmem>>, vector<1x8x1024xf32>
    %360 = vector.shape_cast %359 : vector<1x8x1024xf32> to vector<8x1024xf32>
    %361 = arith.addf %358, %360 : vector<8x1024xf32>
    %cst_99 = arith.constant 0.000000e+00 : f32
    %cst_100 = arith.constant 6.000000e+00 : f32
    %362 = vector.broadcast %cst_99 : f32 to vector<8x1024xf32>
    %363 = arith.maximumf %362, %361 : vector<8x1024xf32>
    %364 = vector.broadcast %cst_100 : f32 to vector<8x1024xf32>
    %365 = arith.minimumf %364, %363 : vector<8x1024xf32>
    %c0_101 = arith.constant 0 : index
    %c5120 = arith.constant 5120 : index
    %366 = vector.load %arg10[%c0_101, %c5120] : memref<8x6144xf32, #tpu.memory_space<vmem>>, vector<8x1024xf32>
    tpu.vector_store %arg10[%c0_101, %c5120], %365 {strides = array<i32>} : memref<8x6144xf32, #tpu.memory_space<vmem>>, vector<8x1024xf32>,
    %c0_102 = arith.constant 0 : index
    %c0_103 = arith.constant 0 : index
    %367 = vector.load %arg1[%c0_102, %c0_103] : memref<8x1024xf32, #tpu.memory_space<vmem>>, vector<8x1024xf32>
    %c0_104 = arith.constant 0 : index
    %c0_105 = arith.constant 0 : index
    %368 = vector.load %arg7[%c0_104, %c0_105] : memref<1024x10xf32, #tpu.memory_space<vmem>>, vector<1024x10xf32>
    %cst_106 = arith.constant dense<0.000000e+00> : vector<8x10xf32>
    %369 = tpu.matmul %367, %368, %cst_106 {dimension_numbers = #tpu.dot_dimension_numbers<[1], [0], [0], [1], [0, 0, 1, 1], [], []>} : vector<8x1024xf32>, vector<1024x10xf32>, vector<8x10xf32> -> vector<8x10xf32>
    %c0_107 = arith.constant 0 : index
    %c0_108 = arith.constant 0 : index
    %370 = vector.load %arg8[%c0_107, %c0_108] : memref<1x10xf32, #tpu.memory_space<vmem>>, vector<1x10xf32>
    %371 = vector.broadcast %370 : vector<1x10xf32> to vector<8x10xf32>
    %372 = arith.addf %369, %371 : vector<8x10xf32>
    %c0_109 = arith.constant 0 : index
    %c0_110 = arith.constant 0 : index
    %373 = vector.load %arg10[%c0_109, %c0_110] : memref<8x6144xf32, #tpu.memory_space<vmem>>, vector<8x6144xf32>
    %c0_111 = arith.constant 0 : index
    %c0_112 = arith.constant 0 : index
    %374 = vector.load %arg6[%c0_111, %c0_112] : memref<6144x10xf32, #tpu.memory_space<vmem>>, vector<6144x10xf32>
    %cst_113 = arith.constant dense<0.000000e+00> : vector<8x10xf32>
    %375 = tpu.matmul %373, %374, %cst_113 {dimension_numbers = #tpu.dot_dimension_numbers<[1], [0], [0], [1], [0, 0, 1, 1], [], []>} : vector<8x6144xf32>, vector<6144x10xf32>, vector<8x10xf32> -> vector<8x10xf32>
    %376 = arith.addf %372, %375 : vector<8x10xf32>
    %c0_114 = arith.constant 0 : index
    %c0_115 = arith.constant 0 : index
    %377 = vector.load %arg9[%c0_114, %c0_115] : memref<8x10xf32, #tpu.memory_space<vmem>>, vector<8x10xf32>
    tpu.vector_store %arg9[%c0_114, %c0_115], %376 {strides = array<i32>} : memref<8x10xf32, #tpu.memory_space<vmem>>, vector<8x10xf32>,
    return
  }
  func.func @transform_0(%arg0: i32) -> (i32, i32) {
    %c0_i32 = arith.constant 0 : i32
    %c0_i32_0 = arith.constant 0 : i32
    return %arg0, %c0_i32 : i32, i32
  }
  func.func @transform_1(%arg0: i32) -> i32 {
    %c0_i32 = arith.constant 0 : i32
    %c0_i32_0 = arith.constant 0 : i32
    return %c0_i32 : i32
  }
  func.func @transform_2(%arg0: i32) -> i32 {
    %c0_i32 = arith.constant 0 : i32
    %c0_i32_0 = arith.constant 0 : i32
    return %c0_i32 : i32
  }
  func.func @transform_3(%arg0: i32) -> i32 {
    %c0_i32 = arith.constant 0 : i32
    %c0_i32_0 = arith.constant 0 : i32
    return %c0_i32 : i32
  }
  func.func @transform_4(%arg0: i32) -> (i32, i32, i32) {
    %c0_i32 = arith.constant 0 : i32
    %c0_i32_0 = arith.constant 0 : i32
    %c0_i32_1 = arith.constant 0 : i32
    %c0_i32_2 = arith.constant 0 : i32
    return %c0_i32, %c0_i32_0, %c0_i32_1 : i32, i32, i32
  }
  func.func @transform_5(%arg0: i32) -> (i32, i32) {
    %c0_i32 = arith.constant 0 : i32
    %c0_i32_0 = arith.constant 0 : i32
    %c0_i32_1 = arith.constant 0 : i32
    return %c0_i32, %c0_i32_0 : i32, i32
  }
  func.func @transform_6(%arg0: i32) -> (i32, i32) {
    %c0_i32 = arith.constant 0 : i32
    %c0_i32_0 = arith.constant 0 : i32
    %c0_i32_1 = arith.constant 0 : i32
    return %c0_i32, %c0_i32_0 : i32, i32
  }
  func.func @transform_7(%arg0: i32) -> (i32, i32) {
    %c0_i32 = arith.constant 0 : i32
    %c0_i32_0 = arith.constant 0 : i32
    %c0_i32_1 = arith.constant 0 : i32
    return %c0_i32, %c0_i32_0 : i32, i32
  }
  func.func @transform_8(%arg0: i32) -> (i32, i32) {
    %c0_i32 = arith.constant 0 : i32
    %c0_i32_0 = arith.constant 0 : i32
    return %arg0, %c0_i32 : i32, i32
  }
}

</mosaic_0001>

<llo_original>
// kernel: simple_mobilenet_v2.1
$region0: #{simple_mobilenet_v2.1}
  #allocation0 [shape = 'u32[]', space=smem, size = 0x4, offset = 0x4, fixed_abs, tag = 'smem constant byte address 0x4 - core index']
  #allocation1 [shape = 'u32[144,128]{1,0:T(1,128)}', space=vmem, size = 0x12000, scoped, tag = 'internal scratch']
  #allocation2 [shape = 'f32[8,6144]{1,0:T(8,128)}', space=vmem, size = 0x30000, scoped, tag = 'scratch operand']
  %s0 = inlined_call_operand.vmem [shape: f32[8,1024], index: 0, kind: input, shape index: {}]
  %s1 = inlined_call_operand.vmem [shape: f32[6], index: 1, kind: input, shape index: {}]
  %s2 = inlined_call_operand.vmem [shape: f32[6], index: 2, kind: input, shape index: {}]
  %s3 = inlined_call_operand.vmem [shape: f32[54], index: 3, kind: input, shape index: {}]
  %s4 = inlined_call_operand.vmem [shape: f32[6,8,1024], index: 4, kind: input, shape index: {}]
  %s5 = inlined_call_operand.vmem [shape: f32[6144,10], index: 5, kind: input, shape index: {}]
  %s6 = inlined_call_operand.vmem [shape: f32[1024,10], index: 6, kind: input, shape index: {}]
  %s7 = inlined_call_operand.vmem [shape: f32[1,10], index: 7, kind: input, shape index: {}]
  %s8 = inlined_call_operand.vmem [shape: f32[8,10], index: 8, kind: output, shape index: {}]
  %s9 = sld [smem:[#allocation0]]
  $region54: #{simple_mobilenet_v2.1} parent=0
    _
  %s11 = ssub.s32 1, %s9
  %s12 = scalar_select 0, %s11, %s9
  $region1: #{simple_mobilenet_v2.1} parent=0
    #allocation3 [shape = 'u8[512]{0}', space=smem, size = 0x200, scoped, tag = 'input window, operand 1, single buffered']
    #allocation4 [shape = 's32[1]{0}', space=sflag, size = 0x4, scoped, tag = 'scoped memory for simple_mobilenet_v2.1']
    #allocation5 [shape = 'u8[512]{0}', space=smem, size = 0x200, scoped, tag = 'input window, operand 2, single buffered']
    #allocation6 [shape = 's32[1]{0}', space=sflag, size = 0x4, scoped, tag = 'scoped memory for simple_mobilenet_v2.1']
    #allocation7 [shape = 'u8[512]{0}', space=smem, size = 0x200, scoped, tag = 'input window, operand 3, single buffered']
    %13 = vsyncpa [#allocation4], 0
    %14 = vsyncpa [#allocation6], 0
    // Predicated region
    $region2: #{simple_mobilenet_v2.1} parent=1 // pred_check
      _
    $region3: #{simple_mobilenet_v2.1} parent=1 // pred_check_branch
      %16 = sbr.rel (0) target = $region5
    $region4: #{simple_mobilenet_v2.1} parent=1 // pred_region
      _
    $region5: #{simple_mobilenet_v2.1} parent=1 // pred_fallthru
      _
    // Predicated region
    $region6: #{simple_mobilenet_v2.1} parent=1 // pred_check
      _
    $region7: #{simple_mobilenet_v2.1} parent=1 // pred_check_branch
      %18 = sbr.rel (0) target = $region9
    $region8: #{simple_mobilenet_v2.1} parent=1 // pred_region
      %s20 = ssub.s32 16, 16
      %21 = vsyncadd [#allocation4], %s20
      %s23 = sshll.u32 %s1, 4
      %s24 = int_to_ptr.vmem [resolvable:$true] %s23
      %26 = dma.vmem_to_smem %s24, 16, [#allocation3], [#allocation4]
    $region9: #{simple_mobilenet_v2.1} parent=1 // pred_fallthru
      _
    // Predicated region
    $region10: #{simple_mobilenet_v2.1} parent=1 // pred_check
      _
    $region11: #{simple_mobilenet_v2.1} parent=1 // pred_check_branch
      %28 = sbr.rel (0) target = $region13
    $region12: #{simple_mobilenet_v2.1} parent=1 // pred_region
      %s30 = ssub.s32 16, 16
      %31 = vsyncadd [#allocation6], %s30
      %s33 = sshll.u32 %s2, 4
      %s34 = int_to_ptr.vmem [resolvable:$true] %s33
      %36 = dma.vmem_to_smem %s34, 16, [#allocation5], [#allocation6]
    $region13: #{simple_mobilenet_v2.1} parent=1 // pred_fallthru
      _
    // Predicated region
    $region14: #{simple_mobilenet_v2.1} parent=1 // pred_check
      _
    $region15: #{simple_mobilenet_v2.1} parent=1 // pred_check_branch
      %38 = sbr.rel (0) target = $region17
    $region16: #{simple_mobilenet_v2.1} parent=1 // pred_region
      %s40 = ssub.s32 16, 16
      %41 = vsyncadd [#allocation6], %s40
      %s43 = sshll.u32 %s3, 4
      %s44 = int_to_ptr.vmem [resolvable:$true] %s43
      %46 = dma.vmem_to_smem %s44, 16, [#allocation7], [#allocation6]
    $region17: #{simple_mobilenet_v2.1} parent=1 // pred_fallthru
      _
    // Predicated region
    $region18: #{simple_mobilenet_v2.1} parent=1 // pred_check
      _
    $region19: #{simple_mobilenet_v2.1} parent=1 // pred_check_branch
      %48 = sbr.rel (0) target = $region21
    $region20: #{simple_mobilenet_v2.1} parent=1 // pred_region
      _
    $region21: #{simple_mobilenet_v2.1} parent=1 // pred_fallthru
      _
    // Predicated region
    $region22: #{simple_mobilenet_v2.1} parent=1 // pred_check
      _
    $region23: #{simple_mobilenet_v2.1} parent=1 // pred_check_branch
      %50 = sbr.rel (0) target = $region25
    $region24: #{simple_mobilenet_v2.1} parent=1 // pred_region
      _
    $region25: #{simple_mobilenet_v2.1} parent=1 // pred_fallthru
      _
    // Predicated region
    $region26: #{simple_mobilenet_v2.1} parent=1 // pred_check
      _
    $region27: #{simple_mobilenet_v2.1} parent=1 // pred_check_branch
      %52 = sbr.rel (0) target = $region29
    $region28: #{simple_mobilenet_v2.1} parent=1 // pred_region
      _
    $region29: #{simple_mobilenet_v2.1} parent=1 // pred_fallthru
      _
    // Predicated region
    $region30: #{simple_mobilenet_v2.1} parent=1 // pred_check
      _
    $region31: #{simple_mobilenet_v2.1} parent=1 // pred_check_branch
      %54 = sbr.rel (0) target = $region33
    $region32: #{simple_mobilenet_v2.1} parent=1 // pred_region
      _
    $region33: #{simple_mobilenet_v2.1} parent=1 // pred_fallthru
      _
    // Predicated region
    $region34: #{simple_mobilenet_v2.1} parent=1 // pred_check
      _
    $region35: #{simple_mobilenet_v2.1} parent=1 // pred_check_branch
      %56 = sbr.rel (0) target = $region37
    $region36: #{simple_mobilenet_v2.1} parent=1 // pred_region
      %57 = dma.done [#allocation4], 16
    $region37: #{simple_mobilenet_v2.1} parent=1 // pred_fallthru
      _
    // Predicated region
    $region38: #{simple_mobilenet_v2.1} parent=1 // pred_check
      _
    $region39: #{simple_mobilenet_v2.1} parent=1 // pred_check_branch
      %59 = sbr.rel (0) target = $region41
    $region40: #{simple_mobilenet_v2.1} parent=1 // pred_region
      %60 = dma.done [#allocation6], 16
    $region41: #{simple_mobilenet_v2.1} parent=1 // pred_fallthru
      _
    // Predicated region
    $region42: #{simple_mobilenet_v2.1} parent=1 // pred_check
      _
    $region43: #{simple_mobilenet_v2.1} parent=1 // pred_check_branch
      %62 = sbr.rel (0) target = $region45
    $region44: #{simple_mobilenet_v2.1} parent=1 // pred_region
      %63 = dma.done [#allocation6], 16
    $region45: #{simple_mobilenet_v2.1} parent=1 // pred_fallthru
      _
    %64 = sfence
    %v65 = vld [vmem:[%s0] sm:$0xff]
    %v66 = vld [vmem:[%s0 + $0x8] sm:$0xff]
    %v67 = vld [vmem:[%s0 + $0x10] sm:$0xff]
    %v68 = vld [vmem:[%s0 + $0x18] sm:$0xff]
    %v69 = vld [vmem:[%s0 + $0x20] sm:$0xff]
    %v70 = vld [vmem:[%s0 + $0x28] sm:$0xff]
    %v71 = vld [vmem:[%s0 + $0x30] sm:$0xff]
    %v72 = vld [vmem:[%s0 + $0x38] sm:$0xff]
    %s73 = sld [smem:[#allocation3]]
    %v74 = vstv %s73
    %v75 = vmul.f32 %v65, %v74
    %v76 = vmul.f32 %v66, %v74
    %v77 = vmul.f32 %v67, %v74
    %v78 = vmul.f32 %v68, %v74
    %v79 = vmul.f32 %v69, %v74
    %v80 = vmul.f32 %v70, %v74
    %v81 = vmul.f32 %v71, %v74
    %v82 = vmul.f32 %v72, %v74
    %s83 = sld [smem:[#allocation5]]
    %v84 = vstv %s83
    %v85 = vadd.f32 %v75, %v84
    %v86 = vadd.f32 %v76, %v84
    %v87 = vadd.f32 %v77, %v84
    %v88 = vadd.f32 %v78, %v84
    %v89 = vadd.f32 %v79, %v84
    %v90 = vadd.f32 %v80, %v84
    %v91 = vadd.f32 %v81, %v84
    %v92 = vadd.f32 %v82, %v84
    %v93 = vmax.f32 %v85, 0.0
    %v94 = vmax.f32 %v86, 0.0
    %v95 = vmax.f32 %v87, 0.0
    %v96 = vmax.f32 %v88, 0.0
    %v97 = vmax.f32 %v89, 0.0
    %v98 = vmax.f32 %v90, 0.0
    %v99 = vmax.f32 %v91, 0.0
    %v100 = vmax.f32 %v92, 0.0
    %v101 = vmin.f32 %v93, 6.0
    %v102 = vmin.f32 %v94, 6.0
    %v103 = vmin.f32 %v95, 6.0
    %v104 = vmin.f32 %v96, 6.0
    %v105 = vmin.f32 %v97, 6.0
    %v106 = vmin.f32 %v98, 6.0
    %v107 = vmin.f32 %v99, 6.0
    %v108 = vmin.f32 %v100, 6.0
    %s109 = sld [smem:[#allocation7 + $0x4]]
    %v110 = vstv %s109
    %v111 = vmul.f32 %v101, %v110
    %v112 = vmul.f32 %v102, %v110
    %v113 = vmul.f32 %v103, %v110
    %v114 = vmul.f32 %v104, %v110
    %v115 = vmul.f32 %v105, %v110
    %v116 = vmul.f32 %v106, %v110
    %v117 = vmul.f32 %v107, %v110
    %v118 = vmul.f32 %v108, %v110
    %119 = vrot.lane.b32.xlu0 %v101, 33
    %v120 = vpop.permute.xlu0 %119
    %121 = vrot.lane.b32.xlu0 %v102, 33
    %v122 = vpop.permute.xlu0 %121
    %123 = vrot.lane.b32.xlu0 %v103, 33
    %v124 = vpop.permute.xlu0 %123
    %125 = vrot.lane.b32.xlu0 %v104, 33
    %v126 = vpop.permute.xlu0 %125
    %127 = vrot.lane.b32.xlu0 %v105, 33
    %v128 = vpop.permute.xlu0 %127
    %129 = vrot.lane.b32.xlu0 %v106, 33
    %v130 = vpop.permute.xlu0 %129
    %131 = vrot.lane.b32.xlu0 %v107, 33
    %v132 = vpop.permute.xlu0 %131
    %133 = vrot.lane.b32.xlu0 %v108, 33
    %v134 = vpop.permute.xlu0 %133
    %v135 = vlaneseq
    %v136 = vand.u32 %v135, 127
    %vm137 = vcmp.lt.s32.totalorder %v136, 33
    %v138 = vsel %vm137, %v132, %v134
    %v139 = vsel %vm137, %v130, %v132
    %v140 = vsel %vm137, %v128, %v130
    %v141 = vsel %vm137, %v126, %v128
    %v142 = vsel %vm137, %v124, %v126
    %v143 = vsel %vm137, %v122, %v124
    %v144 = vsel %vm137, %v120, %v122
    %v145 = vsel %vm137, %v134, %v120
    %s146 = sld [smem:[#allocation7]]
    %v147 = vstv %s146
    %v148 = vmul.f32 %v145, %v147
    %v149 = vmul.f32 %v144, %v147
    %v150 = vmul.f32 %v143, %v147
    %v151 = vmul.f32 %v142, %v147
    %v152 = vmul.f32 %v141, %v147
    %v153 = vmul.f32 %v140, %v147
    %v154 = vmul.f32 %v139, %v147
    %v155 = vmul.f32 %v138, %v147
    %v156 = vadd.f32 %v111, %v148
    %v157 = vadd.f32 %v112, %v149
    %v158 = vadd.f32 %v113, %v150
    %v159 = vadd.f32 %v114, %v151
    %v160 = vadd.f32 %v115, %v152
    %v161 = vadd.f32 %v116, %v153
    %v162 = vadd.f32 %v117, %v154
    %v163 = vadd.f32 %v118, %v155
    %164 = vrot.lane.b32.xlu0 %v101, 32
    %v165 = vpop.permute.xlu0 %164
    %166 = vrot.lane.b32.xlu0 %v102, 32
    %v167 = vpop.permute.xlu0 %166
    %168 = vrot.lane.b32.xlu0 %v103, 32
    %v169 = vpop.permute.xlu0 %168
    %170 = vrot.lane.b32.xlu0 %v104, 32
    %v171 = vpop.permute.xlu0 %170
    %172 = vrot.lane.b32.xlu0 %v105, 32
    %v173 = vpop.permute.xlu0 %172
    %174 = vrot.lane.b32.xlu0 %v106, 32
    %v175 = vpop.permute.xlu0 %174
    %176 = vrot.lane.b32.xlu0 %v107, 32
    %v177 = vpop.permute.xlu0 %176
    %178 = vrot.lane.b32.xlu0 %v108, 32
    %v179 = vpop.permute.xlu0 %178
    %vm180 = vcmp.lt.s32.totalorder %v136, 32
    %v181 = vsel %vm180, %v177, %v179
    %v182 = vsel %vm180, %v175, %v177
    %v183 = vsel %vm180, %v173, %v175
    %v184 = vsel %vm180, %v171, %v173
    %v185 = vsel %vm180, %v169, %v171
    %v186 = vsel %vm180, %v167, %v169
    %v187 = vsel %vm180, %v165, %v167
    %v188 = vsel %vm180, %v179, %v165
    %s189 = sld [smem:[#allocation7 + $0x1]]
    %v190 = vstv %s189
    %v191 = vmul.f32 %v188, %v190
    %v192 = vmul.f32 %v187, %v190
    %v193 = vmul.f32 %v186, %v190
    %v194 = vmul.f32 %v185, %v190
    %v195 = vmul.f32 %v184, %v190
    %v196 = vmul.f32 %v183, %v190
    %v197 = vmul.f32 %v182, %v190
    %v198 = vmul.f32 %v181, %v190
    %v199 = vadd.f32 %v156, %v191
    %v200 = vadd.f32 %v157, %v192
    %v201 = vadd.f32 %v158, %v193
    %v202 = vadd.f32 %v159, %v194
    %v203 = vadd.f32 %v160, %v195
    %v204 = vadd.f32 %v161, %v196
    %v205 = vadd.f32 %v162, %v197
    %v206 = vadd.f32 %v163, %v198
    %207 = vrot.lane.b32.xlu0 %v101, 31
    %v208 = vpop.permute.xlu0 %207
    %209 = vrot.lane.b32.xlu0 %v102, 31
    %v210 = vpop.permute.xlu0 %209
    %211 = vrot.lane.b32.xlu0 %v103, 31
    %v212 = vpop.permute.xlu0 %211
    %213 = vrot.lane.b32.xlu0 %v104, 31
    %v214 = vpop.permute.xlu0 %213
    %215 = vrot.lane.b32.xlu0 %v105, 31
    %v216 = vpop.permute.xlu0 %215
    %217 = vrot.lane.b32.xlu0 %v106, 31
    %v218 = vpop.permute.xlu0 %217
    %219 = vrot.lane.b32.xlu0 %v107, 31
    %v220 = vpop.permute.xlu0 %219
    %221 = vrot.lane.b32.xlu0 %v108, 31
    %v222 = vpop.permute.xlu0 %221
    %vm223 = vcmp.lt.s32.totalorder %v136, 31
    %v224 = vsel %vm223, %v220, %v222
    %v225 = vsel %vm223, %v218, %v220
    %v226 = vsel %vm223, %v216, %v218
    %v227 = vsel %vm223, %v214, %v216
    %v228 = vsel %vm223, %v212, %v214
    %v229 = vsel %vm223, %v210, %v212
    %v230 = vsel %vm223, %v208, %v210
    %v231 = vsel %vm223, %v222, %v208
    %s232 = sld [smem:[#allocation7 + $0x2]]
    %v233 = vstv %s232
    %v234 = vmul.f32 %v231, %v233
    %v235 = vmul.f32 %v230, %v233
    %v236 = vmul.f32 %v229, %v233
    %v237 = vmul.f32 %v228, %v233
    %v238 = vmul.f32 %v227, %v233
    %v239 = vmul.f32 %v226, %v233
    %v240 = vmul.f32 %v225, %v233
    %v241 = vmul.f32 %v224, %v233
    %v242 = vadd.f32 %v199, %v234
    %v243 = vadd.f32 %v200, %v235
    %v244 = vadd.f32 %v201, %v236
    %v245 = vadd.f32 %v202, %v237
    %v246 = vadd.f32 %v203, %v238
    %v247 = vadd.f32 %v204, %v239
    %v248 = vadd.f32 %v205, %v240
    %v249 = vadd.f32 %v206, %v241
    %250 = vrot.lane.b32.xlu0 %v101, 1
    %v251 = vpop.permute.xlu0 %250
    %252 = vrot.lane.b32.xlu0 %v102, 1
    %v253 = vpop.permute.xlu0 %252
    %254 = vrot.lane.b32.xlu0 %v103, 1
    %v255 = vpop.permute.xlu0 %254
    %256 = vrot.lane.b32.xlu0 %v104, 1
    %v257 = vpop.permute.xlu0 %256
    %258 = vrot.lane.b32.xlu0 %v105, 1
    %v259 = vpop.permute.xlu0 %258
    %260 = vrot.lane.b32.xlu0 %v106, 1
    %v261 = vpop.permute.xlu0 %260
    %262 = vrot.lane.b32.xlu0 %v107, 1
    %v263 = vpop.permute.xlu0 %262
    %264 = vrot.lane.b32.xlu0 %v108, 1
    %v265 = vpop.permute.xlu0 %264
    %vm266 = vcmp.lt.s32.totalorder %v136, 1
    %v267 = vsel %vm266, %v263, %v265
    %v268 = vsel %vm266, %v261, %v263
    %v269 = vsel %vm266, %v259, %v261
    %v270 = vsel %vm266, %v257, %v259
    %v271 = vsel %vm266, %v255, %v257
    %v272 = vsel %vm266, %v253, %v255
    %v273 = vsel %vm266, %v251, %v253
    %v274 = vsel %vm266, %v265, %v251
    %s275 = sld [smem:[#allocation7 + $0x3]]
    %v276 = vstv %s275
    %v277 = vmul.f32 %v274, %v276
    %v278 = vmul.f32 %v273, %v276
    %v279 = vmul.f32 %v272, %v276
    %v280 = vmul.f32 %v271, %v276
    %v281 = vmul.f32 %v270, %v276
    %v282 = vmul.f32 %v269, %v276
    %v283 = vmul.f32 %v268, %v276
    %v284 = vmul.f32 %v267, %v276
    %v285 = vadd.f32 %v242, %v277
    %v286 = vadd.f32 %v243, %v278
    %v287 = vadd.f32 %v244, %v279
    %v288 = vadd.f32 %v245, %v280
    %v289 = vadd.f32 %v246, %v281
    %v290 = vadd.f32 %v247, %v282
    %v291 = vadd.f32 %v248, %v283
    %v292 = vadd.f32 %v249, %v284
    %293 = vrot.lane.b32.xlu0 %v101, 127
    %v294 = vpop.permute.xlu0 %293
    %295 = vrot.lane.b32.xlu0 %v102, 127
    %v296 = vpop.permute.xlu0 %295
    %297 = vrot.lane.b32.xlu0 %v103, 127
    %v298 = vpop.permute.xlu0 %297
    %299 = vrot.lane.b32.xlu0 %v104, 127
    %v300 = vpop.permute.xlu0 %299
    %301 = vrot.lane.b32.xlu0 %v105, 127
    %v302 = vpop.permute.xlu0 %301
    %303 = vrot.lane.b32.xlu0 %v106, 127
    %v304 = vpop.permute.xlu0 %303
    %305 = vrot.lane.b32.xlu0 %v107, 127
    %v306 = vpop.permute.xlu0 %305
    %307 = vrot.lane.b32.xlu0 %v108, 127
    %v308 = vpop.permute.xlu0 %307
    %vm309 = vcmp.lt.s32.totalorder %v136, 127
    %v310 = vsel %vm309, %v306, %v308
    %v311 = vsel %vm309, %v304, %v306
    %v312 = vsel %vm309, %v302, %v304
    %v313 = vsel %vm309, %v300, %v302
    %v314 = vsel %vm309, %v298, %v300
    %v315 = vsel %vm309, %v296, %v298
    %v316 = vsel %vm309, %v294, %v296
    %v317 = vsel %vm309, %v308, %v294
    %s318 = sld [smem:[#allocation7 + $0x5]]
    %v319 = vstv %s318
    %v320 = vmul.f32 %v316, %v319
    %v321 = vmul.f32 %v315, %v319
    %v322 = vmul.f32 %v314, %v319
    %v323 = vmul.f32 %v313, %v319
    %v324 = vmul.f32 %v312, %v319
    %v325 = vmul.f32 %v311, %v319
    %v326 = vmul.f32 %v310, %v319
    %v327 = vmul.f32 %v317, %v319
    %v328 = vadd.f32 %v285, %v320
    %v329 = vadd.f32 %v286, %v321
    %v330 = vadd.f32 %v287, %v322
    %v331 = vadd.f32 %v288, %v323
    %v332 = vadd.f32 %v289, %v324
    %v333 = vadd.f32 %v290, %v325
    %v334 = vadd.f32 %v291, %v326
    %v335 = vadd.f32 %v292, %v327
    %336 = vrot.lane.b32.xlu0 %v101, 97
    %v337 = vpop.permute.xlu0 %336
    %338 = vrot.lane.b32.xlu0 %v102, 97
    %v339 = vpop.permute.xlu0 %338
    %340 = vrot.lane.b32.xlu0 %v103, 97
    %v341 = vpop.permute.xlu0 %340
    %342 = vrot.lane.b32.xlu0 %v104, 97
    %v343 = vpop.permute.xlu0 %342
    %344 = vrot.lane.b32.xlu0 %v105, 97
    %v345 = vpop.permute.xlu0 %344
    %346 = vrot.lane.b32.xlu0 %v106, 97
    %v347 = vpop.permute.xlu0 %346
    %348 = vrot.lane.b32.xlu0 %v107, 97
    %v349 = vpop.permute.xlu0 %348
    %350 = vrot.lane.b32.xlu0 %v108, 97
    %v351 = vpop.permute.xlu0 %350
    %vm352 = vcmp.lt.s32.totalorder %v136, 97
    %v353 = vsel %vm352, %v349, %v351
    %v354 = vsel %vm352, %v347, %v349
    %v355 = vsel %vm352, %v345, %v347
    %v356 = vsel %vm352, %v343, %v345
    %v357 = vsel %vm352, %v341, %v343
    %v358 = vsel %vm352, %v339, %v341
    %v359 = vsel %vm352, %v337, %v339
    %v360 = vsel %vm352, %v351, %v337
    %s361 = sld [smem:[#allocation7 + $0x6]]
    %v362 = vstv %s361
    %v363 = vmul.f32 %v359, %v362
    %v364 = vmul.f32 %v358, %v362
    %v365 = vmul.f32 %v357, %v362
    %v366 = vmul.f32 %v356, %v362
    %v367 = vmul.f32 %v355, %v362
    %v368 = vmul.f32 %v354, %v362
    %v369 = vmul.f32 %v353, %v362
    %v370 = vmul.f32 %v360, %v362
    %v371 = vadd.f32 %v328, %v363
    %v372 = vadd.f32 %v329, %v364
    %v373 = vadd.f32 %v330, %v365
    %v374 = vadd.f32 %v331, %v366
    %v375 = vadd.f32 %v332, %v367
    %v376 = vadd.f32 %v333, %v368
    %v377 = vadd.f32 %v334, %v369
    %v378 = vadd.f32 %v335, %v370
    %379 = vrot.lane.b32.xlu0 %v101, 96
    %v380 = vpop.permute.xlu0 %379
    %381 = vrot.lane.b32.xlu0 %v102, 96
    %v382 = vpop.permute.xlu0 %381
    %383 = vrot.lane.b32.xlu0 %v103, 96
    %v384 = vpop.permute.xlu0 %383
    %385 = vrot.lane.b32.xlu0 %v104, 96
    %v386 = vpop.permute.xlu0 %385
    %387 = vrot.lane.b32.xlu0 %v105, 96
    %v388 = vpop.permute.xlu0 %387
    %389 = vrot.lane.b32.xlu0 %v106, 96
    %v390 = vpop.permute.xlu0 %389
    %391 = vrot.lane.b32.xlu0 %v107, 96
    %v392 = vpop.permute.xlu0 %391
    %393 = vrot.lane.b32.xlu0 %v108, 96
    %v394 = vpop.permute.xlu0 %393
    %vm395 = vcmp.lt.s32.totalorder %v136, 96
    %v396 = vsel %vm395, %v392, %v394
    %v397 = vsel %vm395, %v390, %v392
    %v398 = vsel %vm395, %v388, %v390
    %v399 = vsel %vm395, %v386, %v388
    %v400 = vsel %vm395, %v384, %v386
    %v401 = vsel %vm395, %v382, %v384
    %v402 = vsel %vm395, %v380, %v382
    %v403 = vsel %vm395, %v394, %v380
    %s404 = sld [smem:[#allocation7 + $0x7]]
    %v405 = vstv %s404
    %v406 = vmul.f32 %v402, %v405
    %v407 = vmul.f32 %v401, %v405
    %v408 = vmul.f32 %v400, %v405
    %v409 = vmul.f32 %v399, %v405
    %v410 = vmul.f32 %v398, %v405
    %v411 = vmul.f32 %v397, %v405
    %v412 = vmul.f32 %v396, %v405
    %v413 = vmul.f32 %v403, %v405
    %v414 = vadd.f32 %v371, %v406
    %v415 = vadd.f32 %v372, %v407
    %v416 = vadd.f32 %v373, %v408
    %v417 = vadd.f32 %v374, %v409
    %v418 = vadd.f32 %v375, %v410
    %v419 = vadd.f32 %v376, %v411
    %v420 = vadd.f32 %v377, %v412
    %v421 = vadd.f32 %v378, %v413
    %422 = vrot.lane.b32.xlu0 %v101, 95
    %v423 = vpop.permute.xlu0 %422
    %424 = vrot.lane.b32.xlu0 %v102, 95
    %v425 = vpop.permute.xlu0 %424
    %426 = vrot.lane.b32.xlu0 %v103, 95
    %v427 = vpop.permute.xlu0 %426
    %428 = vrot.lane.b32.xlu0 %v104, 95
    %v429 = vpop.permute.xlu0 %428
    %430 = vrot.lane.b32.xlu0 %v105, 95
    %v431 = vpop.permute.xlu0 %430
    %432 = vrot.lane.b32.xlu0 %v106, 95
    %v433 = vpop.permute.xlu0 %432
    %434 = vrot.lane.b32.xlu0 %v107, 95
    %v435 = vpop.permute.xlu0 %434
    %436 = vrot.lane.b32.xlu0 %v108, 95
    %v437 = vpop.permute.xlu0 %436
    %vm438 = vcmp.lt.s32.totalorder %v136, 95
    %v439 = vsel %vm438, %v435, %v437
    %v440 = vsel %vm438, %v433, %v435
    %v441 = vsel %vm438, %v431, %v433
    %v442 = vsel %vm438, %v429, %v431
    %v443 = vsel %vm438, %v427, %v429
    %v444 = vsel %vm438, %v425, %v427
    %v445 = vsel %vm438, %v423, %v425
    %v446 = vsel %vm438, %v437, %v423
    %s447 = sld [smem:[#allocation7 + $0x8]]
    %v448 = vstv %s447
    %v449 = vmul.f32 %v445, %v448
    %v450 = vmul.f32 %v444, %v448
    %v451 = vmul.f32 %v443, %v448
    %v452 = vmul.f32 %v442, %v448
    %v453 = vmul.f32 %v441, %v448
    %v454 = vmul.f32 %v440, %v448
    %v455 = vmul.f32 %v439, %v448
    %v456 = vmul.f32 %v446, %v448
    %v457 = vadd.f32 %v414, %v449
    %v458 = vadd.f32 %v415, %v450
    %v459 = vadd.f32 %v416, %v451
    %v460 = vadd.f32 %v417, %v452
    %v461 = vadd.f32 %v418, %v453
    %v462 = vadd.f32 %v419, %v454
    %v463 = vadd.f32 %v420, %v455
    %v464 = vadd.f32 %v421, %v456
    %v465 = vld [vmem:[%s4] sm:$0xff]
    %v466 = vld [vmem:[%s4 + $0x8] sm:$0xff]
    %v467 = vld [vmem:[%s4 + $0x10] sm:$0xff]
    %v468 = vld [vmem:[%s4 + $0x18] sm:$0xff]
    %v469 = vld [vmem:[%s4 + $0x20] sm:$0xff]
    %v470 = vld [vmem:[%s4 + $0x28] sm:$0xff]
    %v471 = vld [vmem:[%s4 + $0x30] sm:$0xff]
    %v472 = vld [vmem:[%s4 + $0x38] sm:$0xff]
    %v473 = vadd.f32 %v457, %v465
    %v474 = vadd.f32 %v458, %v466
    %v475 = vadd.f32 %v459, %v467
    %v476 = vadd.f32 %v460, %v468
    %v477 = vadd.f32 %v461, %v469
    %v478 = vadd.f32 %v462, %v470
    %v479 = vadd.f32 %v463, %v471
    %v480 = vadd.f32 %v464, %v472
    %v481 = vmax.f32 %v473, 0.0
    %v482 = vmax.f32 %v474, 0.0
    %v483 = vmax.f32 %v475, 0.0
    %v484 = vmax.f32 %v476, 0.0
    %v485 = vmax.f32 %v477, 0.0
    %v486 = vmax.f32 %v478, 0.0
    %v487 = vmax.f32 %v479, 0.0
    %v488 = vmax.f32 %v480, 0.0
    %v489 = vmin.f32 %v481, 6.0
    %v490 = vmin.f32 %v482, 6.0
    %v491 = vmin.f32 %v483, 6.0
    %v492 = vmin.f32 %v484, 6.0
    %v493 = vmin.f32 %v485, 6.0
    %v494 = vmin.f32 %v486, 6.0
    %v495 = vmin.f32 %v487, 6.0
    %v496 = vmin.f32 %v488, 6.0
    %497 = vst [vmem:[#allocation2] sm:$0xff] %v489
    %498 = vst [vmem:[#allocation2 + $0x8] sm:$0xff] %v490
    %499 = vst [vmem:[#allocation2 + $0x10] sm:$0xff] %v491
    %500 = vst [vmem:[#allocation2 + $0x18] sm:$0xff] %v492
    %501 = vst [vmem:[#allocation2 + $0x20] sm:$0xff] %v493
    %502 = vst [vmem:[#allocation2 + $0x28] sm:$0xff] %v494
    %503 = vst [vmem:[#allocation2 + $0x30] sm:$0xff] %v495
    %504 = vst [vmem:[#allocation2 + $0x38] sm:$0xff] %v496
    %s505 = sld [smem:[#allocation3 + $0x1]]
    %v506 = vstv %s505
    %v507 = vmul.f32 %v65, %v506
    %v508 = vmul.f32 %v66, %v506
    %v509 = vmul.f32 %v67, %v506
    %v510 = vmul.f32 %v68, %v506
    %v511 = vmul.f32 %v69, %v506
    %v512 = vmul.f32 %v70, %v506
    %v513 = vmul.f32 %v71, %v506
    %v514 = vmul.f32 %v72, %v506
    %s515 = sld [smem:[#allocation5 + $0x1]]
    %v516 = vstv %s515
    %v517 = vadd.f32 %v507, %v516
    %v518 = vadd.f32 %v508, %v516
    %v519 = vadd.f32 %v509, %v516
    %v520 = vadd.f32 %v510, %v516
    %v521 = vadd.f32 %v511, %v516
    %v522 = vadd.f32 %v512, %v516
    %v523 = vadd.f32 %v513, %v516
    %v524 = vadd.f32 %v514, %v516
    %v525 = vmax.f32 %v517, 0.0
    %v526 = vmax.f32 %v518, 0.0
    %v527 = vmax.f32 %v519, 0.0
    %v528 = vmax.f32 %v520, 0.0
    %v529 = vmax.f32 %v521, 0.0
    %v530 = vmax.f32 %v522, 0.0
    %v531 = vmax.f32 %v523, 0.0
    %v532 = vmax.f32 %v524, 0.0
    %v533 = vmin.f32 %v525, 6.0
    %v534 = vmin.f32 %v526, 6.0
    %v535 = vmin.f32 %v527, 6.0
    %v536 = vmin.f32 %v528, 6.0
    %v537 = vmin.f32 %v529, 6.0
    %v538 = vmin.f32 %v530, 6.0
    %v539 = vmin.f32 %v531, 6.0
    %v540 = vmin.f32 %v532, 6.0
    %s541 = sld [smem:[#allocation7 + $0xd]]
    %v542 = vstv %s541
    %v543 = vmul.f32 %v533, %v542
    %v544 = vmul.f32 %v534, %v542
    %v545 = vmul.f32 %v535, %v542
    %v546 = vmul.f32 %v536, %v542
    %v547 = vmul.f32 %v537, %v542
    %v548 = vmul.f32 %v538, %v542
    %v549 = vmul.f32 %v539, %v542
    %v550 = vmul.f32 %v540, %v542
    %551 = vrot.lane.b32.xlu0 %v533, 33
    %v552 = vpop.permute.xlu0 %551
    %553 = vrot.lane.b32.xlu0 %v534, 33
    %v554 = vpop.permute.xlu0 %553
    %555 = vrot.lane.b32.xlu0 %v535, 33
    %v556 = vpop.permute.xlu0 %555
    %557 = vrot.lane.b32.xlu0 %v536, 33
    %v558 = vpop.permute.xlu0 %557
    %559 = vrot.lane.b32.xlu0 %v537, 33
    %v560 = vpop.permute.xlu0 %559
    %561 = vrot.lane.b32.xlu0 %v538, 33
    %v562 = vpop.permute.xlu0 %561
    %563 = vrot.lane.b32.xlu0 %v539, 33
    %v564 = vpop.permute.xlu0 %563
    %565 = vrot.lane.b32.xlu0 %v540, 33
    %v566 = vpop.permute.xlu0 %565
    %v567 = vsel %vm137, %v564, %v566
    %v568 = vsel %vm137, %v562, %v564
    %v569 = vsel %vm137, %v560, %v562
    %v570 = vsel %vm137, %v558, %v560
    %v571 = vsel %vm137, %v556, %v558
    %v572 = vsel %vm137, %v554, %v556
    %v573 = vsel %vm137, %v552, %v554
    %v574 = vsel %vm137, %v566, %v552
    %s575 = sld [smem:[#allocation7 + $0x9]]
    %v576 = vstv %s575
    %v577 = vmul.f32 %v574, %v576
    %v578 = vmul.f32 %v573, %v576
    %v579 = vmul.f32 %v572, %v576
    %v580 = vmul.f32 %v571, %v576
    %v581 = vmul.f32 %v570, %v576
    %v582 = vmul.f32 %v569, %v576
    %v583 = vmul.f32 %v568, %v576
    %v584 = vmul.f32 %v567, %v576
    %v585 = vadd.f32 %v543, %v577
    %v586 = vadd.f32 %v544, %v578
    %v587 = vadd.f32 %v545, %v579
    %v588 = vadd.f32 %v546, %v580
    %v589 = vadd.f32 %v547, %v581
    %v590 = vadd.f32 %v548, %v582
    %v591 = vadd.f32 %v549, %v583
    %v592 = vadd.f32 %v550, %v584
    %593 = vrot.lane.b32.xlu0 %v533, 32
    %v594 = vpop.permute.xlu0 %593
    %595 = vrot.lane.b32.xlu0 %v534, 32
    %v596 = vpop.permute.xlu0 %595
    %597 = vrot.lane.b32.xlu0 %v535, 32
    %v598 = vpop.permute.xlu0 %597
    %599 = vrot.lane.b32.xlu0 %v536, 32
    %v600 = vpop.permute.xlu0 %599
    %601 = vrot.lane.b32.xlu0 %v537, 32
    %v602 = vpop.permute.xlu0 %601
    %603 = vrot.lane.b32.xlu0 %v538, 32
    %v604 = vpop.permute.xlu0 %603
    %605 = vrot.lane.b32.xlu0 %v539, 32
    %v606 = vpop.permute.xlu0 %605
    %607 = vrot.lane.b32.xlu0 %v540, 32
    %v608 = vpop.permute.xlu0 %607
    %v609 = vsel %vm180, %v606, %v608
    %v610 = vsel %vm180, %v604, %v606
    %v611 = vsel %vm180, %v602, %v604
    %v612 = vsel %vm180, %v600, %v602
    %v613 = vsel %vm180, %v598, %v600
    %v614 = vsel %vm180, %v596, %v598
    %v615 = vsel %vm180, %v594, %v596
    %v616 = vsel %vm180, %v608, %v594
    %s617 = sld [smem:[#allocation7 + $0xa]]
    %v618 = vstv %s617
    %v619 = vmul.f32 %v616, %v618
    %v620 = vmul.f32 %v615, %v618
    %v621 = vmul.f32 %v614, %v618
    %v622 = vmul.f32 %v613, %v618
    %v623 = vmul.f32 %v612, %v618
    %v624 = vmul.f32 %v611, %v618
    %v625 = vmul.f32 %v610, %v618
    %v626 = vmul.f32 %v609, %v618
    %v627 = vadd.f32 %v585, %v619
    %v628 = vadd.f32 %v586, %v620
    %v629 = vadd.f32 %v587, %v621
    %v630 = vadd.f32 %v588, %v622
    %v631 = vadd.f32 %v589, %v623
    %v632 = vadd.f32 %v590, %v624
    %v633 = vadd.f32 %v591, %v625
    %v634 = vadd.f32 %v592, %v626
    %635 = vrot.lane.b32.xlu0 %v533, 31
    %v636 = vpop.permute.xlu0 %635
    %637 = vrot.lane.b32.xlu0 %v534, 31
    %v638 = vpop.permute.xlu0 %637
    %639 = vrot.lane.b32.xlu0 %v535, 31
    %v640 = vpop.permute.xlu0 %639
    %641 = vrot.lane.b32.xlu0 %v536, 31
    %v642 = vpop.permute.xlu0 %641
    %643 = vrot.lane.b32.xlu0 %v537, 31
    %v644 = vpop.permute.xlu0 %643
    %645 = vrot.lane.b32.xlu0 %v538, 31
    %v646 = vpop.permute.xlu0 %645
    %647 = vrot.lane.b32.xlu0 %v539, 31
    %v648 = vpop.permute.xlu0 %647
    %649 = vrot.lane.b32.xlu0 %v540, 31
    %v650 = vpop.permute.xlu0 %649
    %v651 = vsel %vm223, %v648, %v650
    %v652 = vsel %vm223, %v646, %v648
    %v653 = vsel %vm223, %v644, %v646
    %v654 = vsel %vm223, %v642, %v644
    %v655 = vsel %vm223, %v640, %v642
    %v656 = vsel %vm223, %v638, %v640
    %v657 = vsel %vm223, %v636, %v638
    %v658 = vsel %vm223, %v650, %v636
    %s659 = sld [smem:[#allocation7 + $0xb]]
    %v660 = vstv %s659
    %v661 = vmul.f32 %v658, %v660
    %v662 = vmul.f32 %v657, %v660
    %v663 = vmul.f32 %v656, %v660
    %v664 = vmul.f32 %v655, %v660
    %v665 = vmul.f32 %v654, %v660
    %v666 = vmul.f32 %v653, %v660
    %v667 = vmul.f32 %v652, %v660
    %v668 = vmul.f32 %v651, %v660
    %v669 = vadd.f32 %v627, %v661
    %v670 = vadd.f32 %v628, %v662
    %v671 = vadd.f32 %v629, %v663
    %v672 = vadd.f32 %v630, %v664
    %v673 = vadd.f32 %v631, %v665
    %v674 = vadd.f32 %v632, %v666
    %v675 = vadd.f32 %v633, %v667
    %v676 = vadd.f32 %v634, %v668
    %677 = vrot.lane.b32.xlu0 %v533, 1
    %v678 = vpop.permute.xlu0 %677
    %679 = vrot.lane.b32.xlu0 %v534, 1
    %v680 = vpop.permute.xlu0 %679
    %681 = vrot.lane.b32.xlu0 %v535, 1
    %v682 = vpop.permute.xlu0 %681
    %683 = vrot.lane.b32.xlu0 %v536, 1
    %v684 = vpop.permute.xlu0 %683
    %685 = vrot.lane.b32.xlu0 %v537, 1
    %v686 = vpop.permute.xlu0 %685
    %687 = vrot.lane.b32.xlu0 %v538, 1
    %v688 = vpop.permute.xlu0 %687
    %689 = vrot.lane.b32.xlu0 %v539, 1
    %v690 = vpop.permute.xlu0 %689
    %691 = vrot.lane.b32.xlu0 %v540, 1
    %v692 = vpop.permute.xlu0 %691
    %v693 = vsel %vm266, %v690, %v692
    %v694 = vsel %vm266, %v688, %v690
    %v695 = vsel %vm266, %v686, %v688
    %v696 = vsel %vm266, %v684, %v686
    %v697 = vsel %vm266, %v682, %v684
    %v698 = vsel %vm266, %v680, %v682
    %v699 = vsel %vm266, %v678, %v680
    %v700 = vsel %vm266, %v692, %v678
    %s701 = sld [smem:[#allocation7 + $0xc]]
    %v702 = vstv %s701
    %v703 = vmul.f32 %v700, %v702
    %v704 = vmul.f32 %v699, %v702
    %v705 = vmul.f32 %v698, %v702
    %v706 = vmul.f32 %v697, %v702
    %v707 = vmul.f32 %v696, %v702
    %v708 = vmul.f32 %v695, %v702
    %v709 = vmul.f32 %v694, %v702
    %v710 = vmul.f32 %v693, %v702
    %v711 = vadd.f32 %v669, %v703
    %v712 = vadd.f32 %v670, %v704
    %v713 = vadd.f32 %v671, %v705
    %v714 = vadd.f32 %v672, %v706
    %v715 = vadd.f32 %v673, %v707
    %v716 = vadd.f32 %v674, %v708
    %v717 = vadd.f32 %v675, %v709
    %v718 = vadd.f32 %v676, %v710
    %719 = vrot.lane.b32.xlu0 %v533, 127
    %v720 = vpop.permute.xlu0 %719
    %721 = vrot.lane.b32.xlu0 %v534, 127
    %v722 = vpop.permute.xlu0 %721
    %723 = vrot.lane.b32.xlu0 %v535, 127
    %v724 = vpop.permute.xlu0 %723
    %725 = vrot.lane.b32.xlu0 %v536, 127
    %v726 = vpop.permute.xlu0 %725
    %727 = vrot.lane.b32.xlu0 %v537, 127
    %v728 = vpop.permute.xlu0 %727
    %729 = vrot.lane.b32.xlu0 %v538, 127
    %v730 = vpop.permute.xlu0 %729
    %731 = vrot.lane.b32.xlu0 %v539, 127
    %v732 = vpop.permute.xlu0 %731
    %733 = vrot.lane.b32.xlu0 %v540, 127
    %v734 = vpop.permute.xlu0 %733
    %v735 = vsel %vm309, %v732, %v734
    %v736 = vsel %vm309, %v730, %v732
    %v737 = vsel %vm309, %v728, %v730
    %v738 = vsel %vm309, %v726, %v728
    %v739 = vsel %vm309, %v724, %v726
    %v740 = vsel %vm309, %v722, %v724
    %v741 = vsel %vm309, %v720, %v722
    %v742 = vsel %vm309, %v734, %v720
    %s743 = sld [smem:[#allocation7 + $0xe]]
    %v744 = vstv %s743
    %v745 = vmul.f32 %v741, %v744
    %v746 = vmul.f32 %v740, %v744
    %v747 = vmul.f32 %v739, %v744
    %v748 = vmul.f32 %v738, %v744
    %v749 = vmul.f32 %v737, %v744
    %v750 = vmul.f32 %v736, %v744
    %v751 = vmul.f32 %v735, %v744
    %v752 = vmul.f32 %v742, %v744
    %v753 = vadd.f32 %v711, %v745
    %v754 = vadd.f32 %v712, %v746
    %v755 = vadd.f32 %v713, %v747
    %v756 = vadd.f32 %v714, %v748
    %v757 = vadd.f32 %v715, %v749
    %v758 = vadd.f32 %v716, %v750
    %v759 = vadd.f32 %v717, %v751
    %v760 = vadd.f32 %v718, %v752
    %761 = vrot.lane.b32.xlu0 %v533, 97
    %v762 = vpop.permute.xlu0 %761
    %763 = vrot.lane.b32.xlu0 %v534, 97
    %v764 = vpop.permute.xlu0 %763
    %765 = vrot.lane.b32.xlu0 %v535, 97
    %v766 = vpop.permute.xlu0 %765
    %767 = vrot.lane.b32.xlu0 %v536, 97
    %v768 = vpop.permute.xlu0 %767
    %769 = vrot.lane.b32.xlu0 %v537, 97
    %v770 = vpop.permute.xlu0 %769
    %771 = vrot.lane.b32.xlu0 %v538, 97
    %v772 = vpop.permute.xlu0 %771
    %773 = vrot.lane.b32.xlu0 %v539, 97
    %v774 = vpop.permute.xlu0 %773
    %775 = vrot.lane.b32.xlu0 %v540, 97
    %v776 = vpop.permute.xlu0 %775
    %v777 = vsel %vm352, %v774, %v776
    %v778 = vsel %vm352, %v772, %v774
    %v779 = vsel %vm352, %v770, %v772
    %v780 = vsel %vm352, %v768, %v770
    %v781 = vsel %vm352, %v766, %v768
    %v782 = vsel %vm352, %v764, %v766
    %v783 = vsel %vm352, %v762, %v764
    %v784 = vsel %vm352, %v776, %v762
    %s785 = sld [smem:[#allocation7 + $0xf]]
    %v786 = vstv %s785
    %v787 = vmul.f32 %v783, %v786
    %v788 = vmul.f32 %v782, %v786
    %v789 = vmul.f32 %v781, %v786
    %v790 = vmul.f32 %v780, %v786
    %v791 = vmul.f32 %v779, %v786
    %v792 = vmul.f32 %v778, %v786
    %v793 = vmul.f32 %v777, %v786
    %v794 = vmul.f32 %v784, %v786
    %v795 = vadd.f32 %v753, %v787
    %v796 = vadd.f32 %v754, %v788
    %v797 = vadd.f32 %v755, %v789
    %v798 = vadd.f32 %v756, %v790
    %v799 = vadd.f32 %v757, %v791
    %v800 = vadd.f32 %v758, %v792
    %v801 = vadd.f32 %v759, %v793
    %v802 = vadd.f32 %v760, %v794
    %803 = vrot.lane.b32.xlu0 %v533, 96
    %v804 = vpop.permute.xlu0 %803
    %805 = vrot.lane.b32.xlu0 %v534, 96
    %v806 = vpop.permute.xlu0 %805
    %807 = vrot.lane.b32.xlu0 %v535, 96
    %v808 = vpop.permute.xlu0 %807
    %809 = vrot.lane.b32.xlu0 %v536, 96
    %v810 = vpop.permute.xlu0 %809
    %811 = vrot.lane.b32.xlu0 %v537, 96
    %v812 = vpop.permute.xlu0 %811
    %813 = vrot.lane.b32.xlu0 %v538, 96
    %v814 = vpop.permute.xlu0 %813
    %815 = vrot.lane.b32.xlu0 %v539, 96
    %v816 = vpop.permute.xlu0 %815
    %817 = vrot.lane.b32.xlu0 %v540, 96
    %v818 = vpop.permute.xlu0 %817
    %v819 = vsel %vm395, %v816, %v818
    %v820 = vsel %vm395, %v814, %v816
    %v821 = vsel %vm395, %v812, %v814
    %v822 = vsel %vm395, %v810, %v812
    %v823 = vsel %vm395, %v808, %v810
    %v824 = vsel %vm395, %v806, %v808
    %v825 = vsel %vm395, %v804, %v806
    %v826 = vsel %vm395, %v818, %v804
    %s827 = sld [smem:[#allocation7 + $0x10]]
    %v828 = vstv %s827
    %v829 = vmul.f32 %v825, %v828
    %v830 = vmul.f32 %v824, %v828
    %v831 = vmul.f32 %v823, %v828
    %v832 = vmul.f32 %v822, %v828
    %v833 = vmul.f32 %v821, %v828
    %v834 = vmul.f32 %v820, %v828
    %v835 = vmul.f32 %v819, %v828
    %v836 = vmul.f32 %v826, %v828
    %v837 = vadd.f32 %v795, %v829
    %v838 = vadd.f32 %v796, %v830
    %v839 = vadd.f32 %v797, %v831
    %v840 = vadd.f32 %v798, %v832
    %v841 = vadd.f32 %v799, %v833
    %v842 = vadd.f32 %v800, %v834
    %v843 = vadd.f32 %v801, %v835
    %v844 = vadd.f32 %v802, %v836
    %845 = vrot.lane.b32.xlu0 %v533, 95
    %v846 = vpop.permute.xlu0 %845
    %847 = vrot.lane.b32.xlu0 %v534, 95
    %v848 = vpop.permute.xlu0 %847
    %849 = vrot.lane.b32.xlu0 %v535, 95
    %v850 = vpop.permute.xlu0 %849
    %851 = vrot.lane.b32.xlu0 %v536, 95
    %v852 = vpop.permute.xlu0 %851
    %853 = vrot.lane.b32.xlu0 %v537, 95
    %v854 = vpop.permute.xlu0 %853
    %855 = vrot.lane.b32.xlu0 %v538, 95
    %v856 = vpop.permute.xlu0 %855
    %857 = vrot.lane.b32.xlu0 %v539, 95
    %v858 = vpop.permute.xlu0 %857
    %859 = vrot.lane.b32.xlu0 %v540, 95
    %v860 = vpop.permute.xlu0 %859
    %v861 = vsel %vm438, %v858, %v860
    %v862 = vsel %vm438, %v856, %v858
    %v863 = vsel %vm438, %v854, %v856
    %v864 = vsel %vm438, %v852, %v854
    %v865 = vsel %vm438, %v850, %v852
    %v866 = vsel %vm438, %v848, %v850
    %v867 = vsel %vm438, %v846, %v848
    %v868 = vsel %vm438, %v860, %v846
    %s869 = sld [smem:[#allocation7 + $0x11]]
    %v870 = vstv %s869
    %v871 = vmul.f32 %v867, %v870
    %v872 = vmul.f32 %v866, %v870
    %v873 = vmul.f32 %v865, %v870
    %v874 = vmul.f32 %v864, %v870
    %v875 = vmul.f32 %v863, %v870
    %v876 = vmul.f32 %v862, %v870
    %v877 = vmul.f32 %v861, %v870
    %v878 = vmul.f32 %v868, %v870
    %v879 = vadd.f32 %v837, %v871
    %v880 = vadd.f32 %v838, %v872
    %v881 = vadd.f32 %v839, %v873
    %v882 = vadd.f32 %v840, %v874
    %v883 = vadd.f32 %v841, %v875
    %v884 = vadd.f32 %v842, %v876
    %v885 = vadd.f32 %v843, %v877
    %v886 = vadd.f32 %v844, %v878
    %s887 = scalar_lea.vmem %s4, 64
    %v888 = vld [vmem:[%s887] sm:$0xff]
    %v889 = vld [vmem:[%s887 + $0x8] sm:$0xff]
    %v890 = vld [vmem:[%s887 + $0x10] sm:$0xff]
    %v891 = vld [vmem:[%s887 + $0x18] sm:$0xff]
    %v892 = vld [vmem:[%s887 + $0x20] sm:$0xff]
    %v893 = vld [vmem:[%s887 + $0x28] sm:$0xff]
    %v894 = vld [vmem:[%s887 + $0x30] sm:$0xff]
    %v895 = vld [vmem:[%s887 + $0x38] sm:$0xff]
    %v896 = vadd.f32 %v879, %v888
    %v897 = vadd.f32 %v880, %v889
    %v898 = vadd.f32 %v881, %v890
    %v899 = vadd.f32 %v882, %v891
    %v900 = vadd.f32 %v883, %v892
    %v901 = vadd.f32 %v884, %v893
    %v902 = vadd.f32 %v885, %v894
    %v903 = vadd.f32 %v886, %v895
    %v904 = vmax.f32 %v896, 0.0
    %v905 = vmax.f32 %v897, 0.0
    %v906 = vmax.f32 %v898, 0.0
    %v907 = vmax.f32 %v899, 0.0
    %v908 = vmax.f32 %v900, 0.0
    %v909 = vmax.f32 %v901, 0.0
    %v910 = vmax.f32 %v902, 0.0
    %v911 = vmax.f32 %v903, 0.0
    %v912 = vmin.f32 %v904, 6.0
    %v913 = vmin.f32 %v905, 6.0
    %v914 = vmin.f32 %v906, 6.0
    %v915 = vmin.f32 %v907, 6.0
    %v916 = vmin.f32 %v908, 6.0
    %v917 = vmin.f32 %v909, 6.0
    %v918 = vmin.f32 %v910, 6.0
    %v919 = vmin.f32 %v911, 6.0
    %920 = vst [vmem:[#allocation2 + $0x40] sm:$0xff] %v912
    %921 = vst [vmem:[#allocation2 + $0x48] sm:$0xff] %v913
    %922 = vst [vmem:[#allocation2 + $0x50] sm:$0xff] %v914
    %923 = vst [vmem:[#allocation2 + $0x58] sm:$0xff] %v915
    %924 = vst [vmem:[#allocation2 + $0x60] sm:$0xff] %v916
    %925 = vst [vmem:[#allocation2 + $0x68] sm:$0xff] %v917
    %926 = vst [vmem:[#allocation2 + $0x70] sm:$0xff] %v918
    %927 = vst [vmem:[#allocation2 + $0x78] sm:$0xff] %v919
    %s928 = sld [smem:[#allocation3 + $0x2]]
    %v929 = vstv %s928
    %v930 = vmul.f32 %v65, %v929
    %v931 = vmul.f32 %v66, %v929
    %v932 = vmul.f32 %v67, %v929
    %v933 = vmul.f32 %v68, %v929
    %v934 = vmul.f32 %v69, %v929
    %v935 = vmul.f32 %v70, %v929
    %v936 = vmul.f32 %v71, %v929
    %v937 = vmul.f32 %v72, %v929
    %s938 = sld [smem:[#allocation5 + $0x2]]
    %v939 = vstv %s938
    %v940 = vadd.f32 %v930, %v939
    %v941 = vadd.f32 %v931, %v939
    %v942 = vadd.f32 %v932, %v939
    %v943 = vadd.f32 %v933, %v939
    %v944 = vadd.f32 %v934, %v939
    %v945 = vadd.f32 %v935, %v939
    %v946 = vadd.f32 %v936, %v939
    %v947 = vadd.f32 %v937, %v939
    %v948 = vmax.f32 %v940, 0.0
    %v949 = vmax.f32 %v941, 0.0
    %v950 = vmax.f32 %v942, 0.0
    %v951 = vmax.f32 %v943, 0.0
    %v952 = vmax.f32 %v944, 0.0
    %v953 = vmax.f32 %v945, 0.0
    %v954 = vmax.f32 %v946, 0.0
    %v955 = vmax.f32 %v947, 0.0
    %v956 = vmin.f32 %v948, 6.0
    %v957 = vmin.f32 %v949, 6.0
    %v958 = vmin.f32 %v950, 6.0
    %v959 = vmin.f32 %v951, 6.0
    %v960 = vmin.f32 %v952, 6.0
    %v961 = vmin.f32 %v953, 6.0
    %v962 = vmin.f32 %v954, 6.0
    %v963 = vmin.f32 %v955, 6.0
    %s964 = sld [smem:[#allocation7 + $0x16]]
    %v965 = vstv %s964
    %v966 = vmul.f32 %v956, %v965
    %v967 = vmul.f32 %v957, %v965
    %v968 = vmul.f32 %v958, %v965
    %v969 = vmul.f32 %v959, %v965
    %v970 = vmul.f32 %v960, %v965
    %v971 = vmul.f32 %v961, %v965
    %v972 = vmul.f32 %v962, %v965
    %v973 = vmul.f32 %v963, %v965
    %974 = vrot.lane.b32.xlu0 %v956, 33
    %v975 = vpop.permute.xlu0 %974
    %976 = vrot.lane.b32.xlu0 %v957, 33
    %v977 = vpop.permute.xlu0 %976
    %978 = vrot.lane.b32.xlu0 %v958, 33
    %v979 = vpop.permute.xlu0 %978
    %980 = vrot.lane.b32.xlu0 %v959, 33
    %v981 = vpop.permute.xlu0 %980
    %982 = vrot.lane.b32.xlu0 %v960, 33
    %v983 = vpop.permute.xlu0 %982
    %984 = vrot.lane.b32.xlu0 %v961, 33
    %v985 = vpop.permute.xlu0 %984
    %986 = vrot.lane.b32.xlu0 %v962, 33
    %v987 = vpop.permute.xlu0 %986
    %988 = vrot.lane.b32.xlu0 %v963, 33
    %v989 = vpop.permute.xlu0 %988
    %v990 = vsel %vm137, %v987, %v989
    %v991 = vsel %vm137, %v985, %v987
    %v992 = vsel %vm137, %v983, %v985
    %v993 = vsel %vm137, %v981, %v983
    %v994 = vsel %vm137, %v979, %v981
    %v995 = vsel %vm137, %v977, %v979
    %v996 = vsel %vm137, %v975, %v977
    %v997 = vsel %vm137, %v989, %v975
    %s998 = sld [smem:[#allocation7 + $0x12]]
    %v999 = vstv %s998
    %v1000 = vmul.f32 %v997, %v999
    %v1001 = vmul.f32 %v996, %v999
    %v1002 = vmul.f32 %v995, %v999
    %v1003 = vmul.f32 %v994, %v999
    %v1004 = vmul.f32 %v993, %v999
    %v1005 = vmul.f32 %v992, %v999
    %v1006 = vmul.f32 %v991, %v999
    %v1007 = vmul.f32 %v990, %v999
    %v1008 = vadd.f32 %v966, %v1000
    %v1009 = vadd.f32 %v967, %v1001
    %v1010 = vadd.f32 %v968, %v1002
    %v1011 = vadd.f32 %v969, %v1003
    %v1012 = vadd.f32 %v970, %v1004
    %v1013 = vadd.f32 %v971, %v1005
    %v1014 = vadd.f32 %v972, %v1006
    %v1015 = vadd.f32 %v973, %v1007
    %1016 = vrot.lane.b32.xlu0 %v956, 32
    %v1017 = vpop.permute.xlu0 %1016
    %1018 = vrot.lane.b32.xlu0 %v957, 32
    %v1019 = vpop.permute.xlu0 %1018
    %1020 = vrot.lane.b32.xlu0 %v958, 32
    %v1021 = vpop.permute.xlu0 %1020
    %1022 = vrot.lane.b32.xlu0 %v959, 32
    %v1023 = vpop.permute.xlu0 %1022
    %1024 = vrot.lane.b32.xlu0 %v960, 32
    %v1025 = vpop.permute.xlu0 %1024
    %1026 = vrot.lane.b32.xlu0 %v961, 32
    %v1027 = vpop.permute.xlu0 %1026
    %1028 = vrot.lane.b32.xlu0 %v962, 32
    %v1029 = vpop.permute.xlu0 %1028
    %1030 = vrot.lane.b32.xlu0 %v963, 32
    %v1031 = vpop.permute.xlu0 %1030
    %v1032 = vsel %vm180, %v1029, %v1031
    %v1033 = vsel %vm180, %v1027, %v1029
    %v1034 = vsel %vm180, %v1025, %v1027
    %v1035 = vsel %vm180, %v1023, %v1025
    %v1036 = vsel %vm180, %v1021, %v1023
    %v1037 = vsel %vm180, %v1019, %v1021
    %v1038 = vsel %vm180, %v1017, %v1019
    %v1039 = vsel %vm180, %v1031, %v1017
    %s1040 = sld [smem:[#allocation7 + $0x13]]
    %v1041 = vstv %s1040
    %v1042 = vmul.f32 %v1039, %v1041
    %v1043 = vmul.f32 %v1038, %v1041
    %v1044 = vmul.f32 %v1037, %v1041
    %v1045 = vmul.f32 %v1036, %v1041
    %v1046 = vmul.f32 %v1035, %v1041
    %v1047 = vmul.f32 %v1034, %v1041
    %v1048 = vmul.f32 %v1033, %v1041
    %v1049 = vmul.f32 %v1032, %v1041
    %v1050 = vadd.f32 %v1008, %v1042
    %v1051 = vadd.f32 %v1009, %v1043
    %v1052 = vadd.f32 %v1010, %v1044
    %v1053 = vadd.f32 %v1011, %v1045
    %v1054 = vadd.f32 %v1012, %v1046
    %v1055 = vadd.f32 %v1013, %v1047
    %v1056 = vadd.f32 %v1014, %v1048
    %v1057 = vadd.f32 %v1015, %v1049
    %1058 = vrot.lane.b32.xlu0 %v956, 31
    %v1059 = vpop.permute.xlu0 %1058
    %1060 = vrot.lane.b32.xlu0 %v957, 31
    %v1061 = vpop.permute.xlu0 %1060
    %1062 = vrot.lane.b32.xlu0 %v958, 31
    %v1063 = vpop.permute.xlu0 %1062
    %1064 = vrot.lane.b32.xlu0 %v959, 31
    %v1065 = vpop.permute.xlu0 %1064
    %1066 = vrot.lane.b32.xlu0 %v960, 31
    %v1067 = vpop.permute.xlu0 %1066
    %1068 = vrot.lane.b32.xlu0 %v961, 31
    %v1069 = vpop.permute.xlu0 %1068
    %1070 = vrot.lane.b32.xlu0 %v962, 31
    %v1071 = vpop.permute.xlu0 %1070
    %1072 = vrot.lane.b32.xlu0 %v963, 31
    %v1073 = vpop.permute.xlu0 %1072
    %v1074 = vsel %vm223, %v1071, %v1073
    %v1075 = vsel %vm223, %v1069, %v1071
    %v1076 = vsel %vm223, %v1067, %v1069
    %v1077 = vsel %vm223, %v1065, %v1067
    %v1078 = vsel %vm223, %v1063, %v1065
    %v1079 = vsel %vm223, %v1061, %v1063
    %v1080 = vsel %vm223, %v1059, %v1061
    %v1081 = vsel %vm223, %v1073, %v1059
    %s1082 = sld [smem:[#allocation7 + $0x14]]
    %v1083 = vstv %s1082
    %v1084 = vmul.f32 %v1081, %v1083
    %v1085 = vmul.f32 %v1080, %v1083
    %v1086 = vmul.f32 %v1079, %v1083
    %v1087 = vmul.f32 %v1078, %v1083
    %v1088 = vmul.f32 %v1077, %v1083
    %v1089 = vmul.f32 %v1076, %v1083
    %v1090 = vmul.f32 %v1075, %v1083
    %v1091 = vmul.f32 %v1074, %v1083
    %v1092 = vadd.f32 %v1050, %v1084
    %v1093 = vadd.f32 %v1051, %v1085
    %v1094 = vadd.f32 %v1052, %v1086
    %v1095 = vadd.f32 %v1053, %v1087
    %v1096 = vadd.f32 %v1054, %v1088
    %v1097 = vadd.f32 %v1055, %v1089
    %v1098 = vadd.f32 %v1056, %v1090
    %v1099 = vadd.f32 %v1057, %v1091
    %1100 = vrot.lane.b32.xlu0 %v956, 1
    %v1101 = vpop.permute.xlu0 %1100
    %1102 = vrot.lane.b32.xlu0 %v957, 1
    %v1103 = vpop.permute.xlu0 %1102
    %1104 = vrot.lane.b32.xlu0 %v958, 1
    %v1105 = vpop.permute.xlu0 %1104
    %1106 = vrot.lane.b32.xlu0 %v959, 1
    %v1107 = vpop.permute.xlu0 %1106
    %1108 = vrot.lane.b32.xlu0 %v960, 1
    %v1109 = vpop.permute.xlu0 %1108
    %1110 = vrot.lane.b32.xlu0 %v961, 1
    %v1111 = vpop.permute.xlu0 %1110
    %1112 = vrot.lane.b32.xlu0 %v962, 1
    %v1113 = vpop.permute.xlu0 %1112
    %1114 = vrot.lane.b32.xlu0 %v963, 1
    %v1115 = vpop.permute.xlu0 %1114
    %v1116 = vsel %vm266, %v1113, %v1115
    %v1117 = vsel %vm266, %v1111, %v1113
    %v1118 = vsel %vm266, %v1109, %v1111
    %v1119 = vsel %vm266, %v1107, %v1109
    %v1120 = vsel %vm266, %v1105, %v1107
    %v1121 = vsel %vm266, %v1103, %v1105
    %v1122 = vsel %vm266, %v1101, %v1103
    %v1123 = vsel %vm266, %v1115, %v1101
    %s1124 = sld [smem:[#allocation7 + $0x15]]
    %v1125 = vstv %s1124
    %v1126 = vmul.f32 %v1123, %v1125
    %v1127 = vmul.f32 %v1122, %v1125
    %v1128 = vmul.f32 %v1121, %v1125
    %v1129 = vmul.f32 %v1120, %v1125
    %v1130 = vmul.f32 %v1119, %v1125
    %v1131 = vmul.f32 %v1118, %v1125
    %v1132 = vmul.f32 %v1117, %v1125
    %v1133 = vmul.f32 %v1116, %v1125
    %v1134 = vadd.f32 %v1092, %v1126
    %v1135 = vadd.f32 %v1093, %v1127
    %v1136 = vadd.f32 %v1094, %v1128
    %v1137 = vadd.f32 %v1095, %v1129
    %v1138 = vadd.f32 %v1096, %v1130
    %v1139 = vadd.f32 %v1097, %v1131
    %v1140 = vadd.f32 %v1098, %v1132
    %v1141 = vadd.f32 %v1099, %v1133
    %1142 = vrot.lane.b32.xlu0 %v956, 127
    %v1143 = vpop.permute.xlu0 %1142
    %1144 = vrot.lane.b32.xlu0 %v957, 127
    %v1145 = vpop.permute.xlu0 %1144
    %1146 = vrot.lane.b32.xlu0 %v958, 127
    %v1147 = vpop.permute.xlu0 %1146
    %1148 = vrot.lane.b32.xlu0 %v959, 127
    %v1149 = vpop.permute.xlu0 %1148
    %1150 = vrot.lane.b32.xlu0 %v960, 127
    %v1151 = vpop.permute.xlu0 %1150
    %1152 = vrot.lane.b32.xlu0 %v961, 127
    %v1153 = vpop.permute.xlu0 %1152
    %1154 = vrot.lane.b32.xlu0 %v962, 127
    %v1155 = vpop.permute.xlu0 %1154
    %1156 = vrot.lane.b32.xlu0 %v963, 127
    %v1157 = vpop.permute.xlu0 %1156
    %v1158 = vsel %vm309, %v1155, %v1157
    %v1159 = vsel %vm309, %v1153, %v1155
    %v1160 = vsel %vm309, %v1151, %v1153
    %v1161 = vsel %vm309, %v1149, %v1151
    %v1162 = vsel %vm309, %v1147, %v1149
    %v1163 = vsel %vm309, %v1145, %v1147
    %v1164 = vsel %vm309, %v1143, %v1145
    %v1165 = vsel %vm309, %v1157, %v1143
    %s1166 = sld [smem:[#allocation7 + $0x17]]
    %v1167 = vstv %s1166
    %v1168 = vmul.f32 %v1164, %v1167
    %v1169 = vmul.f32 %v1163, %v1167
    %v1170 = vmul.f32 %v1162, %v1167
    %v1171 = vmul.f32 %v1161, %v1167
    %v1172 = vmul.f32 %v1160, %v1167
    %v1173 = vmul.f32 %v1159, %v1167
    %v1174 = vmul.f32 %v1158, %v1167
    %v1175 = vmul.f32 %v1165, %v1167
    %v1176 = vadd.f32 %v1134, %v1168
    %v1177 = vadd.f32 %v1135, %v1169
    %v1178 = vadd.f32 %v1136, %v1170
    %v1179 = vadd.f32 %v1137, %v1171
    %v1180 = vadd.f32 %v1138, %v1172
    %v1181 = vadd.f32 %v1139, %v1173
    %v1182 = vadd.f32 %v1140, %v1174
    %v1183 = vadd.f32 %v1141, %v1175
    %1184 = vrot.lane.b32.xlu0 %v956, 97
    %v1185 = vpop.permute.xlu0 %1184
    %1186 = vrot.lane.b32.xlu0 %v957, 97
    %v1187 = vpop.permute.xlu0 %1186
    %1188 = vrot.lane.b32.xlu0 %v958, 97
    %v1189 = vpop.permute.xlu0 %1188
    %1190 = vrot.lane.b32.xlu0 %v959, 97
    %v1191 = vpop.permute.xlu0 %1190
    %1192 = vrot.lane.b32.xlu0 %v960, 97
    %v1193 = vpop.permute.xlu0 %1192
    %1194 = vrot.lane.b32.xlu0 %v961, 97
    %v1195 = vpop.permute.xlu0 %1194
    %1196 = vrot.lane.b32.xlu0 %v962, 97
    %v1197 = vpop.permute.xlu0 %1196
    %1198 = vrot.lane.b32.xlu0 %v963, 97
    %v1199 = vpop.permute.xlu0 %1198
    %v1200 = vsel %vm352, %v1197, %v1199
    %v1201 = vsel %vm352, %v1195, %v1197
    %v1202 = vsel %vm352, %v1193, %v1195
    %v1203 = vsel %vm352, %v1191, %v1193
    %v1204 = vsel %vm352, %v1189, %v1191
    %v1205 = vsel %vm352, %v1187, %v1189
    %v1206 = vsel %vm352, %v1185, %v1187
    %v1207 = vsel %vm352, %v1199, %v1185
    %s1208 = sld [smem:[#allocation7 + $0x18]]
    %v1209 = vstv %s1208
    %v1210 = vmul.f32 %v1206, %v1209
    %v1211 = vmul.f32 %v1205, %v1209
    %v1212 = vmul.f32 %v1204, %v1209
    %v1213 = vmul.f32 %v1203, %v1209
    %v1214 = vmul.f32 %v1202, %v1209
    %v1215 = vmul.f32 %v1201, %v1209
    %v1216 = vmul.f32 %v1200, %v1209
    %v1217 = vmul.f32 %v1207, %v1209
    %v1218 = vadd.f32 %v1176, %v1210
    %v1219 = vadd.f32 %v1177, %v1211
    %v1220 = vadd.f32 %v1178, %v1212
    %v1221 = vadd.f32 %v1179, %v1213
    %v1222 = vadd.f32 %v1180, %v1214
    %v1223 = vadd.f32 %v1181, %v1215
    %v1224 = vadd.f32 %v1182, %v1216
    %v1225 = vadd.f32 %v1183, %v1217
    %1226 = vrot.lane.b32.xlu0 %v956, 96
    %v1227 = vpop.permute.xlu0 %1226
    %1228 = vrot.lane.b32.xlu0 %v957, 96
    %v1229 = vpop.permute.xlu0 %1228
    %1230 = vrot.lane.b32.xlu0 %v958, 96
    %v1231 = vpop.permute.xlu0 %1230
    %1232 = vrot.lane.b32.xlu0 %v959, 96
    %v1233 = vpop.permute.xlu0 %1232
    %1234 = vrot.lane.b32.xlu0 %v960, 96
    %v1235 = vpop.permute.xlu0 %1234
    %1236 = vrot.lane.b32.xlu0 %v961, 96
    %v1237 = vpop.permute.xlu0 %1236
    %1238 = vrot.lane.b32.xlu0 %v962, 96
    %v1239 = vpop.permute.xlu0 %1238
    %1240 = vrot.lane.b32.xlu0 %v963, 96
    %v1241 = vpop.permute.xlu0 %1240
    %v1242 = vsel %vm395, %v1239, %v1241
    %v1243 = vsel %vm395, %v1237, %v1239
    %v1244 = vsel %vm395, %v1235, %v1237
    %v1245 = vsel %vm395, %v1233, %v1235
    %v1246 = vsel %vm395, %v1231, %v1233
    %v1247 = vsel %vm395, %v1229, %v1231
    %v1248 = vsel %vm395, %v1227, %v1229
    %v1249 = vsel %vm395, %v1241, %v1227
    %s1250 = sld [smem:[#allocation7 + $0x19]]
    %v1251 = vstv %s1250
    %v1252 = vmul.f32 %v1248, %v1251
    %v1253 = vmul.f32 %v1247, %v1251
    %v1254 = vmul.f32 %v1246, %v1251
    %v1255 = vmul.f32 %v1245, %v1251
    %v1256 = vmul.f32 %v1244, %v1251
    %v1257 = vmul.f32 %v1243, %v1251
    %v1258 = vmul.f32 %v1242, %v1251
    %v1259 = vmul.f32 %v1249, %v1251
    %v1260 = vadd.f32 %v1218, %v1252
    %v1261 = vadd.f32 %v1219, %v1253
    %v1262 = vadd.f32 %v1220, %v1254
    %v1263 = vadd.f32 %v1221, %v1255
    %v1264 = vadd.f32 %v1222, %v1256
    %v1265 = vadd.f32 %v1223, %v1257
    %v1266 = vadd.f32 %v1224, %v1258
    %v1267 = vadd.f32 %v1225, %v1259
    %1268 = vrot.lane.b32.xlu0 %v956, 95
    %v1269 = vpop.permute.xlu0 %1268
    %1270 = vrot.lane.b32.xlu0 %v957, 95
    %v1271 = vpop.permute.xlu0 %1270
    %1272 = vrot.lane.b32.xlu0 %v958, 95
    %v1273 = vpop.permute.xlu0 %1272
    %1274 = vrot.lane.b32.xlu0 %v959, 95
    %v1275 = vpop.permute.xlu0 %1274
    %1276 = vrot.lane.b32.xlu0 %v960, 95
    %v1277 = vpop.permute.xlu0 %1276
    %1278 = vrot.lane.b32.xlu0 %v961, 95
    %v1279 = vpop.permute.xlu0 %1278
    %1280 = vrot.lane.b32.xlu0 %v962, 95
    %v1281 = vpop.permute.xlu0 %1280
    %1282 = vrot.lane.b32.xlu0 %v963, 95
    %v1283 = vpop.permute.xlu0 %1282
    %v1284 = vsel %vm438, %v1281, %v1283
    %v1285 = vsel %vm438, %v1279, %v1281
    %v1286 = vsel %vm438, %v1277, %v1279
    %v1287 = vsel %vm438, %v1275, %v1277
    %v1288 = vsel %vm438, %v1273, %v1275
    %v1289 = vsel %vm438, %v1271, %v1273
    %v1290 = vsel %vm438, %v1269, %v1271
    %v1291 = vsel %vm438, %v1283, %v1269
    %s1292 = sld [smem:[#allocation7 + $0x1a]]
    %v1293 = vstv %s1292
    %v1294 = vmul.f32 %v1290, %v1293
    %v1295 = vmul.f32 %v1289, %v1293
    %v1296 = vmul.f32 %v1288, %v1293
    %v1297 = vmul.f32 %v1287, %v1293
    %v1298 = vmul.f32 %v1286, %v1293
    %v1299 = vmul.f32 %v1285, %v1293
    %v1300 = vmul.f32 %v1284, %v1293
    %v1301 = vmul.f32 %v1291, %v1293
    %v1302 = vadd.f32 %v1260, %v1294
    %v1303 = vadd.f32 %v1261, %v1295
    %v1304 = vadd.f32 %v1262, %v1296
    %v1305 = vadd.f32 %v1263, %v1297
    %v1306 = vadd.f32 %v1264, %v1298
    %v1307 = vadd.f32 %v1265, %v1299
    %v1308 = vadd.f32 %v1266, %v1300
    %v1309 = vadd.f32 %v1267, %v1301
    %s1310 = scalar_lea.vmem %s4, 128
    %v1311 = vld [vmem:[%s1310] sm:$0xff]
    %v1312 = vld [vmem:[%s1310 + $0x8] sm:$0xff]
    %v1313 = vld [vmem:[%s1310 + $0x10] sm:$0xff]
    %v1314 = vld [vmem:[%s1310 + $0x18] sm:$0xff]
    %v1315 = vld [vmem:[%s1310 + $0x20] sm:$0xff]
    %v1316 = vld [vmem:[%s1310 + $0x28] sm:$0xff]
    %v1317 = vld [vmem:[%s1310 + $0x30] sm:$0xff]
    %v1318 = vld [vmem:[%s1310 + $0x38] sm:$0xff]
    %v1319 = vadd.f32 %v1302, %v1311
    %v1320 = vadd.f32 %v1303, %v1312
    %v1321 = vadd.f32 %v1304, %v1313
    %v1322 = vadd.f32 %v1305, %v1314
    %v1323 = vadd.f32 %v1306, %v1315
    %v1324 = vadd.f32 %v1307, %v1316
    %v1325 = vadd.f32 %v1308, %v1317
    %v1326 = vadd.f32 %v1309, %v1318
    %v1327 = vmax.f32 %v1319, 0.0
    %v1328 = vmax.f32 %v1320, 0.0
    %v1329 = vmax.f32 %v1321, 0.0
    %v1330 = vmax.f32 %v1322, 0.0
    %v1331 = vmax.f32 %v1323, 0.0
    %v1332 = vmax.f32 %v1324, 0.0
    %v1333 = vmax.f32 %v1325, 0.0
    %v1334 = vmax.f32 %v1326, 0.0
    %v1335 = vmin.f32 %v1327, 6.0
    %v1336 = vmin.f32 %v1328, 6.0
    %v1337 = vmin.f32 %v1329, 6.0
    %v1338 = vmin.f32 %v1330, 6.0
    %v1339 = vmin.f32 %v1331, 6.0
    %v1340 = vmin.f32 %v1332, 6.0
    %v1341 = vmin.f32 %v1333, 6.0
    %v1342 = vmin.f32 %v1334, 6.0
    %1343 = vst [vmem:[#allocation2 + $0x80] sm:$0xff] %v1335
    %1344 = vst [vmem:[#allocation2 + $0x88] sm:$0xff] %v1336
    %1345 = vst [vmem:[#allocation2 + $0x90] sm:$0xff] %v1337
    %1346 = vst [vmem:[#allocation2 + $0x98] sm:$0xff] %v1338
    %1347 = vst [vmem:[#allocation2 + $0xa0] sm:$0xff] %v1339
    %1348 = vst [vmem:[#allocation2 + $0xa8] sm:$0xff] %v1340
    %1349 = vst [vmem:[#allocation2 + $0xb0] sm:$0xff] %v1341
    %1350 = vst [vmem:[#allocation2 + $0xb8] sm:$0xff] %v1342
    %s1351 = sld [smem:[#allocation3 + $0x3]]
    %v1352 = vstv %s1351
    %v1353 = vmul.f32 %v65, %v1352
    %v1354 = vmul.f32 %v66, %v1352
    %v1355 = vmul.f32 %v67, %v1352
    %v1356 = vmul.f32 %v68, %v1352
    %v1357 = vmul.f32 %v69, %v1352
    %v1358 = vmul.f32 %v70, %v1352
    %v1359 = vmul.f32 %v71, %v1352
    %v1360 = vmul.f32 %v72, %v1352
    %s1361 = sld [smem:[#allocation5 + $0x3]]
    %v1362 = vstv %s1361
    %v1363 = vadd.f32 %v1353, %v1362
    %v1364 = vadd.f32 %v1354, %v1362
    %v1365 = vadd.f32 %v1355, %v1362
    %v1366 = vadd.f32 %v1356, %v1362
    %v1367 = vadd.f32 %v1357, %v1362
    %v1368 = vadd.f32 %v1358, %v1362
    %v1369 = vadd.f32 %v1359, %v1362
    %v1370 = vadd.f32 %v1360, %v1362
    %v1371 = vmax.f32 %v1363, 0.0
    %v1372 = vmax.f32 %v1364, 0.0
    %v1373 = vmax.f32 %v1365, 0.0
    %v1374 = vmax.f32 %v1366, 0.0
    %v1375 = vmax.f32 %v1367, 0.0
    %v1376 = vmax.f32 %v1368, 0.0
    %v1377 = vmax.f32 %v1369, 0.0
    %v1378 = vmax.f32 %v1370, 0.0
    %v1379 = vmin.f32 %v1371, 6.0
    %v1380 = vmin.f32 %v1372, 6.0
    %v1381 = vmin.f32 %v1373, 6.0
    %v1382 = vmin.f32 %v1374, 6.0
    %v1383 = vmin.f32 %v1375, 6.0
    %v1384 = vmin.f32 %v1376, 6.0
    %v1385 = vmin.f32 %v1377, 6.0
    %v1386 = vmin.f32 %v1378, 6.0
    %s1387 = sld [smem:[#allocation7 + $0x1f]]
    %v1388 = vstv %s1387
    %v1389 = vmul.f32 %v1379, %v1388
    %v1390 = vmul.f32 %v1380, %v1388
    %v1391 = vmul.f32 %v1381, %v1388
    %v1392 = vmul.f32 %v1382, %v1388
    %v1393 = vmul.f32 %v1383, %v1388
    %v1394 = vmul.f32 %v1384, %v1388
    %v1395 = vmul.f32 %v1385, %v1388
    %v1396 = vmul.f32 %v1386, %v1388
    %1397 = vrot.lane.b32.xlu0 %v1379, 33
    %v1398 = vpop.permute.xlu0 %1397
    %1399 = vrot.lane.b32.xlu0 %v1380, 33
    %v1400 = vpop.permute.xlu0 %1399
    %1401 = vrot.lane.b32.xlu0 %v1381, 33
    %v1402 = vpop.permute.xlu0 %1401
    %1403 = vrot.lane.b32.xlu0 %v1382, 33
    %v1404 = vpop.permute.xlu0 %1403
    %1405 = vrot.lane.b32.xlu0 %v1383, 33
    %v1406 = vpop.permute.xlu0 %1405
    %1407 = vrot.lane.b32.xlu0 %v1384, 33
    %v1408 = vpop.permute.xlu0 %1407
    %1409 = vrot.lane.b32.xlu0 %v1385, 33
    %v1410 = vpop.permute.xlu0 %1409
    %1411 = vrot.lane.b32.xlu0 %v1386, 33
    %v1412 = vpop.permute.xlu0 %1411
    %v1413 = vsel %vm137, %v1410, %v1412
    %v1414 = vsel %vm137, %v1408, %v1410
    %v1415 = vsel %vm137, %v1406, %v1408
    %v1416 = vsel %vm137, %v1404, %v1406
    %v1417 = vsel %vm137, %v1402, %v1404
    %v1418 = vsel %vm137, %v1400, %v1402
    %v1419 = vsel %vm137, %v1398, %v1400
    %v1420 = vsel %vm137, %v1412, %v1398
    %s1421 = sld [smem:[#allocation7 + $0x1b]]
    %v1422 = vstv %s1421
    %v1423 = vmul.f32 %v1420, %v1422
    %v1424 = vmul.f32 %v1419, %v1422
    %v1425 = vmul.f32 %v1418, %v1422
    %v1426 = vmul.f32 %v1417, %v1422
    %v1427 = vmul.f32 %v1416, %v1422
    %v1428 = vmul.f32 %v1415, %v1422
    %v1429 = vmul.f32 %v1414, %v1422
    %v1430 = vmul.f32 %v1413, %v1422
    %v1431 = vadd.f32 %v1389, %v1423
    %v1432 = vadd.f32 %v1390, %v1424
    %v1433 = vadd.f32 %v1391, %v1425
    %v1434 = vadd.f32 %v1392, %v1426
    %v1435 = vadd.f32 %v1393, %v1427
    %v1436 = vadd.f32 %v1394, %v1428
    %v1437 = vadd.f32 %v1395, %v1429
    %v1438 = vadd.f32 %v1396, %v1430
    %1439 = vrot.lane.b32.xlu0 %v1379, 32
    %v1440 = vpop.permute.xlu0 %1439
    %1441 = vrot.lane.b32.xlu0 %v1380, 32
    %v1442 = vpop.permute.xlu0 %1441
    %1443 = vrot.lane.b32.xlu0 %v1381, 32
    %v1444 = vpop.permute.xlu0 %1443
    %1445 = vrot.lane.b32.xlu0 %v1382, 32
    %v1446 = vpop.permute.xlu0 %1445
    %1447 = vrot.lane.b32.xlu0 %v1383, 32
    %v1448 = vpop.permute.xlu0 %1447
    %1449 = vrot.lane.b32.xlu0 %v1384, 32
    %v1450 = vpop.permute.xlu0 %1449
    %1451 = vrot.lane.b32.xlu0 %v1385, 32
    %v1452 = vpop.permute.xlu0 %1451
    %1453 = vrot.lane.b32.xlu0 %v1386, 32
    %v1454 = vpop.permute.xlu0 %1453
    %v1455 = vsel %vm180, %v1452, %v1454
    %v1456 = vsel %vm180, %v1450, %v1452
    %v1457 = vsel %vm180, %v1448, %v1450
    %v1458 = vsel %vm180, %v1446, %v1448
    %v1459 = vsel %vm180, %v1444, %v1446
    %v1460 = vsel %vm180, %v1442, %v1444
    %v1461 = vsel %vm180, %v1440, %v1442
    %v1462 = vsel %vm180, %v1454, %v1440
    %s1463 = sld [smem:[#allocation7 + $0x1c]]
    %v1464 = vstv %s1463
    %v1465 = vmul.f32 %v1462, %v1464
    %v1466 = vmul.f32 %v1461, %v1464
    %v1467 = vmul.f32 %v1460, %v1464
    %v1468 = vmul.f32 %v1459, %v1464
    %v1469 = vmul.f32 %v1458, %v1464
    %v1470 = vmul.f32 %v1457, %v1464
    %v1471 = vmul.f32 %v1456, %v1464
    %v1472 = vmul.f32 %v1455, %v1464
    %v1473 = vadd.f32 %v1431, %v1465
    %v1474 = vadd.f32 %v1432, %v1466
    %v1475 = vadd.f32 %v1433, %v1467
    %v1476 = vadd.f32 %v1434, %v1468
    %v1477 = vadd.f32 %v1435, %v1469
    %v1478 = vadd.f32 %v1436, %v1470
    %v1479 = vadd.f32 %v1437, %v1471
    %v1480 = vadd.f32 %v1438, %v1472
    %1481 = vrot.lane.b32.xlu0 %v1379, 31
    %v1482 = vpop.permute.xlu0 %1481
    %1483 = vrot.lane.b32.xlu0 %v1380, 31
    %v1484 = vpop.permute.xlu0 %1483
    %1485 = vrot.lane.b32.xlu0 %v1381, 31
    %v1486 = vpop.permute.xlu0 %1485
    %1487 = vrot.lane.b32.xlu0 %v1382, 31
    %v1488 = vpop.permute.xlu0 %1487
    %1489 = vrot.lane.b32.xlu0 %v1383, 31
    %v1490 = vpop.permute.xlu0 %1489
    %1491 = vrot.lane.b32.xlu0 %v1384, 31
    %v1492 = vpop.permute.xlu0 %1491
    %1493 = vrot.lane.b32.xlu0 %v1385, 31
    %v1494 = vpop.permute.xlu0 %1493
    %1495 = vrot.lane.b32.xlu0 %v1386, 31
    %v1496 = vpop.permute.xlu0 %1495
    %v1497 = vsel %vm223, %v1494, %v1496
    %v1498 = vsel %vm223, %v1492, %v1494
    %v1499 = vsel %vm223, %v1490, %v1492
    %v1500 = vsel %vm223, %v1488, %v1490
    %v1501 = vsel %vm223, %v1486, %v1488
    %v1502 = vsel %vm223, %v1484, %v1486
    %v1503 = vsel %vm223, %v1482, %v1484
    %v1504 = vsel %vm223, %v1496, %v1482
    %s1505 = sld [smem:[#allocation7 + $0x1d]]
    %v1506 = vstv %s1505
    %v1507 = vmul.f32 %v1504, %v1506
    %v1508 = vmul.f32 %v1503, %v1506
    %v1509 = vmul.f32 %v1502, %v1506
    %v1510 = vmul.f32 %v1501, %v1506
    %v1511 = vmul.f32 %v1500, %v1506
    %v1512 = vmul.f32 %v1499, %v1506
    %v1513 = vmul.f32 %v1498, %v1506
    %v1514 = vmul.f32 %v1497, %v1506
    %v1515 = vadd.f32 %v1473, %v1507
    %v1516 = vadd.f32 %v1474, %v1508
    %v1517 = vadd.f32 %v1475, %v1509
    %v1518 = vadd.f32 %v1476, %v1510
    %v1519 = vadd.f32 %v1477, %v1511
    %v1520 = vadd.f32 %v1478, %v1512
    %v1521 = vadd.f32 %v1479, %v1513
    %v1522 = vadd.f32 %v1480, %v1514
    %1523 = vrot.lane.b32.xlu0 %v1379, 1
    %v1524 = vpop.permute.xlu0 %1523
    %1525 = vrot.lane.b32.xlu0 %v1380, 1
    %v1526 = vpop.permute.xlu0 %1525
    %1527 = vrot.lane.b32.xlu0 %v1381, 1
    %v1528 = vpop.permute.xlu0 %1527
    %1529 = vrot.lane.b32.xlu0 %v1382, 1
    %v1530 = vpop.permute.xlu0 %1529
    %1531 = vrot.lane.b32.xlu0 %v1383, 1
    %v1532 = vpop.permute.xlu0 %1531
    %1533 = vrot.lane.b32.xlu0 %v1384, 1
    %v1534 = vpop.permute.xlu0 %1533
    %1535 = vrot.lane.b32.xlu0 %v1385, 1
    %v1536 = vpop.permute.xlu0 %1535
    %1537 = vrot.lane.b32.xlu0 %v1386, 1
    %v1538 = vpop.permute.xlu0 %1537
    %v1539 = vsel %vm266, %v1536, %v1538
    %v1540 = vsel %vm266, %v1534, %v1536
    %v1541 = vsel %vm266, %v1532, %v1534
    %v1542 = vsel %vm266, %v1530, %v1532
    %v1543 = vsel %vm266, %v1528, %v1530
    %v1544 = vsel %vm266, %v1526, %v1528
    %v1545 = vsel %vm266, %v1524, %v1526
    %v1546 = vsel %vm266, %v1538, %v1524
    %s1547 = sld [smem:[#allocation7 + $0x1e]]
    %v1548 = vstv %s1547
    %v1549 = vmul.f32 %v1546, %v1548
    %v1550 = vmul.f32 %v1545, %v1548
    %v1551 = vmul.f32 %v1544, %v1548
    %v1552 = vmul.f32 %v1543, %v1548
    %v1553 = vmul.f32 %v1542, %v1548
    %v1554 = vmul.f32 %v1541, %v1548
    %v1555 = vmul.f32 %v1540, %v1548
    %v1556 = vmul.f32 %v1539, %v1548
    %v1557 = vadd.f32 %v1515, %v1549
    %v1558 = vadd.f32 %v1516, %v1550
    %v1559 = vadd.f32 %v1517, %v1551
    %v1560 = vadd.f32 %v1518, %v1552
    %v1561 = vadd.f32 %v1519, %v1553
    %v1562 = vadd.f32 %v1520, %v1554
    %v1563 = vadd.f32 %v1521, %v1555
    %v1564 = vadd.f32 %v1522, %v1556
    %1565 = vrot.lane.b32.xlu0 %v1379, 127
    %v1566 = vpop.permute.xlu0 %1565
    %1567 = vrot.lane.b32.xlu0 %v1380, 127
    %v1568 = vpop.permute.xlu0 %1567
    %1569 = vrot.lane.b32.xlu0 %v1381, 127
    %v1570 = vpop.permute.xlu0 %1569
    %1571 = vrot.lane.b32.xlu0 %v1382, 127
    %v1572 = vpop.permute.xlu0 %1571
    %1573 = vrot.lane.b32.xlu0 %v1383, 127
    %v1574 = vpop.permute.xlu0 %1573
    %1575 = vrot.lane.b32.xlu0 %v1384, 127
    %v1576 = vpop.permute.xlu0 %1575
    %1577 = vrot.lane.b32.xlu0 %v1385, 127
    %v1578 = vpop.permute.xlu0 %1577
    %1579 = vrot.lane.b32.xlu0 %v1386, 127
    %v1580 = vpop.permute.xlu0 %1579
    %v1581 = vsel %vm309, %v1578, %v1580
    %v1582 = vsel %vm309, %v1576, %v1578
    %v1583 = vsel %vm309, %v1574, %v1576
    %v1584 = vsel %vm309, %v1572, %v1574
    %v1585 = vsel %vm309, %v1570, %v1572
    %v1586 = vsel %vm309, %v1568, %v1570
    %v1587 = vsel %vm309, %v1566, %v1568
    %v1588 = vsel %vm309, %v1580, %v1566
    %s1589 = sld [smem:[#allocation7 + $0x20]]
    %v1590 = vstv %s1589
    %v1591 = vmul.f32 %v1587, %v1590
    %v1592 = vmul.f32 %v1586, %v1590
    %v1593 = vmul.f32 %v1585, %v1590
    %v1594 = vmul.f32 %v1584, %v1590
    %v1595 = vmul.f32 %v1583, %v1590
    %v1596 = vmul.f32 %v1582, %v1590
    %v1597 = vmul.f32 %v1581, %v1590
    %v1598 = vmul.f32 %v1588, %v1590
    %v1599 = vadd.f32 %v1557, %v1591
    %v1600 = vadd.f32 %v1558, %v1592
    %v1601 = vadd.f32 %v1559, %v1593
    %v1602 = vadd.f32 %v1560, %v1594
    %v1603 = vadd.f32 %v1561, %v1595
    %v1604 = vadd.f32 %v1562, %v1596
    %v1605 = vadd.f32 %v1563, %v1597
    %v1606 = vadd.f32 %v1564, %v1598
    %1607 = vrot.lane.b32.xlu0 %v1379, 97
    %v1608 = vpop.permute.xlu0 %1607
    %1609 = vrot.lane.b32.xlu0 %v1380, 97
    %v1610 = vpop.permute.xlu0 %1609
    %1611 = vrot.lane.b32.xlu0 %v1381, 97
    %v1612 = vpop.permute.xlu0 %1611
    %1613 = vrot.lane.b32.xlu0 %v1382, 97
    %v1614 = vpop.permute.xlu0 %1613
    %1615 = vrot.lane.b32.xlu0 %v1383, 97
    %v1616 = vpop.permute.xlu0 %1615
    %1617 = vrot.lane.b32.xlu0 %v1384, 97
    %v1618 = vpop.permute.xlu0 %1617
    %1619 = vrot.lane.b32.xlu0 %v1385, 97
    %v1620 = vpop.permute.xlu0 %1619
    %1621 = vrot.lane.b32.xlu0 %v1386, 97
    %v1622 = vpop.permute.xlu0 %1621
    %v1623 = vsel %vm352, %v1620, %v1622
    %v1624 = vsel %vm352, %v1618, %v1620
    %v1625 = vsel %vm352, %v1616, %v1618
    %v1626 = vsel %vm352, %v1614, %v1616
    %v1627 = vsel %vm352, %v1612, %v1614
    %v1628 = vsel %vm352, %v1610, %v1612
    %v1629 = vsel %vm352, %v1608, %v1610
    %v1630 = vsel %vm352, %v1622, %v1608
    %s1631 = sld [smem:[#allocation7 + $0x21]]
    %v1632 = vstv %s1631
    %v1633 = vmul.f32 %v1629, %v1632
    %v1634 = vmul.f32 %v1628, %v1632
    %v1635 = vmul.f32 %v1627, %v1632
    %v1636 = vmul.f32 %v1626, %v1632
    %v1637 = vmul.f32 %v1625, %v1632
    %v1638 = vmul.f32 %v1624, %v1632
    %v1639 = vmul.f32 %v1623, %v1632
    %v1640 = vmul.f32 %v1630, %v1632
    %v1641 = vadd.f32 %v1599, %v1633
    %v1642 = vadd.f32 %v1600, %v1634
    %v1643 = vadd.f32 %v1601, %v1635
    %v1644 = vadd.f32 %v1602, %v1636
    %v1645 = vadd.f32 %v1603, %v1637
    %v1646 = vadd.f32 %v1604, %v1638
    %v1647 = vadd.f32 %v1605, %v1639
    %v1648 = vadd.f32 %v1606, %v1640
    %1649 = vrot.lane.b32.xlu0 %v1379, 96
    %v1650 = vpop.permute.xlu0 %1649
    %1651 = vrot.lane.b32.xlu0 %v1380, 96
    %v1652 = vpop.permute.xlu0 %1651
    %1653 = vrot.lane.b32.xlu0 %v1381, 96
    %v1654 = vpop.permute.xlu0 %1653
    %1655 = vrot.lane.b32.xlu0 %v1382, 96
    %v1656 = vpop.permute.xlu0 %1655
    %1657 = vrot.lane.b32.xlu0 %v1383, 96
    %v1658 = vpop.permute.xlu0 %1657
    %1659 = vrot.lane.b32.xlu0 %v1384, 96
    %v1660 = vpop.permute.xlu0 %1659
    %1661 = vrot.lane.b32.xlu0 %v1385, 96
    %v1662 = vpop.permute.xlu0 %1661
    %1663 = vrot.lane.b32.xlu0 %v1386, 96
    %v1664 = vpop.permute.xlu0 %1663
    %v1665 = vsel %vm395, %v1662, %v1664
    %v1666 = vsel %vm395, %v1660, %v1662
    %v1667 = vsel %vm395, %v1658, %v1660
    %v1668 = vsel %vm395, %v1656, %v1658
    %v1669 = vsel %vm395, %v1654, %v1656
    %v1670 = vsel %vm395, %v1652, %v1654
    %v1671 = vsel %vm395, %v1650, %v1652
    %v1672 = vsel %vm395, %v1664, %v1650
    %s1673 = sld [smem:[#allocation7 + $0x22]]
    %v1674 = vstv %s1673
    %v1675 = vmul.f32 %v1671, %v1674
    %v1676 = vmul.f32 %v1670, %v1674
    %v1677 = vmul.f32 %v1669, %v1674
    %v1678 = vmul.f32 %v1668, %v1674
    %v1679 = vmul.f32 %v1667, %v1674
    %v1680 = vmul.f32 %v1666, %v1674
    %v1681 = vmul.f32 %v1665, %v1674
    %v1682 = vmul.f32 %v1672, %v1674
    %v1683 = vadd.f32 %v1641, %v1675
    %v1684 = vadd.f32 %v1642, %v1676
    %v1685 = vadd.f32 %v1643, %v1677
    %v1686 = vadd.f32 %v1644, %v1678
    %v1687 = vadd.f32 %v1645, %v1679
    %v1688 = vadd.f32 %v1646, %v1680
    %v1689 = vadd.f32 %v1647, %v1681
    %v1690 = vadd.f32 %v1648, %v1682
    %1691 = vrot.lane.b32.xlu0 %v1379, 95
    %v1692 = vpop.permute.xlu0 %1691
    %1693 = vrot.lane.b32.xlu0 %v1380, 95
    %v1694 = vpop.permute.xlu0 %1693
    %1695 = vrot.lane.b32.xlu0 %v1381, 95
    %v1696 = vpop.permute.xlu0 %1695
    %1697 = vrot.lane.b32.xlu0 %v1382, 95
    %v1698 = vpop.permute.xlu0 %1697
    %1699 = vrot.lane.b32.xlu0 %v1383, 95
    %v1700 = vpop.permute.xlu0 %1699
    %1701 = vrot.lane.b32.xlu0 %v1384, 95
    %v1702 = vpop.permute.xlu0 %1701
    %1703 = vrot.lane.b32.xlu0 %v1385, 95
    %v1704 = vpop.permute.xlu0 %1703
    %1705 = vrot.lane.b32.xlu0 %v1386, 95
    %v1706 = vpop.permute.xlu0 %1705
    %v1707 = vsel %vm438, %v1704, %v1706
    %v1708 = vsel %vm438, %v1702, %v1704
    %v1709 = vsel %vm438, %v1700, %v1702
    %v1710 = vsel %vm438, %v1698, %v1700
    %v1711 = vsel %vm438, %v1696, %v1698
    %v1712 = vsel %vm438, %v1694, %v1696
    %v1713 = vsel %vm438, %v1692, %v1694
    %v1714 = vsel %vm438, %v1706, %v1692
    %s1715 = sld [smem:[#allocation7 + $0x23]]
    %v1716 = vstv %s1715
    %v1717 = vmul.f32 %v1713, %v1716
    %v1718 = vmul.f32 %v1712, %v1716
    %v1719 = vmul.f32 %v1711, %v1716
    %v1720 = vmul.f32 %v1710, %v1716
    %v1721 = vmul.f32 %v1709, %v1716
    %v1722 = vmul.f32 %v1708, %v1716
    %v1723 = vmul.f32 %v1707, %v1716
    %v1724 = vmul.f32 %v1714, %v1716
    %v1725 = vadd.f32 %v1683, %v1717
    %v1726 = vadd.f32 %v1684, %v1718
    %v1727 = vadd.f32 %v1685, %v1719
    %v1728 = vadd.f32 %v1686, %v1720
    %v1729 = vadd.f32 %v1687, %v1721
    %v1730 = vadd.f32 %v1688, %v1722
    %v1731 = vadd.f32 %v1689, %v1723
    %v1732 = vadd.f32 %v1690, %v1724
    %s1733 = scalar_lea.vmem %s4, 192
    %v1734 = vld [vmem:[%s1733] sm:$0xff]
    %v1735 = vld [vmem:[%s1733 + $0x8] sm:$0xff]
    %v1736 = vld [vmem:[%s1733 + $0x10] sm:$0xff]
    %v1737 = vld [vmem:[%s1733 + $0x18] sm:$0xff]
    %v1738 = vld [vmem:[%s1733 + $0x20] sm:$0xff]
    %v1739 = vld [vmem:[%s1733 + $0x28] sm:$0xff]
    %v1740 = vld [vmem:[%s1733 + $0x30] sm:$0xff]
    %v1741 = vld [vmem:[%s1733 + $0x38] sm:$0xff]
    %v1742 = vadd.f32 %v1725, %v1734
    %v1743 = vadd.f32 %v1726, %v1735
    %v1744 = vadd.f32 %v1727, %v1736
    %v1745 = vadd.f32 %v1728, %v1737
    %v1746 = vadd.f32 %v1729, %v1738
    %v1747 = vadd.f32 %v1730, %v1739
    %v1748 = vadd.f32 %v1731, %v1740
    %v1749 = vadd.f32 %v1732, %v1741
    %v1750 = vmax.f32 %v1742, 0.0
    %v1751 = vmax.f32 %v1743, 0.0
    %v1752 = vmax.f32 %v1744, 0.0
    %v1753 = vmax.f32 %v1745, 0.0
    %v1754 = vmax.f32 %v1746, 0.0
    %v1755 = vmax.f32 %v1747, 0.0
    %v1756 = vmax.f32 %v1748, 0.0
    %v1757 = vmax.f32 %v1749, 0.0
    %v1758 = vmin.f32 %v1750, 6.0
    %v1759 = vmin.f32 %v1751, 6.0
    %v1760 = vmin.f32 %v1752, 6.0
    %v1761 = vmin.f32 %v1753, 6.0
    %v1762 = vmin.f32 %v1754, 6.0
    %v1763 = vmin.f32 %v1755, 6.0
    %v1764 = vmin.f32 %v1756, 6.0
    %v1765 = vmin.f32 %v1757, 6.0
    %1766 = vst [vmem:[#allocation2 + $0xc0] sm:$0xff] %v1758
    %1767 = vst [vmem:[#allocation2 + $0xc8] sm:$0xff] %v1759
    %1768 = vst [vmem:[#allocation2 + $0xd0] sm:$0xff] %v1760
    %1769 = vst [vmem:[#allocation2 + $0xd8] sm:$0xff] %v1761
    %1770 = vst [vmem:[#allocation2 + $0xe0] sm:$0xff] %v1762
    %1771 = vst [vmem:[#allocation2 + $0xe8] sm:$0xff] %v1763
    %1772 = vst [vmem:[#allocation2 + $0xf0] sm:$0xff] %v1764
    %1773 = vst [vmem:[#allocation2 + $0xf8] sm:$0xff] %v1765
    %s1774 = sld [smem:[#allocation3 + $0x4]]
    %v1775 = vstv %s1774
    %v1776 = vmul.f32 %v65, %v1775
    %v1777 = vmul.f32 %v66, %v1775
    %v1778 = vmul.f32 %v67, %v1775
    %v1779 = vmul.f32 %v68, %v1775
    %v1780 = vmul.f32 %v69, %v1775
    %v1781 = vmul.f32 %v70, %v1775
    %v1782 = vmul.f32 %v71, %v1775
    %v1783 = vmul.f32 %v72, %v1775
    %s1784 = sld [smem:[#allocation5 + $0x4]]
    %v1785 = vstv %s1784
    %v1786 = vadd.f32 %v1776, %v1785
    %v1787 = vadd.f32 %v1777, %v1785
    %v1788 = vadd.f32 %v1778, %v1785
    %v1789 = vadd.f32 %v1779, %v1785
    %v1790 = vadd.f32 %v1780, %v1785
    %v1791 = vadd.f32 %v1781, %v1785
    %v1792 = vadd.f32 %v1782, %v1785
    %v1793 = vadd.f32 %v1783, %v1785
    %v1794 = vmax.f32 %v1786, 0.0
    %v1795 = vmax.f32 %v1787, 0.0
    %v1796 = vmax.f32 %v1788, 0.0
    %v1797 = vmax.f32 %v1789, 0.0
    %v1798 = vmax.f32 %v1790, 0.0
    %v1799 = vmax.f32 %v1791, 0.0
    %v1800 = vmax.f32 %v1792, 0.0
    %v1801 = vmax.f32 %v1793, 0.0
    %v1802 = vmin.f32 %v1794, 6.0
    %v1803 = vmin.f32 %v1795, 6.0
    %v1804 = vmin.f32 %v1796, 6.0
    %v1805 = vmin.f32 %v1797, 6.0
    %v1806 = vmin.f32 %v1798, 6.0
    %v1807 = vmin.f32 %v1799, 6.0
    %v1808 = vmin.f32 %v1800, 6.0
    %v1809 = vmin.f32 %v1801, 6.0
    %s1810 = sld [smem:[#allocation7 + $0x28]]
    %v1811 = vstv %s1810
    %v1812 = vmul.f32 %v1802, %v1811
    %v1813 = vmul.f32 %v1803, %v1811
    %v1814 = vmul.f32 %v1804, %v1811
    %v1815 = vmul.f32 %v1805, %v1811
    %v1816 = vmul.f32 %v1806, %v1811
    %v1817 = vmul.f32 %v1807, %v1811
    %v1818 = vmul.f32 %v1808, %v1811
    %v1819 = vmul.f32 %v1809, %v1811
    %1820 = vrot.lane.b32.xlu0 %v1802, 33
    %v1821 = vpop.permute.xlu0 %1820
    %1822 = vrot.lane.b32.xlu0 %v1803, 33
    %v1823 = vpop.permute.xlu0 %1822
    %1824 = vrot.lane.b32.xlu0 %v1804, 33
    %v1825 = vpop.permute.xlu0 %1824
    %1826 = vrot.lane.b32.xlu0 %v1805, 33
    %v1827 = vpop.permute.xlu0 %1826
    %1828 = vrot.lane.b32.xlu0 %v1806, 33
    %v1829 = vpop.permute.xlu0 %1828
    %1830 = vrot.lane.b32.xlu0 %v1807, 33
    %v1831 = vpop.permute.xlu0 %1830
    %1832 = vrot.lane.b32.xlu0 %v1808, 33
    %v1833 = vpop.permute.xlu0 %1832
    %1834 = vrot.lane.b32.xlu0 %v1809, 33
    %v1835 = vpop.permute.xlu0 %1834
    %v1836 = vsel %vm137, %v1833, %v1835
    %v1837 = vsel %vm137, %v1831, %v1833
    %v1838 = vsel %vm137, %v1829, %v1831
    %v1839 = vsel %vm137, %v1827, %v1829
    %v1840 = vsel %vm137, %v1825, %v1827
    %v1841 = vsel %vm137, %v1823, %v1825
    %v1842 = vsel %vm137, %v1821, %v1823
    %v1843 = vsel %vm137, %v1835, %v1821
    %s1844 = sld [smem:[#allocation7 + $0x24]]
    %v1845 = vstv %s1844
    %v1846 = vmul.f32 %v1843, %v1845
    %v1847 = vmul.f32 %v1842, %v1845
    %v1848 = vmul.f32 %v1841, %v1845
    %v1849 = vmul.f32 %v1840, %v1845
    %v1850 = vmul.f32 %v1839, %v1845
    %v1851 = vmul.f32 %v1838, %v1845
    %v1852 = vmul.f32 %v1837, %v1845
    %v1853 = vmul.f32 %v1836, %v1845
    %v1854 = vadd.f32 %v1812, %v1846
    %v1855 = vadd.f32 %v1813, %v1847
    %v1856 = vadd.f32 %v1814, %v1848
    %v1857 = vadd.f32 %v1815, %v1849
    %v1858 = vadd.f32 %v1816, %v1850
    %v1859 = vadd.f32 %v1817, %v1851
    %v1860 = vadd.f32 %v1818, %v1852
    %v1861 = vadd.f32 %v1819, %v1853
    %1862 = vrot.lane.b32.xlu0 %v1802, 32
    %v1863 = vpop.permute.xlu0 %1862
    %1864 = vrot.lane.b32.xlu0 %v1803, 32
    %v1865 = vpop.permute.xlu0 %1864
    %1866 = vrot.lane.b32.xlu0 %v1804, 32
    %v1867 = vpop.permute.xlu0 %1866
    %1868 = vrot.lane.b32.xlu0 %v1805, 32
    %v1869 = vpop.permute.xlu0 %1868
    %1870 = vrot.lane.b32.xlu0 %v1806, 32
    %v1871 = vpop.permute.xlu0 %1870
    %1872 = vrot.lane.b32.xlu0 %v1807, 32
    %v1873 = vpop.permute.xlu0 %1872
    %1874 = vrot.lane.b32.xlu0 %v1808, 32
    %v1875 = vpop.permute.xlu0 %1874
    %1876 = vrot.lane.b32.xlu0 %v1809, 32
    %v1877 = vpop.permute.xlu0 %1876
    %v1878 = vsel %vm180, %v1875, %v1877
    %v1879 = vsel %vm180, %v1873, %v1875
    %v1880 = vsel %vm180, %v1871, %v1873
    %v1881 = vsel %vm180, %v1869, %v1871
    %v1882 = vsel %vm180, %v1867, %v1869
    %v1883 = vsel %vm180, %v1865, %v1867
    %v1884 = vsel %vm180, %v1863, %v1865
    %v1885 = vsel %vm180, %v1877, %v1863
    %s1886 = sld [smem:[#allocation7 + $0x25]]
    %v1887 = vstv %s1886
    %v1888 = vmul.f32 %v1885, %v1887
    %v1889 = vmul.f32 %v1884, %v1887
    %v1890 = vmul.f32 %v1883, %v1887
    %v1891 = vmul.f32 %v1882, %v1887
    %v1892 = vmul.f32 %v1881, %v1887
    %v1893 = vmul.f32 %v1880, %v1887
    %v1894 = vmul.f32 %v1879, %v1887
    %v1895 = vmul.f32 %v1878, %v1887
    %v1896 = vadd.f32 %v1854, %v1888
    %v1897 = vadd.f32 %v1855, %v1889
    %v1898 = vadd.f32 %v1856, %v1890
    %v1899 = vadd.f32 %v1857, %v1891
    %v1900 = vadd.f32 %v1858, %v1892
    %v1901 = vadd.f32 %v1859, %v1893
    %v1902 = vadd.f32 %v1860, %v1894
    %v1903 = vadd.f32 %v1861, %v1895
    %1904 = vrot.lane.b32.xlu0 %v1802, 31
    %v1905 = vpop.permute.xlu0 %1904
    %1906 = vrot.lane.b32.xlu0 %v1803, 31
    %v1907 = vpop.permute.xlu0 %1906
    %1908 = vrot.lane.b32.xlu0 %v1804, 31
    %v1909 = vpop.permute.xlu0 %1908
    %1910 = vrot.lane.b32.xlu0 %v1805, 31
    %v1911 = vpop.permute.xlu0 %1910
    %1912 = vrot.lane.b32.xlu0 %v1806, 31
    %v1913 = vpop.permute.xlu0 %1912
    %1914 = vrot.lane.b32.xlu0 %v1807, 31
    %v1915 = vpop.permute.xlu0 %1914
    %1916 = vrot.lane.b32.xlu0 %v1808, 31
    %v1917 = vpop.permute.xlu0 %1916
    %1918 = vrot.lane.b32.xlu0 %v1809, 31
    %v1919 = vpop.permute.xlu0 %1918
    %v1920 = vsel %vm223, %v1917, %v1919
    %v1921 = vsel %vm223, %v1915, %v1917
    %v1922 = vsel %vm223, %v1913, %v1915
    %v1923 = vsel %vm223, %v1911, %v1913
    %v1924 = vsel %vm223, %v1909, %v1911
    %v1925 = vsel %vm223, %v1907, %v1909
    %v1926 = vsel %vm223, %v1905, %v1907
    %v1927 = vsel %vm223, %v1919, %v1905
    %s1928 = sld [smem:[#allocation7 + $0x26]]
    %v1929 = vstv %s1928
    %v1930 = vmul.f32 %v1927, %v1929
    %v1931 = vmul.f32 %v1926, %v1929
    %v1932 = vmul.f32 %v1925, %v1929
    %v1933 = vmul.f32 %v1924, %v1929
    %v1934 = vmul.f32 %v1923, %v1929
    %v1935 = vmul.f32 %v1922, %v1929
    %v1936 = vmul.f32 %v1921, %v1929
    %v1937 = vmul.f32 %v1920, %v1929
    %v1938 = vadd.f32 %v1896, %v1930
    %v1939 = vadd.f32 %v1897, %v1931
    %v1940 = vadd.f32 %v1898, %v1932
    %v1941 = vadd.f32 %v1899, %v1933
    %v1942 = vadd.f32 %v1900, %v1934
    %v1943 = vadd.f32 %v1901, %v1935
    %v1944 = vadd.f32 %v1902, %v1936
    %v1945 = vadd.f32 %v1903, %v1937
    %1946 = vrot.lane.b32.xlu0 %v1802, 1
    %v1947 = vpop.permute.xlu0 %1946
    %1948 = vrot.lane.b32.xlu0 %v1803, 1
    %v1949 = vpop.permute.xlu0 %1948
    %1950 = vrot.lane.b32.xlu0 %v1804, 1
    %v1951 = vpop.permute.xlu0 %1950
    %1952 = vrot.lane.b32.xlu0 %v1805, 1
    %v1953 = vpop.permute.xlu0 %1952
    %1954 = vrot.lane.b32.xlu0 %v1806, 1
    %v1955 = vpop.permute.xlu0 %1954
    %1956 = vrot.lane.b32.xlu0 %v1807, 1
    %v1957 = vpop.permute.xlu0 %1956
    %1958 = vrot.lane.b32.xlu0 %v1808, 1
    %v1959 = vpop.permute.xlu0 %1958
    %1960 = vrot.lane.b32.xlu0 %v1809, 1
    %v1961 = vpop.permute.xlu0 %1960
    %v1962 = vsel %vm266, %v1959, %v1961
    %v1963 = vsel %vm266, %v1957, %v1959
    %v1964 = vsel %vm266, %v1955, %v1957
    %v1965 = vsel %vm266, %v1953, %v1955
    %v1966 = vsel %vm266, %v1951, %v1953
    %v1967 = vsel %vm266, %v1949, %v1951
    %v1968 = vsel %vm266, %v1947, %v1949
    %v1969 = vsel %vm266, %v1961, %v1947
    %s1970 = sld [smem:[#allocation7 + $0x27]]
    %v1971 = vstv %s1970
    %v1972 = vmul.f32 %v1969, %v1971
    %v1973 = vmul.f32 %v1968, %v1971
    %v1974 = vmul.f32 %v1967, %v1971
    %v1975 = vmul.f32 %v1966, %v1971
    %v1976 = vmul.f32 %v1965, %v1971
    %v1977 = vmul.f32 %v1964, %v1971
    %v1978 = vmul.f32 %v1963, %v1971
    %v1979 = vmul.f32 %v1962, %v1971
    %v1980 = vadd.f32 %v1938, %v1972
    %v1981 = vadd.f32 %v1939, %v1973
    %v1982 = vadd.f32 %v1940, %v1974
    %v1983 = vadd.f32 %v1941, %v1975
    %v1984 = vadd.f32 %v1942, %v1976
    %v1985 = vadd.f32 %v1943, %v1977
    %v1986 = vadd.f32 %v1944, %v1978
    %v1987 = vadd.f32 %v1945, %v1979
    %1988 = vrot.lane.b32.xlu0 %v1802, 127
    %v1989 = vpop.permute.xlu0 %1988
    %1990 = vrot.lane.b32.xlu0 %v1803, 127
    %v1991 = vpop.permute.xlu0 %1990
    %1992 = vrot.lane.b32.xlu0 %v1804, 127
    %v1993 = vpop.permute.xlu0 %1992
    %1994 = vrot.lane.b32.xlu0 %v1805, 127
    %v1995 = vpop.permute.xlu0 %1994
    %1996 = vrot.lane.b32.xlu0 %v1806, 127
    %v1997 = vpop.permute.xlu0 %1996
    %1998 = vrot.lane.b32.xlu0 %v1807, 127
    %v1999 = vpop.permute.xlu0 %1998
    %2000 = vrot.lane.b32.xlu0 %v1808, 127
    %v2001 = vpop.permute.xlu0 %2000
    %2002 = vrot.lane.b32.xlu0 %v1809, 127
    %v2003 = vpop.permute.xlu0 %2002
    %v2004 = vsel %vm309, %v2001, %v2003
    %v2005 = vsel %vm309, %v1999, %v2001
    %v2006 = vsel %vm309, %v1997, %v1999
    %v2007 = vsel %vm309, %v1995, %v1997
    %v2008 = vsel %vm309, %v1993, %v1995
    %v2009 = vsel %vm309, %v1991, %v1993
    %v2010 = vsel %vm309, %v1989, %v1991
    %v2011 = vsel %vm309, %v2003, %v1989
    %s2012 = sld [smem:[#allocation7 + $0x29]]
    %v2013 = vstv %s2012
    %v2014 = vmul.f32 %v2010, %v2013
    %v2015 = vmul.f32 %v2009, %v2013
    %v2016 = vmul.f32 %v2008, %v2013
    %v2017 = vmul.f32 %v2007, %v2013
    %v2018 = vmul.f32 %v2006, %v2013
    %v2019 = vmul.f32 %v2005, %v2013
    %v2020 = vmul.f32 %v2004, %v2013
    %v2021 = vmul.f32 %v2011, %v2013
    %v2022 = vadd.f32 %v1980, %v2014
    %v2023 = vadd.f32 %v1981, %v2015
    %v2024 = vadd.f32 %v1982, %v2016
    %v2025 = vadd.f32 %v1983, %v2017
    %v2026 = vadd.f32 %v1984, %v2018
    %v2027 = vadd.f32 %v1985, %v2019
    %v2028 = vadd.f32 %v1986, %v2020
    %v2029 = vadd.f32 %v1987, %v2021
    %2030 = vrot.lane.b32.xlu0 %v1802, 97
    %v2031 = vpop.permute.xlu0 %2030
    %2032 = vrot.lane.b32.xlu0 %v1803, 97
    %v2033 = vpop.permute.xlu0 %2032
    %2034 = vrot.lane.b32.xlu0 %v1804, 97
    %v2035 = vpop.permute.xlu0 %2034
    %2036 = vrot.lane.b32.xlu0 %v1805, 97
    %v2037 = vpop.permute.xlu0 %2036
    %2038 = vrot.lane.b32.xlu0 %v1806, 97
    %v2039 = vpop.permute.xlu0 %2038
    %2040 = vrot.lane.b32.xlu0 %v1807, 97
    %v2041 = vpop.permute.xlu0 %2040
    %2042 = vrot.lane.b32.xlu0 %v1808, 97
    %v2043 = vpop.permute.xlu0 %2042
    %2044 = vrot.lane.b32.xlu0 %v1809, 97
    %v2045 = vpop.permute.xlu0 %2044
    %v2046 = vsel %vm352, %v2043, %v2045
    %v2047 = vsel %vm352, %v2041, %v2043
    %v2048 = vsel %vm352, %v2039, %v2041
    %v2049 = vsel %vm352, %v2037, %v2039
    %v2050 = vsel %vm352, %v2035, %v2037
    %v2051 = vsel %vm352, %v2033, %v2035
    %v2052 = vsel %vm352, %v2031, %v2033
    %v2053 = vsel %vm352, %v2045, %v2031
    %s2054 = sld [smem:[#allocation7 + $0x2a]]
    %v2055 = vstv %s2054
    %v2056 = vmul.f32 %v2052, %v2055
    %v2057 = vmul.f32 %v2051, %v2055
    %v2058 = vmul.f32 %v2050, %v2055
    %v2059 = vmul.f32 %v2049, %v2055
    %v2060 = vmul.f32 %v2048, %v2055
    %v2061 = vmul.f32 %v2047, %v2055
    %v2062 = vmul.f32 %v2046, %v2055
    %v2063 = vmul.f32 %v2053, %v2055
    %v2064 = vadd.f32 %v2022, %v2056
    %v2065 = vadd.f32 %v2023, %v2057
    %v2066 = vadd.f32 %v2024, %v2058
    %v2067 = vadd.f32 %v2025, %v2059
    %v2068 = vadd.f32 %v2026, %v2060
    %v2069 = vadd.f32 %v2027, %v2061
    %v2070 = vadd.f32 %v2028, %v2062
    %v2071 = vadd.f32 %v2029, %v2063
    %2072 = vrot.lane.b32.xlu0 %v1802, 96
    %v2073 = vpop.permute.xlu0 %2072
    %2074 = vrot.lane.b32.xlu0 %v1803, 96
    %v2075 = vpop.permute.xlu0 %2074
    %2076 = vrot.lane.b32.xlu0 %v1804, 96
    %v2077 = vpop.permute.xlu0 %2076
    %2078 = vrot.lane.b32.xlu0 %v1805, 96
    %v2079 = vpop.permute.xlu0 %2078
    %2080 = vrot.lane.b32.xlu0 %v1806, 96
    %v2081 = vpop.permute.xlu0 %2080
    %2082 = vrot.lane.b32.xlu0 %v1807, 96
    %v2083 = vpop.permute.xlu0 %2082
    %2084 = vrot.lane.b32.xlu0 %v1808, 96
    %v2085 = vpop.permute.xlu0 %2084
    %2086 = vrot.lane.b32.xlu0 %v1809, 96
    %v2087 = vpop.permute.xlu0 %2086
    %v2088 = vsel %vm395, %v2085, %v2087
    %v2089 = vsel %vm395, %v2083, %v2085
    %v2090 = vsel %vm395, %v2081, %v2083
    %v2091 = vsel %vm395, %v2079, %v2081
    %v2092 = vsel %vm395, %v2077, %v2079
    %v2093 = vsel %vm395, %v2075, %v2077
    %v2094 = vsel %vm395, %v2073, %v2075
    %v2095 = vsel %vm395, %v2087, %v2073
    %s2096 = sld [smem:[#allocation7 + $0x2b]]
    %v2097 = vstv %s2096
    %v2098 = vmul.f32 %v2094, %v2097
    %v2099 = vmul.f32 %v2093, %v2097
    %v2100 = vmul.f32 %v2092, %v2097
    %v2101 = vmul.f32 %v2091, %v2097
    %v2102 = vmul.f32 %v2090, %v2097
    %v2103 = vmul.f32 %v2089, %v2097
    %v2104 = vmul.f32 %v2088, %v2097
    %v2105 = vmul.f32 %v2095, %v2097
    %v2106 = vadd.f32 %v2064, %v2098
    %v2107 = vadd.f32 %v2065, %v2099
    %v2108 = vadd.f32 %v2066, %v2100
    %v2109 = vadd.f32 %v2067, %v2101
    %v2110 = vadd.f32 %v2068, %v2102
    %v2111 = vadd.f32 %v2069, %v2103
    %v2112 = vadd.f32 %v2070, %v2104
    %v2113 = vadd.f32 %v2071, %v2105
    %2114 = vrot.lane.b32.xlu0 %v1802, 95
    %v2115 = vpop.permute.xlu0 %2114
    %2116 = vrot.lane.b32.xlu0 %v1803, 95
    %v2117 = vpop.permute.xlu0 %2116
    %2118 = vrot.lane.b32.xlu0 %v1804, 95
    %v2119 = vpop.permute.xlu0 %2118
    %2120 = vrot.lane.b32.xlu0 %v1805, 95
    %v2121 = vpop.permute.xlu0 %2120
    %2122 = vrot.lane.b32.xlu0 %v1806, 95
    %v2123 = vpop.permute.xlu0 %2122
    %2124 = vrot.lane.b32.xlu0 %v1807, 95
    %v2125 = vpop.permute.xlu0 %2124
    %2126 = vrot.lane.b32.xlu0 %v1808, 95
    %v2127 = vpop.permute.xlu0 %2126
    %2128 = vrot.lane.b32.xlu0 %v1809, 95
    %v2129 = vpop.permute.xlu0 %2128
    %v2130 = vsel %vm438, %v2127, %v2129
    %v2131 = vsel %vm438, %v2125, %v2127
    %v2132 = vsel %vm438, %v2123, %v2125
    %v2133 = vsel %vm438, %v2121, %v2123
    %v2134 = vsel %vm438, %v2119, %v2121
    %v2135 = vsel %vm438, %v2117, %v2119
    %v2136 = vsel %vm438, %v2115, %v2117
    %v2137 = vsel %vm438, %v2129, %v2115
    %s2138 = sld [smem:[#allocation7 + $0x2c]]
    %v2139 = vstv %s2138
    %v2140 = vmul.f32 %v2136, %v2139
    %v2141 = vmul.f32 %v2135, %v2139
    %v2142 = vmul.f32 %v2134, %v2139
    %v2143 = vmul.f32 %v2133, %v2139
    %v2144 = vmul.f32 %v2132, %v2139
    %v2145 = vmul.f32 %v2131, %v2139
    %v2146 = vmul.f32 %v2130, %v2139
    %v2147 = vmul.f32 %v2137, %v2139
    %v2148 = vadd.f32 %v2106, %v2140
    %v2149 = vadd.f32 %v2107, %v2141
    %v2150 = vadd.f32 %v2108, %v2142
    %v2151 = vadd.f32 %v2109, %v2143
    %v2152 = vadd.f32 %v2110, %v2144
    %v2153 = vadd.f32 %v2111, %v2145
    %v2154 = vadd.f32 %v2112, %v2146
    %v2155 = vadd.f32 %v2113, %v2147
    %s2156 = scalar_lea.vmem %s4, 256
    %v2157 = vld [vmem:[%s2156] sm:$0xff]
    %v2158 = vld [vmem:[%s2156 + $0x8] sm:$0xff]
    %v2159 = vld [vmem:[%s2156 + $0x10] sm:$0xff]
    %v2160 = vld [vmem:[%s2156 + $0x18] sm:$0xff]
    %v2161 = vld [vmem:[%s2156 + $0x20] sm:$0xff]
    %v2162 = vld [vmem:[%s2156 + $0x28] sm:$0xff]
    %v2163 = vld [vmem:[%s2156 + $0x30] sm:$0xff]
    %v2164 = vld [vmem:[%s2156 + $0x38] sm:$0xff]
    %v2165 = vadd.f32 %v2148, %v2157
    %v2166 = vadd.f32 %v2149, %v2158
    %v2167 = vadd.f32 %v2150, %v2159
    %v2168 = vadd.f32 %v2151, %v2160
    %v2169 = vadd.f32 %v2152, %v2161
    %v2170 = vadd.f32 %v2153, %v2162
    %v2171 = vadd.f32 %v2154, %v2163
    %v2172 = vadd.f32 %v2155, %v2164
    %v2173 = vmax.f32 %v2165, 0.0
    %v2174 = vmax.f32 %v2166, 0.0
    %v2175 = vmax.f32 %v2167, 0.0
    %v2176 = vmax.f32 %v2168, 0.0
    %v2177 = vmax.f32 %v2169, 0.0
    %v2178 = vmax.f32 %v2170, 0.0
    %v2179 = vmax.f32 %v2171, 0.0
    %v2180 = vmax.f32 %v2172, 0.0
    %v2181 = vmin.f32 %v2173, 6.0
    %v2182 = vmin.f32 %v2174, 6.0
    %v2183 = vmin.f32 %v2175, 6.0
    %v2184 = vmin.f32 %v2176, 6.0
    %v2185 = vmin.f32 %v2177, 6.0
    %v2186 = vmin.f32 %v2178, 6.0
    %v2187 = vmin.f32 %v2179, 6.0
    %v2188 = vmin.f32 %v2180, 6.0
    %2189 = vst [vmem:[#allocation2 + $0x100] sm:$0xff] %v2181
    %2190 = vst [vmem:[#allocation2 + $0x108] sm:$0xff] %v2182
    %2191 = vst [vmem:[#allocation2 + $0x110] sm:$0xff] %v2183
    %2192 = vst [vmem:[#allocation2 + $0x118] sm:$0xff] %v2184
    %2193 = vst [vmem:[#allocation2 + $0x120] sm:$0xff] %v2185
    %2194 = vst [vmem:[#allocation2 + $0x128] sm:$0xff] %v2186
    %2195 = vst [vmem:[#allocation2 + $0x130] sm:$0xff] %v2187
    %2196 = vst [vmem:[#allocation2 + $0x138] sm:$0xff] %v2188
    %s2197 = sld [smem:[#allocation3 + $0x5]]
    %v2198 = vstv %s2197
    %v2199 = vmul.f32 %v65, %v2198
    %v2200 = vmul.f32 %v66, %v2198
    %v2201 = vmul.f32 %v67, %v2198
    %v2202 = vmul.f32 %v68, %v2198
    %v2203 = vmul.f32 %v69, %v2198
    %v2204 = vmul.f32 %v70, %v2198
    %v2205 = vmul.f32 %v71, %v2198
    %v2206 = vmul.f32 %v72, %v2198
    %s2207 = sld [smem:[#allocation5 + $0x5]]
    %v2208 = vstv %s2207
    %v2209 = vadd.f32 %v2199, %v2208
    %v2210 = vadd.f32 %v2200, %v2208
    %v2211 = vadd.f32 %v2201, %v2208
    %v2212 = vadd.f32 %v2202, %v2208
    %v2213 = vadd.f32 %v2203, %v2208
    %v2214 = vadd.f32 %v2204, %v2208
    %v2215 = vadd.f32 %v2205, %v2208
    %v2216 = vadd.f32 %v2206, %v2208
    %v2217 = vmax.f32 %v2209, 0.0
    %v2218 = vmax.f32 %v2210, 0.0
    %v2219 = vmax.f32 %v2211, 0.0
    %v2220 = vmax.f32 %v2212, 0.0
    %v2221 = vmax.f32 %v2213, 0.0
    %v2222 = vmax.f32 %v2214, 0.0
    %v2223 = vmax.f32 %v2215, 0.0
    %v2224 = vmax.f32 %v2216, 0.0
    %v2225 = vmin.f32 %v2217, 6.0
    %v2226 = vmin.f32 %v2218, 6.0
    %v2227 = vmin.f32 %v2219, 6.0
    %v2228 = vmin.f32 %v2220, 6.0
    %v2229 = vmin.f32 %v2221, 6.0
    %v2230 = vmin.f32 %v2222, 6.0
    %v2231 = vmin.f32 %v2223, 6.0
    %v2232 = vmin.f32 %v2224, 6.0
    %s2233 = sld [smem:[#allocation7 + $0x31]]
    %v2234 = vstv %s2233
    %v2235 = vmul.f32 %v2225, %v2234
    %v2236 = vmul.f32 %v2226, %v2234
    %v2237 = vmul.f32 %v2227, %v2234
    %v2238 = vmul.f32 %v2228, %v2234
    %v2239 = vmul.f32 %v2229, %v2234
    %v2240 = vmul.f32 %v2230, %v2234
    %v2241 = vmul.f32 %v2231, %v2234
    %v2242 = vmul.f32 %v2232, %v2234
    %2243 = vrot.lane.b32.xlu0 %v2225, 33
    %v2244 = vpop.permute.xlu0 %2243
    %2245 = vrot.lane.b32.xlu0 %v2226, 33
    %v2246 = vpop.permute.xlu0 %2245
    %2247 = vrot.lane.b32.xlu0 %v2227, 33
    %v2248 = vpop.permute.xlu0 %2247
    %2249 = vrot.lane.b32.xlu0 %v2228, 33
    %v2250 = vpop.permute.xlu0 %2249
    %2251 = vrot.lane.b32.xlu0 %v2229, 33
    %v2252 = vpop.permute.xlu0 %2251
    %2253 = vrot.lane.b32.xlu0 %v2230, 33
    %v2254 = vpop.permute.xlu0 %2253
    %2255 = vrot.lane.b32.xlu0 %v2231, 33
    %v2256 = vpop.permute.xlu0 %2255
    %2257 = vrot.lane.b32.xlu0 %v2232, 33
    %v2258 = vpop.permute.xlu0 %2257
    %v2259 = vsel %vm137, %v2256, %v2258
    %v2260 = vsel %vm137, %v2254, %v2256
    %v2261 = vsel %vm137, %v2252, %v2254
    %v2262 = vsel %vm137, %v2250, %v2252
    %v2263 = vsel %vm137, %v2248, %v2250
    %v2264 = vsel %vm137, %v2246, %v2248
    %v2265 = vsel %vm137, %v2244, %v2246
    %v2266 = vsel %vm137, %v2258, %v2244
    %s2267 = sld [smem:[#allocation7 + $0x2d]]
    %v2268 = vstv %s2267
    %v2269 = vmul.f32 %v2266, %v2268
    %v2270 = vmul.f32 %v2265, %v2268
    %v2271 = vmul.f32 %v2264, %v2268
    %v2272 = vmul.f32 %v2263, %v2268
    %v2273 = vmul.f32 %v2262, %v2268
    %v2274 = vmul.f32 %v2261, %v2268
    %v2275 = vmul.f32 %v2260, %v2268
    %v2276 = vmul.f32 %v2259, %v2268
    %v2277 = vadd.f32 %v2235, %v2269
    %v2278 = vadd.f32 %v2236, %v2270
    %v2279 = vadd.f32 %v2237, %v2271
    %v2280 = vadd.f32 %v2238, %v2272
    %v2281 = vadd.f32 %v2239, %v2273
    %v2282 = vadd.f32 %v2240, %v2274
    %v2283 = vadd.f32 %v2241, %v2275
    %v2284 = vadd.f32 %v2242, %v2276
    %2285 = vrot.lane.b32.xlu0 %v2225, 32
    %v2286 = vpop.permute.xlu0 %2285
    %2287 = vrot.lane.b32.xlu0 %v2226, 32
    %v2288 = vpop.permute.xlu0 %2287
    %2289 = vrot.lane.b32.xlu0 %v2227, 32
    %v2290 = vpop.permute.xlu0 %2289
    %2291 = vrot.lane.b32.xlu0 %v2228, 32
    %v2292 = vpop.permute.xlu0 %2291
    %2293 = vrot.lane.b32.xlu0 %v2229, 32
    %v2294 = vpop.permute.xlu0 %2293
    %2295 = vrot.lane.b32.xlu0 %v2230, 32
    %v2296 = vpop.permute.xlu0 %2295
    %2297 = vrot.lane.b32.xlu0 %v2231, 32
    %v2298 = vpop.permute.xlu0 %2297
    %2299 = vrot.lane.b32.xlu0 %v2232, 32
    %v2300 = vpop.permute.xlu0 %2299
    %v2301 = vsel %vm180, %v2298, %v2300
    %v2302 = vsel %vm180, %v2296, %v2298
    %v2303 = vsel %vm180, %v2294, %v2296
    %v2304 = vsel %vm180, %v2292, %v2294
    %v2305 = vsel %vm180, %v2290, %v2292
    %v2306 = vsel %vm180, %v2288, %v2290
    %v2307 = vsel %vm180, %v2286, %v2288
    %v2308 = vsel %vm180, %v2300, %v2286
    %s2309 = sld [smem:[#allocation7 + $0x2e]]
    %v2310 = vstv %s2309
    %v2311 = vmul.f32 %v2308, %v2310
    %v2312 = vmul.f32 %v2307, %v2310
    %v2313 = vmul.f32 %v2306, %v2310
    %v2314 = vmul.f32 %v2305, %v2310
    %v2315 = vmul.f32 %v2304, %v2310
    %v2316 = vmul.f32 %v2303, %v2310
    %v2317 = vmul.f32 %v2302, %v2310
    %v2318 = vmul.f32 %v2301, %v2310
    %v2319 = vadd.f32 %v2277, %v2311
    %v2320 = vadd.f32 %v2278, %v2312
    %v2321 = vadd.f32 %v2279, %v2313
    %v2322 = vadd.f32 %v2280, %v2314
    %v2323 = vadd.f32 %v2281, %v2315
    %v2324 = vadd.f32 %v2282, %v2316
    %v2325 = vadd.f32 %v2283, %v2317
    %v2326 = vadd.f32 %v2284, %v2318
    %2327 = vrot.lane.b32.xlu0 %v2225, 31
    %v2328 = vpop.permute.xlu0 %2327
    %2329 = vrot.lane.b32.xlu0 %v2226, 31
    %v2330 = vpop.permute.xlu0 %2329
    %2331 = vrot.lane.b32.xlu0 %v2227, 31
    %v2332 = vpop.permute.xlu0 %2331
    %2333 = vrot.lane.b32.xlu0 %v2228, 31
    %v2334 = vpop.permute.xlu0 %2333
    %2335 = vrot.lane.b32.xlu0 %v2229, 31
    %v2336 = vpop.permute.xlu0 %2335
    %2337 = vrot.lane.b32.xlu0 %v2230, 31
    %v2338 = vpop.permute.xlu0 %2337
    %2339 = vrot.lane.b32.xlu0 %v2231, 31
    %v2340 = vpop.permute.xlu0 %2339
    %2341 = vrot.lane.b32.xlu0 %v2232, 31
    %v2342 = vpop.permute.xlu0 %2341
    %v2343 = vsel %vm223, %v2340, %v2342
    %v2344 = vsel %vm223, %v2338, %v2340
    %v2345 = vsel %vm223, %v2336, %v2338
    %v2346 = vsel %vm223, %v2334, %v2336
    %v2347 = vsel %vm223, %v2332, %v2334
    %v2348 = vsel %vm223, %v2330, %v2332
    %v2349 = vsel %vm223, %v2328, %v2330
    %v2350 = vsel %vm223, %v2342, %v2328
    %s2351 = sld [smem:[#allocation7 + $0x2f]]
    %v2352 = vstv %s2351
    %v2353 = vmul.f32 %v2350, %v2352
    %v2354 = vmul.f32 %v2349, %v2352
    %v2355 = vmul.f32 %v2348, %v2352
    %v2356 = vmul.f32 %v2347, %v2352
    %v2357 = vmul.f32 %v2346, %v2352
    %v2358 = vmul.f32 %v2345, %v2352
    %v2359 = vmul.f32 %v2344, %v2352
    %v2360 = vmul.f32 %v2343, %v2352
    %v2361 = vadd.f32 %v2319, %v2353
    %v2362 = vadd.f32 %v2320, %v2354
    %v2363 = vadd.f32 %v2321, %v2355
    %v2364 = vadd.f32 %v2322, %v2356
    %v2365 = vadd.f32 %v2323, %v2357
    %v2366 = vadd.f32 %v2324, %v2358
    %v2367 = vadd.f32 %v2325, %v2359
    %v2368 = vadd.f32 %v2326, %v2360
    %2369 = vrot.lane.b32.xlu0 %v2225, 1
    %v2370 = vpop.permute.xlu0 %2369
    %2371 = vrot.lane.b32.xlu0 %v2226, 1
    %v2372 = vpop.permute.xlu0 %2371
    %2373 = vrot.lane.b32.xlu0 %v2227, 1
    %v2374 = vpop.permute.xlu0 %2373
    %2375 = vrot.lane.b32.xlu0 %v2228, 1
    %v2376 = vpop.permute.xlu0 %2375
    %2377 = vrot.lane.b32.xlu0 %v2229, 1
    %v2378 = vpop.permute.xlu0 %2377
    %2379 = vrot.lane.b32.xlu0 %v2230, 1
    %v2380 = vpop.permute.xlu0 %2379
    %2381 = vrot.lane.b32.xlu0 %v2231, 1
    %v2382 = vpop.permute.xlu0 %2381
    %2383 = vrot.lane.b32.xlu0 %v2232, 1
    %v2384 = vpop.permute.xlu0 %2383
    %v2385 = vsel %vm266, %v2382, %v2384
    %v2386 = vsel %vm266, %v2380, %v2382
    %v2387 = vsel %vm266, %v2378, %v2380
    %v2388 = vsel %vm266, %v2376, %v2378
    %v2389 = vsel %vm266, %v2374, %v2376
    %v2390 = vsel %vm266, %v2372, %v2374
    %v2391 = vsel %vm266, %v2370, %v2372
    %v2392 = vsel %vm266, %v2384, %v2370
    %s2393 = sld [smem:[#allocation7 + $0x30]]
    %v2394 = vstv %s2393
    %v2395 = vmul.f32 %v2392, %v2394
    %v2396 = vmul.f32 %v2391, %v2394
    %v2397 = vmul.f32 %v2390, %v2394
    %v2398 = vmul.f32 %v2389, %v2394
    %v2399 = vmul.f32 %v2388, %v2394
    %v2400 = vmul.f32 %v2387, %v2394
    %v2401 = vmul.f32 %v2386, %v2394
    %v2402 = vmul.f32 %v2385, %v2394
    %v2403 = vadd.f32 %v2361, %v2395
    %v2404 = vadd.f32 %v2362, %v2396
    %v2405 = vadd.f32 %v2363, %v2397
    %v2406 = vadd.f32 %v2364, %v2398
    %v2407 = vadd.f32 %v2365, %v2399
    %v2408 = vadd.f32 %v2366, %v2400
    %v2409 = vadd.f32 %v2367, %v2401
    %v2410 = vadd.f32 %v2368, %v2402
    %2411 = vrot.lane.b32.xlu0 %v2225, 127
    %v2412 = vpop.permute.xlu0 %2411
    %2413 = vrot.lane.b32.xlu0 %v2226, 127
    %v2414 = vpop.permute.xlu0 %2413
    %2415 = vrot.lane.b32.xlu0 %v2227, 127
    %v2416 = vpop.permute.xlu0 %2415
    %2417 = vrot.lane.b32.xlu0 %v2228, 127
    %v2418 = vpop.permute.xlu0 %2417
    %2419 = vrot.lane.b32.xlu0 %v2229, 127
    %v2420 = vpop.permute.xlu0 %2419
    %2421 = vrot.lane.b32.xlu0 %v2230, 127
    %v2422 = vpop.permute.xlu0 %2421
    %2423 = vrot.lane.b32.xlu0 %v2231, 127
    %v2424 = vpop.permute.xlu0 %2423
    %2425 = vrot.lane.b32.xlu0 %v2232, 127
    %v2426 = vpop.permute.xlu0 %2425
    %v2427 = vsel %vm309, %v2424, %v2426
    %v2428 = vsel %vm309, %v2422, %v2424
    %v2429 = vsel %vm309, %v2420, %v2422
    %v2430 = vsel %vm309, %v2418, %v2420
    %v2431 = vsel %vm309, %v2416, %v2418
    %v2432 = vsel %vm309, %v2414, %v2416
    %v2433 = vsel %vm309, %v2412, %v2414
    %v2434 = vsel %vm309, %v2426, %v2412
    %s2435 = sld [smem:[#allocation7 + $0x32]]
    %v2436 = vstv %s2435
    %v2437 = vmul.f32 %v2433, %v2436
    %v2438 = vmul.f32 %v2432, %v2436
    %v2439 = vmul.f32 %v2431, %v2436
    %v2440 = vmul.f32 %v2430, %v2436
    %v2441 = vmul.f32 %v2429, %v2436
    %v2442 = vmul.f32 %v2428, %v2436
    %v2443 = vmul.f32 %v2427, %v2436
    %v2444 = vmul.f32 %v2434, %v2436
    %v2445 = vadd.f32 %v2403, %v2437
    %v2446 = vadd.f32 %v2404, %v2438
    %v2447 = vadd.f32 %v2405, %v2439
    %v2448 = vadd.f32 %v2406, %v2440
    %v2449 = vadd.f32 %v2407, %v2441
    %v2450 = vadd.f32 %v2408, %v2442
    %v2451 = vadd.f32 %v2409, %v2443
    %v2452 = vadd.f32 %v2410, %v2444
    %2453 = vrot.lane.b32.xlu0 %v2225, 97
    %v2454 = vpop.permute.xlu0 %2453
    %2455 = vrot.lane.b32.xlu0 %v2226, 97
    %v2456 = vpop.permute.xlu0 %2455
    %2457 = vrot.lane.b32.xlu0 %v2227, 97
    %v2458 = vpop.permute.xlu0 %2457
    %2459 = vrot.lane.b32.xlu0 %v2228, 97
    %v2460 = vpop.permute.xlu0 %2459
    %2461 = vrot.lane.b32.xlu0 %v2229, 97
    %v2462 = vpop.permute.xlu0 %2461
    %2463 = vrot.lane.b32.xlu0 %v2230, 97
    %v2464 = vpop.permute.xlu0 %2463
    %2465 = vrot.lane.b32.xlu0 %v2231, 97
    %v2466 = vpop.permute.xlu0 %2465
    %2467 = vrot.lane.b32.xlu0 %v2232, 97
    %v2468 = vpop.permute.xlu0 %2467
    %v2469 = vsel %vm352, %v2466, %v2468
    %v2470 = vsel %vm352, %v2464, %v2466
    %v2471 = vsel %vm352, %v2462, %v2464
    %v2472 = vsel %vm352, %v2460, %v2462
    %v2473 = vsel %vm352, %v2458, %v2460
    %v2474 = vsel %vm352, %v2456, %v2458
    %v2475 = vsel %vm352, %v2454, %v2456
    %v2476 = vsel %vm352, %v2468, %v2454
    %s2477 = sld [smem:[#allocation7 + $0x33]]
    %v2478 = vstv %s2477
    %v2479 = vmul.f32 %v2475, %v2478
    %v2480 = vmul.f32 %v2474, %v2478
    %v2481 = vmul.f32 %v2473, %v2478
    %v2482 = vmul.f32 %v2472, %v2478
    %v2483 = vmul.f32 %v2471, %v2478
    %v2484 = vmul.f32 %v2470, %v2478
    %v2485 = vmul.f32 %v2469, %v2478
    %v2486 = vmul.f32 %v2476, %v2478
    %v2487 = vadd.f32 %v2445, %v2479
    %v2488 = vadd.f32 %v2446, %v2480
    %v2489 = vadd.f32 %v2447, %v2481
    %v2490 = vadd.f32 %v2448, %v2482
    %v2491 = vadd.f32 %v2449, %v2483
    %v2492 = vadd.f32 %v2450, %v2484
    %v2493 = vadd.f32 %v2451, %v2485
    %v2494 = vadd.f32 %v2452, %v2486
    %2495 = vrot.lane.b32.xlu0 %v2225, 96
    %v2496 = vpop.permute.xlu0 %2495
    %2497 = vrot.lane.b32.xlu0 %v2226, 96
    %v2498 = vpop.permute.xlu0 %2497
    %2499 = vrot.lane.b32.xlu0 %v2227, 96
    %v2500 = vpop.permute.xlu0 %2499
    %2501 = vrot.lane.b32.xlu0 %v2228, 96
    %v2502 = vpop.permute.xlu0 %2501
    %2503 = vrot.lane.b32.xlu0 %v2229, 96
    %v2504 = vpop.permute.xlu0 %2503
    %2505 = vrot.lane.b32.xlu0 %v2230, 96
    %v2506 = vpop.permute.xlu0 %2505
    %2507 = vrot.lane.b32.xlu0 %v2231, 96
    %v2508 = vpop.permute.xlu0 %2507
    %2509 = vrot.lane.b32.xlu0 %v2232, 96
    %v2510 = vpop.permute.xlu0 %2509
    %v2511 = vsel %vm395, %v2508, %v2510
    %v2512 = vsel %vm395, %v2506, %v2508
    %v2513 = vsel %vm395, %v2504, %v2506
    %v2514 = vsel %vm395, %v2502, %v2504
    %v2515 = vsel %vm395, %v2500, %v2502
    %v2516 = vsel %vm395, %v2498, %v2500
    %v2517 = vsel %vm395, %v2496, %v2498
    %v2518 = vsel %vm395, %v2510, %v2496
    %s2519 = sld [smem:[#allocation7 + $0x34]]
    %v2520 = vstv %s2519
    %v2521 = vmul.f32 %v2517, %v2520
    %v2522 = vmul.f32 %v2516, %v2520
    %v2523 = vmul.f32 %v2515, %v2520
    %v2524 = vmul.f32 %v2514, %v2520
    %v2525 = vmul.f32 %v2513, %v2520
    %v2526 = vmul.f32 %v2512, %v2520
    %v2527 = vmul.f32 %v2511, %v2520
    %v2528 = vmul.f32 %v2518, %v2520
    %v2529 = vadd.f32 %v2487, %v2521
    %v2530 = vadd.f32 %v2488, %v2522
    %v2531 = vadd.f32 %v2489, %v2523
    %v2532 = vadd.f32 %v2490, %v2524
    %v2533 = vadd.f32 %v2491, %v2525
    %v2534 = vadd.f32 %v2492, %v2526
    %v2535 = vadd.f32 %v2493, %v2527
    %v2536 = vadd.f32 %v2494, %v2528
    %2537 = vrot.lane.b32.xlu0 %v2225, 95
    %v2538 = vpop.permute.xlu0 %2537
    %2539 = vrot.lane.b32.xlu0 %v2226, 95
    %v2540 = vpop.permute.xlu0 %2539
    %2541 = vrot.lane.b32.xlu0 %v2227, 95
    %v2542 = vpop.permute.xlu0 %2541
    %2543 = vrot.lane.b32.xlu0 %v2228, 95
    %v2544 = vpop.permute.xlu0 %2543
    %2545 = vrot.lane.b32.xlu0 %v2229, 95
    %v2546 = vpop.permute.xlu0 %2545
    %2547 = vrot.lane.b32.xlu0 %v2230, 95
    %v2548 = vpop.permute.xlu0 %2547
    %2549 = vrot.lane.b32.xlu0 %v2231, 95
    %v2550 = vpop.permute.xlu0 %2549
    %2551 = vrot.lane.b32.xlu0 %v2232, 95
    %v2552 = vpop.permute.xlu0 %2551
    %v2553 = vsel %vm438, %v2550, %v2552
    %v2554 = vsel %vm438, %v2548, %v2550
    %v2555 = vsel %vm438, %v2546, %v2548
    %v2556 = vsel %vm438, %v2544, %v2546
    %v2557 = vsel %vm438, %v2542, %v2544
    %v2558 = vsel %vm438, %v2540, %v2542
    %v2559 = vsel %vm438, %v2538, %v2540
    %v2560 = vsel %vm438, %v2552, %v2538
    %s2561 = sld [smem:[#allocation7 + $0x35]]
    %v2562 = vstv %s2561
    %v2563 = vmul.f32 %v2559, %v2562
    %v2564 = vmul.f32 %v2558, %v2562
    %v2565 = vmul.f32 %v2557, %v2562
    %v2566 = vmul.f32 %v2556, %v2562
    %v2567 = vmul.f32 %v2555, %v2562
    %v2568 = vmul.f32 %v2554, %v2562
    %v2569 = vmul.f32 %v2553, %v2562
    %v2570 = vmul.f32 %v2560, %v2562
    %v2571 = vadd.f32 %v2529, %v2563
    %v2572 = vadd.f32 %v2530, %v2564
    %v2573 = vadd.f32 %v2531, %v2565
    %v2574 = vadd.f32 %v2532, %v2566
    %v2575 = vadd.f32 %v2533, %v2567
    %v2576 = vadd.f32 %v2534, %v2568
    %v2577 = vadd.f32 %v2535, %v2569
    %v2578 = vadd.f32 %v2536, %v2570
    %s2579 = scalar_lea.vmem %s4, 320
    %v2580 = vld [vmem:[%s2579] sm:$0xff]
    %v2581 = vld [vmem:[%s2579 + $0x8] sm:$0xff]
    %v2582 = vld [vmem:[%s2579 + $0x10] sm:$0xff]
    %v2583 = vld [vmem:[%s2579 + $0x18] sm:$0xff]
    %v2584 = vld [vmem:[%s2579 + $0x20] sm:$0xff]
    %v2585 = vld [vmem:[%s2579 + $0x28] sm:$0xff]
    %v2586 = vld [vmem:[%s2579 + $0x30] sm:$0xff]
    %v2587 = vld [vmem:[%s2579 + $0x38] sm:$0xff]
    %v2588 = vadd.f32 %v2571, %v2580
    %v2589 = vadd.f32 %v2572, %v2581
    %v2590 = vadd.f32 %v2573, %v2582
    %v2591 = vadd.f32 %v2574, %v2583
    %v2592 = vadd.f32 %v2575, %v2584
    %v2593 = vadd.f32 %v2576, %v2585
    %v2594 = vadd.f32 %v2577, %v2586
    %v2595 = vadd.f32 %v2578, %v2587
    %v2596 = vmax.f32 %v2588, 0.0
    %v2597 = vmax.f32 %v2589, 0.0
    %v2598 = vmax.f32 %v2590, 0.0
    %v2599 = vmax.f32 %v2591, 0.0
    %v2600 = vmax.f32 %v2592, 0.0
    %v2601 = vmax.f32 %v2593, 0.0
    %v2602 = vmax.f32 %v2594, 0.0
    %v2603 = vmax.f32 %v2595, 0.0
    %v2604 = vmin.f32 %v2596, 6.0
    %v2605 = vmin.f32 %v2597, 6.0
    %v2606 = vmin.f32 %v2598, 6.0
    %v2607 = vmin.f32 %v2599, 6.0
    %v2608 = vmin.f32 %v2600, 6.0
    %v2609 = vmin.f32 %v2601, 6.0
    %v2610 = vmin.f32 %v2602, 6.0
    %v2611 = vmin.f32 %v2603, 6.0
    %2612 = vst [vmem:[#allocation2 + $0x140] sm:$0xff] %v2604
    %2613 = vst [vmem:[#allocation2 + $0x148] sm:$0xff] %v2605
    %2614 = vst [vmem:[#allocation2 + $0x150] sm:$0xff] %v2606
    %2615 = vst [vmem:[#allocation2 + $0x158] sm:$0xff] %v2607
    %2616 = vst [vmem:[#allocation2 + $0x160] sm:$0xff] %v2608
    %2617 = vst [vmem:[#allocation2 + $0x168] sm:$0xff] %v2609
    %2618 = vst [vmem:[#allocation2 + $0x170] sm:$0xff] %v2610
    %2619 = vst [vmem:[#allocation2 + $0x178] sm:$0xff] %v2611
    %v2620 = vld [vmem:[%s0] sm:$0xff]
    %v2621 = vld [vmem:[%s0 + $0x8] sm:$0xff]
    %v2622 = vld [vmem:[%s0 + $0x10] sm:$0xff]
    %v2623 = vld [vmem:[%s0 + $0x18] sm:$0xff]
    %v2624 = vld [vmem:[%s0 + $0x20] sm:$0xff]
    %v2625 = vld [vmem:[%s0 + $0x28] sm:$0xff]
    %v2626 = vld [vmem:[%s0 + $0x30] sm:$0xff]
    %v2627 = vld [vmem:[%s0 + $0x38] sm:$0xff]
    %v2628 = vld [vmem:[%s6] sm:$0xff]
    %v2629 = vld [vmem:[%s6 + $0x8] sm:$0xff]
    %v2630 = vld [vmem:[%s6 + $0x10] sm:$0xff]
    %v2631 = vld [vmem:[%s6 + $0x18] sm:$0xff]
    %v2632 = vld [vmem:[%s6 + $0x20] sm:$0xff]
    %v2633 = vld [vmem:[%s6 + $0x28] sm:$0xff]
    %v2634 = vld [vmem:[%s6 + $0x30] sm:$0xff]
    %v2635 = vld [vmem:[%s6 + $0x38] sm:$0xff]
    %v2636 = vld [vmem:[%s6 + $0x40] sm:$0xff]
    %v2637 = vld [vmem:[%s6 + $0x48] sm:$0xff]
    %v2638 = vld [vmem:[%s6 + $0x50] sm:$0xff]
    %v2639 = vld [vmem:[%s6 + $0x58] sm:$0xff]
    %v2640 = vld [vmem:[%s6 + $0x60] sm:$0xff]
    %v2641 = vld [vmem:[%s6 + $0x68] sm:$0xff]
    %v2642 = vld [vmem:[%s6 + $0x70] sm:$0xff]
    %v2643 = vld [vmem:[%s6 + $0x78] sm:$0xff]
    %v2644 = vld [vmem:[%s6 + $0x80] sm:$0xff]
    %v2645 = vld [vmem:[%s6 + $0x88] sm:$0xff]
    %v2646 = vld [vmem:[%s6 + $0x90] sm:$0xff]
    %v2647 = vld [vmem:[%s6 + $0x98] sm:$0xff]
    %v2648 = vld [vmem:[%s6 + $0xa0] sm:$0xff]
    %v2649 = vld [vmem:[%s6 + $0xa8] sm:$0xff]
    %v2650 = vld [vmem:[%s6 + $0xb0] sm:$0xff]
    %v2651 = vld [vmem:[%s6 + $0xb8] sm:$0xff]
    %v2652 = vld [vmem:[%s6 + $0xc0] sm:$0xff]
    %v2653 = vld [vmem:[%s6 + $0xc8] sm:$0xff]
    %v2654 = vld [vmem:[%s6 + $0xd0] sm:$0xff]
    %v2655 = vld [vmem:[%s6 + $0xd8] sm:$0xff]
    %v2656 = vld [vmem:[%s6 + $0xe0] sm:$0xff]
    %v2657 = vld [vmem:[%s6 + $0xe8] sm:$0xff]
    %v2658 = vld [vmem:[%s6 + $0xf0] sm:$0xff]
    %v2659 = vld [vmem:[%s6 + $0xf8] sm:$0xff]
    %v2660 = vld [vmem:[%s6 + $0x100] sm:$0xff]
    %v2661 = vld [vmem:[%s6 + $0x108] sm:$0xff]
    %v2662 = vld [vmem:[%s6 + $0x110] sm:$0xff]
    %v2663 = vld [vmem:[%s6 + $0x118] sm:$0xff]
    %v2664 = vld [vmem:[%s6 + $0x120] sm:$0xff]
    %v2665 = vld [vmem:[%s6 + $0x128] sm:$0xff]
    %v2666 = vld [vmem:[%s6 + $0x130] sm:$0xff]
    %v2667 = vld [vmem:[%s6 + $0x138] sm:$0xff]
    %v2668 = vld [vmem:[%s6 + $0x140] sm:$0xff]
    %v2669 = vld [vmem:[%s6 + $0x148] sm:$0xff]
    %v2670 = vld [vmem:[%s6 + $0x150] sm:$0xff]
    %v2671 = vld [vmem:[%s6 + $0x158] sm:$0xff]
    %v2672 = vld [vmem:[%s6 + $0x160] sm:$0xff]
    %v2673 = vld [vmem:[%s6 + $0x168] sm:$0xff]
    %v2674 = vld [vmem:[%s6 + $0x170] sm:$0xff]
    %v2675 = vld [vmem:[%s6 + $0x178] sm:$0xff]
    %v2676 = vld [vmem:[%s6 + $0x180] sm:$0xff]
    %v2677 = vld [vmem:[%s6 + $0x188] sm:$0xff]
    %v2678 = vld [vmem:[%s6 + $0x190] sm:$0xff]
    %v2679 = vld [vmem:[%s6 + $0x198] sm:$0xff]
    %v2680 = vld [vmem:[%s6 + $0x1a0] sm:$0xff]
    %v2681 = vld [vmem:[%s6 + $0x1a8] sm:$0xff]
    %v2682 = vld [vmem:[%s6 + $0x1b0] sm:$0xff]
    %v2683 = vld [vmem:[%s6 + $0x1b8] sm:$0xff]
    %v2684 = vld [vmem:[%s6 + $0x1c0] sm:$0xff]
    %v2685 = vld [vmem:[%s6 + $0x1c8] sm:$0xff]
    %v2686 = vld [vmem:[%s6 + $0x1d0] sm:$0xff]
    %v2687 = vld [vmem:[%s6 + $0x1d8] sm:$0xff]
    %v2688 = vld [vmem:[%s6 + $0x1e0] sm:$0xff]
    %v2689 = vld [vmem:[%s6 + $0x1e8] sm:$0xff]
    %v2690 = vld [vmem:[%s6 + $0x1f0] sm:$0xff]
    %v2691 = vld [vmem:[%s6 + $0x1f8] sm:$0xff]
    %v2692 = vld [vmem:[%s6 + $0x200] sm:$0xff]
    %v2693 = vld [vmem:[%s6 + $0x208] sm:$0xff]
    %v2694 = vld [vmem:[%s6 + $0x210] sm:$0xff]
    %v2695 = vld [vmem:[%s6 + $0x218] sm:$0xff]
    %v2696 = vld [vmem:[%s6 + $0x220] sm:$0xff]
    %v2697 = vld [vmem:[%s6 + $0x228] sm:$0xff]
    %v2698 = vld [vmem:[%s6 + $0x230] sm:$0xff]
    %v2699 = vld [vmem:[%s6 + $0x238] sm:$0xff]
    %v2700 = vld [vmem:[%s6 + $0x240] sm:$0xff]
    %v2701 = vld [vmem:[%s6 + $0x248] sm:$0xff]
    %v2702 = vld [vmem:[%s6 + $0x250] sm:$0xff]
    %v2703 = vld [vmem:[%s6 + $0x258] sm:$0xff]
    %v2704 = vld [vmem:[%s6 + $0x260] sm:$0xff]
    %v2705 = vld [vmem:[%s6 + $0x268] sm:$0xff]
    %v2706 = vld [vmem:[%s6 + $0x270] sm:$0xff]
    %v2707 = vld [vmem:[%s6 + $0x278] sm:$0xff]
    %v2708 = vld [vmem:[%s6 + $0x280] sm:$0xff]
    %v2709 = vld [vmem:[%s6 + $0x288] sm:$0xff]
    %v2710 = vld [vmem:[%s6 + $0x290] sm:$0xff]
    %v2711 = vld [vmem:[%s6 + $0x298] sm:$0xff]
    %v2712 = vld [vmem:[%s6 + $0x2a0] sm:$0xff]
    %v2713 = vld [vmem:[%s6 + $0x2a8] sm:$0xff]
    %v2714 = vld [vmem:[%s6 + $0x2b0] sm:$0xff]
    %v2715 = vld [vmem:[%s6 + $0x2b8] sm:$0xff]
    %v2716 = vld [vmem:[%s6 + $0x2c0] sm:$0xff]
    %v2717 = vld [vmem:[%s6 + $0x2c8] sm:$0xff]
    %v2718 = vld [vmem:[%s6 + $0x2d0] sm:$0xff]
    %v2719 = vld [vmem:[%s6 + $0x2d8] sm:$0xff]
    %v2720 = vld [vmem:[%s6 + $0x2e0] sm:$0xff]
    %v2721 = vld [vmem:[%s6 + $0x2e8] sm:$0xff]
    %v2722 = vld [vmem:[%s6 + $0x2f0] sm:$0xff]
    %v2723 = vld [vmem:[%s6 + $0x2f8] sm:$0xff]
    %v2724 = vld [vmem:[%s6 + $0x300] sm:$0xff]
    %v2725 = vld [vmem:[%s6 + $0x308] sm:$0xff]
    %v2726 = vld [vmem:[%s6 + $0x310] sm:$0xff]
    %v2727 = vld [vmem:[%s6 + $0x318] sm:$0xff]
    %v2728 = vld [vmem:[%s6 + $0x320] sm:$0xff]
    %v2729 = vld [vmem:[%s6 + $0x328] sm:$0xff]
    %v2730 = vld [vmem:[%s6 + $0x330] sm:$0xff]
    %v2731 = vld [vmem:[%s6 + $0x338] sm:$0xff]
    %v2732 = vld [vmem:[%s6 + $0x340] sm:$0xff]
    %v2733 = vld [vmem:[%s6 + $0x348] sm:$0xff]
    %v2734 = vld [vmem:[%s6 + $0x350] sm:$0xff]
    %v2735 = vld [vmem:[%s6 + $0x358] sm:$0xff]
    %v2736 = vld [vmem:[%s6 + $0x360] sm:$0xff]
    %v2737 = vld [vmem:[%s6 + $0x368] sm:$0xff]
    %v2738 = vld [vmem:[%s6 + $0x370] sm:$0xff]
    %v2739 = vld [vmem:[%s6 + $0x378] sm:$0xff]
    %v2740 = vld [vmem:[%s6 + $0x380] sm:$0xff]
    %v2741 = vld [vmem:[%s6 + $0x388] sm:$0xff]
    %v2742 = vld [vmem:[%s6 + $0x390] sm:$0xff]
    %v2743 = vld [vmem:[%s6 + $0x398] sm:$0xff]
    %v2744 = vld [vmem:[%s6 + $0x3a0] sm:$0xff]
    %v2745 = vld [vmem:[%s6 + $0x3a8] sm:$0xff]
    %v2746 = vld [vmem:[%s6 + $0x3b0] sm:$0xff]
    %v2747 = vld [vmem:[%s6 + $0x3b8] sm:$0xff]
    %v2748 = vld [vmem:[%s6 + $0x3c0] sm:$0xff]
    %v2749 = vld [vmem:[%s6 + $0x3c8] sm:$0xff]
    %v2750 = vld [vmem:[%s6 + $0x3d0] sm:$0xff]
    %v2751 = vld [vmem:[%s6 + $0x3d8] sm:$0xff]
    %v2752 = vld [vmem:[%s6 + $0x3e0] sm:$0xff]
    %v2753 = vld [vmem:[%s6 + $0x3e8] sm:$0xff]
    %v2754 = vld [vmem:[%s6 + $0x3f0] sm:$0xff]
    %v2755 = vld [vmem:[%s6 + $0x3f8] sm:$0xff]
    %v2756 = vld [vmem:[%s7] sm:$0x1]
    %v2758 = vlaneseq
    %v2759 = vshrl.u32 %v2758, 7
    %v2760 = vsub.s32 0, %v2759
    %v2761 = vrot.slane %v2756, %v2760
    %2763 = vmatprep.subr.mxu0 0.0
    %2764 = vmatpush1.msra.mxu0 %v2628
    %2765 = vmatprep.subr.mxu0 0.0
    %2766 = vmatpush1.msra.mxu0 %v2629
    %2767 = vmatprep.subr.mxu0 0.0
    %2768 = vmatpush1.msra.mxu0 %v2630
    %2769 = vmatprep.subr.mxu0 0.0
    %2770 = vmatpush1.msra.mxu0 %v2631
    %2771 = vmatprep.subr.mxu0 0.0
    %2772 = vmatpush1.msra.mxu0 %v2632
    %2773 = vmatprep.subr.mxu0 0.0
    %2774 = vmatpush1.msra.mxu0 %v2633
    %2775 = vmatprep.subr.mxu0 0.0
    %2776 = vmatpush1.msra.mxu0 %v2634
    %2777 = vmatprep.subr.mxu0 0.0
    %2778 = vmatpush1.msra.mxu0 %v2635
    %2779 = vmatprep.subr.mxu0 0.0
    %2780 = vmatpush1.msra.mxu0 %v2636
    %2781 = vmatprep.subr.mxu0 0.0
    %2782 = vmatpush1.msra.mxu0 %v2637
    %2783 = vmatprep.subr.mxu0 0.0
    %2784 = vmatpush1.msra.mxu0 %v2638
    %2785 = vmatprep.subr.mxu0 0.0
    %2786 = vmatpush1.msra.mxu0 %v2639
    %2787 = vmatprep.subr.mxu0 0.0
    %2788 = vmatpush1.msra.mxu0 %v2640
    %2789 = vmatprep.subr.mxu0 0.0
    %2790 = vmatpush1.msra.mxu0 %v2641
    %2791 = vmatprep.subr.mxu0 0.0
    %2792 = vmatpush1.msra.mxu0 %v2642
    %2793 = vmatprep.subr.mxu0 0.0
    %2794 = vmatpush1.msra.mxu0 %v2643
    %2795 = vmatprep.subr.mxu0 0.0
    %2796 = vmatpush1.msra.mxu0 %v2644
    %2797 = vmatprep.subr.mxu0 0.0
    %2798 = vmatpush1.msra.mxu0 %v2645
    %2799 = vmatprep.subr.mxu0 0.0
    %2800 = vmatpush1.msra.mxu0 %v2646
    %2801 = vmatprep.subr.mxu0 0.0
    %2802 = vmatpush1.msra.mxu0 %v2647
    %2803 = vmatprep.subr.mxu0 0.0
    %2804 = vmatpush1.msra.mxu0 %v2648
    %2805 = vmatprep.subr.mxu0 0.0
    %2806 = vmatpush1.msra.mxu0 %v2649
    %2807 = vmatprep.subr.mxu0 0.0
    %2808 = vmatpush1.msra.mxu0 %v2650
    %2809 = vmatprep.subr.mxu0 0.0
    %2810 = vmatpush1.msra.mxu0 %v2651
    %2811 = vmatprep.subr.mxu0 0.0
    %2812 = vmatpush1.msra.mxu0 %v2652
    %2813 = vmatprep.subr.mxu0 0.0
    %2814 = vmatpush1.msra.mxu0 %v2653
    %2815 = vmatprep.subr.mxu0 0.0
    %2816 = vmatpush1.msra.mxu0 %v2654
    %2817 = vmatprep.subr.mxu0 0.0
    %2818 = vmatpush1.msra.mxu0 %v2655
    %2819 = vmatprep.subr.mxu0 0.0
    %2820 = vmatpush1.msra.mxu0 %v2656
    %2821 = vmatprep.subr.mxu0 0.0
    %2822 = vmatpush1.msra.mxu0 %v2657
    %2823 = vmatprep.subr.mxu0 0.0
    %2824 = vmatpush1.msra.mxu0 %v2658
    %2825 = vmatprep.subr.mxu0 0.0
    %2826 = vmatpush1.msra.mxu0 %v2659
    %2827 = vmatprep.mubr.f32.mxu0 %v2621
    %2828 = vmatmul.mubr.f32.gmra.mrb[0].mxu0 %v2620
    %v2829 = vpop.f32.mrb[0].mxu0
    %v2830 = vadd.f32 %v2761, %v2829
    %v2831 = vpop.f32.mrb[0].mxu0
    %2832 = vdwg.mxu0
    %2833 = vmatprep.subr.mxu0 0.0
    %2834 = vmatpush1.msra.mxu0 %v2660
    %2835 = vmatprep.subr.mxu0 0.0
    %2836 = vmatpush1.msra.mxu0 %v2661
    %2837 = vmatprep.subr.mxu0 0.0
    %2838 = vmatpush1.msra.mxu0 %v2662
    %2839 = vmatprep.subr.mxu0 0.0
    %2840 = vmatpush1.msra.mxu0 %v2663
    %2841 = vmatprep.subr.mxu0 0.0
    %2842 = vmatpush1.msra.mxu0 %v2664
    %2843 = vmatprep.subr.mxu0 0.0
    %2844 = vmatpush1.msra.mxu0 %v2665
    %2845 = vmatprep.subr.mxu0 0.0
    %2846 = vmatpush1.msra.mxu0 %v2666
    %2847 = vmatprep.subr.mxu0 0.0
    %2848 = vmatpush1.msra.mxu0 %v2667
    %2849 = vmatprep.subr.mxu0 0.0
    %2850 = vmatpush1.msra.mxu0 %v2668
    %2851 = vmatprep.subr.mxu0 0.0
    %2852 = vmatpush1.msra.mxu0 %v2669
    %2853 = vmatprep.subr.mxu0 0.0
    %2854 = vmatpush1.msra.mxu0 %v2670
    %2855 = vmatprep.subr.mxu0 0.0
    %2856 = vmatpush1.msra.mxu0 %v2671
    %2857 = vmatprep.subr.mxu0 0.0
    %2858 = vmatpush1.msra.mxu0 %v2672
    %2859 = vmatprep.subr.mxu0 0.0
    %2860 = vmatpush1.msra.mxu0 %v2673
    %2861 = vmatprep.subr.mxu0 0.0
    %2862 = vmatpush1.msra.mxu0 %v2674
    %2863 = vmatprep.subr.mxu0 0.0
    %2864 = vmatpush1.msra.mxu0 %v2675
    %2865 = vmatprep.subr.mxu0 0.0
    %2866 = vmatpush1.msra.mxu0 %v2676
    %2867 = vmatprep.subr.mxu0 0.0
    %2868 = vmatpush1.msra.mxu0 %v2677
    %2869 = vmatprep.subr.mxu0 0.0
    %2870 = vmatpush1.msra.mxu0 %v2678
    %2871 = vmatprep.subr.mxu0 0.0
    %2872 = vmatpush1.msra.mxu0 %v2679
    %2873 = vmatprep.subr.mxu0 0.0
    %2874 = vmatpush1.msra.mxu0 %v2680
    %2875 = vmatprep.subr.mxu0 0.0
    %2876 = vmatpush1.msra.mxu0 %v2681
    %2877 = vmatprep.subr.mxu0 0.0
    %2878 = vmatpush1.msra.mxu0 %v2682
    %2879 = vmatprep.subr.mxu0 0.0
    %2880 = vmatpush1.msra.mxu0 %v2683
    %2881 = vmatprep.subr.mxu0 0.0
    %2882 = vmatpush1.msra.mxu0 %v2684
    %2883 = vmatprep.subr.mxu0 0.0
    %2884 = vmatpush1.msra.mxu0 %v2685
    %2885 = vmatprep.subr.mxu0 0.0
    %2886 = vmatpush1.msra.mxu0 %v2686
    %2887 = vmatprep.subr.mxu0 0.0
    %2888 = vmatpush1.msra.mxu0 %v2687
    %2889 = vmatprep.subr.mxu0 0.0
    %2890 = vmatpush1.msra.mxu0 %v2688
    %2891 = vmatprep.subr.mxu0 0.0
    %2892 = vmatpush1.msra.mxu0 %v2689
    %2893 = vmatprep.subr.mxu0 0.0
    %2894 = vmatpush1.msra.mxu0 %v2690
    %2895 = vmatprep.subr.mxu0 0.0
    %2896 = vmatpush1.msra.mxu0 %v2691
    %2897 = vmatprep.mubr.f32.mxu0 %v2623
    %2898 = vmatmul.mubr.f32.gmra.mrb[0].mxu0 %v2622
    %v2899 = vpop.f32.mrb[0].mxu0
    %v2900 = vadd.f32 %v2830, %v2899
    %v2901 = vpop.f32.mrb[0].mxu0
    %2902 = vdwg.mxu0
    %2903 = vmatprep.subr.mxu0 0.0
    %2904 = vmatpush1.msra.mxu0 %v2692
    %2905 = vmatprep.subr.mxu0 0.0
    %2906 = vmatpush1.msra.mxu0 %v2693
    %2907 = vmatprep.subr.mxu0 0.0
    %2908 = vmatpush1.msra.mxu0 %v2694
    %2909 = vmatprep.subr.mxu0 0.0
    %2910 = vmatpush1.msra.mxu0 %v2695
    %2911 = vmatprep.subr.mxu0 0.0
    %2912 = vmatpush1.msra.mxu0 %v2696
    %2913 = vmatprep.subr.mxu0 0.0
    %2914 = vmatpush1.msra.mxu0 %v2697
    %2915 = vmatprep.subr.mxu0 0.0
    %2916 = vmatpush1.msra.mxu0 %v2698
    %2917 = vmatprep.subr.mxu0 0.0
    %2918 = vmatpush1.msra.mxu0 %v2699
    %2919 = vmatprep.subr.mxu0 0.0
    %2920 = vmatpush1.msra.mxu0 %v2700
    %2921 = vmatprep.subr.mxu0 0.0
    %2922 = vmatpush1.msra.mxu0 %v2701
    %2923 = vmatprep.subr.mxu0 0.0
    %2924 = vmatpush1.msra.mxu0 %v2702
    %2925 = vmatprep.subr.mxu0 0.0
    %2926 = vmatpush1.msra.mxu0 %v2703
    %2927 = vmatprep.subr.mxu0 0.0
    %2928 = vmatpush1.msra.mxu0 %v2704
    %2929 = vmatprep.subr.mxu0 0.0
    %2930 = vmatpush1.msra.mxu0 %v2705
    %2931 = vmatprep.subr.mxu0 0.0
    %2932 = vmatpush1.msra.mxu0 %v2706
    %2933 = vmatprep.subr.mxu0 0.0
    %2934 = vmatpush1.msra.mxu0 %v2707
    %2935 = vmatprep.subr.mxu0 0.0
    %2936 = vmatpush1.msra.mxu0 %v2708
    %2937 = vmatprep.subr.mxu0 0.0
    %2938 = vmatpush1.msra.mxu0 %v2709
    %2939 = vmatprep.subr.mxu0 0.0
    %2940 = vmatpush1.msra.mxu0 %v2710
    %2941 = vmatprep.subr.mxu0 0.0
    %2942 = vmatpush1.msra.mxu0 %v2711
    %2943 = vmatprep.subr.mxu0 0.0
    %2944 = vmatpush1.msra.mxu0 %v2712
    %2945 = vmatprep.subr.mxu0 0.0
    %2946 = vmatpush1.msra.mxu0 %v2713
    %2947 = vmatprep.subr.mxu0 0.0
    %2948 = vmatpush1.msra.mxu0 %v2714
    %2949 = vmatprep.subr.mxu0 0.0
    %2950 = vmatpush1.msra.mxu0 %v2715
    %2951 = vmatprep.subr.mxu0 0.0
    %2952 = vmatpush1.msra.mxu0 %v2716
    %2953 = vmatprep.subr.mxu0 0.0
    %2954 = vmatpush1.msra.mxu0 %v2717
    %2955 = vmatprep.subr.mxu0 0.0
    %2956 = vmatpush1.msra.mxu0 %v2718
    %2957 = vmatprep.subr.mxu0 0.0
    %2958 = vmatpush1.msra.mxu0 %v2719
    %2959 = vmatprep.subr.mxu0 0.0
    %2960 = vmatpush1.msra.mxu0 %v2720
    %2961 = vmatprep.subr.mxu0 0.0
    %2962 = vmatpush1.msra.mxu0 %v2721
    %2963 = vmatprep.subr.mxu0 0.0
    %2964 = vmatpush1.msra.mxu0 %v2722
    %2965 = vmatprep.subr.mxu0 0.0
    %2966 = vmatpush1.msra.mxu0 %v2723
    %2967 = vmatprep.mubr.f32.mxu0 %v2625
    %2968 = vmatmul.mubr.f32.gmra.mrb[0].mxu0 %v2624
    %v2969 = vpop.f32.mrb[0].mxu0
    %v2970 = vadd.f32 %v2900, %v2969
    %v2971 = vpop.f32.mrb[0].mxu0
    %2972 = vdwg.mxu0
    %2973 = vmatprep.subr.mxu0 0.0
    %2974 = vmatpush1.msra.mxu0 %v2724
    %2975 = vmatprep.subr.mxu0 0.0
    %2976 = vmatpush1.msra.mxu0 %v2725
    %2977 = vmatprep.subr.mxu0 0.0
    %2978 = vmatpush1.msra.mxu0 %v2726
    %2979 = vmatprep.subr.mxu0 0.0
    %2980 = vmatpush1.msra.mxu0 %v2727
    %2981 = vmatprep.subr.mxu0 0.0
    %2982 = vmatpush1.msra.mxu0 %v2728
    %2983 = vmatprep.subr.mxu0 0.0
    %2984 = vmatpush1.msra.mxu0 %v2729
    %2985 = vmatprep.subr.mxu0 0.0
    %2986 = vmatpush1.msra.mxu0 %v2730
    %2987 = vmatprep.subr.mxu0 0.0
    %2988 = vmatpush1.msra.mxu0 %v2731
    %2989 = vmatprep.subr.mxu0 0.0
    %2990 = vmatpush1.msra.mxu0 %v2732
    %2991 = vmatprep.subr.mxu0 0.0
    %2992 = vmatpush1.msra.mxu0 %v2733
    %2993 = vmatprep.subr.mxu0 0.0
    %2994 = vmatpush1.msra.mxu0 %v2734
    %2995 = vmatprep.subr.mxu0 0.0
    %2996 = vmatpush1.msra.mxu0 %v2735
    %2997 = vmatprep.subr.mxu0 0.0
    %2998 = vmatpush1.msra.mxu0 %v2736
    %2999 = vmatprep.subr.mxu0 0.0
    %3000 = vmatpush1.msra.mxu0 %v2737
    %3001 = vmatprep.subr.mxu0 0.0
    %3002 = vmatpush1.msra.mxu0 %v2738
    %3003 = vmatprep.subr.mxu0 0.0
    %3004 = vmatpush1.msra.mxu0 %v2739
    %3005 = vmatprep.subr.mxu0 0.0
    %3006 = vmatpush1.msra.mxu0 %v2740
    %3007 = vmatprep.subr.mxu0 0.0
    %3008 = vmatpush1.msra.mxu0 %v2741
    %3009 = vmatprep.subr.mxu0 0.0
    %3010 = vmatpush1.msra.mxu0 %v2742
    %3011 = vmatprep.subr.mxu0 0.0
    %3012 = vmatpush1.msra.mxu0 %v2743
    %3013 = vmatprep.subr.mxu0 0.0
    %3014 = vmatpush1.msra.mxu0 %v2744
    %3015 = vmatprep.subr.mxu0 0.0
    %3016 = vmatpush1.msra.mxu0 %v2745
    %3017 = vmatprep.subr.mxu0 0.0
    %3018 = vmatpush1.msra.mxu0 %v2746
    %3019 = vmatprep.subr.mxu0 0.0
    %3020 = vmatpush1.msra.mxu0 %v2747
    %3021 = vmatprep.subr.mxu0 0.0
    %3022 = vmatpush1.msra.mxu0 %v2748
    %3023 = vmatprep.subr.mxu0 0.0
    %3024 = vmatpush1.msra.mxu0 %v2749
    %3025 = vmatprep.subr.mxu0 0.0
    %3026 = vmatpush1.msra.mxu0 %v2750
    %3027 = vmatprep.subr.mxu0 0.0
    %3028 = vmatpush1.msra.mxu0 %v2751
    %3029 = vmatprep.subr.mxu0 0.0
    %3030 = vmatpush1.msra.mxu0 %v2752
    %3031 = vmatprep.subr.mxu0 0.0
    %3032 = vmatpush1.msra.mxu0 %v2753
    %3033 = vmatprep.subr.mxu0 0.0
    %3034 = vmatpush1.msra.mxu0 %v2754
    %3035 = vmatprep.subr.mxu0 0.0
    %3036 = vmatpush1.msra.mxu0 %v2755
    %3037 = vmatprep.mubr.f32.mxu0 %v2627
    %3038 = vmatmul.mubr.f32.gmra.mrb[0].mxu0 %v2626
    %v3039 = vpop.f32.mrb[0].mxu0
    %v3040 = vadd.f32 %v2970, %v3039
    %v3041 = vpop.f32.mrb[0].mxu0
    %3042 = vdwg.mxu0
    %v3043 = vld [vmem:[#allocation2] sm:$0xff]
    %v3044 = vld [vmem:[#allocation2 + $0x8] sm:$0xff]
    %v3045 = vld [vmem:[#allocation2 + $0x10] sm:$0xff]
    %v3046 = vld [vmem:[#allocation2 + $0x18] sm:$0xff]
    %v3047 = vld [vmem:[#allocation2 + $0x20] sm:$0xff]
    %v3048 = vld [vmem:[#allocation2 + $0x28] sm:$0xff]
    %v3049 = vld [vmem:[#allocation2 + $0x30] sm:$0xff]
    %v3050 = vld [vmem:[#allocation2 + $0x38] sm:$0xff]
    %v3051 = vld [vmem:[#allocation2 + $0x40] sm:$0xff]
    %v3052 = vld [vmem:[#allocation2 + $0x48] sm:$0xff]
    %v3053 = vld [vmem:[#allocation2 + $0x50] sm:$0xff]
    %v3054 = vld [vmem:[#allocation2 + $0x58] sm:$0xff]
    %v3055 = vld [vmem:[#allocation2 + $0x60] sm:$0xff]
    %v3056 = vld [vmem:[#allocation2 + $0x68] sm:$0xff]
    %v3057 = vld [vmem:[#allocation2 + $0x70] sm:$0xff]
    %v3058 = vld [vmem:[#allocation2 + $0x78] sm:$0xff]
    %v3059 = vld [vmem:[#allocation2 + $0x80] sm:$0xff]
    %v3060 = vld [vmem:[#allocation2 + $0x88] sm:$0xff]
    %v3061 = vld [vmem:[#allocation2 + $0x90] sm:$0xff]
    %v3062 = vld [vmem:[#allocation2 + $0x98] sm:$0xff]
    %v3063 = vld [vmem:[#allocation2 + $0xa0] sm:$0xff]
    %v3064 = vld [vmem:[#allocation2 + $0xa8] sm:$0xff]
    %v3065 = vld [vmem:[#allocation2 + $0xb0] sm:$0xff]
    %v3066 = vld [vmem:[#allocation2 + $0xb8] sm:$0xff]
    %v3067 = vld [vmem:[#allocation2 + $0xc0] sm:$0xff]
    %v3068 = vld [vmem:[#allocation2 + $0xc8] sm:$0xff]
    %v3069 = vld [vmem:[#allocation2 + $0xd0] sm:$0xff]
    %v3070 = vld [vmem:[#allocation2 + $0xd8] sm:$0xff]
    %v3071 = vld [vmem:[#allocation2 + $0xe0] sm:$0xff]
    %v3072 = vld [vmem:[#allocation2 + $0xe8] sm:$0xff]
    %v3073 = vld [vmem:[#allocation2 + $0xf0] sm:$0xff]
    %v3074 = vld [vmem:[#allocation2 + $0xf8] sm:$0xff]
    %v3075 = vld [vmem:[#allocation2 + $0x100] sm:$0xff]
    %v3076 = vld [vmem:[#allocation2 + $0x108] sm:$0xff]
    %v3077 = vld [vmem:[#allocation2 + $0x110] sm:$0xff]
    %v3078 = vld [vmem:[#allocation2 + $0x118] sm:$0xff]
    %v3079 = vld [vmem:[#allocation2 + $0x120] sm:$0xff]
    %v3080 = vld [vmem:[#allocation2 + $0x128] sm:$0xff]
    %v3081 = vld [vmem:[#allocation2 + $0x130] sm:$0xff]
    %v3082 = vld [vmem:[#allocation2 + $0x138] sm:$0xff]
    %v3083 = vld [vmem:[#allocation2 + $0x140] sm:$0xff]
    %v3084 = vld [vmem:[#allocation2 + $0x148] sm:$0xff]
    %v3085 = vld [vmem:[#allocation2 + $0x150] sm:$0xff]
    %v3086 = vld [vmem:[#allocation2 + $0x158] sm:$0xff]
    %v3087 = vld [vmem:[#allocation2 + $0x160] sm:$0xff]
    %v3088 = vld [vmem:[#allocation2 + $0x168] sm:$0xff]
    %v3089 = vld [vmem:[#allocation2 + $0x170] sm:$0xff]
    %v3090 = vld [vmem:[#allocation2 + $0x178] sm:$0xff]
    %v3091 = vld [vmem:[%s5] sm:$0xff]
    %v3092 = vld [vmem:[%s5 + $0x8] sm:$0xff]
    %v3093 = vld [vmem:[%s5 + $0x10] sm:$0xff]
    %v3094 = vld [vmem:[%s5 + $0x18] sm:$0xff]
    %v3095 = vld [vmem:[%s5 + $0x20] sm:$0xff]
    %v3096 = vld [vmem:[%s5 + $0x28] sm:$0xff]
    %v3097 = vld [vmem:[%s5 + $0x30] sm:$0xff]
    %v3098 = vld [vmem:[%s5 + $0x38] sm:$0xff]
    %v3099 = vld [vmem:[%s5 + $0x40] sm:$0xff]
    %v3100 = vld [vmem:[%s5 + $0x48] sm:$0xff]
    %v3101 = vld [vmem:[%s5 + $0x50] sm:$0xff]
    %v3102 = vld [vmem:[%s5 + $0x58] sm:$0xff]
    %v3103 = vld [vmem:[%s5 + $0x60] sm:$0xff]
    %v3104 = vld [vmem:[%s5 + $0x68] sm:$0xff]
    %v3105 = vld [vmem:[%s5 + $0x70] sm:$0xff]
    %v3106 = vld [vmem:[%s5 + $0x78] sm:$0xff]
    %v3107 = vld [vmem:[%s5 + $0x80] sm:$0xff]
    %v3108 = vld [vmem:[%s5 + $0x88] sm:$0xff]
    %v3109 = vld [vmem:[%s5 + $0x90] sm:$0xff]
    %v3110 = vld [vmem:[%s5 + $0x98] sm:$0xff]
    %v3111 = vld [vmem:[%s5 + $0xa0] sm:$0xff]
    %v3112 = vld [vmem:[%s5 + $0xa8] sm:$0xff]
    %v3113 = vld [vmem:[%s5 + $0xb0] sm:$0xff]
    %v3114 = vld [vmem:[%s5 + $0xb8] sm:$0xff]
    %v3115 = vld [vmem:[%s5 + $0xc0] sm:$0xff]
    %v3116 = vld [vmem:[%s5 + $0xc8] sm:$0xff]
    %v3117 = vld [vmem:[%s5 + $0xd0] sm:$0xff]
    %v3118 = vld [vmem:[%s5 + $0xd8] sm:$0xff]
    %v3119 = vld [vmem:[%s5 + $0xe0] sm:$0xff]
    %v3120 = vld [vmem:[%s5 + $0xe8] sm:$0xff]
    %v3121 = vld [vmem:[%s5 + $0xf0] sm:$0xff]
    %v3122 = vld [vmem:[%s5 + $0xf8] sm:$0xff]
    %v3123 = vld [vmem:[%s5 + $0x100] sm:$0xff]
    %v3124 = vld [vmem:[%s5 + $0x108] sm:$0xff]
    %v3125 = vld [vmem:[%s5 + $0x110] sm:$0xff]
    %v3126 = vld [vmem:[%s5 + $0x118] sm:$0xff]
    %v3127 = vld [vmem:[%s5 + $0x120] sm:$0xff]
    %v3128 = vld [vmem:[%s5 + $0x128] sm:$0xff]
    %v3129 = vld [vmem:[%s5 + $0x130] sm:$0xff]
    %v3130 = vld [vmem:[%s5 + $0x138] sm:$0xff]
    %v3131 = vld [vmem:[%s5 + $0x140] sm:$0xff]
    %v3132 = vld [vmem:[%s5 + $0x148] sm:$0xff]
    %v3133 = vld [vmem:[%s5 + $0x150] sm:$0xff]
    %v3134 = vld [vmem:[%s5 + $0x158] sm:$0xff]
    %v3135 = vld [vmem:[%s5 + $0x160] sm:$0xff]
    %v3136 = vld [vmem:[%s5 + $0x168] sm:$0xff]
    %v3137 = vld [vmem:[%s5 + $0x170] sm:$0xff]
    %v3138 = vld [vmem:[%s5 + $0x178] sm:$0xff]
    %v3139 = vld [vmem:[%s5 + $0x180] sm:$0xff]
    %v3140 = vld [vmem:[%s5 + $0x188] sm:$0xff]
    %v3141 = vld [vmem:[%s5 + $0x190] sm:$0xff]
    %v3142 = vld [vmem:[%s5 + $0x198] sm:$0xff]
    %v3143 = vld [vmem:[%s5 + $0x1a0] sm:$0xff]
    %v3144 = vld [vmem:[%s5 + $0x1a8] sm:$0xff]
    %v3145 = vld [vmem:[%s5 + $0x1b0] sm:$0xff]
    %v3146 = vld [vmem:[%s5 + $0x1b8] sm:$0xff]
    %v3147 = vld [vmem:[%s5 + $0x1c0] sm:$0xff]
    %v3148 = vld [vmem:[%s5 + $0x1c8] sm:$0xff]
    %v3149 = vld [vmem:[%s5 + $0x1d0] sm:$0xff]
    %v3150 = vld [vmem:[%s5 + $0x1d8] sm:$0xff]
    %v3151 = vld [vmem:[%s5 + $0x1e0] sm:$0xff]
    %v3152 = vld [vmem:[%s5 + $0x1e8] sm:$0xff]
    %v3153 = vld [vmem:[%s5 + $0x1f0] sm:$0xff]
    %v3154 = vld [vmem:[%s5 + $0x1f8] sm:$0xff]
    %v3155 = vld [vmem:[%s5 + $0x200] sm:$0xff]
    %v3156 = vld [vmem:[%s5 + $0x208] sm:$0xff]
    %v3157 = vld [vmem:[%s5 + $0x210] sm:$0xff]
    %v3158 = vld [vmem:[%s5 + $0x218] sm:$0xff]
    %v3159 = vld [vmem:[%s5 + $0x220] sm:$0xff]
    %v3160 = vld [vmem:[%s5 + $0x228] sm:$0xff]
    %v3161 = vld [vmem:[%s5 + $0x230] sm:$0xff]
    %v3162 = vld [vmem:[%s5 + $0x238] sm:$0xff]
    %v3163 = vld [vmem:[%s5 + $0x240] sm:$0xff]
    %v3164 = vld [vmem:[%s5 + $0x248] sm:$0xff]
    %v3165 = vld [vmem:[%s5 + $0x250] sm:$0xff]
    %v3166 = vld [vmem:[%s5 + $0x258] sm:$0xff]
    %v3167 = vld [vmem:[%s5 + $0x260] sm:$0xff]
    %v3168 = vld [vmem:[%s5 + $0x268] sm:$0xff]
    %v3169 = vld [vmem:[%s5 + $0x270] sm:$0xff]
    %v3170 = vld [vmem:[%s5 + $0x278] sm:$0xff]
    %v3171 = vld [vmem:[%s5 + $0x280] sm:$0xff]
    %v3172 = vld [vmem:[%s5 + $0x288] sm:$0xff]
    %v3173 = vld [vmem:[%s5 + $0x290] sm:$0xff]
    %v3174 = vld [vmem:[%s5 + $0x298] sm:$0xff]
    %v3175 = vld [vmem:[%s5 + $0x2a0] sm:$0xff]
    %v3176 = vld [vmem:[%s5 + $0x2a8] sm:$0xff]
    %v3177 = vld [vmem:[%s5 + $0x2b0] sm:$0xff]
    %v3178 = vld [vmem:[%s5 + $0x2b8] sm:$0xff]
    %v3179 = vld [vmem:[%s5 + $0x2c0] sm:$0xff]
    %v3180 = vld [vmem:[%s5 + $0x2c8] sm:$0xff]
    %v3181 = vld [vmem:[%s5 + $0x2d0] sm:$0xff]
    %v3182 = vld [vmem:[%s5 + $0x2d8] sm:$0xff]
    %v3183 = vld [vmem:[%s5 + $0x2e0] sm:$0xff]
    %v3184 = vld [vmem:[%s5 + $0x2e8] sm:$0xff]
    %v3185 = vld [vmem:[%s5 + $0x2f0] sm:$0xff]
    %v3186 = vld [vmem:[%s5 + $0x2f8] sm:$0xff]
    %v3187 = vld [vmem:[%s5 + $0x300] sm:$0xff]
    %v3188 = vld [vmem:[%s5 + $0x308] sm:$0xff]
    %v3189 = vld [vmem:[%s5 + $0x310] sm:$0xff]
    %v3190 = vld [vmem:[%s5 + $0x318] sm:$0xff]
    %v3191 = vld [vmem:[%s5 + $0x320] sm:$0xff]
    %v3192 = vld [vmem:[%s5 + $0x328] sm:$0xff]
    %v3193 = vld [vmem:[%s5 + $0x330] sm:$0xff]
    %v3194 = vld [vmem:[%s5 + $0x338] sm:$0xff]
    %v3195 = vld [vmem:[%s5 + $0x340] sm:$0xff]
    %v3196 = vld [vmem:[%s5 + $0x348] sm:$0xff]
    %v3197 = vld [vmem:[%s5 + $0x350] sm:$0xff]
    %v3198 = vld [vmem:[%s5 + $0x358] sm:$0xff]
    %v3199 = vld [vmem:[%s5 + $0x360] sm:$0xff]
    %v3200 = vld [vmem:[%s5 + $0x368] sm:$0xff]
    %v3201 = vld [vmem:[%s5 + $0x370] sm:$0xff]
    %v3202 = vld [vmem:[%s5 + $0x378] sm:$0xff]
    %v3203 = vld [vmem:[%s5 + $0x380] sm:$0xff]
    %v3204 = vld [vmem:[%s5 + $0x388] sm:$0xff]
    %v3205 = vld [vmem:[%s5 + $0x390] sm:$0xff]
    %v3206 = vld [vmem:[%s5 + $0x398] sm:$0xff]
    %v3207 = vld [vmem:[%s5 + $0x3a0] sm:$0xff]
    %v3208 = vld [vmem:[%s5 + $0x3a8] sm:$0xff]
    %v3209 = vld [vmem:[%s5 + $0x3b0] sm:$0xff]
    %v3210 = vld [vmem:[%s5 + $0x3b8] sm:$0xff]
    %v3211 = vld [vmem:[%s5 + $0x3c0] sm:$0xff]
    %v3212 = vld [vmem:[%s5 + $0x3c8] sm:$0xff]
    %v3213 = vld [vmem:[%s5 + $0x3d0] sm:$0xff]
    %v3214 = vld [vmem:[%s5 + $0x3d8] sm:$0xff]
    %v3215 = vld [vmem:[%s5 + $0x3e0] sm:$0xff]
    %v3216 = vld [vmem:[%s5 + $0x3e8] sm:$0xff]
    %v3217 = vld [vmem:[%s5 + $0x3f0] sm:$0xff]
    %v3218 = vld [vmem:[%s5 + $0x3f8] sm:$0xff]
    %v3219 = vld [vmem:[%s5 + $0x400] sm:$0xff]
    %v3220 = vld [vmem:[%s5 + $0x408] sm:$0xff]
    %v3221 = vld [vmem:[%s5 + $0x410] sm:$0xff]
    %v3222 = vld [vmem:[%s5 + $0x418] sm:$0xff]
    %v3223 = vld [vmem:[%s5 + $0x420] sm:$0xff]
    %v3224 = vld [vmem:[%s5 + $0x428] sm:$0xff]
    %v3225 = vld [vmem:[%s5 + $0x430] sm:$0xff]
    %v3226 = vld [vmem:[%s5 + $0x438] sm:$0xff]
    %v3227 = vld [vmem:[%s5 + $0x440] sm:$0xff]
    %v3228 = vld [vmem:[%s5 + $0x448] sm:$0xff]
    %v3229 = vld [vmem:[%s5 + $0x450] sm:$0xff]
    %v3230 = vld [vmem:[%s5 + $0x458] sm:$0xff]
    %v3231 = vld [vmem:[%s5 + $0x460] sm:$0xff]
    %v3232 = vld [vmem:[%s5 + $0x468] sm:$0xff]
    %v3233 = vld [vmem:[%s5 + $0x470] sm:$0xff]
    %v3234 = vld [vmem:[%s5 + $0x478] sm:$0xff]
    %v3235 = vld [vmem:[%s5 + $0x480] sm:$0xff]
    %v3236 = vld [vmem:[%s5 + $0x488] sm:$0xff]
    %v3237 = vld [vmem:[%s5 + $0x490] sm:$0xff]
    %v3238 = vld [vmem:[%s5 + $0x498] sm:$0xff]
    %v3239 = vld [vmem:[%s5 + $0x4a0] sm:$0xff]
    %v3240 = vld [vmem:[%s5 + $0x4a8] sm:$0xff]
    %v3241 = vld [vmem:[%s5 + $0x4b0] sm:$0xff]
    %v3242 = vld [vmem:[%s5 + $0x4b8] sm:$0xff]
    %v3243 = vld [vmem:[%s5 + $0x4c0] sm:$0xff]
    %v3244 = vld [vmem:[%s5 + $0x4c8] sm:$0xff]
    %v3245 = vld [vmem:[%s5 + $0x4d0] sm:$0xff]
    %v3246 = vld [vmem:[%s5 + $0x4d8] sm:$0xff]
    %v3247 = vld [vmem:[%s5 + $0x4e0] sm:$0xff]
    %v3248 = vld [vmem:[%s5 + $0x4e8] sm:$0xff]
    %v3249 = vld [vmem:[%s5 + $0x4f0] sm:$0xff]
    %v3250 = vld [vmem:[%s5 + $0x4f8] sm:$0xff]
    %v3251 = vld [vmem:[%s5 + $0x500] sm:$0xff]
    %v3252 = vld [vmem:[%s5 + $0x508] sm:$0xff]
    %v3253 = vld [vmem:[%s5 + $0x510] sm:$0xff]
    %v3254 = vld [vmem:[%s5 + $0x518] sm:$0xff]
    %v3255 = vld [vmem:[%s5 + $0x520] sm:$0xff]
    %v3256 = vld [vmem:[%s5 + $0x528] sm:$0xff]
    %v3257 = vld [vmem:[%s5 + $0x530] sm:$0xff]
    %v3258 = vld [vmem:[%s5 + $0x538] sm:$0xff]
    %v3259 = vld [vmem:[%s5 + $0x540] sm:$0xff]
    %v3260 = vld [vmem:[%s5 + $0x548] sm:$0xff]
    %v3261 = vld [vmem:[%s5 + $0x550] sm:$0xff]
    %v3262 = vld [vmem:[%s5 + $0x558] sm:$0xff]
    %v3263 = vld [vmem:[%s5 + $0x560] sm:$0xff]
    %v3264 = vld [vmem:[%s5 + $0x568] sm:$0xff]
    %v3265 = vld [vmem:[%s5 + $0x570] sm:$0xff]
    %v3266 = vld [vmem:[%s5 + $0x578] sm:$0xff]
    %v3267 = vld [vmem:[%s5 + $0x580] sm:$0xff]
    %v3268 = vld [vmem:[%s5 + $0x588] sm:$0xff]
    %v3269 = vld [vmem:[%s5 + $0x590] sm:$0xff]
    %v3270 = vld [vmem:[%s5 + $0x598] sm:$0xff]
    %v3271 = vld [vmem:[%s5 + $0x5a0] sm:$0xff]
    %v3272 = vld [vmem:[%s5 + $0x5a8] sm:$0xff]
    %v3273 = vld [vmem:[%s5 + $0x5b0] sm:$0xff]
    %v3274 = vld [vmem:[%s5 + $0x5b8] sm:$0xff]
    %v3275 = vld [vmem:[%s5 + $0x5c0] sm:$0xff]
    %v3276 = vld [vmem:[%s5 + $0x5c8] sm:$0xff]
    %v3277 = vld [vmem:[%s5 + $0x5d0] sm:$0xff]
    %v3278 = vld [vmem:[%s5 + $0x5d8] sm:$0xff]
    %v3279 = vld [vmem:[%s5 + $0x5e0] sm:$0xff]
    %v3280 = vld [vmem:[%s5 + $0x5e8] sm:$0xff]
    %v3281 = vld [vmem:[%s5 + $0x5f0] sm:$0xff]
    %v3282 = vld [vmem:[%s5 + $0x5f8] sm:$0xff]
    %v3283 = vld [vmem:[%s5 + $0x600] sm:$0xff]
    %v3284 = vld [vmem:[%s5 + $0x608] sm:$0xff]
    %v3285 = vld [vmem:[%s5 + $0x610] sm:$0xff]
    %v3286 = vld [vmem:[%s5 + $0x618] sm:$0xff]
    %v3287 = vld [vmem:[%s5 + $0x620] sm:$0xff]
    %v3288 = vld [vmem:[%s5 + $0x628] sm:$0xff]
    %v3289 = vld [vmem:[%s5 + $0x630] sm:$0xff]
    %v3290 = vld [vmem:[%s5 + $0x638] sm:$0xff]
    %v3291 = vld [vmem:[%s5 + $0x640] sm:$0xff]
    %v3292 = vld [vmem:[%s5 + $0x648] sm:$0xff]
    %v3293 = vld [vmem:[%s5 + $0x650] sm:$0xff]
    %v3294 = vld [vmem:[%s5 + $0x658] sm:$0xff]
    %v3295 = vld [vmem:[%s5 + $0x660] sm:$0xff]
    %v3296 = vld [vmem:[%s5 + $0x668] sm:$0xff]
    %v3297 = vld [vmem:[%s5 + $0x670] sm:$0xff]
    %v3298 = vld [vmem:[%s5 + $0x678] sm:$0xff]
    %v3299 = vld [vmem:[%s5 + $0x680] sm:$0xff]
    %v3300 = vld [vmem:[%s5 + $0x688] sm:$0xff]
    %v3301 = vld [vmem:[%s5 + $0x690] sm:$0xff]
    %v3302 = vld [vmem:[%s5 + $0x698] sm:$0xff]
    %v3303 = vld [vmem:[%s5 + $0x6a0] sm:$0xff]
    %v3304 = vld [vmem:[%s5 + $0x6a8] sm:$0xff]
    %v3305 = vld [vmem:[%s5 + $0x6b0] sm:$0xff]
    %v3306 = vld [vmem:[%s5 + $0x6b8] sm:$0xff]
    %v3307 = vld [vmem:[%s5 + $0x6c0] sm:$0xff]
    %v3308 = vld [vmem:[%s5 + $0x6c8] sm:$0xff]
    %v3309 = vld [vmem:[%s5 + $0x6d0] sm:$0xff]
    %v3310 = vld [vmem:[%s5 + $0x6d8] sm:$0xff]
    %v3311 = vld [vmem:[%s5 + $0x6e0] sm:$0xff]
    %v3312 = vld [vmem:[%s5 + $0x6e8] sm:$0xff]
    %v3313 = vld [vmem:[%s5 + $0x6f0] sm:$0xff]
    %v3314 = vld [vmem:[%s5 + $0x6f8] sm:$0xff]
    %v3315 = vld [vmem:[%s5 + $0x700] sm:$0xff]
    %v3316 = vld [vmem:[%s5 + $0x708] sm:$0xff]
    %v3317 = vld [vmem:[%s5 + $0x710] sm:$0xff]
    %v3318 = vld [vmem:[%s5 + $0x718] sm:$0xff]
    %v3319 = vld [vmem:[%s5 + $0x720] sm:$0xff]
    %v3320 = vld [vmem:[%s5 + $0x728] sm:$0xff]
    %v3321 = vld [vmem:[%s5 + $0x730] sm:$0xff]
    %v3322 = vld [vmem:[%s5 + $0x738] sm:$0xff]
    %v3323 = vld [vmem:[%s5 + $0x740] sm:$0xff]
    %v3324 = vld [vmem:[%s5 + $0x748] sm:$0xff]
    %v3325 = vld [vmem:[%s5 + $0x750] sm:$0xff]
    %v3326 = vld [vmem:[%s5 + $0x758] sm:$0xff]
    %v3327 = vld [vmem:[%s5 + $0x760] sm:$0xff]
    %v3328 = vld [vmem:[%s5 + $0x768] sm:$0xff]
    %v3329 = vld [vmem:[%s5 + $0x770] sm:$0xff]
    %v3330 = vld [vmem:[%s5 + $0x778] sm:$0xff]
    %v3331 = vld [vmem:[%s5 + $0x780] sm:$0xff]
    %v3332 = vld [vmem:[%s5 + $0x788] sm:$0xff]
    %v3333 = vld [vmem:[%s5 + $0x790] sm:$0xff]
    %v3334 = vld [vmem:[%s5 + $0x798] sm:$0xff]
    %v3335 = vld [vmem:[%s5 + $0x7a0] sm:$0xff]
    %v3336 = vld [vmem:[%s5 + $0x7a8] sm:$0xff]
    %v3337 = vld [vmem:[%s5 + $0x7b0] sm:$0xff]
    %v3338 = vld [vmem:[%s5 + $0x7b8] sm:$0xff]
    %v3339 = vld [vmem:[%s5 + $0x7c0] sm:$0xff]
    %v3340 = vld [vmem:[%s5 + $0x7c8] sm:$0xff]
    %v3341 = vld [vmem:[%s5 + $0x7d0] sm:$0xff]
    %v3342 = vld [vmem:[%s5 + $0x7d8] sm:$0xff]
    %v3343 = vld [vmem:[%s5 + $0x7e0] sm:$0xff]
    %v3344 = vld [vmem:[%s5 + $0x7e8] sm:$0xff]
    %v3345 = vld [vmem:[%s5 + $0x7f0] sm:$0xff]
    %v3346 = vld [vmem:[%s5 + $0x7f8] sm:$0xff]
    %v3347 = vld [vmem:[%s5 + $0x800] sm:$0xff]
    %v3348 = vld [vmem:[%s5 + $0x808] sm:$0xff]
    %v3349 = vld [vmem:[%s5 + $0x810] sm:$0xff]
    %v3350 = vld [vmem:[%s5 + $0x818] sm:$0xff]
    %v3351 = vld [vmem:[%s5 + $0x820] sm:$0xff]
    %v3352 = vld [vmem:[%s5 + $0x828] sm:$0xff]
    %v3353 = vld [vmem:[%s5 + $0x830] sm:$0xff]
    %v3354 = vld [vmem:[%s5 + $0x838] sm:$0xff]
    %v3355 = vld [vmem:[%s5 + $0x840] sm:$0xff]
    %v3356 = vld [vmem:[%s5 + $0x848] sm:$0xff]
    %v3357 = vld [vmem:[%s5 + $0x850] sm:$0xff]
    %v3358 = vld [vmem:[%s5 + $0x858] sm:$0xff]
    %v3359 = vld [vmem:[%s5 + $0x860] sm:$0xff]
    %v3360 = vld [vmem:[%s5 + $0x868] sm:$0xff]
    %v3361 = vld [vmem:[%s5 + $0x870] sm:$0xff]
    %v3362 = vld [vmem:[%s5 + $0x878] sm:$0xff]
    %v3363 = vld [vmem:[%s5 + $0x880] sm:$0xff]
    %v3364 = vld [vmem:[%s5 + $0x888] sm:$0xff]
    %v3365 = vld [vmem:[%s5 + $0x890] sm:$0xff]
    %v3366 = vld [vmem:[%s5 + $0x898] sm:$0xff]
    %v3367 = vld [vmem:[%s5 + $0x8a0] sm:$0xff]
    %v3368 = vld [vmem:[%s5 + $0x8a8] sm:$0xff]
    %v3369 = vld [vmem:[%s5 + $0x8b0] sm:$0xff]
    %v3370 = vld [vmem:[%s5 + $0x8b8] sm:$0xff]
    %v3371 = vld [vmem:[%s5 + $0x8c0] sm:$0xff]
    %v3372 = vld [vmem:[%s5 + $0x8c8] sm:$0xff]
    %v3373 = vld [vmem:[%s5 + $0x8d0] sm:$0xff]
    %v3374 = vld [vmem:[%s5 + $0x8d8] sm:$0xff]
    %v3375 = vld [vmem:[%s5 + $0x8e0] sm:$0xff]
    %v3376 = vld [vmem:[%s5 + $0x8e8] sm:$0xff]
    %v3377 = vld [vmem:[%s5 + $0x8f0] sm:$0xff]
    %v3378 = vld [vmem:[%s5 + $0x8f8] sm:$0xff]
    %v3379 = vld [vmem:[%s5 + $0x900] sm:$0xff]
    %v3380 = vld [vmem:[%s5 + $0x908] sm:$0xff]
    %v3381 = vld [vmem:[%s5 + $0x910] sm:$0xff]
    %v3382 = vld [vmem:[%s5 + $0x918] sm:$0xff]
    %v3383 = vld [vmem:[%s5 + $0x920] sm:$0xff]
    %v3384 = vld [vmem:[%s5 + $0x928] sm:$0xff]
    %v3385 = vld [vmem:[%s5 + $0x930] sm:$0xff]
    %v3386 = vld [vmem:[%s5 + $0x938] sm:$0xff]
    %v3387 = vld [vmem:[%s5 + $0x940] sm:$0xff]
    %v3388 = vld [vmem:[%s5 + $0x948] sm:$0xff]
    %v3389 = vld [vmem:[%s5 + $0x950] sm:$0xff]
    %v3390 = vld [vmem:[%s5 + $0x958] sm:$0xff]
    %v3391 = vld [vmem:[%s5 + $0x960] sm:$0xff]
    %v3392 = vld [vmem:[%s5 + $0x968] sm:$0xff]
    %v3393 = vld [vmem:[%s5 + $0x970] sm:$0xff]
    %v3394 = vld [vmem:[%s5 + $0x978] sm:$0xff]
    %v3395 = vld [vmem:[%s5 + $0x980] sm:$0xff]
    %v3396 = vld [vmem:[%s5 + $0x988] sm:$0xff]
    %v3397 = vld [vmem:[%s5 + $0x990] sm:$0xff]
    %v3398 = vld [vmem:[%s5 + $0x998] sm:$0xff]
    %v3399 = vld [vmem:[%s5 + $0x9a0] sm:$0xff]
    %v3400 = vld [vmem:[%s5 + $0x9a8] sm:$0xff]
    %v3401 = vld [vmem:[%s5 + $0x9b0] sm:$0xff]
    %v3402 = vld [vmem:[%s5 + $0x9b8] sm:$0xff]
    %v3403 = vld [vmem:[%s5 + $0x9c0] sm:$0xff]
    %v3404 = vld [vmem:[%s5 + $0x9c8] sm:$0xff]
    %v3405 = vld [vmem:[%s5 + $0x9d0] sm:$0xff]
    %v3406 = vld [vmem:[%s5 + $0x9d8] sm:$0xff]
    %v3407 = vld [vmem:[%s5 + $0x9e0] sm:$0xff]
    %v3408 = vld [vmem:[%s5 + $0x9e8] sm:$0xff]
    %v3409 = vld [vmem:[%s5 + $0x9f0] sm:$0xff]
    %v3410 = vld [vmem:[%s5 + $0x9f8] sm:$0xff]
    %v3411 = vld [vmem:[%s5 + $0xa00] sm:$0xff]
    %v3412 = vld [vmem:[%s5 + $0xa08] sm:$0xff]
    %v3413 = vld [vmem:[%s5 + $0xa10] sm:$0xff]
    %v3414 = vld [vmem:[%s5 + $0xa18] sm:$0xff]
    %v3415 = vld [vmem:[%s5 + $0xa20] sm:$0xff]
    %v3416 = vld [vmem:[%s5 + $0xa28] sm:$0xff]
    %v3417 = vld [vmem:[%s5 + $0xa30] sm:$0xff]
    %v3418 = vld [vmem:[%s5 + $0xa38] sm:$0xff]
    %v3419 = vld [vmem:[%s5 + $0xa40] sm:$0xff]
    %v3420 = vld [vmem:[%s5 + $0xa48] sm:$0xff]
    %v3421 = vld [vmem:[%s5 + $0xa50] sm:$0xff]
    %v3422 = vld [vmem:[%s5 + $0xa58] sm:$0xff]
    %v3423 = vld [vmem:[%s5 + $0xa60] sm:$0xff]
    %v3424 = vld [vmem:[%s5 + $0xa68] sm:$0xff]
    %v3425 = vld [vmem:[%s5 + $0xa70] sm:$0xff]
    %v3426 = vld [vmem:[%s5 + $0xa78] sm:$0xff]
    %v3427 = vld [vmem:[%s5 + $0xa80] sm:$0xff]
    %v3428 = vld [vmem:[%s5 + $0xa88] sm:$0xff]
    %v3429 = vld [vmem:[%s5 + $0xa90] sm:$0xff]
    %v3430 = vld [vmem:[%s5 + $0xa98] sm:$0xff]
    %v3431 = vld [vmem:[%s5 + $0xaa0] sm:$0xff]
    %v3432 = vld [vmem:[%s5 + $0xaa8] sm:$0xff]
    %v3433 = vld [vmem:[%s5 + $0xab0] sm:$0xff]
    %v3434 = vld [vmem:[%s5 + $0xab8] sm:$0xff]
    %v3435 = vld [vmem:[%s5 + $0xac0] sm:$0xff]
    %v3436 = vld [vmem:[%s5 + $0xac8] sm:$0xff]
    %v3437 = vld [vmem:[%s5 + $0xad0] sm:$0xff]
    %v3438 = vld [vmem:[%s5 + $0xad8] sm:$0xff]
    %v3439 = vld [vmem:[%s5 + $0xae0] sm:$0xff]
    %v3440 = vld [vmem:[%s5 + $0xae8] sm:$0xff]
    %v3441 = vld [vmem:[%s5 + $0xaf0] sm:$0xff]
    %v3442 = vld [vmem:[%s5 + $0xaf8] sm:$0xff]
    %v3443 = vld [vmem:[%s5 + $0xb00] sm:$0xff]
    %v3444 = vld [vmem:[%s5 + $0xb08] sm:$0xff]
    %v3445 = vld [vmem:[%s5 + $0xb10] sm:$0xff]
    %v3446 = vld [vmem:[%s5 + $0xb18] sm:$0xff]
    %v3447 = vld [vmem:[%s5 + $0xb20] sm:$0xff]
    %v3448 = vld [vmem:[%s5 + $0xb28] sm:$0xff]
    %v3449 = vld [vmem:[%s5 + $0xb30] sm:$0xff]
    %v3450 = vld [vmem:[%s5 + $0xb38] sm:$0xff]
    %v3451 = vld [vmem:[%s5 + $0xb40] sm:$0xff]
    %v3452 = vld [vmem:[%s5 + $0xb48] sm:$0xff]
    %v3453 = vld [vmem:[%s5 + $0xb50] sm:$0xff]
    %v3454 = vld [vmem:[%s5 + $0xb58] sm:$0xff]
    %v3455 = vld [vmem:[%s5 + $0xb60] sm:$0xff]
    %v3456 = vld [vmem:[%s5 + $0xb68] sm:$0xff]
    %v3457 = vld [vmem:[%s5 + $0xb70] sm:$0xff]
    %v3458 = vld [vmem:[%s5 + $0xb78] sm:$0xff]
    %v3459 = vld [vmem:[%s5 + $0xb80] sm:$0xff]
    %v3460 = vld [vmem:[%s5 + $0xb88] sm:$0xff]
    %v3461 = vld [vmem:[%s5 + $0xb90] sm:$0xff]
    %v3462 = vld [vmem:[%s5 + $0xb98] sm:$0xff]
    %v3463 = vld [vmem:[%s5 + $0xba0] sm:$0xff]
    %v3464 = vld [vmem:[%s5 + $0xba8] sm:$0xff]
    %v3465 = vld [vmem:[%s5 + $0xbb0] sm:$0xff]
    %v3466 = vld [vmem:[%s5 + $0xbb8] sm:$0xff]
    %v3467 = vld [vmem:[%s5 + $0xbc0] sm:$0xff]
    %v3468 = vld [vmem:[%s5 + $0xbc8] sm:$0xff]
    %v3469 = vld [vmem:[%s5 + $0xbd0] sm:$0xff]
    %v3470 = vld [vmem:[%s5 + $0xbd8] sm:$0xff]
    %v3471 = vld [vmem:[%s5 + $0xbe0] sm:$0xff]
    %v3472 = vld [vmem:[%s5 + $0xbe8] sm:$0xff]
    %v3473 = vld [vmem:[%s5 + $0xbf0] sm:$0xff]
    %v3474 = vld [vmem:[%s5 + $0xbf8] sm:$0xff]
    %v3475 = vld [vmem:[%s5 + $0xc00] sm:$0xff]
    %v3476 = vld [vmem:[%s5 + $0xc08] sm:$0xff]
    %v3477 = vld [vmem:[%s5 + $0xc10] sm:$0xff]
    %v3478 = vld [vmem:[%s5 + $0xc18] sm:$0xff]
    %v3479 = vld [vmem:[%s5 + $0xc20] sm:$0xff]
    %v3480 = vld [vmem:[%s5 + $0xc28] sm:$0xff]
    %v3481 = vld [vmem:[%s5 + $0xc30] sm:$0xff]
    %v3482 = vld [vmem:[%s5 + $0xc38] sm:$0xff]
    %v3483 = vld [vmem:[%s5 + $0xc40] sm:$0xff]
    %v3484 = vld [vmem:[%s5 + $0xc48] sm:$0xff]
    %v3485 = vld [vmem:[%s5 + $0xc50] sm:$0xff]
    %v3486 = vld [vmem:[%s5 + $0xc58] sm:$0xff]
    %v3487 = vld [vmem:[%s5 + $0xc60] sm:$0xff]
    %v3488 = vld [vmem:[%s5 + $0xc68] sm:$0xff]
    %v3489 = vld [vmem:[%s5 + $0xc70] sm:$0xff]
    %v3490 = vld [vmem:[%s5 + $0xc78] sm:$0xff]
    %v3491 = vld [vmem:[%s5 + $0xc80] sm:$0xff]
    %v3492 = vld [vmem:[%s5 + $0xc88] sm:$0xff]
    %v3493 = vld [vmem:[%s5 + $0xc90] sm:$0xff]
    %v3494 = vld [vmem:[%s5 + $0xc98] sm:$0xff]
    %v3495 = vld [vmem:[%s5 + $0xca0] sm:$0xff]
    %v3496 = vld [vmem:[%s5 + $0xca8] sm:$0xff]
    %v3497 = vld [vmem:[%s5 + $0xcb0] sm:$0xff]
    %v3498 = vld [vmem:[%s5 + $0xcb8] sm:$0xff]
    %v3499 = vld [vmem:[%s5 + $0xcc0] sm:$0xff]
    %v3500 = vld [vmem:[%s5 + $0xcc8] sm:$0xff]
    %v3501 = vld [vmem:[%s5 + $0xcd0] sm:$0xff]
    %v3502 = vld [vmem:[%s5 + $0xcd8] sm:$0xff]
    %v3503 = vld [vmem:[%s5 + $0xce0] sm:$0xff]
    %v3504 = vld [vmem:[%s5 + $0xce8] sm:$0xff]
    %v3505 = vld [vmem:[%s5 + $0xcf0] sm:$0xff]
    %v3506 = vld [vmem:[%s5 + $0xcf8] sm:$0xff]
    %v3507 = vld [vmem:[%s5 + $0xd00] sm:$0xff]
    %v3508 = vld [vmem:[%s5 + $0xd08] sm:$0xff]
    %v3509 = vld [vmem:[%s5 + $0xd10] sm:$0xff]
    %v3510 = vld [vmem:[%s5 + $0xd18] sm:$0xff]
    %v3511 = vld [vmem:[%s5 + $0xd20] sm:$0xff]
    %v3512 = vld [vmem:[%s5 + $0xd28] sm:$0xff]
    %v3513 = vld [vmem:[%s5 + $0xd30] sm:$0xff]
    %v3514 = vld [vmem:[%s5 + $0xd38] sm:$0xff]
    %v3515 = vld [vmem:[%s5 + $0xd40] sm:$0xff]
    %v3516 = vld [vmem:[%s5 + $0xd48] sm:$0xff]
    %v3517 = vld [vmem:[%s5 + $0xd50] sm:$0xff]
    %v3518 = vld [vmem:[%s5 + $0xd58] sm:$0xff]
    %v3519 = vld [vmem:[%s5 + $0xd60] sm:$0xff]
    %v3520 = vld [vmem:[%s5 + $0xd68] sm:$0xff]
    %v3521 = vld [vmem:[%s5 + $0xd70] sm:$0xff]
    %v3522 = vld [vmem:[%s5 + $0xd78] sm:$0xff]
    %v3523 = vld [vmem:[%s5 + $0xd80] sm:$0xff]
    %v3524 = vld [vmem:[%s5 + $0xd88] sm:$0xff]
    %v3525 = vld [vmem:[%s5 + $0xd90] sm:$0xff]
    %v3526 = vld [vmem:[%s5 + $0xd98] sm:$0xff]
    %v3527 = vld [vmem:[%s5 + $0xda0] sm:$0xff]
    %v3528 = vld [vmem:[%s5 + $0xda8] sm:$0xff]
    %v3529 = vld [vmem:[%s5 + $0xdb0] sm:$0xff]
    %v3530 = vld [vmem:[%s5 + $0xdb8] sm:$0xff]
    %v3531 = vld [vmem:[%s5 + $0xdc0] sm:$0xff]
    %v3532 = vld [vmem:[%s5 + $0xdc8] sm:$0xff]
    %v3533 = vld [vmem:[%s5 + $0xdd0] sm:$0xff]
    %v3534 = vld [vmem:[%s5 + $0xdd8] sm:$0xff]
    %v3535 = vld [vmem:[%s5 + $0xde0] sm:$0xff]
    %v3536 = vld [vmem:[%s5 + $0xde8] sm:$0xff]
    %v3537 = vld [vmem:[%s5 + $0xdf0] sm:$0xff]
    %v3538 = vld [vmem:[%s5 + $0xdf8] sm:$0xff]
    %v3539 = vld [vmem:[%s5 + $0xe00] sm:$0xff]
    %v3540 = vld [vmem:[%s5 + $0xe08] sm:$0xff]
    %v3541 = vld [vmem:[%s5 + $0xe10] sm:$0xff]
    %v3542 = vld [vmem:[%s5 + $0xe18] sm:$0xff]
    %v3543 = vld [vmem:[%s5 + $0xe20] sm:$0xff]
    %v3544 = vld [vmem:[%s5 + $0xe28] sm:$0xff]
    %v3545 = vld [vmem:[%s5 + $0xe30] sm:$0xff]
    %v3546 = vld [vmem:[%s5 + $0xe38] sm:$0xff]
    %v3547 = vld [vmem:[%s5 + $0xe40] sm:$0xff]
    %v3548 = vld [vmem:[%s5 + $0xe48] sm:$0xff]
    %v3549 = vld [vmem:[%s5 + $0xe50] sm:$0xff]
    %v3550 = vld [vmem:[%s5 + $0xe58] sm:$0xff]
    %v3551 = vld [vmem:[%s5 + $0xe60] sm:$0xff]
    %v3552 = vld [vmem:[%s5 + $0xe68] sm:$0xff]
    %v3553 = vld [vmem:[%s5 + $0xe70] sm:$0xff]
    %v3554 = vld [vmem:[%s5 + $0xe78] sm:$0xff]
    %v3555 = vld [vmem:[%s5 + $0xe80] sm:$0xff]
    %v3556 = vld [vmem:[%s5 + $0xe88] sm:$0xff]
    %v3557 = vld [vmem:[%s5 + $0xe90] sm:$0xff]
    %v3558 = vld [vmem:[%s5 + $0xe98] sm:$0xff]
    %v3559 = vld [vmem:[%s5 + $0xea0] sm:$0xff]
    %v3560 = vld [vmem:[%s5 + $0xea8] sm:$0xff]
    %v3561 = vld [vmem:[%s5 + $0xeb0] sm:$0xff]
    %v3562 = vld [vmem:[%s5 + $0xeb8] sm:$0xff]
    %v3563 = vld [vmem:[%s5 + $0xec0] sm:$0xff]
    %v3564 = vld [vmem:[%s5 + $0xec8] sm:$0xff]
    %v3565 = vld [vmem:[%s5 + $0xed0] sm:$0xff]
    %v3566 = vld [vmem:[%s5 + $0xed8] sm:$0xff]
    %v3567 = vld [vmem:[%s5 + $0xee0] sm:$0xff]
    %v3568 = vld [vmem:[%s5 + $0xee8] sm:$0xff]
    %v3569 = vld [vmem:[%s5 + $0xef0] sm:$0xff]
    %v3570 = vld [vmem:[%s5 + $0xef8] sm:$0xff]
    %v3571 = vld [vmem:[%s5 + $0xf00] sm:$0xff]
    %v3572 = vld [vmem:[%s5 + $0xf08] sm:$0xff]
    %v3573 = vld [vmem:[%s5 + $0xf10] sm:$0xff]
    %v3574 = vld [vmem:[%s5 + $0xf18] sm:$0xff]
    %v3575 = vld [vmem:[%s5 + $0xf20] sm:$0xff]
    %v3576 = vld [vmem:[%s5 + $0xf28] sm:$0xff]
    %v3577 = vld [vmem:[%s5 + $0xf30] sm:$0xff]
    %v3578 = vld [vmem:[%s5 + $0xf38] sm:$0xff]
    %v3579 = vld [vmem:[%s5 + $0xf40] sm:$0xff]
    %v3580 = vld [vmem:[%s5 + $0xf48] sm:$0xff]
    %v3581 = vld [vmem:[%s5 + $0xf50] sm:$0xff]
    %v3582 = vld [vmem:[%s5 + $0xf58] sm:$0xff]
    %v3583 = vld [vmem:[%s5 + $0xf60] sm:$0xff]
    %v3584 = vld [vmem:[%s5 + $0xf68] sm:$0xff]
    %v3585 = vld [vmem:[%s5 + $0xf70] sm:$0xff]
    %v3586 = vld [vmem:[%s5 + $0xf78] sm:$0xff]
    %v3587 = vld [vmem:[%s5 + $0xf80] sm:$0xff]
    %v3588 = vld [vmem:[%s5 + $0xf88] sm:$0xff]
    %v3589 = vld [vmem:[%s5 + $0xf90] sm:$0xff]
    %v3590 = vld [vmem:[%s5 + $0xf98] sm:$0xff]
    %v3591 = vld [vmem:[%s5 + $0xfa0] sm:$0xff]
    %v3592 = vld [vmem:[%s5 + $0xfa8] sm:$0xff]
    %v3593 = vld [vmem:[%s5 + $0xfb0] sm:$0xff]
    %v3594 = vld [vmem:[%s5 + $0xfb8] sm:$0xff]
    %v3595 = vld [vmem:[%s5 + $0xfc0] sm:$0xff]
    %v3596 = vld [vmem:[%s5 + $0xfc8] sm:$0xff]
    %v3597 = vld [vmem:[%s5 + $0xfd0] sm:$0xff]
    %v3598 = vld [vmem:[%s5 + $0xfd8] sm:$0xff]
    %v3599 = vld [vmem:[%s5 + $0xfe0] sm:$0xff]
    %v3600 = vld [vmem:[%s5 + $0xfe8] sm:$0xff]
    %v3601 = vld [vmem:[%s5 + $0xff0] sm:$0xff]
    %v3602 = vld [vmem:[%s5 + $0xff8] sm:$0xff]
    %v3603 = vld [vmem:[%s5 + $0x1000] sm:$0xff]
    %v3604 = vld [vmem:[%s5 + $0x1008] sm:$0xff]
    %v3605 = vld [vmem:[%s5 + $0x1010] sm:$0xff]
    %v3606 = vld [vmem:[%s5 + $0x1018] sm:$0xff]
    %v3607 = vld [vmem:[%s5 + $0x1020] sm:$0xff]
    %v3608 = vld [vmem:[%s5 + $0x1028] sm:$0xff]
    %v3609 = vld [vmem:[%s5 + $0x1030] sm:$0xff]
    %v3610 = vld [vmem:[%s5 + $0x1038] sm:$0xff]
    %v3611 = vld [vmem:[%s5 + $0x1040] sm:$0xff]
    %v3612 = vld [vmem:[%s5 + $0x1048] sm:$0xff]
    %v3613 = vld [vmem:[%s5 + $0x1050] sm:$0xff]
    %v3614 = vld [vmem:[%s5 + $0x1058] sm:$0xff]
    %v3615 = vld [vmem:[%s5 + $0x1060] sm:$0xff]
    %v3616 = vld [vmem:[%s5 + $0x1068] sm:$0xff]
    %v3617 = vld [vmem:[%s5 + $0x1070] sm:$0xff]
    %v3618 = vld [vmem:[%s5 + $0x1078] sm:$0xff]
    %v3619 = vld [vmem:[%s5 + $0x1080] sm:$0xff]
    %v3620 = vld [vmem:[%s5 + $0x1088] sm:$0xff]
    %v3621 = vld [vmem:[%s5 + $0x1090] sm:$0xff]
    %v3622 = vld [vmem:[%s5 + $0x1098] sm:$0xff]
    %v3623 = vld [vmem:[%s5 + $0x10a0] sm:$0xff]
    %v3624 = vld [vmem:[%s5 + $0x10a8] sm:$0xff]
    %v3625 = vld [vmem:[%s5 + $0x10b0] sm:$0xff]
    %v3626 = vld [vmem:[%s5 + $0x10b8] sm:$0xff]
    %v3627 = vld [vmem:[%s5 + $0x10c0] sm:$0xff]
    %v3628 = vld [vmem:[%s5 + $0x10c8] sm:$0xff]
    %v3629 = vld [vmem:[%s5 + $0x10d0] sm:$0xff]
    %v3630 = vld [vmem:[%s5 + $0x10d8] sm:$0xff]
    %v3631 = vld [vmem:[%s5 + $0x10e0] sm:$0xff]
    %v3632 = vld [vmem:[%s5 + $0x10e8] sm:$0xff]
    %v3633 = vld [vmem:[%s5 + $0x10f0] sm:$0xff]
    %v3634 = vld [vmem:[%s5 + $0x10f8] sm:$0xff]
    %v3635 = vld [vmem:[%s5 + $0x1100] sm:$0xff]
    %v3636 = vld [vmem:[%s5 + $0x1108] sm:$0xff]
    %v3637 = vld [vmem:[%s5 + $0x1110] sm:$0xff]
    %v3638 = vld [vmem:[%s5 + $0x1118] sm:$0xff]
    %v3639 = vld [vmem:[%s5 + $0x1120] sm:$0xff]
    %v3640 = vld [vmem:[%s5 + $0x1128] sm:$0xff]
    %v3641 = vld [vmem:[%s5 + $0x1130] sm:$0xff]
    %v3642 = vld [vmem:[%s5 + $0x1138] sm:$0xff]
    %v3643 = vld [vmem:[%s5 + $0x1140] sm:$0xff]
    %v3644 = vld [vmem:[%s5 + $0x1148] sm:$0xff]
    %v3645 = vld [vmem:[%s5 + $0x1150] sm:$0xff]
    %v3646 = vld [vmem:[%s5 + $0x1158] sm:$0xff]
    %v3647 = vld [vmem:[%s5 + $0x1160] sm:$0xff]
    %v3648 = vld [vmem:[%s5 + $0x1168] sm:$0xff]
    %v3649 = vld [vmem:[%s5 + $0x1170] sm:$0xff]
    %v3650 = vld [vmem:[%s5 + $0x1178] sm:$0xff]
    %v3651 = vld [vmem:[%s5 + $0x1180] sm:$0xff]
    %v3652 = vld [vmem:[%s5 + $0x1188] sm:$0xff]
    %v3653 = vld [vmem:[%s5 + $0x1190] sm:$0xff]
    %v3654 = vld [vmem:[%s5 + $0x1198] sm:$0xff]
    %v3655 = vld [vmem:[%s5 + $0x11a0] sm:$0xff]
    %v3656 = vld [vmem:[%s5 + $0x11a8] sm:$0xff]
    %v3657 = vld [vmem:[%s5 + $0x11b0] sm:$0xff]
    %v3658 = vld [vmem:[%s5 + $0x11b8] sm:$0xff]
    %v3659 = vld [vmem:[%s5 + $0x11c0] sm:$0xff]
    %v3660 = vld [vmem:[%s5 + $0x11c8] sm:$0xff]
    %v3661 = vld [vmem:[%s5 + $0x11d0] sm:$0xff]
    %v3662 = vld [vmem:[%s5 + $0x11d8] sm:$0xff]
    %v3663 = vld [vmem:[%s5 + $0x11e0] sm:$0xff]
    %v3664 = vld [vmem:[%s5 + $0x11e8] sm:$0xff]
    %v3665 = vld [vmem:[%s5 + $0x11f0] sm:$0xff]
    %v3666 = vld [vmem:[%s5 + $0x11f8] sm:$0xff]
    %v3667 = vld [vmem:[%s5 + $0x1200] sm:$0xff]
    %v3668 = vld [vmem:[%s5 + $0x1208] sm:$0xff]
    %v3669 = vld [vmem:[%s5 + $0x1210] sm:$0xff]
    %v3670 = vld [vmem:[%s5 + $0x1218] sm:$0xff]
    %v3671 = vld [vmem:[%s5 + $0x1220] sm:$0xff]
    %v3672 = vld [vmem:[%s5 + $0x1228] sm:$0xff]
    %v3673 = vld [vmem:[%s5 + $0x1230] sm:$0xff]
    %v3674 = vld [vmem:[%s5 + $0x1238] sm:$0xff]
    %v3675 = vld [vmem:[%s5 + $0x1240] sm:$0xff]
    %v3676 = vld [vmem:[%s5 + $0x1248] sm:$0xff]
    %v3677 = vld [vmem:[%s5 + $0x1250] sm:$0xff]
    %v3678 = vld [vmem:[%s5 + $0x1258] sm:$0xff]
    %v3679 = vld [vmem:[%s5 + $0x1260] sm:$0xff]
    %v3680 = vld [vmem:[%s5 + $0x1268] sm:$0xff]
    %v3681 = vld [vmem:[%s5 + $0x1270] sm:$0xff]
    %v3682 = vld [vmem:[%s5 + $0x1278] sm:$0xff]
    %v3683 = vld [vmem:[%s5 + $0x1280] sm:$0xff]
    %v3684 = vld [vmem:[%s5 + $0x1288] sm:$0xff]
    %v3685 = vld [vmem:[%s5 + $0x1290] sm:$0xff]
    %v3686 = vld [vmem:[%s5 + $0x1298] sm:$0xff]
    %v3687 = vld [vmem:[%s5 + $0x12a0] sm:$0xff]
    %v3688 = vld [vmem:[%s5 + $0x12a8] sm:$0xff]
    %v3689 = vld [vmem:[%s5 + $0x12b0] sm:$0xff]
    %v3690 = vld [vmem:[%s5 + $0x12b8] sm:$0xff]
    %v3691 = vld [vmem:[%s5 + $0x12c0] sm:$0xff]
    %v3692 = vld [vmem:[%s5 + $0x12c8] sm:$0xff]
    %v3693 = vld [vmem:[%s5 + $0x12d0] sm:$0xff]
    %v3694 = vld [vmem:[%s5 + $0x12d8] sm:$0xff]
    %v3695 = vld [vmem:[%s5 + $0x12e0] sm:$0xff]
    %v3696 = vld [vmem:[%s5 + $0x12e8] sm:$0xff]
    %v3697 = vld [vmem:[%s5 + $0x12f0] sm:$0xff]
    %v3698 = vld [vmem:[%s5 + $0x12f8] sm:$0xff]
    %v3699 = vld [vmem:[%s5 + $0x1300] sm:$0xff]
    %v3700 = vld [vmem:[%s5 + $0x1308] sm:$0xff]
    %v3701 = vld [vmem:[%s5 + $0x1310] sm:$0xff]
    %v3702 = vld [vmem:[%s5 + $0x1318] sm:$0xff]
    %v3703 = vld [vmem:[%s5 + $0x1320] sm:$0xff]
    %v3704 = vld [vmem:[%s5 + $0x1328] sm:$0xff]
    %v3705 = vld [vmem:[%s5 + $0x1330] sm:$0xff]
    %v3706 = vld [vmem:[%s5 + $0x1338] sm:$0xff]
    %v3707 = vld [vmem:[%s5 + $0x1340] sm:$0xff]
    %v3708 = vld [vmem:[%s5 + $0x1348] sm:$0xff]
    %v3709 = vld [vmem:[%s5 + $0x1350] sm:$0xff]
    %v3710 = vld [vmem:[%s5 + $0x1358] sm:$0xff]
    %v3711 = vld [vmem:[%s5 + $0x1360] sm:$0xff]
    %v3712 = vld [vmem:[%s5 + $0x1368] sm:$0xff]
    %v3713 = vld [vmem:[%s5 + $0x1370] sm:$0xff]
    %v3714 = vld [vmem:[%s5 + $0x1378] sm:$0xff]
    %v3715 = vld [vmem:[%s5 + $0x1380] sm:$0xff]
    %v3716 = vld [vmem:[%s5 + $0x1388] sm:$0xff]
    %v3717 = vld [vmem:[%s5 + $0x1390] sm:$0xff]
    %v3718 = vld [vmem:[%s5 + $0x1398] sm:$0xff]
    %v3719 = vld [vmem:[%s5 + $0x13a0] sm:$0xff]
    %v3720 = vld [vmem:[%s5 + $0x13a8] sm:$0xff]
    %v3721 = vld [vmem:[%s5 + $0x13b0] sm:$0xff]
    %v3722 = vld [vmem:[%s5 + $0x13b8] sm:$0xff]
    %v3723 = vld [vmem:[%s5 + $0x13c0] sm:$0xff]
    %v3724 = vld [vmem:[%s5 + $0x13c8] sm:$0xff]
    %v3725 = vld [vmem:[%s5 + $0x13d0] sm:$0xff]
    %v3726 = vld [vmem:[%s5 + $0x13d8] sm:$0xff]
    %v3727 = vld [vmem:[%s5 + $0x13e0] sm:$0xff]
    %v3728 = vld [vmem:[%s5 + $0x13e8] sm:$0xff]
    %v3729 = vld [vmem:[%s5 + $0x13f0] sm:$0xff]
    %v3730 = vld [vmem:[%s5 + $0x13f8] sm:$0xff]
    %v3731 = vld [vmem:[%s5 + $0x1400] sm:$0xff]
    %v3732 = vld [vmem:[%s5 + $0x1408] sm:$0xff]
    %v3733 = vld [vmem:[%s5 + $0x1410] sm:$0xff]
    %v3734 = vld [vmem:[%s5 + $0x1418] sm:$0xff]
    %v3735 = vld [vmem:[%s5 + $0x1420] sm:$0xff]
    %v3736 = vld [vmem:[%s5 + $0x1428] sm:$0xff]
    %v3737 = vld [vmem:[%s5 + $0x1430] sm:$0xff]
    %v3738 = vld [vmem:[%s5 + $0x1438] sm:$0xff]
    %v3739 = vld [vmem:[%s5 + $0x1440] sm:$0xff]
    %v3740 = vld [vmem:[%s5 + $0x1448] sm:$0xff]
    %v3741 = vld [vmem:[%s5 + $0x1450] sm:$0xff]
    %v3742 = vld [vmem:[%s5 + $0x1458] sm:$0xff]
    %v3743 = vld [vmem:[%s5 + $0x1460] sm:$0xff]
    %v3744 = vld [vmem:[%s5 + $0x1468] sm:$0xff]
    %v3745 = vld [vmem:[%s5 + $0x1470] sm:$0xff]
    %v3746 = vld [vmem:[%s5 + $0x1478] sm:$0xff]
    %v3747 = vld [vmem:[%s5 + $0x1480] sm:$0xff]
    %v3748 = vld [vmem:[%s5 + $0x1488] sm:$0xff]
    %v3749 = vld [vmem:[%s5 + $0x1490] sm:$0xff]
    %v3750 = vld [vmem:[%s5 + $0x1498] sm:$0xff]
    %v3751 = vld [vmem:[%s5 + $0x14a0] sm:$0xff]
    %v3752 = vld [vmem:[%s5 + $0x14a8] sm:$0xff]
    %v3753 = vld [vmem:[%s5 + $0x14b0] sm:$0xff]
    %v3754 = vld [vmem:[%s5 + $0x14b8] sm:$0xff]
    %v3755 = vld [vmem:[%s5 + $0x14c0] sm:$0xff]
    %v3756 = vld [vmem:[%s5 + $0x14c8] sm:$0xff]
    %v3757 = vld [vmem:[%s5 + $0x14d0] sm:$0xff]
    %v3758 = vld [vmem:[%s5 + $0x14d8] sm:$0xff]
    %v3759 = vld [vmem:[%s5 + $0x14e0] sm:$0xff]
    %v3760 = vld [vmem:[%s5 + $0x14e8] sm:$0xff]
    %v3761 = vld [vmem:[%s5 + $0x14f0] sm:$0xff]
    %v3762 = vld [vmem:[%s5 + $0x14f8] sm:$0xff]
    %v3763 = vld [vmem:[%s5 + $0x1500] sm:$0xff]
    %v3764 = vld [vmem:[%s5 + $0x1508] sm:$0xff]
    %v3765 = vld [vmem:[%s5 + $0x1510] sm:$0xff]
    %v3766 = vld [vmem:[%s5 + $0x1518] sm:$0xff]
    %v3767 = vld [vmem:[%s5 + $0x1520] sm:$0xff]
    %v3768 = vld [vmem:[%s5 + $0x1528] sm:$0xff]
    %v3769 = vld [vmem:[%s5 + $0x1530] sm:$0xff]
    %v3770 = vld [vmem:[%s5 + $0x1538] sm:$0xff]
    %v3771 = vld [vmem:[%s5 + $0x1540] sm:$0xff]
    %v3772 = vld [vmem:[%s5 + $0x1548] sm:$0xff]
    %v3773 = vld [vmem:[%s5 + $0x1550] sm:$0xff]
    %v3774 = vld [vmem:[%s5 + $0x1558] sm:$0xff]
    %v3775 = vld [vmem:[%s5 + $0x1560] sm:$0xff]
    %v3776 = vld [vmem:[%s5 + $0x1568] sm:$0xff]
    %v3777 = vld [vmem:[%s5 + $0x1570] sm:$0xff]
    %v3778 = vld [vmem:[%s5 + $0x1578] sm:$0xff]
    %v3779 = vld [vmem:[%s5 + $0x1580] sm:$0xff]
    %v3780 = vld [vmem:[%s5 + $0x1588] sm:$0xff]
    %v3781 = vld [vmem:[%s5 + $0x1590] sm:$0xff]
    %v3782 = vld [vmem:[%s5 + $0x1598] sm:$0xff]
    %v3783 = vld [vmem:[%s5 + $0x15a0] sm:$0xff]
    %v3784 = vld [vmem:[%s5 + $0x15a8] sm:$0xff]
    %v3785 = vld [vmem:[%s5 + $0x15b0] sm:$0xff]
    %v3786 = vld [vmem:[%s5 + $0x15b8] sm:$0xff]
    %v3787 = vld [vmem:[%s5 + $0x15c0] sm:$0xff]
    %v3788 = vld [vmem:[%s5 + $0x15c8] sm:$0xff]
    %v3789 = vld [vmem:[%s5 + $0x15d0] sm:$0xff]
    %v3790 = vld [vmem:[%s5 + $0x15d8] sm:$0xff]
    %v3791 = vld [vmem:[%s5 + $0x15e0] sm:$0xff]
    %v3792 = vld [vmem:[%s5 + $0x15e8] sm:$0xff]
    %v3793 = vld [vmem:[%s5 + $0x15f0] sm:$0xff]
    %v3794 = vld [vmem:[%s5 + $0x15f8] sm:$0xff]
    %v3795 = vld [vmem:[%s5 + $0x1600] sm:$0xff]
    %v3796 = vld [vmem:[%s5 + $0x1608] sm:$0xff]
    %v3797 = vld [vmem:[%s5 + $0x1610] sm:$0xff]
    %v3798 = vld [vmem:[%s5 + $0x1618] sm:$0xff]
    %v3799 = vld [vmem:[%s5 + $0x1620] sm:$0xff]
    %v3800 = vld [vmem:[%s5 + $0x1628] sm:$0xff]
    %v3801 = vld [vmem:[%s5 + $0x1630] sm:$0xff]
    %v3802 = vld [vmem:[%s5 + $0x1638] sm:$0xff]
    %v3803 = vld [vmem:[%s5 + $0x1640] sm:$0xff]
    %v3804 = vld [vmem:[%s5 + $0x1648] sm:$0xff]
    %v3805 = vld [vmem:[%s5 + $0x1650] sm:$0xff]
    %v3806 = vld [vmem:[%s5 + $0x1658] sm:$0xff]
    %v3807 = vld [vmem:[%s5 + $0x1660] sm:$0xff]
    %v3808 = vld [vmem:[%s5 + $0x1668] sm:$0xff]
    %v3809 = vld [vmem:[%s5 + $0x1670] sm:$0xff]
    %v3810 = vld [vmem:[%s5 + $0x1678] sm:$0xff]
    %v3811 = vld [vmem:[%s5 + $0x1680] sm:$0xff]
    %v3812 = vld [vmem:[%s5 + $0x1688] sm:$0xff]
    %v3813 = vld [vmem:[%s5 + $0x1690] sm:$0xff]
    %v3814 = vld [vmem:[%s5 + $0x1698] sm:$0xff]
    %v3815 = vld [vmem:[%s5 + $0x16a0] sm:$0xff]
    %v3816 = vld [vmem:[%s5 + $0x16a8] sm:$0xff]
    %v3817 = vld [vmem:[%s5 + $0x16b0] sm:$0xff]
    %v3818 = vld [vmem:[%s5 + $0x16b8] sm:$0xff]
    %v3819 = vld [vmem:[%s5 + $0x16c0] sm:$0xff]
    %v3820 = vld [vmem:[%s5 + $0x16c8] sm:$0xff]
    %v3821 = vld [vmem:[%s5 + $0x16d0] sm:$0xff]
    %v3822 = vld [vmem:[%s5 + $0x16d8] sm:$0xff]
    %v3823 = vld [vmem:[%s5 + $0x16e0] sm:$0xff]
    %v3824 = vld [vmem:[%s5 + $0x16e8] sm:$0xff]
    %v3825 = vld [vmem:[%s5 + $0x16f0] sm:$0xff]
    %v3826 = vld [vmem:[%s5 + $0x16f8] sm:$0xff]
    %v3827 = vld [vmem:[%s5 + $0x1700] sm:$0xff]
    %v3828 = vld [vmem:[%s5 + $0x1708] sm:$0xff]
    %v3829 = vld [vmem:[%s5 + $0x1710] sm:$0xff]
    %v3830 = vld [vmem:[%s5 + $0x1718] sm:$0xff]
    %v3831 = vld [vmem:[%s5 + $0x1720] sm:$0xff]
    %v3832 = vld [vmem:[%s5 + $0x1728] sm:$0xff]
    %v3833 = vld [vmem:[%s5 + $0x1730] sm:$0xff]
    %v3834 = vld [vmem:[%s5 + $0x1738] sm:$0xff]
    %v3835 = vld [vmem:[%s5 + $0x1740] sm:$0xff]
    %v3836 = vld [vmem:[%s5 + $0x1748] sm:$0xff]
    %v3837 = vld [vmem:[%s5 + $0x1750] sm:$0xff]
    %v3838 = vld [vmem:[%s5 + $0x1758] sm:$0xff]
    %v3839 = vld [vmem:[%s5 + $0x1760] sm:$0xff]
    %v3840 = vld [vmem:[%s5 + $0x1768] sm:$0xff]
    %v3841 = vld [vmem:[%s5 + $0x1770] sm:$0xff]
    %v3842 = vld [vmem:[%s5 + $0x1778] sm:$0xff]
    %v3843 = vld [vmem:[%s5 + $0x1780] sm:$0xff]
    %v3844 = vld [vmem:[%s5 + $0x1788] sm:$0xff]
    %v3845 = vld [vmem:[%s5 + $0x1790] sm:$0xff]
    %v3846 = vld [vmem:[%s5 + $0x1798] sm:$0xff]
    %v3847 = vld [vmem:[%s5 + $0x17a0] sm:$0xff]
    %v3848 = vld [vmem:[%s5 + $0x17a8] sm:$0xff]
    %v3849 = vld [vmem:[%s5 + $0x17b0] sm:$0xff]
    %v3850 = vld [vmem:[%s5 + $0x17b8] sm:$0xff]
    %v3851 = vld [vmem:[%s5 + $0x17c0] sm:$0xff]
    %v3852 = vld [vmem:[%s5 + $0x17c8] sm:$0xff]
    %v3853 = vld [vmem:[%s5 + $0x17d0] sm:$0xff]
    %v3854 = vld [vmem:[%s5 + $0x17d8] sm:$0xff]
    %v3855 = vld [vmem:[%s5 + $0x17e0] sm:$0xff]
    %v3856 = vld [vmem:[%s5 + $0x17e8] sm:$0xff]
    %v3857 = vld [vmem:[%s5 + $0x17f0] sm:$0xff]
    %v3858 = vld [vmem:[%s5 + $0x17f8] sm:$0xff]
    %3859 = vmatprep.subr.mxu0 0.0
    %3860 = vmatpush1.msra.mxu0 %v3091
    %3861 = vmatprep.subr.mxu0 0.0
    %3862 = vmatpush1.msra.mxu0 %v3092
    %3863 = vmatprep.subr.mxu0 0.0
    %3864 = vmatpush1.msra.mxu0 %v3093
    %3865 = vmatprep.subr.mxu0 0.0
    %3866 = vmatpush1.msra.mxu0 %v3094
    %3867 = vmatprep.subr.mxu0 0.0
    %3868 = vmatpush1.msra.mxu0 %v3095
    %3869 = vmatprep.subr.mxu0 0.0
    %3870 = vmatpush1.msra.mxu0 %v3096
    %3871 = vmatprep.subr.mxu0 0.0
    %3872 = vmatpush1.msra.mxu0 %v3097
    %3873 = vmatprep.subr.mxu0 0.0
    %3874 = vmatpush1.msra.mxu0 %v3098
    %3875 = vmatprep.subr.mxu0 0.0
    %3876 = vmatpush1.msra.mxu0 %v3099
    %3877 = vmatprep.subr.mxu0 0.0
    %3878 = vmatpush1.msra.mxu0 %v3100
    %3879 = vmatprep.subr.mxu0 0.0
    %3880 = vmatpush1.msra.mxu0 %v3101
    %3881 = vmatprep.subr.mxu0 0.0
    %3882 = vmatpush1.msra.mxu0 %v3102
    %3883 = vmatprep.subr.mxu0 0.0
    %3884 = vmatpush1.msra.mxu0 %v3103
    %3885 = vmatprep.subr.mxu0 0.0
    %3886 = vmatpush1.msra.mxu0 %v3104
    %3887 = vmatprep.subr.mxu0 0.0
    %3888 = vmatpush1.msra.mxu0 %v3105
    %3889 = vmatprep.subr.mxu0 0.0
    %3890 = vmatpush1.msra.mxu0 %v3106
    %3891 = vmatprep.subr.mxu0 0.0
    %3892 = vmatpush1.msra.mxu0 %v3107
    %3893 = vmatprep.subr.mxu0 0.0
    %3894 = vmatpush1.msra.mxu0 %v3108
    %3895 = vmatprep.subr.mxu0 0.0
    %3896 = vmatpush1.msra.mxu0 %v3109
    %3897 = vmatprep.subr.mxu0 0.0
    %3898 = vmatpush1.msra.mxu0 %v3110
    %3899 = vmatprep.subr.mxu0 0.0
    %3900 = vmatpush1.msra.mxu0 %v3111
    %3901 = vmatprep.subr.mxu0 0.0
    %3902 = vmatpush1.msra.mxu0 %v3112
    %3903 = vmatprep.subr.mxu0 0.0
    %3904 = vmatpush1.msra.mxu0 %v3113
    %3905 = vmatprep.subr.mxu0 0.0
    %3906 = vmatpush1.msra.mxu0 %v3114
    %3907 = vmatprep.subr.mxu0 0.0
    %3908 = vmatpush1.msra.mxu0 %v3115
    %3909 = vmatprep.subr.mxu0 0.0
    %3910 = vmatpush1.msra.mxu0 %v3116
    %3911 = vmatprep.subr.mxu0 0.0
    %3912 = vmatpush1.msra.mxu0 %v3117
    %3913 = vmatprep.subr.mxu0 0.0
    %3914 = vmatpush1.msra.mxu0 %v3118
    %3915 = vmatprep.subr.mxu0 0.0
    %3916 = vmatpush1.msra.mxu0 %v3119
    %3917 = vmatprep.subr.mxu0 0.0
    %3918 = vmatpush1.msra.mxu0 %v3120
    %3919 = vmatprep.subr.mxu0 0.0
    %3920 = vmatpush1.msra.mxu0 %v3121
    %3921 = vmatprep.subr.mxu0 0.0
    %3922 = vmatpush1.msra.mxu0 %v3122
    %3923 = vmatprep.mubr.f32.mxu0 %v3044
    %3924 = vmatmul.mubr.f32.gmra.mrb[0].mxu0 %v3043
    %v3925 = vpop.f32.mrb[0].mxu0
    %v3926 = vadd.f32 0.0, %v3925
    %v3927 = vpop.f32.mrb[0].mxu0
    %3928 = vdwg.mxu0
    %3929 = vmatprep.subr.mxu0 0.0
    %3930 = vmatpush1.msra.mxu0 %v3123
    %3931 = vmatprep.subr.mxu0 0.0
    %3932 = vmatpush1.msra.mxu0 %v3124
    %3933 = vmatprep.subr.mxu0 0.0
    %3934 = vmatpush1.msra.mxu0 %v3125
    %3935 = vmatprep.subr.mxu0 0.0
    %3936 = vmatpush1.msra.mxu0 %v3126
    %3937 = vmatprep.subr.mxu0 0.0
    %3938 = vmatpush1.msra.mxu0 %v3127
    %3939 = vmatprep.subr.mxu0 0.0
    %3940 = vmatpush1.msra.mxu0 %v3128
    %3941 = vmatprep.subr.mxu0 0.0
    %3942 = vmatpush1.msra.mxu0 %v3129
    %3943 = vmatprep.subr.mxu0 0.0
    %3944 = vmatpush1.msra.mxu0 %v3130
    %3945 = vmatprep.subr.mxu0 0.0
    %3946 = vmatpush1.msra.mxu0 %v3131
    %3947 = vmatprep.subr.mxu0 0.0
    %3948 = vmatpush1.msra.mxu0 %v3132
    %3949 = vmatprep.subr.mxu0 0.0
    %3950 = vmatpush1.msra.mxu0 %v3133
    %3951 = vmatprep.subr.mxu0 0.0
    %3952 = vmatpush1.msra.mxu0 %v3134
    %3953 = vmatprep.subr.mxu0 0.0
    %3954 = vmatpush1.msra.mxu0 %v3135
    %3955 = vmatprep.subr.mxu0 0.0
    %3956 = vmatpush1.msra.mxu0 %v3136
    %3957 = vmatprep.subr.mxu0 0.0
    %3958 = vmatpush1.msra.mxu0 %v3137
    %3959 = vmatprep.subr.mxu0 0.0
    %3960 = vmatpush1.msra.mxu0 %v3138
    %3961 = vmatprep.subr.mxu0 0.0
    %3962 = vmatpush1.msra.mxu0 %v3139
    %3963 = vmatprep.subr.mxu0 0.0
    %3964 = vmatpush1.msra.mxu0 %v3140
    %3965 = vmatprep.subr.mxu0 0.0
    %3966 = vmatpush1.msra.mxu0 %v3141
    %3967 = vmatprep.subr.mxu0 0.0
    %3968 = vmatpush1.msra.mxu0 %v3142
    %3969 = vmatprep.subr.mxu0 0.0
    %3970 = vmatpush1.msra.mxu0 %v3143
    %3971 = vmatprep.subr.mxu0 0.0
    %3972 = vmatpush1.msra.mxu0 %v3144
    %3973 = vmatprep.subr.mxu0 0.0
    %3974 = vmatpush1.msra.mxu0 %v3145
    %3975 = vmatprep.subr.mxu0 0.0
    %3976 = vmatpush1.msra.mxu0 %v3146
    %3977 = vmatprep.subr.mxu0 0.0
    %3978 = vmatpush1.msra.mxu0 %v3147
    %3979 = vmatprep.subr.mxu0 0.0
    %3980 = vmatpush1.msra.mxu0 %v3148
    %3981 = vmatprep.subr.mxu0 0.0
    %3982 = vmatpush1.msra.mxu0 %v3149
    %3983 = vmatprep.subr.mxu0 0.0
    %3984 = vmatpush1.msra.mxu0 %v3150
    %3985 = vmatprep.subr.mxu0 0.0
    %3986 = vmatpush1.msra.mxu0 %v3151
    %3987 = vmatprep.subr.mxu0 0.0
    %3988 = vmatpush1.msra.mxu0 %v3152
    %3989 = vmatprep.subr.mxu0 0.0
    %3990 = vmatpush1.msra.mxu0 %v3153
    %3991 = vmatprep.subr.mxu0 0.0
    %3992 = vmatpush1.msra.mxu0 %v3154
    %3993 = vmatprep.mubr.f32.mxu0 %v3046
    %3994 = vmatmul.mubr.f32.gmra.mrb[0].mxu0 %v3045
    %v3995 = vpop.f32.mrb[0].mxu0
    %v3996 = vadd.f32 %v3926, %v3995
    %v3997 = vpop.f32.mrb[0].mxu0
    %3998 = vdwg.mxu0
    %3999 = vmatprep.subr.mxu0 0.0
    %4000 = vmatpush1.msra.mxu0 %v3155
    %4001 = vmatprep.subr.mxu0 0.0
    %4002 = vmatpush1.msra.mxu0 %v3156
    %4003 = vmatprep.subr.mxu0 0.0
    %4004 = vmatpush1.msra.mxu0 %v3157
    %4005 = vmatprep.subr.mxu0 0.0
    %4006 = vmatpush1.msra.mxu0 %v3158
    %4007 = vmatprep.subr.mxu0 0.0
    %4008 = vmatpush1.msra.mxu0 %v3159
    %4009 = vmatprep.subr.mxu0 0.0
    %4010 = vmatpush1.msra.mxu0 %v3160
    %4011 = vmatprep.subr.mxu0 0.0
    %4012 = vmatpush1.msra.mxu0 %v3161
    %4013 = vmatprep.subr.mxu0 0.0
    %4014 = vmatpush1.msra.mxu0 %v3162
    %4015 = vmatprep.subr.mxu0 0.0
    %4016 = vmatpush1.msra.mxu0 %v3163
    %4017 = vmatprep.subr.mxu0 0.0
    %4018 = vmatpush1.msra.mxu0 %v3164
    %4019 = vmatprep.subr.mxu0 0.0
    %4020 = vmatpush1.msra.mxu0 %v3165
    %4021 = vmatprep.subr.mxu0 0.0
    %4022 = vmatpush1.msra.mxu0 %v3166
    %4023 = vmatprep.subr.mxu0 0.0
    %4024 = vmatpush1.msra.mxu0 %v3167
    %4025 = vmatprep.subr.mxu0 0.0
    %4026 = vmatpush1.msra.mxu0 %v3168
    %4027 = vmatprep.subr.mxu0 0.0
    %4028 = vmatpush1.msra.mxu0 %v3169
    %4029 = vmatprep.subr.mxu0 0.0
    %4030 = vmatpush1.msra.mxu0 %v3170
    %4031 = vmatprep.subr.mxu0 0.0
    %4032 = vmatpush1.msra.mxu0 %v3171
    %4033 = vmatprep.subr.mxu0 0.0
    %4034 = vmatpush1.msra.mxu0 %v3172
    %4035 = vmatprep.subr.mxu0 0.0
    %4036 = vmatpush1.msra.mxu0 %v3173
    %4037 = vmatprep.subr.mxu0 0.0
    %4038 = vmatpush1.msra.mxu0 %v3174
    %4039 = vmatprep.subr.mxu0 0.0
    %4040 = vmatpush1.msra.mxu0 %v3175
    %4041 = vmatprep.subr.mxu0 0.0
    %4042 = vmatpush1.msra.mxu0 %v3176
    %4043 = vmatprep.subr.mxu0 0.0
    %4044 = vmatpush1.msra.mxu0 %v3177
    %4045 = vmatprep.subr.mxu0 0.0
    %4046 = vmatpush1.msra.mxu0 %v3178
    %4047 = vmatprep.subr.mxu0 0.0
    %4048 = vmatpush1.msra.mxu0 %v3179
    %4049 = vmatprep.subr.mxu0 0.0
    %4050 = vmatpush1.msra.mxu0 %v3180
    %4051 = vmatprep.subr.mxu0 0.0
    %4052 = vmatpush1.msra.mxu0 %v3181
    %4053 = vmatprep.subr.mxu0 0.0
    %4054 = vmatpush1.msra.mxu0 %v3182
    %4055 = vmatprep.subr.mxu0 0.0
    %4056 = vmatpush1.msra.mxu0 %v3183
    %4057 = vmatprep.subr.mxu0 0.0
    %4058 = vmatpush1.msra.mxu0 %v3184
    %4059 = vmatprep.subr.mxu0 0.0
    %4060 = vmatpush1.msra.mxu0 %v3185
    %4061 = vmatprep.subr.mxu0 0.0
    %4062 = vmatpush1.msra.mxu0 %v3186
    %4063 = vmatprep.mubr.f32.mxu0 %v3048
    %4064 = vmatmul.mubr.f32.gmra.mrb[0].mxu0 %v3047
    %v4065 = vpop.f32.mrb[0].mxu0
    %v4066 = vadd.f32 %v3996, %v4065
    %v4067 = vpop.f32.mrb[0].mxu0
    %4068 = vdwg.mxu0
    %4069 = vmatprep.subr.mxu0 0.0
    %4070 = vmatpush1.msra.mxu0 %v3187
    %4071 = vmatprep.subr.mxu0 0.0
    %4072 = vmatpush1.msra.mxu0 %v3188
    %4073 = vmatprep.subr.mxu0 0.0
    %4074 = vmatpush1.msra.mxu0 %v3189
    %4075 = vmatprep.subr.mxu0 0.0
    %4076 = vmatpush1.msra.mxu0 %v3190
    %4077 = vmatprep.subr.mxu0 0.0
    %4078 = vmatpush1.msra.mxu0 %v3191
    %4079 = vmatprep.subr.mxu0 0.0
    %4080 = vmatpush1.msra.mxu0 %v3192
    %4081 = vmatprep.subr.mxu0 0.0
    %4082 = vmatpush1.msra.mxu0 %v3193
    %4083 = vmatprep.subr.mxu0 0.0
    %4084 = vmatpush1.msra.mxu0 %v3194
    %4085 = vmatprep.subr.mxu0 0.0
    %4086 = vmatpush1.msra.mxu0 %v3195
    %4087 = vmatprep.subr.mxu0 0.0
    %4088 = vmatpush1.msra.mxu0 %v3196
    %4089 = vmatprep.subr.mxu0 0.0
    %4090 = vmatpush1.msra.mxu0 %v3197
    %4091 = vmatprep.subr.mxu0 0.0
    %4092 = vmatpush1.msra.mxu0 %v3198
    %4093 = vmatprep.subr.mxu0 0.0
    %4094 = vmatpush1.msra.mxu0 %v3199
    %4095 = vmatprep.subr.mxu0 0.0
    %4096 = vmatpush1.msra.mxu0 %v3200
    %4097 = vmatprep.subr.mxu0 0.0
    %4098 = vmatpush1.msra.mxu0 %v3201
    %4099 = vmatprep.subr.mxu0 0.0
    %4100 = vmatpush1.msra.mxu0 %v3202
    %4101 = vmatprep.subr.mxu0 0.0
    %4102 = vmatpush1.msra.mxu0 %v3203
    %4103 = vmatprep.subr.mxu0 0.0
    %4104 = vmatpush1.msra.mxu0 %v3204
    %4105 = vmatprep.subr.mxu0 0.0
    %4106 = vmatpush1.msra.mxu0 %v3205
    %4107 = vmatprep.subr.mxu0 0.0
    %4108 = vmatpush1.msra.mxu0 %v3206
    %4109 = vmatprep.subr.mxu0 0.0
    %4110 = vmatpush1.msra.mxu0 %v3207
    %4111 = vmatprep.subr.mxu0 0.0
    %4112 = vmatpush1.msra.mxu0 %v3208
    %4113 = vmatprep.subr.mxu0 0.0
    %4114 = vmatpush1.msra.mxu0 %v3209
    %4115 = vmatprep.subr.mxu0 0.0
    %4116 = vmatpush1.msra.mxu0 %v3210
    %4117 = vmatprep.subr.mxu0 0.0
    %4118 = vmatpush1.msra.mxu0 %v3211
    %4119 = vmatprep.subr.mxu0 0.0
    %4120 = vmatpush1.msra.mxu0 %v3212
    %4121 = vmatprep.subr.mxu0 0.0
    %4122 = vmatpush1.msra.mxu0 %v3213
    %4123 = vmatprep.subr.mxu0 0.0
    %4124 = vmatpush1.msra.mxu0 %v3214
    %4125 = vmatprep.subr.mxu0 0.0
    %4126 = vmatpush1.msra.mxu0 %v3215
    %4127 = vmatprep.subr.mxu0 0.0
    %4128 = vmatpush1.msra.mxu0 %v3216
    %4129 = vmatprep.subr.mxu0 0.0
    %4130 = vmatpush1.msra.mxu0 %v3217
    %4131 = vmatprep.subr.mxu0 0.0
    %4132 = vmatpush1.msra.mxu0 %v3218
    %4133 = vmatprep.mubr.f32.mxu0 %v3050
    %4134 = vmatmul.mubr.f32.gmra.mrb[0].mxu0 %v3049
    %v4135 = vpop.f32.mrb[0].mxu0
    %v4136 = vadd.f32 %v4066, %v4135
    %v4137 = vpop.f32.mrb[0].mxu0
    %4138 = vdwg.mxu0
    %4139 = vmatprep.subr.mxu0 0.0
    %4140 = vmatpush1.msra.mxu0 %v3219
    %4141 = vmatprep.subr.mxu0 0.0
    %4142 = vmatpush1.msra.mxu0 %v3220
    %4143 = vmatprep.subr.mxu0 0.0
    %4144 = vmatpush1.msra.mxu0 %v3221
    %4145 = vmatprep.subr.mxu0 0.0
    %4146 = vmatpush1.msra.mxu0 %v3222
    %4147 = vmatprep.subr.mxu0 0.0
    %4148 = vmatpush1.msra.mxu0 %v3223
    %4149 = vmatprep.subr.mxu0 0.0
    %4150 = vmatpush1.msra.mxu0 %v3224
    %4151 = vmatprep.subr.mxu0 0.0
    %4152 = vmatpush1.msra.mxu0 %v3225
    %4153 = vmatprep.subr.mxu0 0.0
    %4154 = vmatpush1.msra.mxu0 %v3226
    %4155 = vmatprep.subr.mxu0 0.0
    %4156 = vmatpush1.msra.mxu0 %v3227
    %4157 = vmatprep.subr.mxu0 0.0
    %4158 = vmatpush1.msra.mxu0 %v3228
    %4159 = vmatprep.subr.mxu0 0.0
    %4160 = vmatpush1.msra.mxu0 %v3229
    %4161 = vmatprep.subr.mxu0 0.0
    %4162 = vmatpush1.msra.mxu0 %v3230
    %4163 = vmatprep.subr.mxu0 0.0
    %4164 = vmatpush1.msra.mxu0 %v3231
    %4165 = vmatprep.subr.mxu0 0.0
    %4166 = vmatpush1.msra.mxu0 %v3232
    %4167 = vmatprep.subr.mxu0 0.0
    %4168 = vmatpush1.msra.mxu0 %v3233
    %4169 = vmatprep.subr.mxu0 0.0
    %4170 = vmatpush1.msra.mxu0 %v3234
    %4171 = vmatprep.subr.mxu0 0.0
    %4172 = vmatpush1.msra.mxu0 %v3235
    %4173 = vmatprep.subr.mxu0 0.0
    %4174 = vmatpush1.msra.mxu0 %v3236
    %4175 = vmatprep.subr.mxu0 0.0
    %4176 = vmatpush1.msra.mxu0 %v3237
    %4177 = vmatprep.subr.mxu0 0.0
    %4178 = vmatpush1.msra.mxu0 %v3238
    %4179 = vmatprep.subr.mxu0 0.0
    %4180 = vmatpush1.msra.mxu0 %v3239
    %4181 = vmatprep.subr.mxu0 0.0
    %4182 = vmatpush1.msra.mxu0 %v3240
    %4183 = vmatprep.subr.mxu0 0.0
    %4184 = vmatpush1.msra.mxu0 %v3241
    %4185 = vmatprep.subr.mxu0 0.0
    %4186 = vmatpush1.msra.mxu0 %v3242
    %4187 = vmatprep.subr.mxu0 0.0
    %4188 = vmatpush1.msra.mxu0 %v3243
    %4189 = vmatprep.subr.mxu0 0.0
    %4190 = vmatpush1.msra.mxu0 %v3244
    %4191 = vmatprep.subr.mxu0 0.0
    %4192 = vmatpush1.msra.mxu0 %v3245
    %4193 = vmatprep.subr.mxu0 0.0
    %4194 = vmatpush1.msra.mxu0 %v3246
    %4195 = vmatprep.subr.mxu0 0.0
    %4196 = vmatpush1.msra.mxu0 %v3247
    %4197 = vmatprep.subr.mxu0 0.0
    %4198 = vmatpush1.msra.mxu0 %v3248
    %4199 = vmatprep.subr.mxu0 0.0
    %4200 = vmatpush1.msra.mxu0 %v3249
    %4201 = vmatprep.subr.mxu0 0.0
    %4202 = vmatpush1.msra.mxu0 %v3250
    %4203 = vmatprep.mubr.f32.mxu0 %v3052
    %4204 = vmatmul.mubr.f32.gmra.mrb[0].mxu0 %v3051
    %v4205 = vpop.f32.mrb[0].mxu0
    %v4206 = vadd.f32 %v4136, %v4205
    %v4207 = vpop.f32.mrb[0].mxu0
    %4208 = vdwg.mxu0
    %4209 = vmatprep.subr.mxu0 0.0
    %4210 = vmatpush1.msra.mxu0 %v3251
    %4211 = vmatprep.subr.mxu0 0.0
    %4212 = vmatpush1.msra.mxu0 %v3252
    %4213 = vmatprep.subr.mxu0 0.0
    %4214 = vmatpush1.msra.mxu0 %v3253
    %4215 = vmatprep.subr.mxu0 0.0
    %4216 = vmatpush1.msra.mxu0 %v3254
    %4217 = vmatprep.subr.mxu0 0.0
    %4218 = vmatpush1.msra.mxu0 %v3255
    %4219 = vmatprep.subr.mxu0 0.0
    %4220 = vmatpush1.msra.mxu0 %v3256
    %4221 = vmatprep.subr.mxu0 0.0
    %4222 = vmatpush1.msra.mxu0 %v3257
    %4223 = vmatprep.subr.mxu0 0.0
    %4224 = vmatpush1.msra.mxu0 %v3258
    %4225 = vmatprep.subr.mxu0 0.0
    %4226 = vmatpush1.msra.mxu0 %v3259
    %4227 = vmatprep.subr.mxu0 0.0
    %4228 = vmatpush1.msra.mxu0 %v3260
    %4229 = vmatprep.subr.mxu0 0.0
    %4230 = vmatpush1.msra.mxu0 %v3261
    %4231 = vmatprep.subr.mxu0 0.0
    %4232 = vmatpush1.msra.mxu0 %v3262
    %4233 = vmatprep.subr.mxu0 0.0
    %4234 = vmatpush1.msra.mxu0 %v3263
    %4235 = vmatprep.subr.mxu0 0.0
    %4236 = vmatpush1.msra.mxu0 %v3264
    %4237 = vmatprep.subr.mxu0 0.0
    %4238 = vmatpush1.msra.mxu0 %v3265
    %4239 = vmatprep.subr.mxu0 0.0
    %4240 = vmatpush1.msra.mxu0 %v3266
    %4241 = vmatprep.subr.mxu0 0.0
    %4242 = vmatpush1.msra.mxu0 %v3267
    %4243 = vmatprep.subr.mxu0 0.0
    %4244 = vmatpush1.msra.mxu0 %v3268
    %4245 = vmatprep.subr.mxu0 0.0
    %4246 = vmatpush1.msra.mxu0 %v3269
    %4247 = vmatprep.subr.mxu0 0.0
    %4248 = vmatpush1.msra.mxu0 %v3270
    %4249 = vmatprep.subr.mxu0 0.0
    %4250 = vmatpush1.msra.mxu0 %v3271
    %4251 = vmatprep.subr.mxu0 0.0
    %4252 = vmatpush1.msra.mxu0 %v3272
    %4253 = vmatprep.subr.mxu0 0.0
    %4254 = vmatpush1.msra.mxu0 %v3273
    %4255 = vmatprep.subr.mxu0 0.0
    %4256 = vmatpush1.msra.mxu0 %v3274
    %4257 = vmatprep.subr.mxu0 0.0
    %4258 = vmatpush1.msra.mxu0 %v3275
    %4259 = vmatprep.subr.mxu0 0.0
    %4260 = vmatpush1.msra.mxu0 %v3276
    %4261 = vmatprep.subr.mxu0 0.0
    %4262 = vmatpush1.msra.mxu0 %v3277
    %4263 = vmatprep.subr.mxu0 0.0
    %4264 = vmatpush1.msra.mxu0 %v3278
    %4265 = vmatprep.subr.mxu0 0.0
    %4266 = vmatpush1.msra.mxu0 %v3279
    %4267 = vmatprep.subr.mxu0 0.0
    %4268 = vmatpush1.msra.mxu0 %v3280
    %4269 = vmatprep.subr.mxu0 0.0
    %4270 = vmatpush1.msra.mxu0 %v3281
    %4271 = vmatprep.subr.mxu0 0.0
    %4272 = vmatpush1.msra.mxu0 %v3282
    %4273 = vmatprep.mubr.f32.mxu0 %v3054
    %4274 = vmatmul.mubr.f32.gmra.mrb[0].mxu0 %v3053
    %v4275 = vpop.f32.mrb[0].mxu0
    %v4276 = vadd.f32 %v4206, %v4275
    %v4277 = vpop.f32.mrb[0].mxu0
    %4278 = vdwg.mxu0
    %4279 = vmatprep.subr.mxu0 0.0
    %4280 = vmatpush1.msra.mxu0 %v3283
    %4281 = vmatprep.subr.mxu0 0.0
    %4282 = vmatpush1.msra.mxu0 %v3284
    %4283 = vmatprep.subr.mxu0 0.0
    %4284 = vmatpush1.msra.mxu0 %v3285
    %4285 = vmatprep.subr.mxu0 0.0
    %4286 = vmatpush1.msra.mxu0 %v3286
    %4287 = vmatprep.subr.mxu0 0.0
    %4288 = vmatpush1.msra.mxu0 %v3287
    %4289 = vmatprep.subr.mxu0 0.0
    %4290 = vmatpush1.msra.mxu0 %v3288
    %4291 = vmatprep.subr.mxu0 0.0
    %4292 = vmatpush1.msra.mxu0 %v3289
    %4293 = vmatprep.subr.mxu0 0.0
    %4294 = vmatpush1.msra.mxu0 %v3290
    %4295 = vmatprep.subr.mxu0 0.0
    %4296 = vmatpush1.msra.mxu0 %v3291
    %4297 = vmatprep.subr.mxu0 0.0
    %4298 = vmatpush1.msra.mxu0 %v3292
    %4299 = vmatprep.subr.mxu0 0.0
    %4300 = vmatpush1.msra.mxu0 %v3293
    %4301 = vmatprep.subr.mxu0 0.0
    %4302 = vmatpush1.msra.mxu0 %v3294
    %4303 = vmatprep.subr.mxu0 0.0
    %4304 = vmatpush1.msra.mxu0 %v3295
    %4305 = vmatprep.subr.mxu0 0.0
    %4306 = vmatpush1.msra.mxu0 %v3296
    %4307 = vmatprep.subr.mxu0 0.0
    %4308 = vmatpush1.msra.mxu0 %v3297
    %4309 = vmatprep.subr.mxu0 0.0
    %4310 = vmatpush1.msra.mxu0 %v3298
    %4311 = vmatprep.subr.mxu0 0.0
    %4312 = vmatpush1.msra.mxu0 %v3299
    %4313 = vmatprep.subr.mxu0 0.0
    %4314 = vmatpush1.msra.mxu0 %v3300
    %4315 = vmatprep.subr.mxu0 0.0
    %4316 = vmatpush1.msra.mxu0 %v3301
    %4317 = vmatprep.subr.mxu0 0.0
    %4318 = vmatpush1.msra.mxu0 %v3302
    %4319 = vmatprep.subr.mxu0 0.0
    %4320 = vmatpush1.msra.mxu0 %v3303
    %4321 = vmatprep.subr.mxu0 0.0
    %4322 = vmatpush1.msra.mxu0 %v3304
    %4323 = vmatprep.subr.mxu0 0.0
    %4324 = vmatpush1.msra.mxu0 %v3305
    %4325 = vmatprep.subr.mxu0 0.0
    %4326 = vmatpush1.msra.mxu0 %v3306
    %4327 = vmatprep.subr.mxu0 0.0
    %4328 = vmatpush1.msra.mxu0 %v3307
    %4329 = vmatprep.subr.mxu0 0.0
    %4330 = vmatpush1.msra.mxu0 %v3308
    %4331 = vmatprep.subr.mxu0 0.0
    %4332 = vmatpush1.msra.mxu0 %v3309
    %4333 = vmatprep.subr.mxu0 0.0
    %4334 = vmatpush1.msra.mxu0 %v3310
    %4335 = vmatprep.subr.mxu0 0.0
    %4336 = vmatpush1.msra.mxu0 %v3311
    %4337 = vmatprep.subr.mxu0 0.0
    %4338 = vmatpush1.msra.mxu0 %v3312
    %4339 = vmatprep.subr.mxu0 0.0
    %4340 = vmatpush1.msra.mxu0 %v3313
    %4341 = vmatprep.subr.mxu0 0.0
    %4342 = vmatpush1.msra.mxu0 %v3314
    %4343 = vmatprep.mubr.f32.mxu0 %v3056
    %4344 = vmatmul.mubr.f32.gmra.mrb[0].mxu0 %v3055
    %v4345 = vpop.f32.mrb[0].mxu0
    %v4346 = vadd.f32 %v4276, %v4345
    %v4347 = vpop.f32.mrb[0].mxu0
    %4348 = vdwg.mxu0
    %4349 = vmatprep.subr.mxu0 0.0
    %4350 = vmatpush1.msra.mxu0 %v3315
    %4351 = vmatprep.subr.mxu0 0.0
    %4352 = vmatpush1.msra.mxu0 %v3316
    %4353 = vmatprep.subr.mxu0 0.0
    %4354 = vmatpush1.msra.mxu0 %v3317
    %4355 = vmatprep.subr.mxu0 0.0
    %4356 = vmatpush1.msra.mxu0 %v3318
    %4357 = vmatprep.subr.mxu0 0.0
    %4358 = vmatpush1.msra.mxu0 %v3319
    %4359 = vmatprep.subr.mxu0 0.0
    %4360 = vmatpush1.msra.mxu0 %v3320
    %4361 = vmatprep.subr.mxu0 0.0
    %4362 = vmatpush1.msra.mxu0 %v3321
    %4363 = vmatprep.subr.mxu0 0.0
    %4364 = vmatpush1.msra.mxu0 %v3322
    %4365 = vmatprep.subr.mxu0 0.0
    %4366 = vmatpush1.msra.mxu0 %v3323
    %4367 = vmatprep.subr.mxu0 0.0
    %4368 = vmatpush1.msra.mxu0 %v3324
    %4369 = vmatprep.subr.mxu0 0.0
    %4370 = vmatpush1.msra.mxu0 %v3325
    %4371 = vmatprep.subr.mxu0 0.0
    %4372 = vmatpush1.msra.mxu0 %v3326
    %4373 = vmatprep.subr.mxu0 0.0
    %4374 = vmatpush1.msra.mxu0 %v3327
    %4375 = vmatprep.subr.mxu0 0.0
    %4376 = vmatpush1.msra.mxu0 %v3328
    %4377 = vmatprep.subr.mxu0 0.0
    %4378 = vmatpush1.msra.mxu0 %v3329
    %4379 = vmatprep.subr.mxu0 0.0
    %4380 = vmatpush1.msra.mxu0 %v3330
    %4381 = vmatprep.subr.mxu0 0.0
    %4382 = vmatpush1.msra.mxu0 %v3331
    %4383 = vmatprep.subr.mxu0 0.0
    %4384 = vmatpush1.msra.mxu0 %v3332
    %4385 = vmatprep.subr.mxu0 0.0
    %4386 = vmatpush1.msra.mxu0 %v3333
    %4387 = vmatprep.subr.mxu0 0.0
    %4388 = vmatpush1.msra.mxu0 %v3334
    %4389 = vmatprep.subr.mxu0 0.0
    %4390 = vmatpush1.msra.mxu0 %v3335
    %4391 = vmatprep.subr.mxu0 0.0
    %4392 = vmatpush1.msra.mxu0 %v3336
    %4393 = vmatprep.subr.mxu0 0.0
    %4394 = vmatpush1.msra.mxu0 %v3337
    %4395 = vmatprep.subr.mxu0 0.0
    %4396 = vmatpush1.msra.mxu0 %v3338
    %4397 = vmatprep.subr.mxu0 0.0
    %4398 = vmatpush1.msra.mxu0 %v3339
    %4399 = vmatprep.subr.mxu0 0.0
    %4400 = vmatpush1.msra.mxu0 %v3340
    %4401 = vmatprep.subr.mxu0 0.0
    %4402 = vmatpush1.msra.mxu0 %v3341
    %4403 = vmatprep.subr.mxu0 0.0
    %4404 = vmatpush1.msra.mxu0 %v3342
    %4405 = vmatprep.subr.mxu0 0.0
    %4406 = vmatpush1.msra.mxu0 %v3343
    %4407 = vmatprep.subr.mxu0 0.0
    %4408 = vmatpush1.msra.mxu0 %v3344
    %4409 = vmatprep.subr.mxu0 0.0
    %4410 = vmatpush1.msra.mxu0 %v3345
    %4411 = vmatprep.subr.mxu0 0.0
    %4412 = vmatpush1.msra.mxu0 %v3346
    %4413 = vmatprep.mubr.f32.mxu0 %v3058
    %4414 = vmatmul.mubr.f32.gmra.mrb[0].mxu0 %v3057
    %v4415 = vpop.f32.mrb[0].mxu0
    %v4416 = vadd.f32 %v4346, %v4415
    %v4417 = vpop.f32.mrb[0].mxu0
    %4418 = vdwg.mxu0
    %4419 = vmatprep.subr.mxu0 0.0
    %4420 = vmatpush1.msra.mxu0 %v3347
    %4421 = vmatprep.subr.mxu0 0.0
    %4422 = vmatpush1.msra.mxu0 %v3348
    %4423 = vmatprep.subr.mxu0 0.0
    %4424 = vmatpush1.msra.mxu0 %v3349
    %4425 = vmatprep.subr.mxu0 0.0
    %4426 = vmatpush1.msra.mxu0 %v3350
    %4427 = vmatprep.subr.mxu0 0.0
    %4428 = vmatpush1.msra.mxu0 %v3351
    %4429 = vmatprep.subr.mxu0 0.0
    %4430 = vmatpush1.msra.mxu0 %v3352
    %4431 = vmatprep.subr.mxu0 0.0
    %4432 = vmatpush1.msra.mxu0 %v3353
    %4433 = vmatprep.subr.mxu0 0.0
    %4434 = vmatpush1.msra.mxu0 %v3354
    %4435 = vmatprep.subr.mxu0 0.0
    %4436 = vmatpush1.msra.mxu0 %v3355
    %4437 = vmatprep.subr.mxu0 0.0
    %4438 = vmatpush1.msra.mxu0 %v3356
    %4439 = vmatprep.subr.mxu0 0.0
    %4440 = vmatpush1.msra.mxu0 %v3357
    %4441 = vmatprep.subr.mxu0 0.0
    %4442 = vmatpush1.msra.mxu0 %v3358
    %4443 = vmatprep.subr.mxu0 0.0
    %4444 = vmatpush1.msra.mxu0 %v3359
    %4445 = vmatprep.subr.mxu0 0.0
    %4446 = vmatpush1.msra.mxu0 %v3360
    %4447 = vmatprep.subr.mxu0 0.0
    %4448 = vmatpush1.msra.mxu0 %v3361
    %4449 = vmatprep.subr.mxu0 0.0
    %4450 = vmatpush1.msra.mxu0 %v3362
    %4451 = vmatprep.subr.mxu0 0.0
    %4452 = vmatpush1.msra.mxu0 %v3363
    %4453 = vmatprep.subr.mxu0 0.0
    %4454 = vmatpush1.msra.mxu0 %v3364
    %4455 = vmatprep.subr.mxu0 0.0
    %4456 = vmatpush1.msra.mxu0 %v3365
    %4457 = vmatprep.subr.mxu0 0.0
    %4458 = vmatpush1.msra.mxu0 %v3366
    %4459 = vmatprep.subr.mxu0 0.0
    %4460 = vmatpush1.msra.mxu0 %v3367
    %4461 = vmatprep.subr.mxu0 0.0
    %4462 = vmatpush1.msra.mxu0 %v3368
    %4463 = vmatprep.subr.mxu0 0.0
    %4464 = vmatpush1.msra.mxu0 %v3369
    %4465 = vmatprep.subr.mxu0 0.0
    %4466 = vmatpush1.msra.mxu0 %v3370
    %4467 = vmatprep.subr.mxu0 0.0
    %4468 = vmatpush1.msra.mxu0 %v3371
    %4469 = vmatprep.subr.mxu0 0.0
    %4470 = vmatpush1.msra.mxu0 %v3372
    %4471 = vmatprep.subr.mxu0 0.0
    %4472 = vmatpush1.msra.mxu0 %v3373
    %4473 = vmatprep.subr.mxu0 0.0
    %4474 = vmatpush1.msra.mxu0 %v3374
    %4475 = vmatprep.subr.mxu0 0.0
    %4476 = vmatpush1.msra.mxu0 %v3375
    %4477 = vmatprep.subr.mxu0 0.0
    %4478 = vmatpush1.msra.mxu0 %v3376
    %4479 = vmatprep.subr.mxu0 0.0
    %4480 = vmatpush1.msra.mxu0 %v3377
    %4481 = vmatprep.subr.mxu0 0.0
    %4482 = vmatpush1.msra.mxu0 %v3378
    %4483 = vmatprep.mubr.f32.mxu0 %v3060
    %4484 = vmatmul.mubr.f32.gmra.mrb[0].mxu0 %v3059
    %v4485 = vpop.f32.mrb[0].mxu0
    %v4486 = vadd.f32 %v4416, %v4485
    %v4487 = vpop.f32.mrb[0].mxu0
    %4488 = vdwg.mxu0
    %4489 = vmatprep.subr.mxu0 0.0
    %4490 = vmatpush1.msra.mxu0 %v3379
    %4491 = vmatprep.subr.mxu0 0.0
    %4492 = vmatpush1.msra.mxu0 %v3380
    %4493 = vmatprep.subr.mxu0 0.0
    %4494 = vmatpush1.msra.mxu0 %v3381
    %4495 = vmatprep.subr.mxu0 0.0
    %4496 = vmatpush1.msra.mxu0 %v3382
    %4497 = vmatprep.subr.mxu0 0.0
    %4498 = vmatpush1.msra.mxu0 %v3383
    %4499 = vmatprep.subr.mxu0 0.0
    %4500 = vmatpush1.msra.mxu0 %v3384
    %4501 = vmatprep.subr.mxu0 0.0
    %4502 = vmatpush1.msra.mxu0 %v3385
    %4503 = vmatprep.subr.mxu0 0.0
    %4504 = vmatpush1.msra.mxu0 %v3386
    %4505 = vmatprep.subr.mxu0 0.0
    %4506 = vmatpush1.msra.mxu0 %v3387
    %4507 = vmatprep.subr.mxu0 0.0
    %4508 = vmatpush1.msra.mxu0 %v3388
    %4509 = vmatprep.subr.mxu0 0.0
    %4510 = vmatpush1.msra.mxu0 %v3389
    %4511 = vmatprep.subr.mxu0 0.0
    %4512 = vmatpush1.msra.mxu0 %v3390
    %4513 = vmatprep.subr.mxu0 0.0
    %4514 = vmatpush1.msra.mxu0 %v3391
    %4515 = vmatprep.subr.mxu0 0.0
    %4516 = vmatpush1.msra.mxu0 %v3392
    %4517 = vmatprep.subr.mxu0 0.0
    %4518 = vmatpush1.msra.mxu0 %v3393
    %4519 = vmatprep.subr.mxu0 0.0
    %4520 = vmatpush1.msra.mxu0 %v3394
    %4521 = vmatprep.subr.mxu0 0.0
    %4522 = vmatpush1.msra.mxu0 %v3395
    %4523 = vmatprep.subr.mxu0 0.0
    %4524 = vmatpush1.msra.mxu0 %v3396
    %4525 = vmatprep.subr.mxu0 0.0
    %4526 = vmatpush1.msra.mxu0 %v3397
    %4527 = vmatprep.subr.mxu0 0.0
    %4528 = vmatpush1.msra.mxu0 %v3398
    %4529 = vmatprep.subr.mxu0 0.0
    %4530 = vmatpush1.msra.mxu0 %v3399
    %4531 = vmatprep.subr.mxu0 0.0
    %4532 = vmatpush1.msra.mxu0 %v3400
    %4533 = vmatprep.subr.mxu0 0.0
    %4534 = vmatpush1.msra.mxu0 %v3401
    %4535 = vmatprep.subr.mxu0 0.0
    %4536 = vmatpush1.msra.mxu0 %v3402
    %4537 = vmatprep.subr.mxu0 0.0
    %4538 = vmatpush1.msra.mxu0 %v3403
    %4539 = vmatprep.subr.mxu0 0.0
    %4540 = vmatpush1.msra.mxu0 %v3404
    %4541 = vmatprep.subr.mxu0 0.0
    %4542 = vmatpush1.msra.mxu0 %v3405
    %4543 = vmatprep.subr.mxu0 0.0
    %4544 = vmatpush1.msra.mxu0 %v3406
    %4545 = vmatprep.subr.mxu0 0.0
    %4546 = vmatpush1.msra.mxu0 %v3407
    %4547 = vmatprep.subr.mxu0 0.0
    %4548 = vmatpush1.msra.mxu0 %v3408
    %4549 = vmatprep.subr.mxu0 0.0
    %4550 = vmatpush1.msra.mxu0 %v3409
    %4551 = vmatprep.subr.mxu0 0.0
    %4552 = vmatpush1.msra.mxu0 %v3410
    %4553 = vmatprep.mubr.f32.mxu0 %v3062
    %4554 = vmatmul.mubr.f32.gmra.mrb[0].mxu0 %v3061
    %v4555 = vpop.f32.mrb[0].mxu0
    %v4556 = vadd.f32 %v4486, %v4555
    %v4557 = vpop.f32.mrb[0].mxu0
    %4558 = vdwg.mxu0
    %4559 = vmatprep.subr.mxu0 0.0
    %4560 = vmatpush1.msra.mxu0 %v3411
    %4561 = vmatprep.subr.mxu0 0.0
    %4562 = vmatpush1.msra.mxu0 %v3412
    %4563 = vmatprep.subr.mxu0 0.0
    %4564 = vmatpush1.msra.mxu0 %v3413
    %4565 = vmatprep.subr.mxu0 0.0
    %4566 = vmatpush1.msra.mxu0 %v3414
    %4567 = vmatprep.subr.mxu0 0.0
    %4568 = vmatpush1.msra.mxu0 %v3415
    %4569 = vmatprep.subr.mxu0 0.0
    %4570 = vmatpush1.msra.mxu0 %v3416
    %4571 = vmatprep.subr.mxu0 0.0
    %4572 = vmatpush1.msra.mxu0 %v3417
    %4573 = vmatprep.subr.mxu0 0.0
    %4574 = vmatpush1.msra.mxu0 %v3418
    %4575 = vmatprep.subr.mxu0 0.0
    %4576 = vmatpush1.msra.mxu0 %v3419
    %4577 = vmatprep.subr.mxu0 0.0
    %4578 = vmatpush1.msra.mxu0 %v3420
    %4579 = vmatprep.subr.mxu0 0.0
    %4580 = vmatpush1.msra.mxu0 %v3421
    %4581 = vmatprep.subr.mxu0 0.0
    %4582 = vmatpush1.msra.mxu0 %v3422
    %4583 = vmatprep.subr.mxu0 0.0
    %4584 = vmatpush1.msra.mxu0 %v3423
    %4585 = vmatprep.subr.mxu0 0.0
    %4586 = vmatpush1.msra.mxu0 %v3424
    %4587 = vmatprep.subr.mxu0 0.0
    %4588 = vmatpush1.msra.mxu0 %v3425
    %4589 = vmatprep.subr.mxu0 0.0
    %4590 = vmatpush1.msra.mxu0 %v3426
    %4591 = vmatprep.subr.mxu0 0.0
    %4592 = vmatpush1.msra.mxu0 %v3427
    %4593 = vmatprep.subr.mxu0 0.0
    %4594 = vmatpush1.msra.mxu0 %v3428
    %4595 = vmatprep.subr.mxu0 0.0
    %4596 = vmatpush1.msra.mxu0 %v3429
    %4597 = vmatprep.subr.mxu0 0.0
    %4598 = vmatpush1.msra.mxu0 %v3430
    %4599 = vmatprep.subr.mxu0 0.0
    %4600 = vmatpush1.msra.mxu0 %v3431
    %4601 = vmatprep.subr.mxu0 0.0
    %4602 = vmatpush1.msra.mxu0 %v3432
    %4603 = vmatprep.subr.mxu0 0.0
    %4604 = vmatpush1.msra.mxu0 %v3433
    %4605 = vmatprep.subr.mxu0 0.0
    %4606 = vmatpush1.msra.mxu0 %v3434
    %4607 = vmatprep.subr.mxu0 0.0
    %4608 = vmatpush1.msra.mxu0 %v3435
    %4609 = vmatprep.subr.mxu0 0.0
    %4610 = vmatpush1.msra.mxu0 %v3436
    %4611 = vmatprep.subr.mxu0 0.0
    %4612 = vmatpush1.msra.mxu0 %v3437
    %4613 = vmatprep.subr.mxu0 0.0
    %4614 = vmatpush1.msra.mxu0 %v3438
    %4615 = vmatprep.subr.mxu0 0.0
    %4616 = vmatpush1.msra.mxu0 %v3439
    %4617 = vmatprep.subr.mxu0 0.0
    %4618 = vmatpush1.msra.mxu0 %v3440
    %4619 = vmatprep.subr.mxu0 0.0
    %4620 = vmatpush1.msra.mxu0 %v3441
    %4621 = vmatprep.subr.mxu0 0.0
    %4622 = vmatpush1.msra.mxu0 %v3442
    %4623 = vmatprep.mubr.f32.mxu0 %v3064
    %4624 = vmatmul.mubr.f32.gmra.mrb[0].mxu0 %v3063
    %v4625 = vpop.f32.mrb[0].mxu0
    %v4626 = vadd.f32 %v4556, %v4625
    %v4627 = vpop.f32.mrb[0].mxu0
    %4628 = vdwg.mxu0
    %4629 = vmatprep.subr.mxu0 0.0
    %4630 = vmatpush1.msra.mxu0 %v3443
    %4631 = vmatprep.subr.mxu0 0.0
    %4632 = vmatpush1.msra.mxu0 %v3444
    %4633 = vmatprep.subr.mxu0 0.0
    %4634 = vmatpush1.msra.mxu0 %v3445
    %4635 = vmatprep.subr.mxu0 0.0
    %4636 = vmatpush1.msra.mxu0 %v3446
    %4637 = vmatprep.subr.mxu0 0.0
    %4638 = vmatpush1.msra.mxu0 %v3447
    %4639 = vmatprep.subr.mxu0 0.0
    %4640 = vmatpush1.msra.mxu0 %v3448
    %4641 = vmatprep.subr.mxu0 0.0
    %4642 = vmatpush1.msra.mxu0 %v3449
    %4643 = vmatprep.subr.mxu0 0.0
    %4644 = vmatpush1.msra.mxu0 %v3450
    %4645 = vmatprep.subr.mxu0 0.0
    %4646 = vmatpush1.msra.mxu0 %v3451
    %4647 = vmatprep.subr.mxu0 0.0
    %4648 = vmatpush1.msra.mxu0 %v3452
    %4649 = vmatprep.subr.mxu0 0.0
    %4650 = vmatpush1.msra.mxu0 %v3453
    %4651 = vmatprep.subr.mxu0 0.0
    %4652 = vmatpush1.msra.mxu0 %v3454
    %4653 = vmatprep.subr.mxu0 0.0
    %4654 = vmatpush1.msra.mxu0 %v3455
    %4655 = vmatprep.subr.mxu0 0.0
    %4656 = vmatpush1.msra.mxu0 %v3456
    %4657 = vmatprep.subr.mxu0 0.0
    %4658 = vmatpush1.msra.mxu0 %v3457
    %4659 = vmatprep.subr.mxu0 0.0
    %4660 = vmatpush1.msra.mxu0 %v3458
    %4661 = vmatprep.subr.mxu0 0.0
    %4662 = vmatpush1.msra.mxu0 %v3459
    %4663 = vmatprep.subr.mxu0 0.0
    %4664 = vmatpush1.msra.mxu0 %v3460
    %4665 = vmatprep.subr.mxu0 0.0
    %4666 = vmatpush1.msra.mxu0 %v3461
    %4667 = vmatprep.subr.mxu0 0.0
    %4668 = vmatpush1.msra.mxu0 %v3462
    %4669 = vmatprep.subr.mxu0 0.0
    %4670 = vmatpush1.msra.mxu0 %v3463
    %4671 = vmatprep.subr.mxu0 0.0
    %4672 = vmatpush1.msra.mxu0 %v3464
    %4673 = vmatprep.subr.mxu0 0.0
    %4674 = vmatpush1.msra.mxu0 %v3465
    %4675 = vmatprep.subr.mxu0 0.0
    %4676 = vmatpush1.msra.mxu0 %v3466
    %4677 = vmatprep.subr.mxu0 0.0
    %4678 = vmatpush1.msra.mxu0 %v3467
    %4679 = vmatprep.subr.mxu0 0.0
    %4680 = vmatpush1.msra.mxu0 %v3468
    %4681 = vmatprep.subr.mxu0 0.0
    %4682 = vmatpush1.msra.mxu0 %v3469
    %4683 = vmatprep.subr.mxu0 0.0
    %4684 = vmatpush1.msra.mxu0 %v3470
    %4685 = vmatprep.subr.mxu0 0.0
    %4686 = vmatpush1.msra.mxu0 %v3471
    %4687 = vmatprep.subr.mxu0 0.0
    %4688 = vmatpush1.msra.mxu0 %v3472
    %4689 = vmatprep.subr.mxu0 0.0
    %4690 = vmatpush1.msra.mxu0 %v3473
    %4691 = vmatprep.subr.mxu0 0.0
    %4692 = vmatpush1.msra.mxu0 %v3474
    %4693 = vmatprep.mubr.f32.mxu0 %v3066
    %4694 = vmatmul.mubr.f32.gmra.mrb[0].mxu0 %v3065
    %v4695 = vpop.f32.mrb[0].mxu0
    %v4696 = vadd.f32 %v4626, %v4695
    %v4697 = vpop.f32.mrb[0].mxu0
    %4698 = vdwg.mxu0
    %4699 = vmatprep.subr.mxu0 0.0
    %4700 = vmatpush1.msra.mxu0 %v3475
    %4701 = vmatprep.subr.mxu0 0.0
    %4702 = vmatpush1.msra.mxu0 %v3476
    %4703 = vmatprep.subr.mxu0 0.0
    %4704 = vmatpush1.msra.mxu0 %v3477
    %4705 = vmatprep.subr.mxu0 0.0
    %4706 = vmatpush1.msra.mxu0 %v3478
    %4707 = vmatprep.subr.mxu0 0.0
    %4708 = vmatpush1.msra.mxu0 %v3479
    %4709 = vmatprep.subr.mxu0 0.0
    %4710 = vmatpush1.msra.mxu0 %v3480
    %4711 = vmatprep.subr.mxu0 0.0
    %4712 = vmatpush1.msra.mxu0 %v3481
    %4713 = vmatprep.subr.mxu0 0.0
    %4714 = vmatpush1.msra.mxu0 %v3482
    %4715 = vmatprep.subr.mxu0 0.0
    %4716 = vmatpush1.msra.mxu0 %v3483
    %4717 = vmatprep.subr.mxu0 0.0
    %4718 = vmatpush1.msra.mxu0 %v3484
    %4719 = vmatprep.subr.mxu0 0.0
    %4720 = vmatpush1.msra.mxu0 %v3485
    %4721 = vmatprep.subr.mxu0 0.0
    %4722 = vmatpush1.msra.mxu0 %v3486
    %4723 = vmatprep.subr.mxu0 0.0
    %4724 = vmatpush1.msra.mxu0 %v3487
    %4725 = vmatprep.subr.mxu0 0.0
    %4726 = vmatpush1.msra.mxu0 %v3488
    %4727 = vmatprep.subr.mxu0 0.0
    %4728 = vmatpush1.msra.mxu0 %v3489
    %4729 = vmatprep.subr.mxu0 0.0
    %4730 = vmatpush1.msra.mxu0 %v3490
    %4731 = vmatprep.subr.mxu0 0.0
    %4732 = vmatpush1.msra.mxu0 %v3491
    %4733 = vmatprep.subr.mxu0 0.0
    %4734 = vmatpush1.msra.mxu0 %v3492
    %4735 = vmatprep.subr.mxu0 0.0
    %4736 = vmatpush1.msra.mxu0 %v3493
    %4737 = vmatprep.subr.mxu0 0.0
    %4738 = vmatpush1.msra.mxu0 %v3494
    %4739 = vmatprep.subr.mxu0 0.0
    %4740 = vmatpush1.msra.mxu0 %v3495
    %4741 = vmatprep.subr.mxu0 0.0
    %4742 = vmatpush1.msra.mxu0 %v3496
    %4743 = vmatprep.subr.mxu0 0.0
    %4744 = vmatpush1.msra.mxu0 %v3497
    %4745 = vmatprep.subr.mxu0 0.0
    %4746 = vmatpush1.msra.mxu0 %v3498
    %4747 = vmatprep.subr.mxu0 0.0
    %4748 = vmatpush1.msra.mxu0 %v3499
    %4749 = vmatprep.subr.mxu0 0.0
    %4750 = vmatpush1.msra.mxu0 %v3500
    %4751 = vmatprep.subr.mxu0 0.0
    %4752 = vmatpush1.msra.mxu0 %v3501
    %4753 = vmatprep.subr.mxu0 0.0
    %4754 = vmatpush1.msra.mxu0 %v3502
    %4755 = vmatprep.subr.mxu0 0.0
    %4756 = vmatpush1.msra.mxu0 %v3503
    %4757 = vmatprep.subr.mxu0 0.0
    %4758 = vmatpush1.msra.mxu0 %v3504
    %4759 = vmatprep.subr.mxu0 0.0
    %4760 = vmatpush1.msra.mxu0 %v3505
    %4761 = vmatprep.subr.mxu0 0.0
    %4762 = vmatpush1.msra.mxu0 %v3506
    %4763 = vmatprep.mubr.f32.mxu0 %v3068
    %4764 = vmatmul.mubr.f32.gmra.mrb[0].mxu0 %v3067
    %v4765 = vpop.f32.mrb[0].mxu0
    %v4766 = vadd.f32 %v4696, %v4765
    %v4767 = vpop.f32.mrb[0].mxu0
    %4768 = vdwg.mxu0
    %4769 = vmatprep.subr.mxu0 0.0
    %4770 = vmatpush1.msra.mxu0 %v3507
    %4771 = vmatprep.subr.mxu0 0.0
    %4772 = vmatpush1.msra.mxu0 %v3508
    %4773 = vmatprep.subr.mxu0 0.0
    %4774 = vmatpush1.msra.mxu0 %v3509
    %4775 = vmatprep.subr.mxu0 0.0
    %4776 = vmatpush1.msra.mxu0 %v3510
    %4777 = vmatprep.subr.mxu0 0.0
    %4778 = vmatpush1.msra.mxu0 %v3511
    %4779 = vmatprep.subr.mxu0 0.0
    %4780 = vmatpush1.msra.mxu0 %v3512
    %4781 = vmatprep.subr.mxu0 0.0
    %4782 = vmatpush1.msra.mxu0 %v3513
    %4783 = vmatprep.subr.mxu0 0.0
    %4784 = vmatpush1.msra.mxu0 %v3514
    %4785 = vmatprep.subr.mxu0 0.0
    %4786 = vmatpush1.msra.mxu0 %v3515
    %4787 = vmatprep.subr.mxu0 0.0
    %4788 = vmatpush1.msra.mxu0 %v3516
    %4789 = vmatprep.subr.mxu0 0.0
    %4790 = vmatpush1.msra.mxu0 %v3517
    %4791 = vmatprep.subr.mxu0 0.0
    %4792 = vmatpush1.msra.mxu0 %v3518
    %4793 = vmatprep.subr.mxu0 0.0
    %4794 = vmatpush1.msra.mxu0 %v3519
    %4795 = vmatprep.subr.mxu0 0.0
    %4796 = vmatpush1.msra.mxu0 %v3520
    %4797 = vmatprep.subr.mxu0 0.0
    %4798 = vmatpush1.msra.mxu0 %v3521
    %4799 = vmatprep.subr.mxu0 0.0
    %4800 = vmatpush1.msra.mxu0 %v3522
    %4801 = vmatprep.subr.mxu0 0.0
    %4802 = vmatpush1.msra.mxu0 %v3523
    %4803 = vmatprep.subr.mxu0 0.0
    %4804 = vmatpush1.msra.mxu0 %v3524
    %4805 = vmatprep.subr.mxu0 0.0
    %4806 = vmatpush1.msra.mxu0 %v3525
    %4807 = vmatprep.subr.mxu0 0.0
    %4808 = vmatpush1.msra.mxu0 %v3526
    %4809 = vmatprep.subr.mxu0 0.0
    %4810 = vmatpush1.msra.mxu0 %v3527
    %4811 = vmatprep.subr.mxu0 0.0
    %4812 = vmatpush1.msra.mxu0 %v3528
    %4813 = vmatprep.subr.mxu0 0.0
    %4814 = vmatpush1.msra.mxu0 %v3529
    %4815 = vmatprep.subr.mxu0 0.0
    %4816 = vmatpush1.msra.mxu0 %v3530
    %4817 = vmatprep.subr.mxu0 0.0
    %4818 = vmatpush1.msra.mxu0 %v3531
    %4819 = vmatprep.subr.mxu0 0.0
    %4820 = vmatpush1.msra.mxu0 %v3532
    %4821 = vmatprep.subr.mxu0 0.0
    %4822 = vmatpush1.msra.mxu0 %v3533
    %4823 = vmatprep.subr.mxu0 0.0
    %4824 = vmatpush1.msra.mxu0 %v3534
    %4825 = vmatprep.subr.mxu0 0.0
    %4826 = vmatpush1.msra.mxu0 %v3535
    %4827 = vmatprep.subr.mxu0 0.0
    %4828 = vmatpush1.msra.mxu0 %v3536
    %4829 = vmatprep.subr.mxu0 0.0
    %4830 = vmatpush1.msra.mxu0 %v3537
    %4831 = vmatprep.subr.mxu0 0.0
    %4832 = vmatpush1.msra.mxu0 %v3538
    %4833 = vmatprep.mubr.f32.mxu0 %v3070
    %4834 = vmatmul.mubr.f32.gmra.mrb[0].mxu0 %v3069
    %v4835 = vpop.f32.mrb[0].mxu0
    %v4836 = vadd.f32 %v4766, %v4835
    %v4837 = vpop.f32.mrb[0].mxu0
    %4838 = vdwg.mxu0
    %4839 = vmatprep.subr.mxu0 0.0
    %4840 = vmatpush1.msra.mxu0 %v3539
    %4841 = vmatprep.subr.mxu0 0.0
    %4842 = vmatpush1.msra.mxu0 %v3540
    %4843 = vmatprep.subr.mxu0 0.0
    %4844 = vmatpush1.msra.mxu0 %v3541
    %4845 = vmatprep.subr.mxu0 0.0
    %4846 = vmatpush1.msra.mxu0 %v3542
    %4847 = vmatprep.subr.mxu0 0.0
    %4848 = vmatpush1.msra.mxu0 %v3543
    %4849 = vmatprep.subr.mxu0 0.0
    %4850 = vmatpush1.msra.mxu0 %v3544
    %4851 = vmatprep.subr.mxu0 0.0
    %4852 = vmatpush1.msra.mxu0 %v3545
    %4853 = vmatprep.subr.mxu0 0.0
    %4854 = vmatpush1.msra.mxu0 %v3546
    %4855 = vmatprep.subr.mxu0 0.0
    %4856 = vmatpush1.msra.mxu0 %v3547
    %4857 = vmatprep.subr.mxu0 0.0
    %4858 = vmatpush1.msra.mxu0 %v3548
    %4859 = vmatprep.subr.mxu0 0.0
    %4860 = vmatpush1.msra.mxu0 %v3549
    %4861 = vmatprep.subr.mxu0 0.0
    %4862 = vmatpush1.msra.mxu0 %v3550
    %4863 = vmatprep.subr.mxu0 0.0
    %4864 = vmatpush1.msra.mxu0 %v3551
    %4865 = vmatprep.subr.mxu0 0.0
    %4866 = vmatpush1.msra.mxu0 %v3552
    %4867 = vmatprep.subr.mxu0 0.0
    %4868 = vmatpush1.msra.mxu0 %v3553
    %4869 = vmatprep.subr.mxu0 0.0
    %4870 = vmatpush1.msra.mxu0 %v3554
    %4871 = vmatprep.subr.mxu0 0.0
    %4872 = vmatpush1.msra.mxu0 %v3555
    %4873 = vmatprep.subr.mxu0 0.0
    %4874 = vmatpush1.msra.mxu0 %v3556
    %4875 = vmatprep.subr.mxu0 0.0
    %4876 = vmatpush1.msra.mxu0 %v3557
    %4877 = vmatprep.subr.mxu0 0.0
    %4878 = vmatpush1.msra.mxu0 %v3558
    %4879 = vmatprep.subr.mxu0 0.0
    %4880 = vmatpush1.msra.mxu0 %v3559
    %4881 = vmatprep.subr.mxu0 0.0
    %4882 = vmatpush1.msra.mxu0 %v3560
    %4883 = vmatprep.subr.mxu0 0.0
    %4884 = vmatpush1.msra.mxu0 %v3561
    %4885 = vmatprep.subr.mxu0 0.0
    %4886 = vmatpush1.msra.mxu0 %v3562
    %4887 = vmatprep.subr.mxu0 0.0
    %4888 = vmatpush1.msra.mxu0 %v3563
    %4889 = vmatprep.subr.mxu0 0.0
    %4890 = vmatpush1.msra.mxu0 %v3564
    %4891 = vmatprep.subr.mxu0 0.0
    %4892 = vmatpush1.msra.mxu0 %v3565
    %4893 = vmatprep.subr.mxu0 0.0
    %4894 = vmatpush1.msra.mxu0 %v3566
    %4895 = vmatprep.subr.mxu0 0.0
    %4896 = vmatpush1.msra.mxu0 %v3567
    %4897 = vmatprep.subr.mxu0 0.0
    %4898 = vmatpush1.msra.mxu0 %v3568
    %4899 = vmatprep.subr.mxu0 0.0
    %4900 = vmatpush1.msra.mxu0 %v3569
    %4901 = vmatprep.subr.mxu0 0.0
    %4902 = vmatpush1.msra.mxu0 %v3570
    %4903 = vmatprep.mubr.f32.mxu0 %v3072
    %4904 = vmatmul.mubr.f32.gmra.mrb[0].mxu0 %v3071
    %v4905 = vpop.f32.mrb[0].mxu0
    %v4906 = vadd.f32 %v4836, %v4905
    %v4907 = vpop.f32.mrb[0].mxu0
    %4908 = vdwg.mxu0
    %4909 = vmatprep.subr.mxu0 0.0
    %4910 = vmatpush1.msra.mxu0 %v3571
    %4911 = vmatprep.subr.mxu0 0.0
    %4912 = vmatpush1.msra.mxu0 %v3572
    %4913 = vmatprep.subr.mxu0 0.0
    %4914 = vmatpush1.msra.mxu0 %v3573
    %4915 = vmatprep.subr.mxu0 0.0
    %4916 = vmatpush1.msra.mxu0 %v3574
    %4917 = vmatprep.subr.mxu0 0.0
    %4918 = vmatpush1.msra.mxu0 %v3575
    %4919 = vmatprep.subr.mxu0 0.0
    %4920 = vmatpush1.msra.mxu0 %v3576
    %4921 = vmatprep.subr.mxu0 0.0
    %4922 = vmatpush1.msra.mxu0 %v3577
    %4923 = vmatprep.subr.mxu0 0.0
    %4924 = vmatpush1.msra.mxu0 %v3578
    %4925 = vmatprep.subr.mxu0 0.0
    %4926 = vmatpush1.msra.mxu0 %v3579
    %4927 = vmatprep.subr.mxu0 0.0
    %4928 = vmatpush1.msra.mxu0 %v3580
    %4929 = vmatprep.subr.mxu0 0.0
    %4930 = vmatpush1.msra.mxu0 %v3581
    %4931 = vmatprep.subr.mxu0 0.0
    %4932 = vmatpush1.msra.mxu0 %v3582
    %4933 = vmatprep.subr.mxu0 0.0
    %4934 = vmatpush1.msra.mxu0 %v3583
    %4935 = vmatprep.subr.mxu0 0.0
    %4936 = vmatpush1.msra.mxu0 %v3584
    %4937 = vmatprep.subr.mxu0 0.0
    %4938 = vmatpush1.msra.mxu0 %v3585
    %4939 = vmatprep.subr.mxu0 0.0
    %4940 = vmatpush1.msra.mxu0 %v3586
    %4941 = vmatprep.subr.mxu0 0.0
    %4942 = vmatpush1.msra.mxu0 %v3587
    %4943 = vmatprep.subr.mxu0 0.0
    %4944 = vmatpush1.msra.mxu0 %v3588
    %4945 = vmatprep.subr.mxu0 0.0
    %4946 = vmatpush1.msra.mxu0 %v3589
    %4947 = vmatprep.subr.mxu0 0.0
    %4948 = vmatpush1.msra.mxu0 %v3590
    %4949 = vmatprep.subr.mxu0 0.0
    %4950 = vmatpush1.msra.mxu0 %v3591
    %4951 = vmatprep.subr.mxu0 0.0
    %4952 = vmatpush1.msra.mxu0 %v3592
    %4953 = vmatprep.subr.mxu0 0.0
    %4954 = vmatpush1.msra.mxu0 %v3593
    %4955 = vmatprep.subr.mxu0 0.0
    %4956 = vmatpush1.msra.mxu0 %v3594
    %4957 = vmatprep.subr.mxu0 0.0
    %4958 = vmatpush1.msra.mxu0 %v3595
    %4959 = vmatprep.subr.mxu0 0.0
    %4960 = vmatpush1.msra.mxu0 %v3596
    %4961 = vmatprep.subr.mxu0 0.0
    %4962 = vmatpush1.msra.mxu0 %v3597
    %4963 = vmatprep.subr.mxu0 0.0
    %4964 = vmatpush1.msra.mxu0 %v3598
    %4965 = vmatprep.subr.mxu0 0.0
    %4966 = vmatpush1.msra.mxu0 %v3599
    %4967 = vmatprep.subr.mxu0 0.0
    %4968 = vmatpush1.msra.mxu0 %v3600
    %4969 = vmatprep.subr.mxu0 0.0
    %4970 = vmatpush1.msra.mxu0 %v3601
    %4971 = vmatprep.subr.mxu0 0.0
    %4972 = vmatpush1.msra.mxu0 %v3602
    %4973 = vmatprep.mubr.f32.mxu0 %v3074
    %4974 = vmatmul.mubr.f32.gmra.mrb[0].mxu0 %v3073
    %v4975 = vpop.f32.mrb[0].mxu0
    %v4976 = vadd.f32 %v4906, %v4975
    %v4977 = vpop.f32.mrb[0].mxu0
    %4978 = vdwg.mxu0
    %4979 = vmatprep.subr.mxu0 0.0
    %4980 = vmatpush1.msra.mxu0 %v3603
    %4981 = vmatprep.subr.mxu0 0.0
    %4982 = vmatpush1.msra.mxu0 %v3604
    %4983 = vmatprep.subr.mxu0 0.0
    %4984 = vmatpush1.msra.mxu0 %v3605
    %4985 = vmatprep.subr.mxu0 0.0
    %4986 = vmatpush1.msra.mxu0 %v3606
    %4987 = vmatprep.subr.mxu0 0.0
    %4988 = vmatpush1.msra.mxu0 %v3607
    %4989 = vmatprep.subr.mxu0 0.0
    %4990 = vmatpush1.msra.mxu0 %v3608
    %4991 = vmatprep.subr.mxu0 0.0
    %4992 = vmatpush1.msra.mxu0 %v3609
    %4993 = vmatprep.subr.mxu0 0.0
    %4994 = vmatpush1.msra.mxu0 %v3610
    %4995 = vmatprep.subr.mxu0 0.0
    %4996 = vmatpush1.msra.mxu0 %v3611
    %4997 = vmatprep.subr.mxu0 0.0
    %4998 = vmatpush1.msra.mxu0 %v3612
    %4999 = vmatprep.subr.mxu0 0.0
    %5000 = vmatpush1.msra.mxu0 %v3613
    %5001 = vmatprep.subr.mxu0 0.0
    %5002 = vmatpush1.msra.mxu0 %v3614
    %5003 = vmatprep.subr.mxu0 0.0
    %5004 = vmatpush1.msra.mxu0 %v3615
    %5005 = vmatprep.subr.mxu0 0.0
    %5006 = vmatpush1.msra.mxu0 %v3616
    %5007 = vmatprep.subr.mxu0 0.0
    %5008 = vmatpush1.msra.mxu0 %v3617
    %5009 = vmatprep.subr.mxu0 0.0
    %5010 = vmatpush1.msra.mxu0 %v3618
    %5011 = vmatprep.subr.mxu0 0.0
    %5012 = vmatpush1.msra.mxu0 %v3619
    %5013 = vmatprep.subr.mxu0 0.0
    %5014 = vmatpush1.msra.mxu0 %v3620
    %5015 = vmatprep.subr.mxu0 0.0
    %5016 = vmatpush1.msra.mxu0 %v3621
    %5017 = vmatprep.subr.mxu0 0.0
    %5018 = vmatpush1.msra.mxu0 %v3622
    %5019 = vmatprep.subr.mxu0 0.0
    %5020 = vmatpush1.msra.mxu0 %v3623
    %5021 = vmatprep.subr.mxu0 0.0
    %5022 = vmatpush1.msra.mxu0 %v3624
    %5023 = vmatprep.subr.mxu0 0.0
    %5024 = vmatpush1.msra.mxu0 %v3625
    %5025 = vmatprep.subr.mxu0 0.0
    %5026 = vmatpush1.msra.mxu0 %v3626
    %5027 = vmatprep.subr.mxu0 0.0
    %5028 = vmatpush1.msra.mxu0 %v3627
    %5029 = vmatprep.subr.mxu0 0.0
    %5030 = vmatpush1.msra.mxu0 %v3628
    %5031 = vmatprep.subr.mxu0 0.0
    %5032 = vmatpush1.msra.mxu0 %v3629
    %5033 = vmatprep.subr.mxu0 0.0
    %5034 = vmatpush1.msra.mxu0 %v3630
    %5035 = vmatprep.subr.mxu0 0.0
    %5036 = vmatpush1.msra.mxu0 %v3631
    %5037 = vmatprep.subr.mxu0 0.0
    %5038 = vmatpush1.msra.mxu0 %v3632
    %5039 = vmatprep.subr.mxu0 0.0
    %5040 = vmatpush1.msra.mxu0 %v3633
    %5041 = vmatprep.subr.mxu0 0.0
    %5042 = vmatpush1.msra.mxu0 %v3634
    %5043 = vmatprep.mubr.f32.mxu0 %v3076
    %5044 = vmatmul.mubr.f32.gmra.mrb[0].mxu0 %v3075
    %v5045 = vpop.f32.mrb[0].mxu0
    %v5046 = vadd.f32 %v4976, %v5045
    %v5047 = vpop.f32.mrb[0].mxu0
    %5048 = vdwg.mxu0
    %5049 = vmatprep.subr.mxu0 0.0
    %5050 = vmatpush1.msra.mxu0 %v3635
    %5051 = vmatprep.subr.mxu0 0.0
    %5052 = vmatpush1.msra.mxu0 %v3636
    %5053 = vmatprep.subr.mxu0 0.0
    %5054 = vmatpush1.msra.mxu0 %v3637
    %5055 = vmatprep.subr.mxu0 0.0
    %5056 = vmatpush1.msra.mxu0 %v3638
    %5057 = vmatprep.subr.mxu0 0.0
    %5058 = vmatpush1.msra.mxu0 %v3639
    %5059 = vmatprep.subr.mxu0 0.0
    %5060 = vmatpush1.msra.mxu0 %v3640
    %5061 = vmatprep.subr.mxu0 0.0
    %5062 = vmatpush1.msra.mxu0 %v3641
    %5063 = vmatprep.subr.mxu0 0.0
    %5064 = vmatpush1.msra.mxu0 %v3642
    %5065 = vmatprep.subr.mxu0 0.0
    %5066 = vmatpush1.msra.mxu0 %v3643
    %5067 = vmatprep.subr.mxu0 0.0
    %5068 = vmatpush1.msra.mxu0 %v3644
    %5069 = vmatprep.subr.mxu0 0.0
    %5070 = vmatpush1.msra.mxu0 %v3645
    %5071 = vmatprep.subr.mxu0 0.0
    %5072 = vmatpush1.msra.mxu0 %v3646
    %5073 = vmatprep.subr.mxu0 0.0
    %5074 = vmatpush1.msra.mxu0 %v3647
    %5075 = vmatprep.subr.mxu0 0.0
    %5076 = vmatpush1.msra.mxu0 %v3648
    %5077 = vmatprep.subr.mxu0 0.0
    %5078 = vmatpush1.msra.mxu0 %v3649
    %5079 = vmatprep.subr.mxu0 0.0
    %5080 = vmatpush1.msra.mxu0 %v3650
    %5081 = vmatprep.subr.mxu0 0.0
    %5082 = vmatpush1.msra.mxu0 %v3651
    %5083 = vmatprep.subr.mxu0 0.0
    %5084 = vmatpush1.msra.mxu0 %v3652
    %5085 = vmatprep.subr.mxu0 0.0
    %5086 = vmatpush1.msra.mxu0 %v3653
    %5087 = vmatprep.subr.mxu0 0.0
    %5088 = vmatpush1.msra.mxu0 %v3654
    %5089 = vmatprep.subr.mxu0 0.0
    %5090 = vmatpush1.msra.mxu0 %v3655
    %5091 = vmatprep.subr.mxu0 0.0
    %5092 = vmatpush1.msra.mxu0 %v3656
    %5093 = vmatprep.subr.mxu0 0.0
    %5094 = vmatpush1.msra.mxu0 %v3657
    %5095 = vmatprep.subr.mxu0 0.0
    %5096 = vmatpush1.msra.mxu0 %v3658
    %5097 = vmatprep.subr.mxu0 0.0
    %5098 = vmatpush1.msra.mxu0 %v3659
    %5099 = vmatprep.subr.mxu0 0.0
    %5100 = vmatpush1.msra.mxu0 %v3660
    %5101 = vmatprep.subr.mxu0 0.0
    %5102 = vmatpush1.msra.mxu0 %v3661
    %5103 = vmatprep.subr.mxu0 0.0
    %5104 = vmatpush1.msra.mxu0 %v3662
    %5105 = vmatprep.subr.mxu0 0.0
    %5106 = vmatpush1.msra.mxu0 %v3663
    %5107 = vmatprep.subr.mxu0 0.0
    %5108 = vmatpush1.msra.mxu0 %v3664
    %5109 = vmatprep.subr.mxu0 0.0
    %5110 = vmatpush1.msra.mxu0 %v3665
    %5111 = vmatprep.subr.mxu0 0.0
    %5112 = vmatpush1.msra.mxu0 %v3666
    %5113 = vmatprep.mubr.f32.mxu0 %v3078
    %5114 = vmatmul.mubr.f32.gmra.mrb[0].mxu0 %v3077
    %v5115 = vpop.f32.mrb[0].mxu0
    %v5116 = vadd.f32 %v5046, %v5115
    %v5117 = vpop.f32.mrb[0].mxu0
    %5118 = vdwg.mxu0
    %5119 = vmatprep.subr.mxu0 0.0
    %5120 = vmatpush1.msra.mxu0 %v3667
    %5121 = vmatprep.subr.mxu0 0.0
    %5122 = vmatpush1.msra.mxu0 %v3668
    %5123 = vmatprep.subr.mxu0 0.0
    %5124 = vmatpush1.msra.mxu0 %v3669
    %5125 = vmatprep.subr.mxu0 0.0
    %5126 = vmatpush1.msra.mxu0 %v3670
    %5127 = vmatprep.subr.mxu0 0.0
    %5128 = vmatpush1.msra.mxu0 %v3671
    %5129 = vmatprep.subr.mxu0 0.0
    %5130 = vmatpush1.msra.mxu0 %v3672
    %5131 = vmatprep.subr.mxu0 0.0
    %5132 = vmatpush1.msra.mxu0 %v3673
    %5133 = vmatprep.subr.mxu0 0.0
    %5134 = vmatpush1.msra.mxu0 %v3674
    %5135 = vmatprep.subr.mxu0 0.0
    %5136 = vmatpush1.msra.mxu0 %v3675
    %5137 = vmatprep.subr.mxu0 0.0
    %5138 = vmatpush1.msra.mxu0 %v3676
    %5139 = vmatprep.subr.mxu0 0.0
    %5140 = vmatpush1.msra.mxu0 %v3677
    %5141 = vmatprep.subr.mxu0 0.0
    %5142 = vmatpush1.msra.mxu0 %v3678
    %5143 = vmatprep.subr.mxu0 0.0
    %5144 = vmatpush1.msra.mxu0 %v3679
    %5145 = vmatprep.subr.mxu0 0.0
    %5146 = vmatpush1.msra.mxu0 %v3680
    %5147 = vmatprep.subr.mxu0 0.0
    %5148 = vmatpush1.msra.mxu0 %v3681
    %5149 = vmatprep.subr.mxu0 0.0
    %5150 = vmatpush1.msra.mxu0 %v3682
    %5151 = vmatprep.subr.mxu0 0.0
    %5152 = vmatpush1.msra.mxu0 %v3683
    %5153 = vmatprep.subr.mxu0 0.0
    %5154 = vmatpush1.msra.mxu0 %v3684
    %5155 = vmatprep.subr.mxu0 0.0
    %5156 = vmatpush1.msra.mxu0 %v3685
    %5157 = vmatprep.subr.mxu0 0.0
    %5158 = vmatpush1.msra.mxu0 %v3686
    %5159 = vmatprep.subr.mxu0 0.0
    %5160 = vmatpush1.msra.mxu0 %v3687
    %5161 = vmatprep.subr.mxu0 0.0
    %5162 = vmatpush1.msra.mxu0 %v3688
    %5163 = vmatprep.subr.mxu0 0.0
    %5164 = vmatpush1.msra.mxu0 %v3689
    %5165 = vmatprep.subr.mxu0 0.0
    %5166 = vmatpush1.msra.mxu0 %v3690
    %5167 = vmatprep.subr.mxu0 0.0
    %5168 = vmatpush1.msra.mxu0 %v3691
    %5169 = vmatprep.subr.mxu0 0.0
    %5170 = vmatpush1.msra.mxu0 %v3692
    %5171 = vmatprep.subr.mxu0 0.0
    %5172 = vmatpush1.msra.mxu0 %v3693
    %5173 = vmatprep.subr.mxu0 0.0
    %5174 = vmatpush1.msra.mxu0 %v3694
    %5175 = vmatprep.subr.mxu0 0.0
    %5176 = vmatpush1.msra.mxu0 %v3695
    %5177 = vmatprep.subr.mxu0 0.0
    %5178 = vmatpush1.msra.mxu0 %v3696
    %5179 = vmatprep.subr.mxu0 0.0
    %5180 = vmatpush1.msra.mxu0 %v3697
    %5181 = vmatprep.subr.mxu0 0.0
    %5182 = vmatpush1.msra.mxu0 %v3698
    %5183 = vmatprep.mubr.f32.mxu0 %v3080
    %5184 = vmatmul.mubr.f32.gmra.mrb[0].mxu0 %v3079
    %v5185 = vpop.f32.mrb[0].mxu0
    %v5186 = vadd.f32 %v5116, %v5185
    %v5187 = vpop.f32.mrb[0].mxu0
    %5188 = vdwg.mxu0
    %5189 = vmatprep.subr.mxu0 0.0
    %5190 = vmatpush1.msra.mxu0 %v3699
    %5191 = vmatprep.subr.mxu0 0.0
    %5192 = vmatpush1.msra.mxu0 %v3700
    %5193 = vmatprep.subr.mxu0 0.0
    %5194 = vmatpush1.msra.mxu0 %v3701
    %5195 = vmatprep.subr.mxu0 0.0
    %5196 = vmatpush1.msra.mxu0 %v3702
    %5197 = vmatprep.subr.mxu0 0.0
    %5198 = vmatpush1.msra.mxu0 %v3703
    %5199 = vmatprep.subr.mxu0 0.0
    %5200 = vmatpush1.msra.mxu0 %v3704
    %5201 = vmatprep.subr.mxu0 0.0
    %5202 = vmatpush1.msra.mxu0 %v3705
    %5203 = vmatprep.subr.mxu0 0.0
    %5204 = vmatpush1.msra.mxu0 %v3706
    %5205 = vmatprep.subr.mxu0 0.0
    %5206 = vmatpush1.msra.mxu0 %v3707
    %5207 = vmatprep.subr.mxu0 0.0
    %5208 = vmatpush1.msra.mxu0 %v3708
    %5209 = vmatprep.subr.mxu0 0.0
    %5210 = vmatpush1.msra.mxu0 %v3709
    %5211 = vmatprep.subr.mxu0 0.0
    %5212 = vmatpush1.msra.mxu0 %v3710
    %5213 = vmatprep.subr.mxu0 0.0
    %5214 = vmatpush1.msra.mxu0 %v3711
    %5215 = vmatprep.subr.mxu0 0.0
    %5216 = vmatpush1.msra.mxu0 %v3712
    %5217 = vmatprep.subr.mxu0 0.0
    %5218 = vmatpush1.msra.mxu0 %v3713
    %5219 = vmatprep.subr.mxu0 0.0
    %5220 = vmatpush1.msra.mxu0 %v3714
    %5221 = vmatprep.subr.mxu0 0.0
    %5222 = vmatpush1.msra.mxu0 %v3715
    %5223 = vmatprep.subr.mxu0 0.0
    %5224 = vmatpush1.msra.mxu0 %v3716
    %5225 = vmatprep.subr.mxu0 0.0
    %5226 = vmatpush1.msra.mxu0 %v3717
    %5227 = vmatprep.subr.mxu0 0.0
    %5228 = vmatpush1.msra.mxu0 %v3718
    %5229 = vmatprep.subr.mxu0 0.0
    %5230 = vmatpush1.msra.mxu0 %v3719
    %5231 = vmatprep.subr.mxu0 0.0
    %5232 = vmatpush1.msra.mxu0 %v3720
    %5233 = vmatprep.subr.mxu0 0.0
    %5234 = vmatpush1.msra.mxu0 %v3721
    %5235 = vmatprep.subr.mxu0 0.0
    %5236 = vmatpush1.msra.mxu0 %v3722
    %5237 = vmatprep.subr.mxu0 0.0
    %5238 = vmatpush1.msra.mxu0 %v3723
    %5239 = vmatprep.subr.mxu0 0.0
    %5240 = vmatpush1.msra.mxu0 %v3724
    %5241 = vmatprep.subr.mxu0 0.0
    %5242 = vmatpush1.msra.mxu0 %v3725
    %5243 = vmatprep.subr.mxu0 0.0
    %5244 = vmatpush1.msra.mxu0 %v3726
    %5245 = vmatprep.subr.mxu0 0.0
    %5246 = vmatpush1.msra.mxu0 %v3727
    %5247 = vmatprep.subr.mxu0 0.0
    %5248 = vmatpush1.msra.mxu0 %v3728
    %5249 = vmatprep.subr.mxu0 0.0
    %5250 = vmatpush1.msra.mxu0 %v3729
    %5251 = vmatprep.subr.mxu0 0.0
    %5252 = vmatpush1.msra.mxu0 %v3730
    %5253 = vmatprep.mubr.f32.mxu0 %v3082
    %5254 = vmatmul.mubr.f32.gmra.mrb[0].mxu0 %v3081
    %v5255 = vpop.f32.mrb[0].mxu0
    %v5256 = vadd.f32 %v5186, %v5255
    %v5257 = vpop.f32.mrb[0].mxu0
    %5258 = vdwg.mxu0
    %5259 = vmatprep.subr.mxu0 0.0
    %5260 = vmatpush1.msra.mxu0 %v3731
    %5261 = vmatprep.subr.mxu0 0.0
    %5262 = vmatpush1.msra.mxu0 %v3732
    %5263 = vmatprep.subr.mxu0 0.0
    %5264 = vmatpush1.msra.mxu0 %v3733
    %5265 = vmatprep.subr.mxu0 0.0
    %5266 = vmatpush1.msra.mxu0 %v3734
    %5267 = vmatprep.subr.mxu0 0.0
    %5268 = vmatpush1.msra.mxu0 %v3735
    %5269 = vmatprep.subr.mxu0 0.0
    %5270 = vmatpush1.msra.mxu0 %v3736
    %5271 = vmatprep.subr.mxu0 0.0
    %5272 = vmatpush1.msra.mxu0 %v3737
    %5273 = vmatprep.subr.mxu0 0.0
    %5274 = vmatpush1.msra.mxu0 %v3738
    %5275 = vmatprep.subr.mxu0 0.0
    %5276 = vmatpush1.msra.mxu0 %v3739
    %5277 = vmatprep.subr.mxu0 0.0
    %5278 = vmatpush1.msra.mxu0 %v3740
    %5279 = vmatprep.subr.mxu0 0.0
    %5280 = vmatpush1.msra.mxu0 %v3741
    %5281 = vmatprep.subr.mxu0 0.0
    %5282 = vmatpush1.msra.mxu0 %v3742
    %5283 = vmatprep.subr.mxu0 0.0
    %5284 = vmatpush1.msra.mxu0 %v3743
    %5285 = vmatprep.subr.mxu0 0.0
    %5286 = vmatpush1.msra.mxu0 %v3744
    %5287 = vmatprep.subr.mxu0 0.0
    %5288 = vmatpush1.msra.mxu0 %v3745
    %5289 = vmatprep.subr.mxu0 0.0
    %5290 = vmatpush1.msra.mxu0 %v3746
    %5291 = vmatprep.subr.mxu0 0.0
    %5292 = vmatpush1.msra.mxu0 %v3747
    %5293 = vmatprep.subr.mxu0 0.0
    %5294 = vmatpush1.msra.mxu0 %v3748
    %5295 = vmatprep.subr.mxu0 0.0
    %5296 = vmatpush1.msra.mxu0 %v3749
    %5297 = vmatprep.subr.mxu0 0.0
    %5298 = vmatpush1.msra.mxu0 %v3750
    %5299 = vmatprep.subr.mxu0 0.0
    %5300 = vmatpush1.msra.mxu0 %v3751
    %5301 = vmatprep.subr.mxu0 0.0
    %5302 = vmatpush1.msra.mxu0 %v3752
    %5303 = vmatprep.subr.mxu0 0.0
    %5304 = vmatpush1.msra.mxu0 %v3753
    %5305 = vmatprep.subr.mxu0 0.0
    %5306 = vmatpush1.msra.mxu0 %v3754
    %5307 = vmatprep.subr.mxu0 0.0
    %5308 = vmatpush1.msra.mxu0 %v3755
    %5309 = vmatprep.subr.mxu0 0.0
    %5310 = vmatpush1.msra.mxu0 %v3756
    %5311 = vmatprep.subr.mxu0 0.0
    %5312 = vmatpush1.msra.mxu0 %v3757
    %5313 = vmatprep.subr.mxu0 0.0
    %5314 = vmatpush1.msra.mxu0 %v3758
    %5315 = vmatprep.subr.mxu0 0.0
    %5316 = vmatpush1.msra.mxu0 %v3759
    %5317 = vmatprep.subr.mxu0 0.0
    %5318 = vmatpush1.msra.mxu0 %v3760
    %5319 = vmatprep.subr.mxu0 0.0
    %5320 = vmatpush1.msra.mxu0 %v3761
    %5321 = vmatprep.subr.mxu0 0.0
    %5322 = vmatpush1.msra.mxu0 %v3762
    %5323 = vmatprep.mubr.f32.mxu0 %v3084
    %5324 = vmatmul.mubr.f32.gmra.mrb[0].mxu0 %v3083
    %v5325 = vpop.f32.mrb[0].mxu0
    %v5326 = vadd.f32 %v5256, %v5325
    %v5327 = vpop.f32.mrb[0].mxu0
    %5328 = vdwg.mxu0
    %5329 = vmatprep.subr.mxu0 0.0
    %5330 = vmatpush1.msra.mxu0 %v3763
    %5331 = vmatprep.subr.mxu0 0.0
    %5332 = vmatpush1.msra.mxu0 %v3764
    %5333 = vmatprep.subr.mxu0 0.0
    %5334 = vmatpush1.msra.mxu0 %v3765
    %5335 = vmatprep.subr.mxu0 0.0
    %5336 = vmatpush1.msra.mxu0 %v3766
    %5337 = vmatprep.subr.mxu0 0.0
    %5338 = vmatpush1.msra.mxu0 %v3767
    %5339 = vmatprep.subr.mxu0 0.0
    %5340 = vmatpush1.msra.mxu0 %v3768
    %5341 = vmatprep.subr.mxu0 0.0
    %5342 = vmatpush1.msra.mxu0 %v3769
    %5343 = vmatprep.subr.mxu0 0.0
    %5344 = vmatpush1.msra.mxu0 %v3770
    %5345 = vmatprep.subr.mxu0 0.0
    %5346 = vmatpush1.msra.mxu0 %v3771
    %5347 = vmatprep.subr.mxu0 0.0
    %5348 = vmatpush1.msra.mxu0 %v3772
    %5349 = vmatprep.subr.mxu0 0.0
    %5350 = vmatpush1.msra.mxu0 %v3773
    %5351 = vmatprep.subr.mxu0 0.0
    %5352 = vmatpush1.msra.mxu0 %v3774
    %5353 = vmatprep.subr.mxu0 0.0
    %5354 = vmatpush1.msra.mxu0 %v3775
    %5355 = vmatprep.subr.mxu0 0.0
    %5356 = vmatpush1.msra.mxu0 %v3776
    %5357 = vmatprep.subr.mxu0 0.0
    %5358 = vmatpush1.msra.mxu0 %v3777
    %5359 = vmatprep.subr.mxu0 0.0
    %5360 = vmatpush1.msra.mxu0 %v3778
    %5361 = vmatprep.subr.mxu0 0.0
    %5362 = vmatpush1.msra.mxu0 %v3779
    %5363 = vmatprep.subr.mxu0 0.0
    %5364 = vmatpush1.msra.mxu0 %v3780
    %5365 = vmatprep.subr.mxu0 0.0
    %5366 = vmatpush1.msra.mxu0 %v3781
    %5367 = vmatprep.subr.mxu0 0.0
    %5368 = vmatpush1.msra.mxu0 %v3782
    %5369 = vmatprep.subr.mxu0 0.0
    %5370 = vmatpush1.msra.mxu0 %v3783
    %5371 = vmatprep.subr.mxu0 0.0
    %5372 = vmatpush1.msra.mxu0 %v3784
    %5373 = vmatprep.subr.mxu0 0.0
    %5374 = vmatpush1.msra.mxu0 %v3785
    %5375 = vmatprep.subr.mxu0 0.0
    %5376 = vmatpush1.msra.mxu0 %v3786
    %5377 = vmatprep.subr.mxu0 0.0
    %5378 = vmatpush1.msra.mxu0 %v3787
    %5379 = vmatprep.subr.mxu0 0.0
    %5380 = vmatpush1.msra.mxu0 %v3788
    %5381 = vmatprep.subr.mxu0 0.0
    %5382 = vmatpush1.msra.mxu0 %v3789
    %5383 = vmatprep.subr.mxu0 0.0
    %5384 = vmatpush1.msra.mxu0 %v3790
    %5385 = vmatprep.subr.mxu0 0.0
    %5386 = vmatpush1.msra.mxu0 %v3791
    %5387 = vmatprep.subr.mxu0 0.0
    %5388 = vmatpush1.msra.mxu0 %v3792
    %5389 = vmatprep.subr.mxu0 0.0
    %5390 = vmatpush1.msra.mxu0 %v3793
    %5391 = vmatprep.subr.mxu0 0.0
    %5392 = vmatpush1.msra.mxu0 %v3794
    %5393 = vmatprep.mubr.f32.mxu0 %v3086
    %5394 = vmatmul.mubr.f32.gmra.mrb[0].mxu0 %v3085
    %v5395 = vpop.f32.mrb[0].mxu0
    %v5396 = vadd.f32 %v5326, %v5395
    %v5397 = vpop.f32.mrb[0].mxu0
    %5398 = vdwg.mxu0
    %5399 = vmatprep.subr.mxu0 0.0
    %5400 = vmatpush1.msra.mxu0 %v3795
    %5401 = vmatprep.subr.mxu0 0.0
    %5402 = vmatpush1.msra.mxu0 %v3796
    %5403 = vmatprep.subr.mxu0 0.0
    %5404 = vmatpush1.msra.mxu0 %v3797
    %5405 = vmatprep.subr.mxu0 0.0
    %5406 = vmatpush1.msra.mxu0 %v3798
    %5407 = vmatprep.subr.mxu0 0.0
    %5408 = vmatpush1.msra.mxu0 %v3799
    %5409 = vmatprep.subr.mxu0 0.0
    %5410 = vmatpush1.msra.mxu0 %v3800
    %5411 = vmatprep.subr.mxu0 0.0
    %5412 = vmatpush1.msra.mxu0 %v3801
    %5413 = vmatprep.subr.mxu0 0.0
    %5414 = vmatpush1.msra.mxu0 %v3802
    %5415 = vmatprep.subr.mxu0 0.0
    %5416 = vmatpush1.msra.mxu0 %v3803
    %5417 = vmatprep.subr.mxu0 0.0
    %5418 = vmatpush1.msra.mxu0 %v3804
    %5419 = vmatprep.subr.mxu0 0.0
    %5420 = vmatpush1.msra.mxu0 %v3805
    %5421 = vmatprep.subr.mxu0 0.0
    %5422 = vmatpush1.msra.mxu0 %v3806
    %5423 = vmatprep.subr.mxu0 0.0
    %5424 = vmatpush1.msra.mxu0 %v3807
    %5425 = vmatprep.subr.mxu0 0.0
    %5426 = vmatpush1.msra.mxu0 %v3808
    %5427 = vmatprep.subr.mxu0 0.0
    %5428 = vmatpush1.msra.mxu0 %v3809
    %5429 = vmatprep.subr.mxu0 0.0
    %5430 = vmatpush1.msra.mxu0 %v3810
    %5431 = vmatprep.subr.mxu0 0.0
    %5432 = vmatpush1.msra.mxu0 %v3811
    %5433 = vmatprep.subr.mxu0 0.0
    %5434 = vmatpush1.msra.mxu0 %v3812
    %5435 = vmatprep.subr.mxu0 0.0
    %5436 = vmatpush1.msra.mxu0 %v3813
    %5437 = vmatprep.subr.mxu0 0.0
    %5438 = vmatpush1.msra.mxu0 %v3814
    %5439 = vmatprep.subr.mxu0 0.0
    %5440 = vmatpush1.msra.mxu0 %v3815
    %5441 = vmatprep.subr.mxu0 0.0
    %5442 = vmatpush1.msra.mxu0 %v3816
    %5443 = vmatprep.subr.mxu0 0.0
    %5444 = vmatpush1.msra.mxu0 %v3817
    %5445 = vmatprep.subr.mxu0 0.0
    %5446 = vmatpush1.msra.mxu0 %v3818
    %5447 = vmatprep.subr.mxu0 0.0
    %5448 = vmatpush1.msra.mxu0 %v3819
    %5449 = vmatprep.subr.mxu0 0.0
    %5450 = vmatpush1.msra.mxu0 %v3820
    %5451 = vmatprep.subr.mxu0 0.0
    %5452 = vmatpush1.msra.mxu0 %v3821
    %5453 = vmatprep.subr.mxu0 0.0
    %5454 = vmatpush1.msra.mxu0 %v3822
    %5455 = vmatprep.subr.mxu0 0.0
    %5456 = vmatpush1.msra.mxu0 %v3823
    %5457 = vmatprep.subr.mxu0 0.0
    %5458 = vmatpush1.msra.mxu0 %v3824
    %5459 = vmatprep.subr.mxu0 0.0
    %5460 = vmatpush1.msra.mxu0 %v3825
    %5461 = vmatprep.subr.mxu0 0.0
    %5462 = vmatpush1.msra.mxu0 %v3826
    %5463 = vmatprep.mubr.f32.mxu0 %v3088
    %5464 = vmatmul.mubr.f32.gmra.mrb[0].mxu0 %v3087
    %v5465 = vpop.f32.mrb[0].mxu0
    %v5466 = vadd.f32 %v5396, %v5465
    %v5467 = vpop.f32.mrb[0].mxu0
    %5468 = vdwg.mxu0
    %5469 = vmatprep.subr.mxu0 0.0
    %5470 = vmatpush1.msra.mxu0 %v3827
    %5471 = vmatprep.subr.mxu0 0.0
    %5472 = vmatpush1.msra.mxu0 %v3828
    %5473 = vmatprep.subr.mxu0 0.0
    %5474 = vmatpush1.msra.mxu0 %v3829
    %5475 = vmatprep.subr.mxu0 0.0
    %5476 = vmatpush1.msra.mxu0 %v3830
    %5477 = vmatprep.subr.mxu0 0.0
    %5478 = vmatpush1.msra.mxu0 %v3831
    %5479 = vmatprep.subr.mxu0 0.0
    %5480 = vmatpush1.msra.mxu0 %v3832
    %5481 = vmatprep.subr.mxu0 0.0
    %5482 = vmatpush1.msra.mxu0 %v3833
    %5483 = vmatprep.subr.mxu0 0.0
    %5484 = vmatpush1.msra.mxu0 %v3834
    %5485 = vmatprep.subr.mxu0 0.0
    %5486 = vmatpush1.msra.mxu0 %v3835
    %5487 = vmatprep.subr.mxu0 0.0
    %5488 = vmatpush1.msra.mxu0 %v3836
    %5489 = vmatprep.subr.mxu0 0.0
    %5490 = vmatpush1.msra.mxu0 %v3837
    %5491 = vmatprep.subr.mxu0 0.0
    %5492 = vmatpush1.msra.mxu0 %v3838
    %5493 = vmatprep.subr.mxu0 0.0
    %5494 = vmatpush1.msra.mxu0 %v3839
    %5495 = vmatprep.subr.mxu0 0.0
    %5496 = vmatpush1.msra.mxu0 %v3840
    %5497 = vmatprep.subr.mxu0 0.0
    %5498 = vmatpush1.msra.mxu0 %v3841
    %5499 = vmatprep.subr.mxu0 0.0
    %5500 = vmatpush1.msra.mxu0 %v3842
    %5501 = vmatprep.subr.mxu0 0.0
    %5502 = vmatpush1.msra.mxu0 %v3843
    %5503 = vmatprep.subr.mxu0 0.0
    %5504 = vmatpush1.msra.mxu0 %v3844
    %5505 = vmatprep.subr.mxu0 0.0
    %5506 = vmatpush1.msra.mxu0 %v3845
    %5507 = vmatprep.subr.mxu0 0.0
    %5508 = vmatpush1.msra.mxu0 %v3846
    %5509 = vmatprep.subr.mxu0 0.0
    %5510 = vmatpush1.msra.mxu0 %v3847
    %5511 = vmatprep.subr.mxu0 0.0
    %5512 = vmatpush1.msra.mxu0 %v3848
    %5513 = vmatprep.subr.mxu0 0.0
    %5514 = vmatpush1.msra.mxu0 %v3849
    %5515 = vmatprep.subr.mxu0 0.0
    %5516 = vmatpush1.msra.mxu0 %v3850
    %5517 = vmatprep.subr.mxu0 0.0
    %5518 = vmatpush1.msra.mxu0 %v3851
    %5519 = vmatprep.subr.mxu0 0.0
    %5520 = vmatpush1.msra.mxu0 %v3852
    %5521 = vmatprep.subr.mxu0 0.0
    %5522 = vmatpush1.msra.mxu0 %v3853
    %5523 = vmatprep.subr.mxu0 0.0
    %5524 = vmatpush1.msra.mxu0 %v3854
    %5525 = vmatprep.subr.mxu0 0.0
    %5526 = vmatpush1.msra.mxu0 %v3855
    %5527 = vmatprep.subr.mxu0 0.0
    %5528 = vmatpush1.msra.mxu0 %v3856
    %5529 = vmatprep.subr.mxu0 0.0
    %5530 = vmatpush1.msra.mxu0 %v3857
    %5531 = vmatprep.subr.mxu0 0.0
    %5532 = vmatpush1.msra.mxu0 %v3858
    %5533 = vmatprep.mubr.f32.mxu0 %v3090
    %5534 = vmatmul.mubr.f32.gmra.mrb[0].mxu0 %v3089
    %v5535 = vpop.f32.mrb[0].mxu0
    %v5536 = vadd.f32 %v5466, %v5535
    %v5537 = vpop.f32.mrb[0].mxu0
    %5538 = vdwg.mxu0
    %v5539 = vadd.f32 %v3040, %v5536
    %vm5540 = vcmask 80896
    %5541 = vst.msk [vmem:[%s8] sm:$0xff] %vm5540, %v5539
    // Predicated region
    $region46: #{simple_mobilenet_v2.1} parent=1 // pred_check
      _
    $region47: #{simple_mobilenet_v2.1} parent=1 // pred_check_branch
      %5543 = sbr.rel (0) target = $region49
    $region48: #{simple_mobilenet_v2.1} parent=1 // pred_region
      _
    $region49: #{simple_mobilenet_v2.1} parent=1 // pred_fallthru
      _
    // Predicated region
    $region50: #{simple_mobilenet_v2.1} parent=1 // pred_check
      _
    $region51: #{simple_mobilenet_v2.1} parent=1 // pred_check_branch
      %5545 = sbr.rel (0) target = $region53
    $region52: #{simple_mobilenet_v2.1} parent=1 // pred_region
      _
    $region53: #{simple_mobilenet_v2.1} parent=1 // pred_fallthru
      _
    %5546 = vsyncpa [#allocation4], 1
    %5547 = vsyncpa [#allocation6], 1

</llo_original>
